<compile_context>
chip_gen: v6e
topology: v6e:2x2x1
jax: 0.10.0
libtpu: 0.0.40
codegen_flags: <defaults>
</compile_context>

<pallas_src>
import functools

import jax
import jax.numpy as jnp
from jax import lax
from jax.experimental import pallas as pl
from jax.experimental.pallas import tpu as pltpu

LEAKY_SLOPE = 0.01     # F.leaky_relu default negative_slope
LANE = 128             # TPU lane width (alignment unit for batch packing)


# ----------------------------------------------------------------------------
# Static per-layer configuration (mirrors the PyTorch module constructor)
# ----------------------------------------------------------------------------
def build_layer_cfg(kd, ks, n_layers, dim_hidden, stride, length):
    cfg = []

    def add(kind, c_in, c_out, k, s, p, act, bn):
        nonlocal length
        l_in = length
        if kind == "conv":
            l_dil, p_eff, s_eff = l_in, p, s
        else:  # ConvTranspose1d == stride-1 conv on the zero-dilated input
            l_dil, p_eff, s_eff = (l_in - 1) * s + 1, k - 1 - p, 1
        l_padded = l_dil + 2 * p_eff
        l_full = l_padded - k + 1                 # stride-1 conv output length
        l_out = (l_full - 1) // s_eff + 1         # after keeping every s-th col
        slot = -(-l_padded // LANE) * LANE        # 128-aligned per-batch stride
        assert l_full + k - 1 == l_padded         # tap reads stay in the window
        assert l_out >= 1 and p_eff >= 0
        cfg.append(dict(kind=kind, c_in=c_in, c_out=c_out, ks=k, stride=s,
                        pad=p, act=act, bn=bn, l_in=l_in, l_dil=l_dil,
                        p_eff=p_eff, s_eff=s_eff, l_padded=l_padded,
                        l_full=l_full, l_out=l_out, slot=slot))
        length = l_out

    add("conv", 1, 2 * kd, ks, 4, ks // 4, "leaky", True)             # conv1/bn1
    add("conv", 2 * kd, kd, ks, 2, ks // 2 - 1, "leaky", True)        # conv_enc1
    for _ in range(n_layers - 1):                                     # conv_enc
        add("conv", kd, kd, ks, stride, ks // 2 - 1, "leaky", True)
    add("conv", kd, dim_hidden, 1, 1, 0, "none", True)                # conv_code
    add("convt", dim_hidden, kd, ks, 2, ks // 2 - 1, "leaky", True)   # conv_dec1
    for _ in range(n_layers - 1):                                     # conv_dec
        add("convt", kd, kd, ks, 2, ks // 2 - 1, "leaky", True)
    add("convt", kd, 2 * kd, ks, 4, ks // 4, "leaky", True)           # conv_dec_last
    add("convt", 2 * kd, 1, ks + 1, 1, ks // 2, "sigmoid", False)     # conv_rec
    return cfg


def _layer_extra_count(lc):
    n = 0
    if lc["kind"] == "convt" and lc["stride"] > 1:
        n += 1                                     # dilation matrix D
    if lc["s_eff"] > 1:
        n += 1                                     # stride-selection matrix S
    return n


# ----------------------------------------------------------------------------
# The single fused Pallas kernel: entire ConvAE forward
# ----------------------------------------------------------------------------
def _convae_kernel(*refs, cfg, c_pad, slab_w, batch, eps):
    """refs = (x_ref, <per-layer tensors>, out_ref, pad_scratch).

    x_ref   : (B, C_pad, L0) channels-first input, channel 0 = signal
    per layer: W (ks, C_pad, C_pad) with W[t] = (C_out, C_in) tap matrix,
               bias/gamma/beta (C_pad, 1),
               [D (l_in, l_dil) if ConvT stride>1], [S (l_full, l_out) if s_eff>1]
    out_ref : (B, C_pad, L_out) lane-dense output (channel 0 = reconstruction)
    pad_scratch : (C_pad, slab_w) f32 VMEM scratch holding the zero-padded
        (and zero-dilated, for ConvT) inputs of BOTH batch elements, packed at
        128-aligned lane offsets so one dot per tap covers the whole batch.
    """
    f32 = jnp.float32

    x_ref = refs[0]
    idx = 1
    layer_refs = []
    for lc in cfg:
        n = 4 + _layer_extra_count(lc)
        layer_refs.append(refs[idx:idx + n])
        idx += n
    out_ref = refs[idx]
    pad_ref = refs[idx + 1]

    # One-time hygiene fill (6 vreg stores) so lanes between/after the packed
    # batch segments are always finite; per-layer fills below touch halos only.
    pad_ref[...] = jnp.zeros((c_pad, slab_w), f32)

    # Per-batch activations, channels-first (C_pad, L), f32, lane-dense.
    h = [x_ref[b].astype(f32) for b in range(batch)]

    for li, lc in enumerate(cfg):
        lrefs = list(layer_refs[li])
        w_ref, b_ref, g_ref, bt_ref = lrefs[:4]
        extra = lrefs[4:]
        pos = 0
        d_ref = None
        s_ref = None
        if lc["kind"] == "convt" and lc["stride"] > 1:
            d_ref = extra[pos]; pos += 1
        if lc["s_eff"] > 1:
            s_ref = extra[pos]; pos += 1

        slot = lc["slot"]
        p_eff, l_dil, l_padded = lc["p_eff"], lc["l_dil"], lc["l_padded"]
        l_full, l_out, ks = lc["l_full"], lc["l_out"], lc["ks"]

        # ---- assemble the padded (and dilated) inputs of all batches --------
        for b in range(batch):
            hb = h[b]                                       # (C_pad, l_in)
            if d_ref is not None:
                # zero-dilate along L with one MXU dot: (C,l_in)@(l_in,l_dil)
                hb = jnp.dot(hb, d_ref[...], preferred_element_type=f32)
            off = b * slot
            if p_eff > 0:                                   # halo-only zeroing
                pad_ref[:, off:off + p_eff] = jnp.zeros((c_pad, p_eff), f32)
                pad_ref[:, off + p_eff + l_dil:off + l_padded] = (
                    jnp.zeros((c_pad, p_eff), f32))
            pad_ref[:, off + p_eff:off + p_eff + l_dil] = hb

        # ---- ONE MXU dot per tap over the whole batch-packed slab -----------
        n_big = (batch - 1) * slot + l_full
        acc = jnp.zeros((c_pad, n_big), f32)
        for t in range(ks):
            acc = acc + jnp.dot(w_ref[t], pad_ref[:, t:t + n_big],
                                preferred_element_type=f32)

        bias = b_ref[...]                                   # (C_pad, 1)

        # ---- per-batch: extract valid columns, stride-select, bias, leaky ---
        new_h = []
        for b in range(batch):
            a = acc[:, b * slot:b * slot + l_full]          # 128-aligned slice
            if s_ref is not None:
                # keep every s-th column via one MXU dot with the 0/1 matrix
                a = jnp.dot(a, s_ref[...], preferred_element_type=f32)
            a = a + bias
            if lc["act"] == "leaky":
                a = jnp.where(a > 0, a, LEAKY_SLOPE * a)
            new_h.append(a)

        # ---- BatchNorm1d (training-mode batch statistics, biased variance) --
        if lc["bn"]:
            gamma = g_ref[...]                              # (C_pad, 1)
            beta = bt_ref[...]
            cnt = float(batch * l_out)
            s1 = new_h[0].sum(axis=-1, keepdims=True)
            s2 = (new_h[0] * new_h[0]).sum(axis=-1, keepdims=True)
            for a in new_h[1:]:
                s1 = s1 + a.sum(axis=-1, keepdims=True)
                s2 = s2 + (a * a).sum(axis=-1, keepdims=True)
            mean = s1 * (1.0 / cnt)
            var = jnp.maximum(s2 * (1.0 / cnt) - mean * mean, 0.0)
            scale = gamma * lax.rsqrt(var + eps)
            shift = beta - mean * scale
            new_h = [a * scale + shift for a in new_h]

        if lc["act"] == "sigmoid":
            # single EUP transcendental, exact [0,1] range
            new_h = [0.5 * (jnp.tanh(0.5 * a) + 1.0) for a in new_h]

        h = new_h

    # Output is already (C_pad, L) lane-dense -- direct store, no transpose dot.
    for b in range(batch):
        out_ref[b] = h[b].astype(out_ref.dtype)


# ----------------------------------------------------------------------------
# Plain-JAX glue: parameter repacking (tap-major, channel-padded) and wrapper
# ----------------------------------------------------------------------------
def _prepare_layer_tensors(layers, cfg, c_pad):
    tensors = []
    for (w, b, g, bt), lc in zip(layers, cfg):
        k, ci, co = lc["ks"], lc["c_in"], lc["c_out"]
        if lc["kind"] == "conv":
            # Conv1d weight (C_out, C_in, ks) -> taps (ks, C_out, C_in)
            taps = jnp.transpose(w, (2, 0, 1))
        else:
            # ConvTranspose1d weight (C_in, C_out, ks): equivalent stride-1
            # conv uses the tap-reversed kernel -> (ks, C_out, C_in)
            taps = jnp.transpose(jnp.flip(w, axis=2), (2, 1, 0))
        w_p = jnp.zeros((k, c_pad, c_pad), jnp.float32).at[:, :co, :ci].set(taps)
        b_p = jnp.zeros((c_pad, 1), jnp.float32).at[:co, 0].set(b)
        g_p = jnp.ones((c_pad, 1), jnp.float32).at[:co, 0].set(g)
        bt_p = jnp.zeros((c_pad, 1), jnp.float32).at[:co, 0].set(bt)
        group = [w_p, b_p, g_p, bt_p]
        if lc["kind"] == "convt" and lc["stride"] > 1:
            # D[i, m] = (m == stride*i): (l_in, l_dil) zero-dilation matrix
            i = jnp.arange(lc["l_in"])[:, None]
            m = jnp.arange(lc["l_dil"])[None, :]
            group.append((m == lc["stride"] * i).astype(jnp.float32))
        if lc["s_eff"] > 1:
            # S[r, j] = (r == s*j): (l_full, l_out) stride-selection matrix
            r = jnp.arange(lc["l_full"])[:, None]
            j = jnp.arange(lc["l_out"])[None, :]
            group.append((r == lc["s_eff"] * j).astype(jnp.float32))
        tensors += group
    return tensors


def convae_forward(x, layers, *, cfg, bn_eps):
    """x: (B, 1, L) float32 in PyTorch NCW layout.  Returns (B, 1, L)."""
    batch, _, length = x.shape
    c_pad = max(8, max(max(lc["c_in"], lc["c_out"]) for lc in cfg))
    c_pad = -(-c_pad // 8) * 8                    # sublane-aligned channel pad
    slab_need = max((batch - 1) * lc["slot"] + lc["l_padded"] for lc in cfg)
    slab_w = -(-slab_need // LANE) * LANE
    for lc in cfg:                                # static safety checks
        assert (batch - 1) * lc["slot"] + lc["l_padded"] <= slab_w
    l_final = cfg[-1]["l_out"]

    # Module boundary only: NCW -> channels-first padded (B, C_pad, L).
    x_cf = jnp.zeros((batch, c_pad, length), jnp.float32)
    x_cf = x_cf.at[:, 0, :].set(x[:, 0, :].astype(jnp.float32))

    layer_tensors = _prepare_layer_tensors(layers, cfg, c_pad)

    kern = functools.partial(_convae_kernel, cfg=cfg, c_pad=c_pad,
                             slab_w=slab_w, batch=batch, eps=float(bn_eps))
    vmem = pl.BlockSpec(memory_space=pltpu.MemorySpace.VMEM)
    out = pl.pallas_call(
        kern,
        out_shape=jax.ShapeDtypeStruct((batch, c_pad, l_final), jnp.float32),
        in_specs=[vmem] * (1 + len(layer_tensors)),
        out_specs=vmem,
        scratch_shapes=[pltpu.VMEM((c_pad, slab_w), jnp.float32)],
    )(x_cf, *layer_tensors)

    # Module boundary: back to NCW (B, 1, L); channel 0 is the reconstruction.
    return out[:, :1, :]


# ----------------------------------------------------------------------------
# Parameter init (mirrors a fresh PyTorch module: BN weight=1, bias=0)
# ----------------------------------------------------------------------------
def init_params(key, kd, ks, n_layers, dim_hidden):
    keys = iter(jax.random.split(key, 64))

    def conv_w(c_out, c_in, k):     # nn.Conv1d weight layout
        return 0.1 * jax.random.normal(next(keys), (c_out, c_in, k), jnp.float32)

    def convt_w(c_in, c_out, k):    # nn.ConvTranspose1d weight layout
        return 0.1 * jax.random.normal(next(keys), (c_in, c_out, k), jnp.float32)

    def bias(c):
        return 0.1 * jax.random.normal(next(keys), (c,), jnp.float32)

    def entry_conv(c_in, c_out, k):
        return (conv_w(c_out, c_in, k), bias(c_out),
                jnp.ones((c_out,), jnp.float32), jnp.zeros((c_out,), jnp.float32))

    def entry_convt(c_in, c_out, k):
        return (convt_w(c_in, c_out, k), bias(c_out),
                jnp.ones((c_out,), jnp.float32), jnp.zeros((c_out,), jnp.float32))

    layers = [entry_conv(1, 2 * kd, ks), entry_conv(2 * kd, kd, ks)]
    layers += [entry_conv(kd, kd, ks) for _ in range(n_layers - 1)]
    layers += [entry_conv(kd, dim_hidden, 1), entry_convt(dim_hidden, kd, ks)]
    layers += [entry_convt(kd, kd, ks) for _ in range(n_layers - 1)]
    layers += [entry_convt(kd, 2 * kd, ks), entry_convt(2 * kd, 1, ks + 1)]
    return layers


if __name__ == "__main__":
    # ConvAE(kd=4, ks=8, n_layers=2, dim_hidden=8, bn_eps=1e-5, stride=2)
    kd, ks, n_layers, dim_hidden, bn_eps, stride = 4, 8, 2, 8, 1e-5, 2
    batch, length = 2, 256

    key = jax.random.PRNGKey(0)
    kx, kp = jax.random.split(key)
    x = jax.random.normal(kx, (batch, 1, length), jnp.float32)
    layers = init_params(kp, kd, ks, n_layers, dim_hidden)
    cfg = build_layer_cfg(kd, ks, n_layers, dim_hidden, stride, length)

    fwd = jax.jit(functools.partial(convae_forward, cfg=cfg, bn_eps=bn_eps))
    out = jax.block_until_ready(fwd(x, layers))

    assert out.shape == (batch, 1, length), out.shape
    assert bool(jnp.all(jnp.isfinite(out)))
    assert bool(jnp.all((out >= 0.0) & (out <= 1.0)))   # sigmoid output range
    print("KERNEL_OK")
</pallas_src>

<mosaic_0001>
module attributes {stable_mosaic.version = 11 : i64} {
  func.func @_convae_kernel(%arg0: memref<2x8x256xf32, #tpu.memory_space<vmem>>, %arg1: memref<8x8x8xf32, #tpu.memory_space<vmem>>, %arg2: memref<8x1xf32, #tpu.memory_space<vmem>>, %arg3: memref<8x1xf32, #tpu.memory_space<vmem>>, %arg4: memref<8x1xf32, #tpu.memory_space<vmem>>, %arg5: memref<253x64xf32, #tpu.memory_space<vmem>>, %arg6: memref<8x8x8xf32, #tpu.memory_space<vmem>>, %arg7: memref<8x1xf32, #tpu.memory_space<vmem>>, %arg8: memref<8x1xf32, #tpu.memory_space<vmem>>, %arg9: memref<8x1xf32, #tpu.memory_space<vmem>>, %arg10: memref<63x32xf32, #tpu.memory_space<vmem>>, %arg11: memref<8x8x8xf32, #tpu.memory_space<vmem>>, %arg12: memref<8x1xf32, #tpu.memory_space<vmem>>, %arg13: memref<8x1xf32, #tpu.memory_space<vmem>>, %arg14: memref<8x1xf32, #tpu.memory_space<vmem>>, %arg15: memref<31x16xf32, #tpu.memory_space<vmem>>, %arg16: memref<1x8x8xf32, #tpu.memory_space<vmem>>, %arg17: memref<8x1xf32, #tpu.memory_space<vmem>>, %arg18: memref<8x1xf32, #tpu.memory_space<vmem>>, %arg19: memref<8x1xf32, #tpu.memory_space<vmem>>, %arg20: memref<8x8x8xf32, #tpu.memory_space<vmem>>, %arg21: memref<8x1xf32, #tpu.memory_space<vmem>>, %arg22: memref<8x1xf32, #tpu.memory_space<vmem>>, %arg23: memref<8x1xf32, #tpu.memory_space<vmem>>, %arg24: memref<16x31xf32, #tpu.memory_space<vmem>>, %arg25: memref<8x8x8xf32, #tpu.memory_space<vmem>>, %arg26: memref<8x1xf32, #tpu.memory_space<vmem>>, %arg27: memref<8x1xf32, #tpu.memory_space<vmem>>, %arg28: memref<8x1xf32, #tpu.memory_space<vmem>>, %arg29: memref<32x63xf32, #tpu.memory_space<vmem>>, %arg30: memref<8x8x8xf32, #tpu.memory_space<vmem>>, %arg31: memref<8x1xf32, #tpu.memory_space<vmem>>, %arg32: memref<8x1xf32, #tpu.memory_space<vmem>>, %arg33: memref<8x1xf32, #tpu.memory_space<vmem>>, %arg34: memref<64x253xf32, #tpu.memory_space<vmem>>, %arg35: memref<9x8x8xf32, #tpu.memory_space<vmem>>, %arg36: memref<8x1xf32, #tpu.memory_space<vmem>>, %arg37: memref<8x1xf32, #tpu.memory_space<vmem>>, %arg38: memref<8x1xf32, #tpu.memory_space<vmem>>, %arg39: memref<2x8x256xf32, #tpu.memory_space<vmem>>, %arg40: memref<8x768xf32, #tpu.memory_space<vmem>>) attributes {dimension_semantics = [], scalar_prefetch = 0 : i64, scratch_operands = 1 : i64, tpu.core_type = #tpu.core_type<tc>} {
    %cst = arith.constant 0.000000e+00 : f32
    %0 = vector.broadcast %cst : f32 to vector<8x768xf32>
    %c0 = arith.constant 0 : index
    %c0_0 = arith.constant 0 : index
    %1 = vector.load %arg40[%c0, %c0_0] : memref<8x768xf32, #tpu.memory_space<vmem>>, vector<8x768xf32>
    tpu.vector_store %arg40[%c0, %c0_0], %0 {strides = array<i32>} : memref<8x768xf32, #tpu.memory_space<vmem>>, vector<8x768xf32>,
    %c0_1 = arith.constant 0 : index
    %c0_2 = arith.constant 0 : index
    %c0_3 = arith.constant 0 : index
    %2 = vector.load %arg0[%c0_1, %c0_2, %c0_3] : memref<2x8x256xf32, #tpu.memory_space<vmem>>, vector<1x8x256xf32>
    %3 = vector.shape_cast %2 : vector<1x8x256xf32> to vector<8x256xf32>
    %c1 = arith.constant 1 : index
    %c0_4 = arith.constant 0 : index
    %c0_5 = arith.constant 0 : index
    %4 = vector.load %arg0[%c1, %c0_4, %c0_5] : memref<2x8x256xf32, #tpu.memory_space<vmem>>, vector<1x8x256xf32>
    %5 = vector.shape_cast %4 : vector<1x8x256xf32> to vector<8x256xf32>
    %cst_6 = arith.constant 0.000000e+00 : f32
    %6 = vector.broadcast %cst_6 : f32 to vector<8x2xf32>
    %c0_7 = arith.constant 0 : index
    %c0_8 = arith.constant 0 : index
    %7 = vector.load %arg40[%c0_7, %c0_8] : memref<8x768xf32, #tpu.memory_space<vmem>>, vector<8x2xf32>
    tpu.vector_store %arg40[%c0_7, %c0_8], %6 {strides = array<i32>} : memref<8x768xf32, #tpu.memory_space<vmem>>, vector<8x2xf32>,
    %cst_9 = arith.constant 0.000000e+00 : f32
    %8 = vector.broadcast %cst_9 : f32 to vector<8x2xf32>
    %c0_10 = arith.constant 0 : index
    %c258 = arith.constant 258 : index
    %9 = vector.load %arg40[%c0_10, %c258] : memref<8x768xf32, #tpu.memory_space<vmem>>, vector<8x2xf32>
    tpu.vector_store %arg40[%c0_10, %c258], %8 {strides = array<i32>} : memref<8x768xf32, #tpu.memory_space<vmem>>, vector<8x2xf32>,
    %c0_11 = arith.constant 0 : index
    %c2 = arith.constant 2 : index
    %10 = vector.load %arg40[%c0_11, %c2] : memref<8x768xf32, #tpu.memory_space<vmem>>, vector<8x256xf32>
    tpu.vector_store %arg40[%c0_11, %c2], %3 {strides = array<i32>} : memref<8x768xf32, #tpu.memory_space<vmem>>, vector<8x256xf32>,
    %cst_12 = arith.constant 0.000000e+00 : f32
    %11 = vector.broadcast %cst_12 : f32 to vector<8x2xf32>
    %c0_13 = arith.constant 0 : index
    %c384 = arith.constant 384 : index
    %12 = vector.load %arg40[%c0_13, %c384] : memref<8x768xf32, #tpu.memory_space<vmem>>, vector<8x2xf32>
    tpu.vector_store %arg40[%c0_13, %c384], %11 {strides = array<i32>} : memref<8x768xf32, #tpu.memory_space<vmem>>, vector<8x2xf32>,
    %cst_14 = arith.constant 0.000000e+00 : f32
    %13 = vector.broadcast %cst_14 : f32 to vector<8x2xf32>
    %c0_15 = arith.constant 0 : index
    %c642 = arith.constant 642 : index
    %14 = vector.load %arg40[%c0_15, %c642] : memref<8x768xf32, #tpu.memory_space<vmem>>, vector<8x2xf32>
    tpu.vector_store %arg40[%c0_15, %c642], %13 {strides = array<i32>} : memref<8x768xf32, #tpu.memory_space<vmem>>, vector<8x2xf32>,
    %c0_16 = arith.constant 0 : index
    %c386 = arith.constant 386 : index
    %15 = vector.load %arg40[%c0_16, %c386] : memref<8x768xf32, #tpu.memory_space<vmem>>, vector<8x256xf32>
    tpu.vector_store %arg40[%c0_16, %c386], %5 {strides = array<i32>} : memref<8x768xf32, #tpu.memory_space<vmem>>, vector<8x256xf32>,
    %cst_17 = arith.constant 0.000000e+00 : f32
    %16 = vector.broadcast %cst_17 : f32 to vector<8x637xf32>
    %c0_18 = arith.constant 0 : index
    %c0_19 = arith.constant 0 : index
    %c0_20 = arith.constant 0 : index
    %17 = vector.load %arg1[%c0_18, %c0_19, %c0_20] : memref<8x8x8xf32, #tpu.memory_space<vmem>>, vector<1x8x8xf32>
    %18 = vector.shape_cast %17 : vector<1x8x8xf32> to vector<8x8xf32>
    %c0_21 = arith.constant 0 : index
    %c0_22 = arith.constant 0 : index
    %19 = vector.load %arg40[%c0_21, %c0_22] : memref<8x768xf32, #tpu.memory_space<vmem>>, vector<8x637xf32>
    %cst_23 = arith.constant dense<0.000000e+00> : vector<8x637xf32>
    %20 = tpu.matmul %18, %19, %cst_23 {dimension_numbers = #tpu.dot_dimension_numbers<[1], [0], [0], [1], [0, 0, 1, 1], [], []>} : vector<8x8xf32>, vector<8x637xf32>, vector<8x637xf32> -> vector<8x637xf32>
    %21 = arith.addf %16, %20 : vector<8x637xf32>
    %c1_24 = arith.constant 1 : index
    %c0_25 = arith.constant 0 : index
    %c0_26 = arith.constant 0 : index
    %22 = vector.load %arg1[%c1_24, %c0_25, %c0_26] : memref<8x8x8xf32, #tpu.memory_space<vmem>>, vector<1x8x8xf32>
    %23 = vector.shape_cast %22 : vector<1x8x8xf32> to vector<8x8xf32>
    %c0_27 = arith.constant 0 : index
    %c1_28 = arith.constant 1 : index
    %24 = vector.load %arg40[%c0_27, %c1_28] : memref<8x768xf32, #tpu.memory_space<vmem>>, vector<8x637xf32>
    %cst_29 = arith.constant dense<0.000000e+00> : vector<8x637xf32>
    %25 = tpu.matmul %23, %24, %cst_29 {dimension_numbers = #tpu.dot_dimension_numbers<[1], [0], [0], [1], [0, 0, 1, 1], [], []>} : vector<8x8xf32>, vector<8x637xf32>, vector<8x637xf32> -> vector<8x637xf32>
    %26 = arith.addf %21, %25 : vector<8x637xf32>
    %c2_30 = arith.constant 2 : index
    %c0_31 = arith.constant 0 : index
    %c0_32 = arith.constant 0 : index
    %27 = vector.load %arg1[%c2_30, %c0_31, %c0_32] : memref<8x8x8xf32, #tpu.memory_space<vmem>>, vector<1x8x8xf32>
    %28 = vector.shape_cast %27 : vector<1x8x8xf32> to vector<8x8xf32>
    %c0_33 = arith.constant 0 : index
    %c2_34 = arith.constant 2 : index
    %29 = vector.load %arg40[%c0_33, %c2_34] : memref<8x768xf32, #tpu.memory_space<vmem>>, vector<8x637xf32>
    %cst_35 = arith.constant dense<0.000000e+00> : vector<8x637xf32>
    %30 = tpu.matmul %28, %29, %cst_35 {dimension_numbers = #tpu.dot_dimension_numbers<[1], [0], [0], [1], [0, 0, 1, 1], [], []>} : vector<8x8xf32>, vector<8x637xf32>, vector<8x637xf32> -> vector<8x637xf32>
    %31 = arith.addf %26, %30 : vector<8x637xf32>
    %c3 = arith.constant 3 : index
    %c0_36 = arith.constant 0 : index
    %c0_37 = arith.constant 0 : index
    %32 = vector.load %arg1[%c3, %c0_36, %c0_37] : memref<8x8x8xf32, #tpu.memory_space<vmem>>, vector<1x8x8xf32>
    %33 = vector.shape_cast %32 : vector<1x8x8xf32> to vector<8x8xf32>
    %c0_38 = arith.constant 0 : index
    %c3_39 = arith.constant 3 : index
    %34 = vector.load %arg40[%c0_38, %c3_39] : memref<8x768xf32, #tpu.memory_space<vmem>>, vector<8x637xf32>
    %cst_40 = arith.constant dense<0.000000e+00> : vector<8x637xf32>
    %35 = tpu.matmul %33, %34, %cst_40 {dimension_numbers = #tpu.dot_dimension_numbers<[1], [0], [0], [1], [0, 0, 1, 1], [], []>} : vector<8x8xf32>, vector<8x637xf32>, vector<8x637xf32> -> vector<8x637xf32>
    %36 = arith.addf %31, %35 : vector<8x637xf32>
    %c4 = arith.constant 4 : index
    %c0_41 = arith.constant 0 : index
    %c0_42 = arith.constant 0 : index
    %37 = vector.load %arg1[%c4, %c0_41, %c0_42] : memref<8x8x8xf32, #tpu.memory_space<vmem>>, vector<1x8x8xf32>
    %38 = vector.shape_cast %37 : vector<1x8x8xf32> to vector<8x8xf32>
    %c0_43 = arith.constant 0 : index
    %c4_44 = arith.constant 4 : index
    %39 = vector.load %arg40[%c0_43, %c4_44] : memref<8x768xf32, #tpu.memory_space<vmem>>, vector<8x637xf32>
    %cst_45 = arith.constant dense<0.000000e+00> : vector<8x637xf32>
    %40 = tpu.matmul %38, %39, %cst_45 {dimension_numbers = #tpu.dot_dimension_numbers<[1], [0], [0], [1], [0, 0, 1, 1], [], []>} : vector<8x8xf32>, vector<8x637xf32>, vector<8x637xf32> -> vector<8x637xf32>
    %41 = arith.addf %36, %40 : vector<8x637xf32>
    %c5 = arith.constant 5 : index
    %c0_46 = arith.constant 0 : index
    %c0_47 = arith.constant 0 : index
    %42 = vector.load %arg1[%c5, %c0_46, %c0_47] : memref<8x8x8xf32, #tpu.memory_space<vmem>>, vector<1x8x8xf32>
    %43 = vector.shape_cast %42 : vector<1x8x8xf32> to vector<8x8xf32>
    %c0_48 = arith.constant 0 : index
    %c5_49 = arith.constant 5 : index
    %44 = vector.load %arg40[%c0_48, %c5_49] : memref<8x768xf32, #tpu.memory_space<vmem>>, vector<8x637xf32>
    %cst_50 = arith.constant dense<0.000000e+00> : vector<8x637xf32>
    %45 = tpu.matmul %43, %44, %cst_50 {dimension_numbers = #tpu.dot_dimension_numbers<[1], [0], [0], [1], [0, 0, 1, 1], [], []>} : vector<8x8xf32>, vector<8x637xf32>, vector<8x637xf32> -> vector<8x637xf32>
    %46 = arith.addf %41, %45 : vector<8x637xf32>
    %c6 = arith.constant 6 : index
    %c0_51 = arith.constant 0 : index
    %c0_52 = arith.constant 0 : index
    %47 = vector.load %arg1[%c6, %c0_51, %c0_52] : memref<8x8x8xf32, #tpu.memory_space<vmem>>, vector<1x8x8xf32>
    %48 = vector.shape_cast %47 : vector<1x8x8xf32> to vector<8x8xf32>
    %c0_53 = arith.constant 0 : index
    %c6_54 = arith.constant 6 : index
    %49 = vector.load %arg40[%c0_53, %c6_54] : memref<8x768xf32, #tpu.memory_space<vmem>>, vector<8x637xf32>
    %cst_55 = arith.constant dense<0.000000e+00> : vector<8x637xf32>
    %50 = tpu.matmul %48, %49, %cst_55 {dimension_numbers = #tpu.dot_dimension_numbers<[1], [0], [0], [1], [0, 0, 1, 1], [], []>} : vector<8x8xf32>, vector<8x637xf32>, vector<8x637xf32> -> vector<8x637xf32>
    %51 = arith.addf %46, %50 : vector<8x637xf32>
    %c7 = arith.constant 7 : index
    %c0_56 = arith.constant 0 : index
    %c0_57 = arith.constant 0 : index
    %52 = vector.load %arg1[%c7, %c0_56, %c0_57] : memref<8x8x8xf32, #tpu.memory_space<vmem>>, vector<1x8x8xf32>
    %53 = vector.shape_cast %52 : vector<1x8x8xf32> to vector<8x8xf32>
    %c0_58 = arith.constant 0 : index
    %c7_59 = arith.constant 7 : index
    %54 = vector.load %arg40[%c0_58, %c7_59] : memref<8x768xf32, #tpu.memory_space<vmem>>, vector<8x637xf32>
    %cst_60 = arith.constant dense<0.000000e+00> : vector<8x637xf32>
    %55 = tpu.matmul %53, %54, %cst_60 {dimension_numbers = #tpu.dot_dimension_numbers<[1], [0], [0], [1], [0, 0, 1, 1], [], []>} : vector<8x8xf32>, vector<8x637xf32>, vector<8x637xf32> -> vector<8x637xf32>
    %56 = arith.addf %51, %55 : vector<8x637xf32>
    %c0_61 = arith.constant 0 : index
    %c0_62 = arith.constant 0 : index
    %57 = vector.load %arg2[%c0_61, %c0_62] : memref<8x1xf32, #tpu.memory_space<vmem>>, vector<8x1xf32>
    %58 = vector.extract_strided_slice %56 {offsets = [0, 0], sizes = [8, 253], strides = [1, 1]} : vector<8x637xf32> to vector<8x253xf32>
    %c0_63 = arith.constant 0 : index
    %c0_64 = arith.constant 0 : index
    %59 = vector.load %arg5[%c0_63, %c0_64] : memref<253x64xf32, #tpu.memory_space<vmem>>, vector<253x64xf32>
    %cst_65 = arith.constant dense<0.000000e+00> : vector<8x64xf32>
    %60 = tpu.matmul %58, %59, %cst_65 {dimension_numbers = #tpu.dot_dimension_numbers<[1], [0], [0], [1], [0, 0, 1, 1], [], []>} : vector<8x253xf32>, vector<253x64xf32>, vector<8x64xf32> -> vector<8x64xf32>
    %61 = vector.broadcast %57 : vector<8x1xf32> to vector<8x64xf32>
    %62 = arith.addf %60, %61 : vector<8x64xf32>
    %cst_66 = arith.constant 0.000000e+00 : f32
    %63 = vector.broadcast %cst_66 : f32 to vector<8x64xf32>
    %64 = arith.cmpf ogt, %62, %63 : vector<8x64xf32>
    %cst_67 = arith.constant 0.00999999977 : f32
    %65 = vector.broadcast %cst_67 : f32 to vector<8x64xf32>
    %66 = arith.mulf %65, %62 : vector<8x64xf32>
    %67 = arith.select %64, %62, %66 : vector<8x64xi1>, vector<8x64xf32>
    %68 = vector.extract_strided_slice %56 {offsets = [0, 384], sizes = [8, 253], strides = [1, 1]} : vector<8x637xf32> to vector<8x253xf32>
    %c0_68 = arith.constant 0 : index
    %c0_69 = arith.constant 0 : index
    %69 = vector.load %arg5[%c0_68, %c0_69] : memref<253x64xf32, #tpu.memory_space<vmem>>, vector<253x64xf32>
    %cst_70 = arith.constant dense<0.000000e+00> : vector<8x64xf32>
    %70 = tpu.matmul %68, %69, %cst_70 {dimension_numbers = #tpu.dot_dimension_numbers<[1], [0], [0], [1], [0, 0, 1, 1], [], []>} : vector<8x253xf32>, vector<253x64xf32>, vector<8x64xf32> -> vector<8x64xf32>
    %71 = vector.broadcast %57 : vector<8x1xf32> to vector<8x64xf32>
    %72 = arith.addf %70, %71 : vector<8x64xf32>
    %cst_71 = arith.constant 0.000000e+00 : f32
    %73 = vector.broadcast %cst_71 : f32 to vector<8x64xf32>
    %74 = arith.cmpf ogt, %72, %73 : vector<8x64xf32>
    %cst_72 = arith.constant 0.00999999977 : f32
    %75 = vector.broadcast %cst_72 : f32 to vector<8x64xf32>
    %76 = arith.mulf %75, %72 : vector<8x64xf32>
    %77 = arith.select %74, %72, %76 : vector<8x64xi1>, vector<8x64xf32>
    %c0_73 = arith.constant 0 : index
    %c0_74 = arith.constant 0 : index
    %78 = vector.load %arg3[%c0_73, %c0_74] : memref<8x1xf32, #tpu.memory_space<vmem>>, vector<8x1xf32>
    %c0_75 = arith.constant 0 : index
    %c0_76 = arith.constant 0 : index
    %79 = vector.load %arg4[%c0_75, %c0_76] : memref<8x1xf32, #tpu.memory_space<vmem>>, vector<8x1xf32>
    %cst_77 = arith.constant dense<0.000000e+00> : vector<8xf32>
    %80 = vector.multi_reduction <add>, %67, %cst_77 [1] : vector<8x64xf32> to vector<8xf32>
    %81 = vector.shape_cast %80 : vector<8xf32> to vector<8x1xf32>
    %82 = arith.mulf %67, %67 : vector<8x64xf32>
    %cst_78 = arith.constant dense<0.000000e+00> : vector<8xf32>
    %83 = vector.multi_reduction <add>, %82, %cst_78 [1] : vector<8x64xf32> to vector<8xf32>
    %84 = vector.shape_cast %83 : vector<8xf32> to vector<8x1xf32>
    %cst_79 = arith.constant dense<0.000000e+00> : vector<8xf32>
    %85 = vector.multi_reduction <add>, %77, %cst_79 [1] : vector<8x64xf32> to vector<8xf32>
    %86 = vector.shape_cast %85 : vector<8xf32> to vector<8x1xf32>
    %87 = arith.addf %81, %86 : vector<8x1xf32>
    %88 = arith.mulf %77, %77 : vector<8x64xf32>
    %cst_80 = arith.constant dense<0.000000e+00> : vector<8xf32>
    %89 = vector.multi_reduction <add>, %88, %cst_80 [1] : vector<8x64xf32> to vector<8xf32>
    %90 = vector.shape_cast %89 : vector<8xf32> to vector<8x1xf32>
    %91 = arith.addf %84, %90 : vector<8x1xf32>
    %cst_81 = arith.constant 7.812500e-03 : f32
    %92 = vector.broadcast %cst_81 : f32 to vector<8x1xf32>
    %93 = arith.mulf %87, %92 : vector<8x1xf32>
    %cst_82 = arith.constant 7.812500e-03 : f32
    %94 = vector.broadcast %cst_82 : f32 to vector<8x1xf32>
    %95 = arith.mulf %91, %94 : vector<8x1xf32>
    %96 = arith.mulf %93, %93 : vector<8x1xf32>
    %97 = arith.subf %95, %96 : vector<8x1xf32>
    %cst_83 = arith.constant 0.000000e+00 : f32
    %98 = vector.broadcast %cst_83 : f32 to vector<8x1xf32>
    %99 = arith.maximumf %97, %98 : vector<8x1xf32>
    %cst_84 = arith.constant 9.99999974E-6 : f32
    %100 = vector.broadcast %cst_84 : f32 to vector<8x1xf32>
    %101 = arith.addf %99, %100 : vector<8x1xf32>
    %102 = math.rsqrt %101 : vector<8x1xf32>
    %103 = arith.mulf %78, %102 : vector<8x1xf32>
    %104 = arith.mulf %93, %103 : vector<8x1xf32>
    %105 = arith.subf %79, %104 : vector<8x1xf32>
    %106 = vector.broadcast %103 : vector<8x1xf32> to vector<8x64xf32>
    %107 = arith.mulf %67, %106 : vector<8x64xf32>
    %108 = vector.broadcast %105 : vector<8x1xf32> to vector<8x64xf32>
    %109 = arith.addf %107, %108 : vector<8x64xf32>
    %110 = vector.broadcast %103 : vector<8x1xf32> to vector<8x64xf32>
    %111 = arith.mulf %77, %110 : vector<8x64xf32>
    %112 = vector.broadcast %105 : vector<8x1xf32> to vector<8x64xf32>
    %113 = arith.addf %111, %112 : vector<8x64xf32>
    %cst_85 = arith.constant 0.000000e+00 : f32
    %114 = vector.broadcast %cst_85 : f32 to vector<8x3xf32>
    %c0_86 = arith.constant 0 : index
    %c0_87 = arith.constant 0 : index
    %115 = vector.load %arg40[%c0_86, %c0_87] : memref<8x768xf32, #tpu.memory_space<vmem>>, vector<8x3xf32>
    tpu.vector_store %arg40[%c0_86, %c0_87], %114 {strides = array<i32>} : memref<8x768xf32, #tpu.memory_space<vmem>>, vector<8x3xf32>,
    %cst_88 = arith.constant 0.000000e+00 : f32
    %116 = vector.broadcast %cst_88 : f32 to vector<8x3xf32>
    %c0_89 = arith.constant 0 : index
    %c67 = arith.constant 67 : index
    %117 = vector.load %arg40[%c0_89, %c67] : memref<8x768xf32, #tpu.memory_space<vmem>>, vector<8x3xf32>
    tpu.vector_store %arg40[%c0_89, %c67], %116 {strides = array<i32>} : memref<8x768xf32, #tpu.memory_space<vmem>>, vector<8x3xf32>,
    %c0_90 = arith.constant 0 : index
    %c3_91 = arith.constant 3 : index
    %118 = vector.load %arg40[%c0_90, %c3_91] : memref<8x768xf32, #tpu.memory_space<vmem>>, vector<8x64xf32>
    tpu.vector_store %arg40[%c0_90, %c3_91], %109 {strides = array<i32>} : memref<8x768xf32, #tpu.memory_space<vmem>>, vector<8x64xf32>,
    %cst_92 = arith.constant 0.000000e+00 : f32
    %119 = vector.broadcast %cst_92 : f32 to vector<8x3xf32>
    %c0_93 = arith.constant 0 : index
    %c128 = arith.constant 128 : index
    %120 = vector.load %arg40[%c0_93, %c128] : memref<8x768xf32, #tpu.memory_space<vmem>>, vector<8x3xf32>
    tpu.vector_store %arg40[%c0_93, %c128], %119 {strides = array<i32>} : memref<8x768xf32, #tpu.memory_space<vmem>>, vector<8x3xf32>,
    %cst_94 = arith.constant 0.000000e+00 : f32
    %121 = vector.broadcast %cst_94 : f32 to vector<8x3xf32>
    %c0_95 = arith.constant 0 : index
    %c195 = arith.constant 195 : index
    %122 = vector.load %arg40[%c0_95, %c195] : memref<8x768xf32, #tpu.memory_space<vmem>>, vector<8x3xf32>
    tpu.vector_store %arg40[%c0_95, %c195], %121 {strides = array<i32>} : memref<8x768xf32, #tpu.memory_space<vmem>>, vector<8x3xf32>,
    %c0_96 = arith.constant 0 : index
    %c131 = arith.constant 131 : index
    %123 = vector.load %arg40[%c0_96, %c131] : memref<8x768xf32, #tpu.memory_space<vmem>>, vector<8x64xf32>
    tpu.vector_store %arg40[%c0_96, %c131], %113 {strides = array<i32>} : memref<8x768xf32, #tpu.memory_space<vmem>>, vector<8x64xf32>,
    %cst_97 = arith.constant 0.000000e+00 : f32
    %124 = vector.broadcast %cst_97 : f32 to vector<8x191xf32>
    %c0_98 = arith.constant 0 : index
    %c0_99 = arith.constant 0 : index
    %c0_100 = arith.constant 0 : index
    %125 = vector.load %arg6[%c0_98, %c0_99, %c0_100] : memref<8x8x8xf32, #tpu.memory_space<vmem>>, vector<1x8x8xf32>
    %126 = vector.shape_cast %125 : vector<1x8x8xf32> to vector<8x8xf32>
    %c0_101 = arith.constant 0 : index
    %c0_102 = arith.constant 0 : index
    %127 = vector.load %arg40[%c0_101, %c0_102] : memref<8x768xf32, #tpu.memory_space<vmem>>, vector<8x191xf32>
    %cst_103 = arith.constant dense<0.000000e+00> : vector<8x191xf32>
    %128 = tpu.matmul %126, %127, %cst_103 {dimension_numbers = #tpu.dot_dimension_numbers<[1], [0], [0], [1], [0, 0, 1, 1], [], []>} : vector<8x8xf32>, vector<8x191xf32>, vector<8x191xf32> -> vector<8x191xf32>
    %129 = arith.addf %124, %128 : vector<8x191xf32>
    %c1_104 = arith.constant 1 : index
    %c0_105 = arith.constant 0 : index
    %c0_106 = arith.constant 0 : index
    %130 = vector.load %arg6[%c1_104, %c0_105, %c0_106] : memref<8x8x8xf32, #tpu.memory_space<vmem>>, vector<1x8x8xf32>
    %131 = vector.shape_cast %130 : vector<1x8x8xf32> to vector<8x8xf32>
    %c0_107 = arith.constant 0 : index
    %c1_108 = arith.constant 1 : index
    %132 = vector.load %arg40[%c0_107, %c1_108] : memref<8x768xf32, #tpu.memory_space<vmem>>, vector<8x191xf32>
    %cst_109 = arith.constant dense<0.000000e+00> : vector<8x191xf32>
    %133 = tpu.matmul %131, %132, %cst_109 {dimension_numbers = #tpu.dot_dimension_numbers<[1], [0], [0], [1], [0, 0, 1, 1], [], []>} : vector<8x8xf32>, vector<8x191xf32>, vector<8x191xf32> -> vector<8x191xf32>
    %134 = arith.addf %129, %133 : vector<8x191xf32>
    %c2_110 = arith.constant 2 : index
    %c0_111 = arith.constant 0 : index
    %c0_112 = arith.constant 0 : index
    %135 = vector.load %arg6[%c2_110, %c0_111, %c0_112] : memref<8x8x8xf32, #tpu.memory_space<vmem>>, vector<1x8x8xf32>
    %136 = vector.shape_cast %135 : vector<1x8x8xf32> to vector<8x8xf32>
    %c0_113 = arith.constant 0 : index
    %c2_114 = arith.constant 2 : index
    %137 = vector.load %arg40[%c0_113, %c2_114] : memref<8x768xf32, #tpu.memory_space<vmem>>, vector<8x191xf32>
    %cst_115 = arith.constant dense<0.000000e+00> : vector<8x191xf32>
    %138 = tpu.matmul %136, %137, %cst_115 {dimension_numbers = #tpu.dot_dimension_numbers<[1], [0], [0], [1], [0, 0, 1, 1], [], []>} : vector<8x8xf32>, vector<8x191xf32>, vector<8x191xf32> -> vector<8x191xf32>
    %139 = arith.addf %134, %138 : vector<8x191xf32>
    %c3_116 = arith.constant 3 : index
    %c0_117 = arith.constant 0 : index
    %c0_118 = arith.constant 0 : index
    %140 = vector.load %arg6[%c3_116, %c0_117, %c0_118] : memref<8x8x8xf32, #tpu.memory_space<vmem>>, vector<1x8x8xf32>
    %141 = vector.shape_cast %140 : vector<1x8x8xf32> to vector<8x8xf32>
    %c0_119 = arith.constant 0 : index
    %c3_120 = arith.constant 3 : index
    %142 = vector.load %arg40[%c0_119, %c3_120] : memref<8x768xf32, #tpu.memory_space<vmem>>, vector<8x191xf32>
    %cst_121 = arith.constant dense<0.000000e+00> : vector<8x191xf32>
    %143 = tpu.matmul %141, %142, %cst_121 {dimension_numbers = #tpu.dot_dimension_numbers<[1], [0], [0], [1], [0, 0, 1, 1], [], []>} : vector<8x8xf32>, vector<8x191xf32>, vector<8x191xf32> -> vector<8x191xf32>
    %144 = arith.addf %139, %143 : vector<8x191xf32>
    %c4_122 = arith.constant 4 : index
    %c0_123 = arith.constant 0 : index
    %c0_124 = arith.constant 0 : index
    %145 = vector.load %arg6[%c4_122, %c0_123, %c0_124] : memref<8x8x8xf32, #tpu.memory_space<vmem>>, vector<1x8x8xf32>
    %146 = vector.shape_cast %145 : vector<1x8x8xf32> to vector<8x8xf32>
    %c0_125 = arith.constant 0 : index
    %c4_126 = arith.constant 4 : index
    %147 = vector.load %arg40[%c0_125, %c4_126] : memref<8x768xf32, #tpu.memory_space<vmem>>, vector<8x191xf32>
    %cst_127 = arith.constant dense<0.000000e+00> : vector<8x191xf32>
    %148 = tpu.matmul %146, %147, %cst_127 {dimension_numbers = #tpu.dot_dimension_numbers<[1], [0], [0], [1], [0, 0, 1, 1], [], []>} : vector<8x8xf32>, vector<8x191xf32>, vector<8x191xf32> -> vector<8x191xf32>
    %149 = arith.addf %144, %148 : vector<8x191xf32>
    %c5_128 = arith.constant 5 : index
    %c0_129 = arith.constant 0 : index
    %c0_130 = arith.constant 0 : index
    %150 = vector.load %arg6[%c5_128, %c0_129, %c0_130] : memref<8x8x8xf32, #tpu.memory_space<vmem>>, vector<1x8x8xf32>
    %151 = vector.shape_cast %150 : vector<1x8x8xf32> to vector<8x8xf32>
    %c0_131 = arith.constant 0 : index
    %c5_132 = arith.constant 5 : index
    %152 = vector.load %arg40[%c0_131, %c5_132] : memref<8x768xf32, #tpu.memory_space<vmem>>, vector<8x191xf32>
    %cst_133 = arith.constant dense<0.000000e+00> : vector<8x191xf32>
    %153 = tpu.matmul %151, %152, %cst_133 {dimension_numbers = #tpu.dot_dimension_numbers<[1], [0], [0], [1], [0, 0, 1, 1], [], []>} : vector<8x8xf32>, vector<8x191xf32>, vector<8x191xf32> -> vector<8x191xf32>
    %154 = arith.addf %149, %153 : vector<8x191xf32>
    %c6_134 = arith.constant 6 : index
    %c0_135 = arith.constant 0 : index
    %c0_136 = arith.constant 0 : index
    %155 = vector.load %arg6[%c6_134, %c0_135, %c0_136] : memref<8x8x8xf32, #tpu.memory_space<vmem>>, vector<1x8x8xf32>
    %156 = vector.shape_cast %155 : vector<1x8x8xf32> to vector<8x8xf32>
    %c0_137 = arith.constant 0 : index
    %c6_138 = arith.constant 6 : index
    %157 = vector.load %arg40[%c0_137, %c6_138] : memref<8x768xf32, #tpu.memory_space<vmem>>, vector<8x191xf32>
    %cst_139 = arith.constant dense<0.000000e+00> : vector<8x191xf32>
    %158 = tpu.matmul %156, %157, %cst_139 {dimension_numbers = #tpu.dot_dimension_numbers<[1], [0], [0], [1], [0, 0, 1, 1], [], []>} : vector<8x8xf32>, vector<8x191xf32>, vector<8x191xf32> -> vector<8x191xf32>
    %159 = arith.addf %154, %158 : vector<8x191xf32>
    %c7_140 = arith.constant 7 : index
    %c0_141 = arith.constant 0 : index
    %c0_142 = arith.constant 0 : index
    %160 = vector.load %arg6[%c7_140, %c0_141, %c0_142] : memref<8x8x8xf32, #tpu.memory_space<vmem>>, vector<1x8x8xf32>
    %161 = vector.shape_cast %160 : vector<1x8x8xf32> to vector<8x8xf32>
    %c0_143 = arith.constant 0 : index
    %c7_144 = arith.constant 7 : index
    %162 = vector.load %arg40[%c0_143, %c7_144] : memref<8x768xf32, #tpu.memory_space<vmem>>, vector<8x191xf32>
    %cst_145 = arith.constant dense<0.000000e+00> : vector<8x191xf32>
    %163 = tpu.matmul %161, %162, %cst_145 {dimension_numbers = #tpu.dot_dimension_numbers<[1], [0], [0], [1], [0, 0, 1, 1], [], []>} : vector<8x8xf32>, vector<8x191xf32>, vector<8x191xf32> -> vector<8x191xf32>
    %164 = arith.addf %159, %163 : vector<8x191xf32>
    %c0_146 = arith.constant 0 : index
    %c0_147 = arith.constant 0 : index
    %165 = vector.load %arg7[%c0_146, %c0_147] : memref<8x1xf32, #tpu.memory_space<vmem>>, vector<8x1xf32>
    %166 = vector.extract_strided_slice %164 {offsets = [0, 0], sizes = [8, 63], strides = [1, 1]} : vector<8x191xf32> to vector<8x63xf32>
    %c0_148 = arith.constant 0 : index
    %c0_149 = arith.constant 0 : index
    %167 = vector.load %arg10[%c0_148, %c0_149] : memref<63x32xf32, #tpu.memory_space<vmem>>, vector<63x32xf32>
    %cst_150 = arith.constant dense<0.000000e+00> : vector<8x32xf32>
    %168 = tpu.matmul %166, %167, %cst_150 {dimension_numbers = #tpu.dot_dimension_numbers<[1], [0], [0], [1], [0, 0, 1, 1], [], []>} : vector<8x63xf32>, vector<63x32xf32>, vector<8x32xf32> -> vector<8x32xf32>
    %169 = vector.broadcast %165 : vector<8x1xf32> to vector<8x32xf32>
    %170 = arith.addf %168, %169 : vector<8x32xf32>
    %cst_151 = arith.constant 0.000000e+00 : f32
    %171 = vector.broadcast %cst_151 : f32 to vector<8x32xf32>
    %172 = arith.cmpf ogt, %170, %171 : vector<8x32xf32>
    %cst_152 = arith.constant 0.00999999977 : f32
    %173 = vector.broadcast %cst_152 : f32 to vector<8x32xf32>
    %174 = arith.mulf %173, %170 : vector<8x32xf32>
    %175 = arith.select %172, %170, %174 : vector<8x32xi1>, vector<8x32xf32>
    %176 = vector.extract_strided_slice %164 {offsets = [0, 128], sizes = [8, 63], strides = [1, 1]} : vector<8x191xf32> to vector<8x63xf32>
    %c0_153 = arith.constant 0 : index
    %c0_154 = arith.constant 0 : index
    %177 = vector.load %arg10[%c0_153, %c0_154] : memref<63x32xf32, #tpu.memory_space<vmem>>, vector<63x32xf32>
    %cst_155 = arith.constant dense<0.000000e+00> : vector<8x32xf32>
    %178 = tpu.matmul %176, %177, %cst_155 {dimension_numbers = #tpu.dot_dimension_numbers<[1], [0], [0], [1], [0, 0, 1, 1], [], []>} : vector<8x63xf32>, vector<63x32xf32>, vector<8x32xf32> -> vector<8x32xf32>
    %179 = vector.broadcast %165 : vector<8x1xf32> to vector<8x32xf32>
    %180 = arith.addf %178, %179 : vector<8x32xf32>
    %cst_156 = arith.constant 0.000000e+00 : f32
    %181 = vector.broadcast %cst_156 : f32 to vector<8x32xf32>
    %182 = arith.cmpf ogt, %180, %181 : vector<8x32xf32>
    %cst_157 = arith.constant 0.00999999977 : f32
    %183 = vector.broadcast %cst_157 : f32 to vector<8x32xf32>
    %184 = arith.mulf %183, %180 : vector<8x32xf32>
    %185 = arith.select %182, %180, %184 : vector<8x32xi1>, vector<8x32xf32>
    %c0_158 = arith.constant 0 : index
    %c0_159 = arith.constant 0 : index
    %186 = vector.load %arg8[%c0_158, %c0_159] : memref<8x1xf32, #tpu.memory_space<vmem>>, vector<8x1xf32>
    %c0_160 = arith.constant 0 : index
    %c0_161 = arith.constant 0 : index
    %187 = vector.load %arg9[%c0_160, %c0_161] : memref<8x1xf32, #tpu.memory_space<vmem>>, vector<8x1xf32>
    %cst_162 = arith.constant dense<0.000000e+00> : vector<8xf32>
    %188 = vector.multi_reduction <add>, %175, %cst_162 [1] : vector<8x32xf32> to vector<8xf32>
    %189 = vector.shape_cast %188 : vector<8xf32> to vector<8x1xf32>
    %190 = arith.mulf %175, %175 : vector<8x32xf32>
    %cst_163 = arith.constant dense<0.000000e+00> : vector<8xf32>
    %191 = vector.multi_reduction <add>, %190, %cst_163 [1] : vector<8x32xf32> to vector<8xf32>
    %192 = vector.shape_cast %191 : vector<8xf32> to vector<8x1xf32>
    %cst_164 = arith.constant dense<0.000000e+00> : vector<8xf32>
    %193 = vector.multi_reduction <add>, %185, %cst_164 [1] : vector<8x32xf32> to vector<8xf32>
    %194 = vector.shape_cast %193 : vector<8xf32> to vector<8x1xf32>
    %195 = arith.addf %189, %194 : vector<8x1xf32>
    %196 = arith.mulf %185, %185 : vector<8x32xf32>
    %cst_165 = arith.constant dense<0.000000e+00> : vector<8xf32>
    %197 = vector.multi_reduction <add>, %196, %cst_165 [1] : vector<8x32xf32> to vector<8xf32>
    %198 = vector.shape_cast %197 : vector<8xf32> to vector<8x1xf32>
    %199 = arith.addf %192, %198 : vector<8x1xf32>
    %cst_166 = arith.constant 1.562500e-02 : f32
    %200 = vector.broadcast %cst_166 : f32 to vector<8x1xf32>
    %201 = arith.mulf %195, %200 : vector<8x1xf32>
    %cst_167 = arith.constant 1.562500e-02 : f32
    %202 = vector.broadcast %cst_167 : f32 to vector<8x1xf32>
    %203 = arith.mulf %199, %202 : vector<8x1xf32>
    %204 = arith.mulf %201, %201 : vector<8x1xf32>
    %205 = arith.subf %203, %204 : vector<8x1xf32>
    %cst_168 = arith.constant 0.000000e+00 : f32
    %206 = vector.broadcast %cst_168 : f32 to vector<8x1xf32>
    %207 = arith.maximumf %205, %206 : vector<8x1xf32>
    %cst_169 = arith.constant 9.99999974E-6 : f32
    %208 = vector.broadcast %cst_169 : f32 to vector<8x1xf32>
    %209 = arith.addf %207, %208 : vector<8x1xf32>
    %210 = math.rsqrt %209 : vector<8x1xf32>
    %211 = arith.mulf %186, %210 : vector<8x1xf32>
    %212 = arith.mulf %201, %211 : vector<8x1xf32>
    %213 = arith.subf %187, %212 : vector<8x1xf32>
    %214 = vector.broadcast %211 : vector<8x1xf32> to vector<8x32xf32>
    %215 = arith.mulf %175, %214 : vector<8x32xf32>
    %216 = vector.broadcast %213 : vector<8x1xf32> to vector<8x32xf32>
    %217 = arith.addf %215, %216 : vector<8x32xf32>
    %218 = vector.broadcast %211 : vector<8x1xf32> to vector<8x32xf32>
    %219 = arith.mulf %185, %218 : vector<8x32xf32>
    %220 = vector.broadcast %213 : vector<8x1xf32> to vector<8x32xf32>
    %221 = arith.addf %219, %220 : vector<8x32xf32>
    %cst_170 = arith.constant 0.000000e+00 : f32
    %222 = vector.broadcast %cst_170 : f32 to vector<8x3xf32>
    %c0_171 = arith.constant 0 : index
    %c0_172 = arith.constant 0 : index
    %223 = vector.load %arg40[%c0_171, %c0_172] : memref<8x768xf32, #tpu.memory_space<vmem>>, vector<8x3xf32>
    tpu.vector_store %arg40[%c0_171, %c0_172], %222 {strides = array<i32>} : memref<8x768xf32, #tpu.memory_space<vmem>>, vector<8x3xf32>,
    %cst_173 = arith.constant 0.000000e+00 : f32
    %224 = vector.broadcast %cst_173 : f32 to vector<8x3xf32>
    %c0_174 = arith.constant 0 : index
    %c35 = arith.constant 35 : index
    %225 = vector.load %arg40[%c0_174, %c35] : memref<8x768xf32, #tpu.memory_space<vmem>>, vector<8x3xf32>
    tpu.vector_store %arg40[%c0_174, %c35], %224 {strides = array<i32>} : memref<8x768xf32, #tpu.memory_space<vmem>>, vector<8x3xf32>,
    %c0_175 = arith.constant 0 : index
    %c3_176 = arith.constant 3 : index
    %226 = vector.load %arg40[%c0_175, %c3_176] : memref<8x768xf32, #tpu.memory_space<vmem>>, vector<8x32xf32>
    tpu.vector_store %arg40[%c0_175, %c3_176], %217 {strides = array<i32>} : memref<8x768xf32, #tpu.memory_space<vmem>>, vector<8x32xf32>,
    %cst_177 = arith.constant 0.000000e+00 : f32
    %227 = vector.broadcast %cst_177 : f32 to vector<8x3xf32>
    %c0_178 = arith.constant 0 : index
    %c128_179 = arith.constant 128 : index
    %228 = vector.load %arg40[%c0_178, %c128_179] : memref<8x768xf32, #tpu.memory_space<vmem>>, vector<8x3xf32>
    tpu.vector_store %arg40[%c0_178, %c128_179], %227 {strides = array<i32>} : memref<8x768xf32, #tpu.memory_space<vmem>>, vector<8x3xf32>,
    %cst_180 = arith.constant 0.000000e+00 : f32
    %229 = vector.broadcast %cst_180 : f32 to vector<8x3xf32>
    %c0_181 = arith.constant 0 : index
    %c163 = arith.constant 163 : index
    %230 = vector.load %arg40[%c0_181, %c163] : memref<8x768xf32, #tpu.memory_space<vmem>>, vector<8x3xf32>
    tpu.vector_store %arg40[%c0_181, %c163], %229 {strides = array<i32>} : memref<8x768xf32, #tpu.memory_space<vmem>>, vector<8x3xf32>,
    %c0_182 = arith.constant 0 : index
    %c131_183 = arith.constant 131 : index
    %231 = vector.load %arg40[%c0_182, %c131_183] : memref<8x768xf32, #tpu.memory_space<vmem>>, vector<8x32xf32>
    tpu.vector_store %arg40[%c0_182, %c131_183], %221 {strides = array<i32>} : memref<8x768xf32, #tpu.memory_space<vmem>>, vector<8x32xf32>,
    %cst_184 = arith.constant 0.000000e+00 : f32
    %232 = vector.broadcast %cst_184 : f32 to vector<8x159xf32>
    %c0_185 = arith.constant 0 : index
    %c0_186 = arith.constant 0 : index
    %c0_187 = arith.constant 0 : index
    %233 = vector.load %arg11[%c0_185, %c0_186, %c0_187] : memref<8x8x8xf32, #tpu.memory_space<vmem>>, vector<1x8x8xf32>
    %234 = vector.shape_cast %233 : vector<1x8x8xf32> to vector<8x8xf32>
    %c0_188 = arith.constant 0 : index
    %c0_189 = arith.constant 0 : index
    %235 = vector.load %arg40[%c0_188, %c0_189] : memref<8x768xf32, #tpu.memory_space<vmem>>, vector<8x159xf32>
    %cst_190 = arith.constant dense<0.000000e+00> : vector<8x159xf32>
    %236 = tpu.matmul %234, %235, %cst_190 {dimension_numbers = #tpu.dot_dimension_numbers<[1], [0], [0], [1], [0, 0, 1, 1], [], []>} : vector<8x8xf32>, vector<8x159xf32>, vector<8x159xf32> -> vector<8x159xf32>
    %237 = arith.addf %232, %236 : vector<8x159xf32>
    %c1_191 = arith.constant 1 : index
    %c0_192 = arith.constant 0 : index
    %c0_193 = arith.constant 0 : index
    %238 = vector.load %arg11[%c1_191, %c0_192, %c0_193] : memref<8x8x8xf32, #tpu.memory_space<vmem>>, vector<1x8x8xf32>
    %239 = vector.shape_cast %238 : vector<1x8x8xf32> to vector<8x8xf32>
    %c0_194 = arith.constant 0 : index
    %c1_195 = arith.constant 1 : index
    %240 = vector.load %arg40[%c0_194, %c1_195] : memref<8x768xf32, #tpu.memory_space<vmem>>, vector<8x159xf32>
    %cst_196 = arith.constant dense<0.000000e+00> : vector<8x159xf32>
    %241 = tpu.matmul %239, %240, %cst_196 {dimension_numbers = #tpu.dot_dimension_numbers<[1], [0], [0], [1], [0, 0, 1, 1], [], []>} : vector<8x8xf32>, vector<8x159xf32>, vector<8x159xf32> -> vector<8x159xf32>
    %242 = arith.addf %237, %241 : vector<8x159xf32>
    %c2_197 = arith.constant 2 : index
    %c0_198 = arith.constant 0 : index
    %c0_199 = arith.constant 0 : index
    %243 = vector.load %arg11[%c2_197, %c0_198, %c0_199] : memref<8x8x8xf32, #tpu.memory_space<vmem>>, vector<1x8x8xf32>
    %244 = vector.shape_cast %243 : vector<1x8x8xf32> to vector<8x8xf32>
    %c0_200 = arith.constant 0 : index
    %c2_201 = arith.constant 2 : index
    %245 = vector.load %arg40[%c0_200, %c2_201] : memref<8x768xf32, #tpu.memory_space<vmem>>, vector<8x159xf32>
    %cst_202 = arith.constant dense<0.000000e+00> : vector<8x159xf32>
    %246 = tpu.matmul %244, %245, %cst_202 {dimension_numbers = #tpu.dot_dimension_numbers<[1], [0], [0], [1], [0, 0, 1, 1], [], []>} : vector<8x8xf32>, vector<8x159xf32>, vector<8x159xf32> -> vector<8x159xf32>
    %247 = arith.addf %242, %246 : vector<8x159xf32>
    %c3_203 = arith.constant 3 : index
    %c0_204 = arith.constant 0 : index
    %c0_205 = arith.constant 0 : index
    %248 = vector.load %arg11[%c3_203, %c0_204, %c0_205] : memref<8x8x8xf32, #tpu.memory_space<vmem>>, vector<1x8x8xf32>
    %249 = vector.shape_cast %248 : vector<1x8x8xf32> to vector<8x8xf32>
    %c0_206 = arith.constant 0 : index
    %c3_207 = arith.constant 3 : index
    %250 = vector.load %arg40[%c0_206, %c3_207] : memref<8x768xf32, #tpu.memory_space<vmem>>, vector<8x159xf32>
    %cst_208 = arith.constant dense<0.000000e+00> : vector<8x159xf32>
    %251 = tpu.matmul %249, %250, %cst_208 {dimension_numbers = #tpu.dot_dimension_numbers<[1], [0], [0], [1], [0, 0, 1, 1], [], []>} : vector<8x8xf32>, vector<8x159xf32>, vector<8x159xf32> -> vector<8x159xf32>
    %252 = arith.addf %247, %251 : vector<8x159xf32>
    %c4_209 = arith.constant 4 : index
    %c0_210 = arith.constant 0 : index
    %c0_211 = arith.constant 0 : index
    %253 = vector.load %arg11[%c4_209, %c0_210, %c0_211] : memref<8x8x8xf32, #tpu.memory_space<vmem>>, vector<1x8x8xf32>
    %254 = vector.shape_cast %253 : vector<1x8x8xf32> to vector<8x8xf32>
    %c0_212 = arith.constant 0 : index
    %c4_213 = arith.constant 4 : index
    %255 = vector.load %arg40[%c0_212, %c4_213] : memref<8x768xf32, #tpu.memory_space<vmem>>, vector<8x159xf32>
    %cst_214 = arith.constant dense<0.000000e+00> : vector<8x159xf32>
    %256 = tpu.matmul %254, %255, %cst_214 {dimension_numbers = #tpu.dot_dimension_numbers<[1], [0], [0], [1], [0, 0, 1, 1], [], []>} : vector<8x8xf32>, vector<8x159xf32>, vector<8x159xf32> -> vector<8x159xf32>
    %257 = arith.addf %252, %256 : vector<8x159xf32>
    %c5_215 = arith.constant 5 : index
    %c0_216 = arith.constant 0 : index
    %c0_217 = arith.constant 0 : index
    %258 = vector.load %arg11[%c5_215, %c0_216, %c0_217] : memref<8x8x8xf32, #tpu.memory_space<vmem>>, vector<1x8x8xf32>
    %259 = vector.shape_cast %258 : vector<1x8x8xf32> to vector<8x8xf32>
    %c0_218 = arith.constant 0 : index
    %c5_219 = arith.constant 5 : index
    %260 = vector.load %arg40[%c0_218, %c5_219] : memref<8x768xf32, #tpu.memory_space<vmem>>, vector<8x159xf32>
    %cst_220 = arith.constant dense<0.000000e+00> : vector<8x159xf32>
    %261 = tpu.matmul %259, %260, %cst_220 {dimension_numbers = #tpu.dot_dimension_numbers<[1], [0], [0], [1], [0, 0, 1, 1], [], []>} : vector<8x8xf32>, vector<8x159xf32>, vector<8x159xf32> -> vector<8x159xf32>
    %262 = arith.addf %257, %261 : vector<8x159xf32>
    %c6_221 = arith.constant 6 : index
    %c0_222 = arith.constant 0 : index
    %c0_223 = arith.constant 0 : index
    %263 = vector.load %arg11[%c6_221, %c0_222, %c0_223] : memref<8x8x8xf32, #tpu.memory_space<vmem>>, vector<1x8x8xf32>
    %264 = vector.shape_cast %263 : vector<1x8x8xf32> to vector<8x8xf32>
    %c0_224 = arith.constant 0 : index
    %c6_225 = arith.constant 6 : index
    %265 = vector.load %arg40[%c0_224, %c6_225] : memref<8x768xf32, #tpu.memory_space<vmem>>, vector<8x159xf32>
    %cst_226 = arith.constant dense<0.000000e+00> : vector<8x159xf32>
    %266 = tpu.matmul %264, %265, %cst_226 {dimension_numbers = #tpu.dot_dimension_numbers<[1], [0], [0], [1], [0, 0, 1, 1], [], []>} : vector<8x8xf32>, vector<8x159xf32>, vector<8x159xf32> -> vector<8x159xf32>
    %267 = arith.addf %262, %266 : vector<8x159xf32>
    %c7_227 = arith.constant 7 : index
    %c0_228 = arith.constant 0 : index
    %c0_229 = arith.constant 0 : index
    %268 = vector.load %arg11[%c7_227, %c0_228, %c0_229] : memref<8x8x8xf32, #tpu.memory_space<vmem>>, vector<1x8x8xf32>
    %269 = vector.shape_cast %268 : vector<1x8x8xf32> to vector<8x8xf32>
    %c0_230 = arith.constant 0 : index
    %c7_231 = arith.constant 7 : index
    %270 = vector.load %arg40[%c0_230, %c7_231] : memref<8x768xf32, #tpu.memory_space<vmem>>, vector<8x159xf32>
    %cst_232 = arith.constant dense<0.000000e+00> : vector<8x159xf32>
    %271 = tpu.matmul %269, %270, %cst_232 {dimension_numbers = #tpu.dot_dimension_numbers<[1], [0], [0], [1], [0, 0, 1, 1], [], []>} : vector<8x8xf32>, vector<8x159xf32>, vector<8x159xf32> -> vector<8x159xf32>
    %272 = arith.addf %267, %271 : vector<8x159xf32>
    %c0_233 = arith.constant 0 : index
    %c0_234 = arith.constant 0 : index
    %273 = vector.load %arg12[%c0_233, %c0_234] : memref<8x1xf32, #tpu.memory_space<vmem>>, vector<8x1xf32>
    %274 = vector.extract_strided_slice %272 {offsets = [0, 0], sizes = [8, 31], strides = [1, 1]} : vector<8x159xf32> to vector<8x31xf32>
    %c0_235 = arith.constant 0 : index
    %c0_236 = arith.constant 0 : index
    %275 = vector.load %arg15[%c0_235, %c0_236] : memref<31x16xf32, #tpu.memory_space<vmem>>, vector<31x16xf32>
    %cst_237 = arith.constant dense<0.000000e+00> : vector<8x16xf32>
    %276 = tpu.matmul %274, %275, %cst_237 {dimension_numbers = #tpu.dot_dimension_numbers<[1], [0], [0], [1], [0, 0, 1, 1], [], []>} : vector<8x31xf32>, vector<31x16xf32>, vector<8x16xf32> -> vector<8x16xf32>
    %277 = vector.broadcast %273 : vector<8x1xf32> to vector<8x16xf32>
    %278 = arith.addf %276, %277 : vector<8x16xf32>
    %cst_238 = arith.constant 0.000000e+00 : f32
    %279 = vector.broadcast %cst_238 : f32 to vector<8x16xf32>
    %280 = arith.cmpf ogt, %278, %279 : vector<8x16xf32>
    %cst_239 = arith.constant 0.00999999977 : f32
    %281 = vector.broadcast %cst_239 : f32 to vector<8x16xf32>
    %282 = arith.mulf %281, %278 : vector<8x16xf32>
    %283 = arith.select %280, %278, %282 : vector<8x16xi1>, vector<8x16xf32>
    %284 = vector.extract_strided_slice %272 {offsets = [0, 128], sizes = [8, 31], strides = [1, 1]} : vector<8x159xf32> to vector<8x31xf32>
    %c0_240 = arith.constant 0 : index
    %c0_241 = arith.constant 0 : index
    %285 = vector.load %arg15[%c0_240, %c0_241] : memref<31x16xf32, #tpu.memory_space<vmem>>, vector<31x16xf32>
    %cst_242 = arith.constant dense<0.000000e+00> : vector<8x16xf32>
    %286 = tpu.matmul %284, %285, %cst_242 {dimension_numbers = #tpu.dot_dimension_numbers<[1], [0], [0], [1], [0, 0, 1, 1], [], []>} : vector<8x31xf32>, vector<31x16xf32>, vector<8x16xf32> -> vector<8x16xf32>
    %287 = vector.broadcast %273 : vector<8x1xf32> to vector<8x16xf32>
    %288 = arith.addf %286, %287 : vector<8x16xf32>
    %cst_243 = arith.constant 0.000000e+00 : f32
    %289 = vector.broadcast %cst_243 : f32 to vector<8x16xf32>
    %290 = arith.cmpf ogt, %288, %289 : vector<8x16xf32>
    %cst_244 = arith.constant 0.00999999977 : f32
    %291 = vector.broadcast %cst_244 : f32 to vector<8x16xf32>
    %292 = arith.mulf %291, %288 : vector<8x16xf32>
    %293 = arith.select %290, %288, %292 : vector<8x16xi1>, vector<8x16xf32>
    %c0_245 = arith.constant 0 : index
    %c0_246 = arith.constant 0 : index
    %294 = vector.load %arg13[%c0_245, %c0_246] : memref<8x1xf32, #tpu.memory_space<vmem>>, vector<8x1xf32>
    %c0_247 = arith.constant 0 : index
    %c0_248 = arith.constant 0 : index
    %295 = vector.load %arg14[%c0_247, %c0_248] : memref<8x1xf32, #tpu.memory_space<vmem>>, vector<8x1xf32>
    %cst_249 = arith.constant dense<0.000000e+00> : vector<8xf32>
    %296 = vector.multi_reduction <add>, %283, %cst_249 [1] : vector<8x16xf32> to vector<8xf32>
    %297 = vector.shape_cast %296 : vector<8xf32> to vector<8x1xf32>
    %298 = arith.mulf %283, %283 : vector<8x16xf32>
    %cst_250 = arith.constant dense<0.000000e+00> : vector<8xf32>
    %299 = vector.multi_reduction <add>, %298, %cst_250 [1] : vector<8x16xf32> to vector<8xf32>
    %300 = vector.shape_cast %299 : vector<8xf32> to vector<8x1xf32>
    %cst_251 = arith.constant dense<0.000000e+00> : vector<8xf32>
    %301 = vector.multi_reduction <add>, %293, %cst_251 [1] : vector<8x16xf32> to vector<8xf32>
    %302 = vector.shape_cast %301 : vector<8xf32> to vector<8x1xf32>
    %303 = arith.addf %297, %302 : vector<8x1xf32>
    %304 = arith.mulf %293, %293 : vector<8x16xf32>
    %cst_252 = arith.constant dense<0.000000e+00> : vector<8xf32>
    %305 = vector.multi_reduction <add>, %304, %cst_252 [1] : vector<8x16xf32> to vector<8xf32>
    %306 = vector.shape_cast %305 : vector<8xf32> to vector<8x1xf32>
    %307 = arith.addf %300, %306 : vector<8x1xf32>
    %cst_253 = arith.constant 3.125000e-02 : f32
    %308 = vector.broadcast %cst_253 : f32 to vector<8x1xf32>
    %309 = arith.mulf %303, %308 : vector<8x1xf32>
    %cst_254 = arith.constant 3.125000e-02 : f32
    %310 = vector.broadcast %cst_254 : f32 to vector<8x1xf32>
    %311 = arith.mulf %307, %310 : vector<8x1xf32>
    %312 = arith.mulf %309, %309 : vector<8x1xf32>
    %313 = arith.subf %311, %312 : vector<8x1xf32>
    %cst_255 = arith.constant 0.000000e+00 : f32
    %314 = vector.broadcast %cst_255 : f32 to vector<8x1xf32>
    %315 = arith.maximumf %313, %314 : vector<8x1xf32>
    %cst_256 = arith.constant 9.99999974E-6 : f32
    %316 = vector.broadcast %cst_256 : f32 to vector<8x1xf32>
    %317 = arith.addf %315, %316 : vector<8x1xf32>
    %318 = math.rsqrt %317 : vector<8x1xf32>
    %319 = arith.mulf %294, %318 : vector<8x1xf32>
    %320 = arith.mulf %309, %319 : vector<8x1xf32>
    %321 = arith.subf %295, %320 : vector<8x1xf32>
    %322 = vector.broadcast %319 : vector<8x1xf32> to vector<8x16xf32>
    %323 = arith.mulf %283, %322 : vector<8x16xf32>
    %324 = vector.broadcast %321 : vector<8x1xf32> to vector<8x16xf32>
    %325 = arith.addf %323, %324 : vector<8x16xf32>
    %326 = vector.broadcast %319 : vector<8x1xf32> to vector<8x16xf32>
    %327 = arith.mulf %293, %326 : vector<8x16xf32>
    %328 = vector.broadcast %321 : vector<8x1xf32> to vector<8x16xf32>
    %329 = arith.addf %327, %328 : vector<8x16xf32>
    %c0_257 = arith.constant 0 : index
    %c0_258 = arith.constant 0 : index
    %330 = vector.load %arg40[%c0_257, %c0_258] : memref<8x768xf32, #tpu.memory_space<vmem>>, vector<8x16xf32>
    tpu.vector_store %arg40[%c0_257, %c0_258], %325 {strides = array<i32>} : memref<8x768xf32, #tpu.memory_space<vmem>>, vector<8x16xf32>,
    %c0_259 = arith.constant 0 : index
    %c128_260 = arith.constant 128 : index
    %331 = vector.load %arg40[%c0_259, %c128_260] : memref<8x768xf32, #tpu.memory_space<vmem>>, vector<8x16xf32>
    tpu.vector_store %arg40[%c0_259, %c128_260], %329 {strides = array<i32>} : memref<8x768xf32, #tpu.memory_space<vmem>>, vector<8x16xf32>,
    %cst_261 = arith.constant 0.000000e+00 : f32
    %332 = vector.broadcast %cst_261 : f32 to vector<8x144xf32>
    %c0_262 = arith.constant 0 : index
    %c0_263 = arith.constant 0 : index
    %c0_264 = arith.constant 0 : index
    %333 = vector.load %arg16[%c0_262, %c0_263, %c0_264] : memref<1x8x8xf32, #tpu.memory_space<vmem>>, vector<1x8x8xf32>
    %334 = vector.shape_cast %333 : vector<1x8x8xf32> to vector<8x8xf32>
    %c0_265 = arith.constant 0 : index
    %c0_266 = arith.constant 0 : index
    %335 = vector.load %arg40[%c0_265, %c0_266] : memref<8x768xf32, #tpu.memory_space<vmem>>, vector<8x144xf32>
    %cst_267 = arith.constant dense<0.000000e+00> : vector<8x144xf32>
    %336 = tpu.matmul %334, %335, %cst_267 {dimension_numbers = #tpu.dot_dimension_numbers<[1], [0], [0], [1], [0, 0, 1, 1], [], []>} : vector<8x8xf32>, vector<8x144xf32>, vector<8x144xf32> -> vector<8x144xf32>
    %337 = arith.addf %332, %336 : vector<8x144xf32>
    %c0_268 = arith.constant 0 : index
    %c0_269 = arith.constant 0 : index
    %338 = vector.load %arg17[%c0_268, %c0_269] : memref<8x1xf32, #tpu.memory_space<vmem>>, vector<8x1xf32>
    %339 = vector.extract_strided_slice %337 {offsets = [0, 0], sizes = [8, 16], strides = [1, 1]} : vector<8x144xf32> to vector<8x16xf32>
    %340 = vector.broadcast %338 : vector<8x1xf32> to vector<8x16xf32>
    %341 = arith.addf %339, %340 : vector<8x16xf32>
    %342 = vector.extract_strided_slice %337 {offsets = [0, 128], sizes = [8, 16], strides = [1, 1]} : vector<8x144xf32> to vector<8x16xf32>
    %343 = vector.broadcast %338 : vector<8x1xf32> to vector<8x16xf32>
    %344 = arith.addf %342, %343 : vector<8x16xf32>
    %c0_270 = arith.constant 0 : index
    %c0_271 = arith.constant 0 : index
    %345 = vector.load %arg18[%c0_270, %c0_271] : memref<8x1xf32, #tpu.memory_space<vmem>>, vector<8x1xf32>
    %c0_272 = arith.constant 0 : index
    %c0_273 = arith.constant 0 : index
    %346 = vector.load %arg19[%c0_272, %c0_273] : memref<8x1xf32, #tpu.memory_space<vmem>>, vector<8x1xf32>
    %cst_274 = arith.constant dense<0.000000e+00> : vector<8xf32>
    %347 = vector.multi_reduction <add>, %341, %cst_274 [1] : vector<8x16xf32> to vector<8xf32>
    %348 = vector.shape_cast %347 : vector<8xf32> to vector<8x1xf32>
    %349 = arith.mulf %341, %341 : vector<8x16xf32>
    %cst_275 = arith.constant dense<0.000000e+00> : vector<8xf32>
    %350 = vector.multi_reduction <add>, %349, %cst_275 [1] : vector<8x16xf32> to vector<8xf32>
    %351 = vector.shape_cast %350 : vector<8xf32> to vector<8x1xf32>
    %cst_276 = arith.constant dense<0.000000e+00> : vector<8xf32>
    %352 = vector.multi_reduction <add>, %344, %cst_276 [1] : vector<8x16xf32> to vector<8xf32>
    %353 = vector.shape_cast %352 : vector<8xf32> to vector<8x1xf32>
    %354 = arith.addf %348, %353 : vector<8x1xf32>
    %355 = arith.mulf %344, %344 : vector<8x16xf32>
    %cst_277 = arith.constant dense<0.000000e+00> : vector<8xf32>
    %356 = vector.multi_reduction <add>, %355, %cst_277 [1] : vector<8x16xf32> to vector<8xf32>
    %357 = vector.shape_cast %356 : vector<8xf32> to vector<8x1xf32>
    %358 = arith.addf %351, %357 : vector<8x1xf32>
    %cst_278 = arith.constant 3.125000e-02 : f32
    %359 = vector.broadcast %cst_278 : f32 to vector<8x1xf32>
    %360 = arith.mulf %354, %359 : vector<8x1xf32>
    %cst_279 = arith.constant 3.125000e-02 : f32
    %361 = vector.broadcast %cst_279 : f32 to vector<8x1xf32>
    %362 = arith.mulf %358, %361 : vector<8x1xf32>
    %363 = arith.mulf %360, %360 : vector<8x1xf32>
    %364 = arith.subf %362, %363 : vector<8x1xf32>
    %cst_280 = arith.constant 0.000000e+00 : f32
    %365 = vector.broadcast %cst_280 : f32 to vector<8x1xf32>
    %366 = arith.maximumf %364, %365 : vector<8x1xf32>
    %cst_281 = arith.constant 9.99999974E-6 : f32
    %367 = vector.broadcast %cst_281 : f32 to vector<8x1xf32>
    %368 = arith.addf %366, %367 : vector<8x1xf32>
    %369 = math.rsqrt %368 : vector<8x1xf32>
    %370 = arith.mulf %345, %369 : vector<8x1xf32>
    %371 = arith.mulf %360, %370 : vector<8x1xf32>
    %372 = arith.subf %346, %371 : vector<8x1xf32>
    %373 = vector.broadcast %370 : vector<8x1xf32> to vector<8x16xf32>
    %374 = arith.mulf %341, %373 : vector<8x16xf32>
    %375 = vector.broadcast %372 : vector<8x1xf32> to vector<8x16xf32>
    %376 = arith.addf %374, %375 : vector<8x16xf32>
    %377 = vector.broadcast %370 : vector<8x1xf32> to vector<8x16xf32>
    %378 = arith.mulf %344, %377 : vector<8x16xf32>
    %379 = vector.broadcast %372 : vector<8x1xf32> to vector<8x16xf32>
    %380 = arith.addf %378, %379 : vector<8x16xf32>
    %c0_282 = arith.constant 0 : index
    %c0_283 = arith.constant 0 : index
    %381 = vector.load %arg24[%c0_282, %c0_283] : memref<16x31xf32, #tpu.memory_space<vmem>>, vector<16x31xf32>
    %cst_284 = arith.constant dense<0.000000e+00> : vector<8x31xf32>
    %382 = tpu.matmul %376, %381, %cst_284 {dimension_numbers = #tpu.dot_dimension_numbers<[1], [0], [0], [1], [0, 0, 1, 1], [], []>} : vector<8x16xf32>, vector<16x31xf32>, vector<8x31xf32> -> vector<8x31xf32>
    %cst_285 = arith.constant 0.000000e+00 : f32
    %383 = vector.broadcast %cst_285 : f32 to vector<8x4xf32>
    %c0_286 = arith.constant 0 : index
    %c0_287 = arith.constant 0 : index
    %384 = vector.load %arg40[%c0_286, %c0_287] : memref<8x768xf32, #tpu.memory_space<vmem>>, vector<8x4xf32>
    tpu.vector_store %arg40[%c0_286, %c0_287], %383 {strides = array<i32>} : memref<8x768xf32, #tpu.memory_space<vmem>>, vector<8x4xf32>,
    %cst_288 = arith.constant 0.000000e+00 : f32
    %385 = vector.broadcast %cst_288 : f32 to vector<8x4xf32>
    %c0_289 = arith.constant 0 : index
    %c35_290 = arith.constant 35 : index
    %386 = vector.load %arg40[%c0_289, %c35_290] : memref<8x768xf32, #tpu.memory_space<vmem>>, vector<8x4xf32>
    tpu.vector_store %arg40[%c0_289, %c35_290], %385 {strides = array<i32>} : memref<8x768xf32, #tpu.memory_space<vmem>>, vector<8x4xf32>,
    %c0_291 = arith.constant 0 : index
    %c4_292 = arith.constant 4 : index
    %387 = vector.load %arg40[%c0_291, %c4_292] : memref<8x768xf32, #tpu.memory_space<vmem>>, vector<8x31xf32>
    tpu.vector_store %arg40[%c0_291, %c4_292], %382 {strides = array<i32>} : memref<8x768xf32, #tpu.memory_space<vmem>>, vector<8x31xf32>,
    %c0_293 = arith.constant 0 : index
    %c0_294 = arith.constant 0 : index
    %388 = vector.load %arg24[%c0_293, %c0_294] : memref<16x31xf32, #tpu.memory_space<vmem>>, vector<16x31xf32>
    %cst_295 = arith.constant dense<0.000000e+00> : vector<8x31xf32>
    %389 = tpu.matmul %380, %388, %cst_295 {dimension_numbers = #tpu.dot_dimension_numbers<[1], [0], [0], [1], [0, 0, 1, 1], [], []>} : vector<8x16xf32>, vector<16x31xf32>, vector<8x31xf32> -> vector<8x31xf32>
    %cst_296 = arith.constant 0.000000e+00 : f32
    %390 = vector.broadcast %cst_296 : f32 to vector<8x4xf32>
    %c0_297 = arith.constant 0 : index
    %c128_298 = arith.constant 128 : index
    %391 = vector.load %arg40[%c0_297, %c128_298] : memref<8x768xf32, #tpu.memory_space<vmem>>, vector<8x4xf32>
    tpu.vector_store %arg40[%c0_297, %c128_298], %390 {strides = array<i32>} : memref<8x768xf32, #tpu.memory_space<vmem>>, vector<8x4xf32>,
    %cst_299 = arith.constant 0.000000e+00 : f32
    %392 = vector.broadcast %cst_299 : f32 to vector<8x4xf32>
    %c0_300 = arith.constant 0 : index
    %c163_301 = arith.constant 163 : index
    %393 = vector.load %arg40[%c0_300, %c163_301] : memref<8x768xf32, #tpu.memory_space<vmem>>, vector<8x4xf32>
    tpu.vector_store %arg40[%c0_300, %c163_301], %392 {strides = array<i32>} : memref<8x768xf32, #tpu.memory_space<vmem>>, vector<8x4xf32>,
    %c0_302 = arith.constant 0 : index
    %c132 = arith.constant 132 : index
    %394 = vector.load %arg40[%c0_302, %c132] : memref<8x768xf32, #tpu.memory_space<vmem>>, vector<8x31xf32>
    tpu.vector_store %arg40[%c0_302, %c132], %389 {strides = array<i32>} : memref<8x768xf32, #tpu.memory_space<vmem>>, vector<8x31xf32>,
    %cst_303 = arith.constant 0.000000e+00 : f32
    %395 = vector.broadcast %cst_303 : f32 to vector<8x160xf32>
    %c0_304 = arith.constant 0 : index
    %c0_305 = arith.constant 0 : index
    %c0_306 = arith.constant 0 : index
    %396 = vector.load %arg20[%c0_304, %c0_305, %c0_306] : memref<8x8x8xf32, #tpu.memory_space<vmem>>, vector<1x8x8xf32>
    %397 = vector.shape_cast %396 : vector<1x8x8xf32> to vector<8x8xf32>
    %c0_307 = arith.constant 0 : index
    %c0_308 = arith.constant 0 : index
    %398 = vector.load %arg40[%c0_307, %c0_308] : memref<8x768xf32, #tpu.memory_space<vmem>>, vector<8x160xf32>
    %cst_309 = arith.constant dense<0.000000e+00> : vector<8x160xf32>
    %399 = tpu.matmul %397, %398, %cst_309 {dimension_numbers = #tpu.dot_dimension_numbers<[1], [0], [0], [1], [0, 0, 1, 1], [], []>} : vector<8x8xf32>, vector<8x160xf32>, vector<8x160xf32> -> vector<8x160xf32>
    %400 = arith.addf %395, %399 : vector<8x160xf32>
    %c1_310 = arith.constant 1 : index
    %c0_311 = arith.constant 0 : index
    %c0_312 = arith.constant 0 : index
    %401 = vector.load %arg20[%c1_310, %c0_311, %c0_312] : memref<8x8x8xf32, #tpu.memory_space<vmem>>, vector<1x8x8xf32>
    %402 = vector.shape_cast %401 : vector<1x8x8xf32> to vector<8x8xf32>
    %c0_313 = arith.constant 0 : index
    %c1_314 = arith.constant 1 : index
    %403 = vector.load %arg40[%c0_313, %c1_314] : memref<8x768xf32, #tpu.memory_space<vmem>>, vector<8x160xf32>
    %cst_315 = arith.constant dense<0.000000e+00> : vector<8x160xf32>
    %404 = tpu.matmul %402, %403, %cst_315 {dimension_numbers = #tpu.dot_dimension_numbers<[1], [0], [0], [1], [0, 0, 1, 1], [], []>} : vector<8x8xf32>, vector<8x160xf32>, vector<8x160xf32> -> vector<8x160xf32>
    %405 = arith.addf %400, %404 : vector<8x160xf32>
    %c2_316 = arith.constant 2 : index
    %c0_317 = arith.constant 0 : index
    %c0_318 = arith.constant 0 : index
    %406 = vector.load %arg20[%c2_316, %c0_317, %c0_318] : memref<8x8x8xf32, #tpu.memory_space<vmem>>, vector<1x8x8xf32>
    %407 = vector.shape_cast %406 : vector<1x8x8xf32> to vector<8x8xf32>
    %c0_319 = arith.constant 0 : index
    %c2_320 = arith.constant 2 : index
    %408 = vector.load %arg40[%c0_319, %c2_320] : memref<8x768xf32, #tpu.memory_space<vmem>>, vector<8x160xf32>
    %cst_321 = arith.constant dense<0.000000e+00> : vector<8x160xf32>
    %409 = tpu.matmul %407, %408, %cst_321 {dimension_numbers = #tpu.dot_dimension_numbers<[1], [0], [0], [1], [0, 0, 1, 1], [], []>} : vector<8x8xf32>, vector<8x160xf32>, vector<8x160xf32> -> vector<8x160xf32>
    %410 = arith.addf %405, %409 : vector<8x160xf32>
    %c3_322 = arith.constant 3 : index
    %c0_323 = arith.constant 0 : index
    %c0_324 = arith.constant 0 : index
    %411 = vector.load %arg20[%c3_322, %c0_323, %c0_324] : memref<8x8x8xf32, #tpu.memory_space<vmem>>, vector<1x8x8xf32>
    %412 = vector.shape_cast %411 : vector<1x8x8xf32> to vector<8x8xf32>
    %c0_325 = arith.constant 0 : index
    %c3_326 = arith.constant 3 : index
    %413 = vector.load %arg40[%c0_325, %c3_326] : memref<8x768xf32, #tpu.memory_space<vmem>>, vector<8x160xf32>
    %cst_327 = arith.constant dense<0.000000e+00> : vector<8x160xf32>
    %414 = tpu.matmul %412, %413, %cst_327 {dimension_numbers = #tpu.dot_dimension_numbers<[1], [0], [0], [1], [0, 0, 1, 1], [], []>} : vector<8x8xf32>, vector<8x160xf32>, vector<8x160xf32> -> vector<8x160xf32>
    %415 = arith.addf %410, %414 : vector<8x160xf32>
    %c4_328 = arith.constant 4 : index
    %c0_329 = arith.constant 0 : index
    %c0_330 = arith.constant 0 : index
    %416 = vector.load %arg20[%c4_328, %c0_329, %c0_330] : memref<8x8x8xf32, #tpu.memory_space<vmem>>, vector<1x8x8xf32>
    %417 = vector.shape_cast %416 : vector<1x8x8xf32> to vector<8x8xf32>
    %c0_331 = arith.constant 0 : index
    %c4_332 = arith.constant 4 : index
    %418 = vector.load %arg40[%c0_331, %c4_332] : memref<8x768xf32, #tpu.memory_space<vmem>>, vector<8x160xf32>
    %cst_333 = arith.constant dense<0.000000e+00> : vector<8x160xf32>
    %419 = tpu.matmul %417, %418, %cst_333 {dimension_numbers = #tpu.dot_dimension_numbers<[1], [0], [0], [1], [0, 0, 1, 1], [], []>} : vector<8x8xf32>, vector<8x160xf32>, vector<8x160xf32> -> vector<8x160xf32>
    %420 = arith.addf %415, %419 : vector<8x160xf32>
    %c5_334 = arith.constant 5 : index
    %c0_335 = arith.constant 0 : index
    %c0_336 = arith.constant 0 : index
    %421 = vector.load %arg20[%c5_334, %c0_335, %c0_336] : memref<8x8x8xf32, #tpu.memory_space<vmem>>, vector<1x8x8xf32>
    %422 = vector.shape_cast %421 : vector<1x8x8xf32> to vector<8x8xf32>
    %c0_337 = arith.constant 0 : index
    %c5_338 = arith.constant 5 : index
    %423 = vector.load %arg40[%c0_337, %c5_338] : memref<8x768xf32, #tpu.memory_space<vmem>>, vector<8x160xf32>
    %cst_339 = arith.constant dense<0.000000e+00> : vector<8x160xf32>
    %424 = tpu.matmul %422, %423, %cst_339 {dimension_numbers = #tpu.dot_dimension_numbers<[1], [0], [0], [1], [0, 0, 1, 1], [], []>} : vector<8x8xf32>, vector<8x160xf32>, vector<8x160xf32> -> vector<8x160xf32>
    %425 = arith.addf %420, %424 : vector<8x160xf32>
    %c6_340 = arith.constant 6 : index
    %c0_341 = arith.constant 0 : index
    %c0_342 = arith.constant 0 : index
    %426 = vector.load %arg20[%c6_340, %c0_341, %c0_342] : memref<8x8x8xf32, #tpu.memory_space<vmem>>, vector<1x8x8xf32>
    %427 = vector.shape_cast %426 : vector<1x8x8xf32> to vector<8x8xf32>
    %c0_343 = arith.constant 0 : index
    %c6_344 = arith.constant 6 : index
    %428 = vector.load %arg40[%c0_343, %c6_344] : memref<8x768xf32, #tpu.memory_space<vmem>>, vector<8x160xf32>
    %cst_345 = arith.constant dense<0.000000e+00> : vector<8x160xf32>
    %429 = tpu.matmul %427, %428, %cst_345 {dimension_numbers = #tpu.dot_dimension_numbers<[1], [0], [0], [1], [0, 0, 1, 1], [], []>} : vector<8x8xf32>, vector<8x160xf32>, vector<8x160xf32> -> vector<8x160xf32>
    %430 = arith.addf %425, %429 : vector<8x160xf32>
    %c7_346 = arith.constant 7 : index
    %c0_347 = arith.constant 0 : index
    %c0_348 = arith.constant 0 : index
    %431 = vector.load %arg20[%c7_346, %c0_347, %c0_348] : memref<8x8x8xf32, #tpu.memory_space<vmem>>, vector<1x8x8xf32>
    %432 = vector.shape_cast %431 : vector<1x8x8xf32> to vector<8x8xf32>
    %c0_349 = arith.constant 0 : index
    %c7_350 = arith.constant 7 : index
    %433 = vector.load %arg40[%c0_349, %c7_350] : memref<8x768xf32, #tpu.memory_space<vmem>>, vector<8x160xf32>
    %cst_351 = arith.constant dense<0.000000e+00> : vector<8x160xf32>
    %434 = tpu.matmul %432, %433, %cst_351 {dimension_numbers = #tpu.dot_dimension_numbers<[1], [0], [0], [1], [0, 0, 1, 1], [], []>} : vector<8x8xf32>, vector<8x160xf32>, vector<8x160xf32> -> vector<8x160xf32>
    %435 = arith.addf %430, %434 : vector<8x160xf32>
    %c0_352 = arith.constant 0 : index
    %c0_353 = arith.constant 0 : index
    %436 = vector.load %arg21[%c0_352, %c0_353] : memref<8x1xf32, #tpu.memory_space<vmem>>, vector<8x1xf32>
    %437 = vector.extract_strided_slice %435 {offsets = [0, 0], sizes = [8, 32], strides = [1, 1]} : vector<8x160xf32> to vector<8x32xf32>
    %438 = vector.broadcast %436 : vector<8x1xf32> to vector<8x32xf32>
    %439 = arith.addf %437, %438 : vector<8x32xf32>
    %cst_354 = arith.constant 0.000000e+00 : f32
    %440 = vector.broadcast %cst_354 : f32 to vector<8x32xf32>
    %441 = arith.cmpf ogt, %439, %440 : vector<8x32xf32>
    %cst_355 = arith.constant 0.00999999977 : f32
    %442 = vector.broadcast %cst_355 : f32 to vector<8x32xf32>
    %443 = arith.mulf %442, %439 : vector<8x32xf32>
    %444 = arith.select %441, %439, %443 : vector<8x32xi1>, vector<8x32xf32>
    %445 = vector.extract_strided_slice %435 {offsets = [0, 128], sizes = [8, 32], strides = [1, 1]} : vector<8x160xf32> to vector<8x32xf32>
    %446 = vector.broadcast %436 : vector<8x1xf32> to vector<8x32xf32>
    %447 = arith.addf %445, %446 : vector<8x32xf32>
    %cst_356 = arith.constant 0.000000e+00 : f32
    %448 = vector.broadcast %cst_356 : f32 to vector<8x32xf32>
    %449 = arith.cmpf ogt, %447, %448 : vector<8x32xf32>
    %cst_357 = arith.constant 0.00999999977 : f32
    %450 = vector.broadcast %cst_357 : f32 to vector<8x32xf32>
    %451 = arith.mulf %450, %447 : vector<8x32xf32>
    %452 = arith.select %449, %447, %451 : vector<8x32xi1>, vector<8x32xf32>
    %c0_358 = arith.constant 0 : index
    %c0_359 = arith.constant 0 : index
    %453 = vector.load %arg22[%c0_358, %c0_359] : memref<8x1xf32, #tpu.memory_space<vmem>>, vector<8x1xf32>
    %c0_360 = arith.constant 0 : index
    %c0_361 = arith.constant 0 : index
    %454 = vector.load %arg23[%c0_360, %c0_361] : memref<8x1xf32, #tpu.memory_space<vmem>>, vector<8x1xf32>
    %cst_362 = arith.constant dense<0.000000e+00> : vector<8xf32>
    %455 = vector.multi_reduction <add>, %444, %cst_362 [1] : vector<8x32xf32> to vector<8xf32>
    %456 = vector.shape_cast %455 : vector<8xf32> to vector<8x1xf32>
    %457 = arith.mulf %444, %444 : vector<8x32xf32>
    %cst_363 = arith.constant dense<0.000000e+00> : vector<8xf32>
    %458 = vector.multi_reduction <add>, %457, %cst_363 [1] : vector<8x32xf32> to vector<8xf32>
    %459 = vector.shape_cast %458 : vector<8xf32> to vector<8x1xf32>
    %cst_364 = arith.constant dense<0.000000e+00> : vector<8xf32>
    %460 = vector.multi_reduction <add>, %452, %cst_364 [1] : vector<8x32xf32> to vector<8xf32>
    %461 = vector.shape_cast %460 : vector<8xf32> to vector<8x1xf32>
    %462 = arith.addf %456, %461 : vector<8x1xf32>
    %463 = arith.mulf %452, %452 : vector<8x32xf32>
    %cst_365 = arith.constant dense<0.000000e+00> : vector<8xf32>
    %464 = vector.multi_reduction <add>, %463, %cst_365 [1] : vector<8x32xf32> to vector<8xf32>
    %465 = vector.shape_cast %464 : vector<8xf32> to vector<8x1xf32>
    %466 = arith.addf %459, %465 : vector<8x1xf32>
    %cst_366 = arith.constant 1.562500e-02 : f32
    %467 = vector.broadcast %cst_366 : f32 to vector<8x1xf32>
    %468 = arith.mulf %462, %467 : vector<8x1xf32>
    %cst_367 = arith.constant 1.562500e-02 : f32
    %469 = vector.broadcast %cst_367 : f32 to vector<8x1xf32>
    %470 = arith.mulf %466, %469 : vector<8x1xf32>
    %471 = arith.mulf %468, %468 : vector<8x1xf32>
    %472 = arith.subf %470, %471 : vector<8x1xf32>
    %cst_368 = arith.constant 0.000000e+00 : f32
    %473 = vector.broadcast %cst_368 : f32 to vector<8x1xf32>
    %474 = arith.maximumf %472, %473 : vector<8x1xf32>
    %cst_369 = arith.constant 9.99999974E-6 : f32
    %475 = vector.broadcast %cst_369 : f32 to vector<8x1xf32>
    %476 = arith.addf %474, %475 : vector<8x1xf32>
    %477 = math.rsqrt %476 : vector<8x1xf32>
    %478 = arith.mulf %453, %477 : vector<8x1xf32>
    %479 = arith.mulf %468, %478 : vector<8x1xf32>
    %480 = arith.subf %454, %479 : vector<8x1xf32>
    %481 = vector.broadcast %478 : vector<8x1xf32> to vector<8x32xf32>
    %482 = arith.mulf %444, %481 : vector<8x32xf32>
    %483 = vector.broadcast %480 : vector<8x1xf32> to vector<8x32xf32>
    %484 = arith.addf %482, %483 : vector<8x32xf32>
    %485 = vector.broadcast %478 : vector<8x1xf32> to vector<8x32xf32>
    %486 = arith.mulf %452, %485 : vector<8x32xf32>
    %487 = vector.broadcast %480 : vector<8x1xf32> to vector<8x32xf32>
    %488 = arith.addf %486, %487 : vector<8x32xf32>
    %c0_370 = arith.constant 0 : index
    %c0_371 = arith.constant 0 : index
    %489 = vector.load %arg29[%c0_370, %c0_371] : memref<32x63xf32, #tpu.memory_space<vmem>>, vector<32x63xf32>
    %cst_372 = arith.constant dense<0.000000e+00> : vector<8x63xf32>
    %490 = tpu.matmul %484, %489, %cst_372 {dimension_numbers = #tpu.dot_dimension_numbers<[1], [0], [0], [1], [0, 0, 1, 1], [], []>} : vector<8x32xf32>, vector<32x63xf32>, vector<8x63xf32> -> vector<8x63xf32>
    %cst_373 = arith.constant 0.000000e+00 : f32
    %491 = vector.broadcast %cst_373 : f32 to vector<8x4xf32>
    %c0_374 = arith.constant 0 : index
    %c0_375 = arith.constant 0 : index
    %492 = vector.load %arg40[%c0_374, %c0_375] : memref<8x768xf32, #tpu.memory_space<vmem>>, vector<8x4xf32>
    tpu.vector_store %arg40[%c0_374, %c0_375], %491 {strides = array<i32>} : memref<8x768xf32, #tpu.memory_space<vmem>>, vector<8x4xf32>,
    %cst_376 = arith.constant 0.000000e+00 : f32
    %493 = vector.broadcast %cst_376 : f32 to vector<8x4xf32>
    %c0_377 = arith.constant 0 : index
    %c67_378 = arith.constant 67 : index
    %494 = vector.load %arg40[%c0_377, %c67_378] : memref<8x768xf32, #tpu.memory_space<vmem>>, vector<8x4xf32>
    tpu.vector_store %arg40[%c0_377, %c67_378], %493 {strides = array<i32>} : memref<8x768xf32, #tpu.memory_space<vmem>>, vector<8x4xf32>,
    %c0_379 = arith.constant 0 : index
    %c4_380 = arith.constant 4 : index
    %495 = vector.load %arg40[%c0_379, %c4_380] : memref<8x768xf32, #tpu.memory_space<vmem>>, vector<8x63xf32>
    tpu.vector_store %arg40[%c0_379, %c4_380], %490 {strides = array<i32>} : memref<8x768xf32, #tpu.memory_space<vmem>>, vector<8x63xf32>,
    %c0_381 = arith.constant 0 : index
    %c0_382 = arith.constant 0 : index
    %496 = vector.load %arg29[%c0_381, %c0_382] : memref<32x63xf32, #tpu.memory_space<vmem>>, vector<32x63xf32>
    %cst_383 = arith.constant dense<0.000000e+00> : vector<8x63xf32>
    %497 = tpu.matmul %488, %496, %cst_383 {dimension_numbers = #tpu.dot_dimension_numbers<[1], [0], [0], [1], [0, 0, 1, 1], [], []>} : vector<8x32xf32>, vector<32x63xf32>, vector<8x63xf32> -> vector<8x63xf32>
    %cst_384 = arith.constant 0.000000e+00 : f32
    %498 = vector.broadcast %cst_384 : f32 to vector<8x4xf32>
    %c0_385 = arith.constant 0 : index
    %c128_386 = arith.constant 128 : index
    %499 = vector.load %arg40[%c0_385, %c128_386] : memref<8x768xf32, #tpu.memory_space<vmem>>, vector<8x4xf32>
    tpu.vector_store %arg40[%c0_385, %c128_386], %498 {strides = array<i32>} : memref<8x768xf32, #tpu.memory_space<vmem>>, vector<8x4xf32>,
    %cst_387 = arith.constant 0.000000e+00 : f32
    %500 = vector.broadcast %cst_387 : f32 to vector<8x4xf32>
    %c0_388 = arith.constant 0 : index
    %c195_389 = arith.constant 195 : index
    %501 = vector.load %arg40[%c0_388, %c195_389] : memref<8x768xf32, #tpu.memory_space<vmem>>, vector<8x4xf32>
    tpu.vector_store %arg40[%c0_388, %c195_389], %500 {strides = array<i32>} : memref<8x768xf32, #tpu.memory_space<vmem>>, vector<8x4xf32>,
    %c0_390 = arith.constant 0 : index
    %c132_391 = arith.constant 132 : index
    %502 = vector.load %arg40[%c0_390, %c132_391] : memref<8x768xf32, #tpu.memory_space<vmem>>, vector<8x63xf32>
    tpu.vector_store %arg40[%c0_390, %c132_391], %497 {strides = array<i32>} : memref<8x768xf32, #tpu.memory_space<vmem>>, vector<8x63xf32>,
    %cst_392 = arith.constant 0.000000e+00 : f32
    %503 = vector.broadcast %cst_392 : f32 to vector<8x192xf32>
    %c0_393 = arith.constant 0 : index
    %c0_394 = arith.constant 0 : index
    %c0_395 = arith.constant 0 : index
    %504 = vector.load %arg25[%c0_393, %c0_394, %c0_395] : memref<8x8x8xf32, #tpu.memory_space<vmem>>, vector<1x8x8xf32>
    %505 = vector.shape_cast %504 : vector<1x8x8xf32> to vector<8x8xf32>
    %c0_396 = arith.constant 0 : index
    %c0_397 = arith.constant 0 : index
    %506 = vector.load %arg40[%c0_396, %c0_397] : memref<8x768xf32, #tpu.memory_space<vmem>>, vector<8x192xf32>
    %cst_398 = arith.constant dense<0.000000e+00> : vector<8x192xf32>
    %507 = tpu.matmul %505, %506, %cst_398 {dimension_numbers = #tpu.dot_dimension_numbers<[1], [0], [0], [1], [0, 0, 1, 1], [], []>} : vector<8x8xf32>, vector<8x192xf32>, vector<8x192xf32> -> vector<8x192xf32>
    %508 = arith.addf %503, %507 : vector<8x192xf32>
    %c1_399 = arith.constant 1 : index
    %c0_400 = arith.constant 0 : index
    %c0_401 = arith.constant 0 : index
    %509 = vector.load %arg25[%c1_399, %c0_400, %c0_401] : memref<8x8x8xf32, #tpu.memory_space<vmem>>, vector<1x8x8xf32>
    %510 = vector.shape_cast %509 : vector<1x8x8xf32> to vector<8x8xf32>
    %c0_402 = arith.constant 0 : index
    %c1_403 = arith.constant 1 : index
    %511 = vector.load %arg40[%c0_402, %c1_403] : memref<8x768xf32, #tpu.memory_space<vmem>>, vector<8x192xf32>
    %cst_404 = arith.constant dense<0.000000e+00> : vector<8x192xf32>
    %512 = tpu.matmul %510, %511, %cst_404 {dimension_numbers = #tpu.dot_dimension_numbers<[1], [0], [0], [1], [0, 0, 1, 1], [], []>} : vector<8x8xf32>, vector<8x192xf32>, vector<8x192xf32> -> vector<8x192xf32>
    %513 = arith.addf %508, %512 : vector<8x192xf32>
    %c2_405 = arith.constant 2 : index
    %c0_406 = arith.constant 0 : index
    %c0_407 = arith.constant 0 : index
    %514 = vector.load %arg25[%c2_405, %c0_406, %c0_407] : memref<8x8x8xf32, #tpu.memory_space<vmem>>, vector<1x8x8xf32>
    %515 = vector.shape_cast %514 : vector<1x8x8xf32> to vector<8x8xf32>
    %c0_408 = arith.constant 0 : index
    %c2_409 = arith.constant 2 : index
    %516 = vector.load %arg40[%c0_408, %c2_409] : memref<8x768xf32, #tpu.memory_space<vmem>>, vector<8x192xf32>
    %cst_410 = arith.constant dense<0.000000e+00> : vector<8x192xf32>
    %517 = tpu.matmul %515, %516, %cst_410 {dimension_numbers = #tpu.dot_dimension_numbers<[1], [0], [0], [1], [0, 0, 1, 1], [], []>} : vector<8x8xf32>, vector<8x192xf32>, vector<8x192xf32> -> vector<8x192xf32>
    %518 = arith.addf %513, %517 : vector<8x192xf32>
    %c3_411 = arith.constant 3 : index
    %c0_412 = arith.constant 0 : index
    %c0_413 = arith.constant 0 : index
    %519 = vector.load %arg25[%c3_411, %c0_412, %c0_413] : memref<8x8x8xf32, #tpu.memory_space<vmem>>, vector<1x8x8xf32>
    %520 = vector.shape_cast %519 : vector<1x8x8xf32> to vector<8x8xf32>
    %c0_414 = arith.constant 0 : index
    %c3_415 = arith.constant 3 : index
    %521 = vector.load %arg40[%c0_414, %c3_415] : memref<8x768xf32, #tpu.memory_space<vmem>>, vector<8x192xf32>
    %cst_416 = arith.constant dense<0.000000e+00> : vector<8x192xf32>
    %522 = tpu.matmul %520, %521, %cst_416 {dimension_numbers = #tpu.dot_dimension_numbers<[1], [0], [0], [1], [0, 0, 1, 1], [], []>} : vector<8x8xf32>, vector<8x192xf32>, vector<8x192xf32> -> vector<8x192xf32>
    %523 = arith.addf %518, %522 : vector<8x192xf32>
    %c4_417 = arith.constant 4 : index
    %c0_418 = arith.constant 0 : index
    %c0_419 = arith.constant 0 : index
    %524 = vector.load %arg25[%c4_417, %c0_418, %c0_419] : memref<8x8x8xf32, #tpu.memory_space<vmem>>, vector<1x8x8xf32>
    %525 = vector.shape_cast %524 : vector<1x8x8xf32> to vector<8x8xf32>
    %c0_420 = arith.constant 0 : index
    %c4_421 = arith.constant 4 : index
    %526 = vector.load %arg40[%c0_420, %c4_421] : memref<8x768xf32, #tpu.memory_space<vmem>>, vector<8x192xf32>
    %cst_422 = arith.constant dense<0.000000e+00> : vector<8x192xf32>
    %527 = tpu.matmul %525, %526, %cst_422 {dimension_numbers = #tpu.dot_dimension_numbers<[1], [0], [0], [1], [0, 0, 1, 1], [], []>} : vector<8x8xf32>, vector<8x192xf32>, vector<8x192xf32> -> vector<8x192xf32>
    %528 = arith.addf %523, %527 : vector<8x192xf32>
    %c5_423 = arith.constant 5 : index
    %c0_424 = arith.constant 0 : index
    %c0_425 = arith.constant 0 : index
    %529 = vector.load %arg25[%c5_423, %c0_424, %c0_425] : memref<8x8x8xf32, #tpu.memory_space<vmem>>, vector<1x8x8xf32>
    %530 = vector.shape_cast %529 : vector<1x8x8xf32> to vector<8x8xf32>
    %c0_426 = arith.constant 0 : index
    %c5_427 = arith.constant 5 : index
    %531 = vector.load %arg40[%c0_426, %c5_427] : memref<8x768xf32, #tpu.memory_space<vmem>>, vector<8x192xf32>
    %cst_428 = arith.constant dense<0.000000e+00> : vector<8x192xf32>
    %532 = tpu.matmul %530, %531, %cst_428 {dimension_numbers = #tpu.dot_dimension_numbers<[1], [0], [0], [1], [0, 0, 1, 1], [], []>} : vector<8x8xf32>, vector<8x192xf32>, vector<8x192xf32> -> vector<8x192xf32>
    %533 = arith.addf %528, %532 : vector<8x192xf32>
    %c6_429 = arith.constant 6 : index
    %c0_430 = arith.constant 0 : index
    %c0_431 = arith.constant 0 : index
    %534 = vector.load %arg25[%c6_429, %c0_430, %c0_431] : memref<8x8x8xf32, #tpu.memory_space<vmem>>, vector<1x8x8xf32>
    %535 = vector.shape_cast %534 : vector<1x8x8xf32> to vector<8x8xf32>
    %c0_432 = arith.constant 0 : index
    %c6_433 = arith.constant 6 : index
    %536 = vector.load %arg40[%c0_432, %c6_433] : memref<8x768xf32, #tpu.memory_space<vmem>>, vector<8x192xf32>
    %cst_434 = arith.constant dense<0.000000e+00> : vector<8x192xf32>
    %537 = tpu.matmul %535, %536, %cst_434 {dimension_numbers = #tpu.dot_dimension_numbers<[1], [0], [0], [1], [0, 0, 1, 1], [], []>} : vector<8x8xf32>, vector<8x192xf32>, vector<8x192xf32> -> vector<8x192xf32>
    %538 = arith.addf %533, %537 : vector<8x192xf32>
    %c7_435 = arith.constant 7 : index
    %c0_436 = arith.constant 0 : index
    %c0_437 = arith.constant 0 : index
    %539 = vector.load %arg25[%c7_435, %c0_436, %c0_437] : memref<8x8x8xf32, #tpu.memory_space<vmem>>, vector<1x8x8xf32>
    %540 = vector.shape_cast %539 : vector<1x8x8xf32> to vector<8x8xf32>
    %c0_438 = arith.constant 0 : index
    %c7_439 = arith.constant 7 : index
    %541 = vector.load %arg40[%c0_438, %c7_439] : memref<8x768xf32, #tpu.memory_space<vmem>>, vector<8x192xf32>
    %cst_440 = arith.constant dense<0.000000e+00> : vector<8x192xf32>
    %542 = tpu.matmul %540, %541, %cst_440 {dimension_numbers = #tpu.dot_dimension_numbers<[1], [0], [0], [1], [0, 0, 1, 1], [], []>} : vector<8x8xf32>, vector<8x192xf32>, vector<8x192xf32> -> vector<8x192xf32>
    %543 = arith.addf %538, %542 : vector<8x192xf32>
    %c0_441 = arith.constant 0 : index
    %c0_442 = arith.constant 0 : index
    %544 = vector.load %arg26[%c0_441, %c0_442] : memref<8x1xf32, #tpu.memory_space<vmem>>, vector<8x1xf32>
    %545 = vector.extract_strided_slice %543 {offsets = [0, 0], sizes = [8, 64], strides = [1, 1]} : vector<8x192xf32> to vector<8x64xf32>
    %546 = vector.broadcast %544 : vector<8x1xf32> to vector<8x64xf32>
    %547 = arith.addf %545, %546 : vector<8x64xf32>
    %cst_443 = arith.constant 0.000000e+00 : f32
    %548 = vector.broadcast %cst_443 : f32 to vector<8x64xf32>
    %549 = arith.cmpf ogt, %547, %548 : vector<8x64xf32>
    %cst_444 = arith.constant 0.00999999977 : f32
    %550 = vector.broadcast %cst_444 : f32 to vector<8x64xf32>
    %551 = arith.mulf %550, %547 : vector<8x64xf32>
    %552 = arith.select %549, %547, %551 : vector<8x64xi1>, vector<8x64xf32>
    %553 = vector.extract_strided_slice %543 {offsets = [0, 128], sizes = [8, 64], strides = [1, 1]} : vector<8x192xf32> to vector<8x64xf32>
    %554 = vector.broadcast %544 : vector<8x1xf32> to vector<8x64xf32>
    %555 = arith.addf %553, %554 : vector<8x64xf32>
    %cst_445 = arith.constant 0.000000e+00 : f32
    %556 = vector.broadcast %cst_445 : f32 to vector<8x64xf32>
    %557 = arith.cmpf ogt, %555, %556 : vector<8x64xf32>
    %cst_446 = arith.constant 0.00999999977 : f32
    %558 = vector.broadcast %cst_446 : f32 to vector<8x64xf32>
    %559 = arith.mulf %558, %555 : vector<8x64xf32>
    %560 = arith.select %557, %555, %559 : vector<8x64xi1>, vector<8x64xf32>
    %c0_447 = arith.constant 0 : index
    %c0_448 = arith.constant 0 : index
    %561 = vector.load %arg27[%c0_447, %c0_448] : memref<8x1xf32, #tpu.memory_space<vmem>>, vector<8x1xf32>
    %c0_449 = arith.constant 0 : index
    %c0_450 = arith.constant 0 : index
    %562 = vector.load %arg28[%c0_449, %c0_450] : memref<8x1xf32, #tpu.memory_space<vmem>>, vector<8x1xf32>
    %cst_451 = arith.constant dense<0.000000e+00> : vector<8xf32>
    %563 = vector.multi_reduction <add>, %552, %cst_451 [1] : vector<8x64xf32> to vector<8xf32>
    %564 = vector.shape_cast %563 : vector<8xf32> to vector<8x1xf32>
    %565 = arith.mulf %552, %552 : vector<8x64xf32>
    %cst_452 = arith.constant dense<0.000000e+00> : vector<8xf32>
    %566 = vector.multi_reduction <add>, %565, %cst_452 [1] : vector<8x64xf32> to vector<8xf32>
    %567 = vector.shape_cast %566 : vector<8xf32> to vector<8x1xf32>
    %cst_453 = arith.constant dense<0.000000e+00> : vector<8xf32>
    %568 = vector.multi_reduction <add>, %560, %cst_453 [1] : vector<8x64xf32> to vector<8xf32>
    %569 = vector.shape_cast %568 : vector<8xf32> to vector<8x1xf32>
    %570 = arith.addf %564, %569 : vector<8x1xf32>
    %571 = arith.mulf %560, %560 : vector<8x64xf32>
    %cst_454 = arith.constant dense<0.000000e+00> : vector<8xf32>
    %572 = vector.multi_reduction <add>, %571, %cst_454 [1] : vector<8x64xf32> to vector<8xf32>
    %573 = vector.shape_cast %572 : vector<8xf32> to vector<8x1xf32>
    %574 = arith.addf %567, %573 : vector<8x1xf32>
    %cst_455 = arith.constant 7.812500e-03 : f32
    %575 = vector.broadcast %cst_455 : f32 to vector<8x1xf32>
    %576 = arith.mulf %570, %575 : vector<8x1xf32>
    %cst_456 = arith.constant 7.812500e-03 : f32
    %577 = vector.broadcast %cst_456 : f32 to vector<8x1xf32>
    %578 = arith.mulf %574, %577 : vector<8x1xf32>
    %579 = arith.mulf %576, %576 : vector<8x1xf32>
    %580 = arith.subf %578, %579 : vector<8x1xf32>
    %cst_457 = arith.constant 0.000000e+00 : f32
    %581 = vector.broadcast %cst_457 : f32 to vector<8x1xf32>
    %582 = arith.maximumf %580, %581 : vector<8x1xf32>
    %cst_458 = arith.constant 9.99999974E-6 : f32
    %583 = vector.broadcast %cst_458 : f32 to vector<8x1xf32>
    %584 = arith.addf %582, %583 : vector<8x1xf32>
    %585 = math.rsqrt %584 : vector<8x1xf32>
    %586 = arith.mulf %561, %585 : vector<8x1xf32>
    %587 = arith.mulf %576, %586 : vector<8x1xf32>
    %588 = arith.subf %562, %587 : vector<8x1xf32>
    %589 = vector.broadcast %586 : vector<8x1xf32> to vector<8x64xf32>
    %590 = arith.mulf %552, %589 : vector<8x64xf32>
    %591 = vector.broadcast %588 : vector<8x1xf32> to vector<8x64xf32>
    %592 = arith.addf %590, %591 : vector<8x64xf32>
    %593 = vector.broadcast %586 : vector<8x1xf32> to vector<8x64xf32>
    %594 = arith.mulf %560, %593 : vector<8x64xf32>
    %595 = vector.broadcast %588 : vector<8x1xf32> to vector<8x64xf32>
    %596 = arith.addf %594, %595 : vector<8x64xf32>
    %c0_459 = arith.constant 0 : index
    %c0_460 = arith.constant 0 : index
    %597 = vector.load %arg34[%c0_459, %c0_460] : memref<64x253xf32, #tpu.memory_space<vmem>>, vector<64x253xf32>
    %cst_461 = arith.constant dense<0.000000e+00> : vector<8x253xf32>
    %598 = tpu.matmul %592, %597, %cst_461 {dimension_numbers = #tpu.dot_dimension_numbers<[1], [0], [0], [1], [0, 0, 1, 1], [], []>} : vector<8x64xf32>, vector<64x253xf32>, vector<8x253xf32> -> vector<8x253xf32>
    %cst_462 = arith.constant 0.000000e+00 : f32
    %599 = vector.broadcast %cst_462 : f32 to vector<8x5xf32>
    %c0_463 = arith.constant 0 : index
    %c0_464 = arith.constant 0 : index
    %600 = vector.load %arg40[%c0_463, %c0_464] : memref<8x768xf32, #tpu.memory_space<vmem>>, vector<8x5xf32>
    tpu.vector_store %arg40[%c0_463, %c0_464], %599 {strides = array<i32>} : memref<8x768xf32, #tpu.memory_space<vmem>>, vector<8x5xf32>,
    %cst_465 = arith.constant 0.000000e+00 : f32
    %601 = vector.broadcast %cst_465 : f32 to vector<8x5xf32>
    %c0_466 = arith.constant 0 : index
    %c258_467 = arith.constant 258 : index
    %602 = vector.load %arg40[%c0_466, %c258_467] : memref<8x768xf32, #tpu.memory_space<vmem>>, vector<8x5xf32>
    tpu.vector_store %arg40[%c0_466, %c258_467], %601 {strides = array<i32>} : memref<8x768xf32, #tpu.memory_space<vmem>>, vector<8x5xf32>,
    %c0_468 = arith.constant 0 : index
    %c5_469 = arith.constant 5 : index
    %603 = vector.load %arg40[%c0_468, %c5_469] : memref<8x768xf32, #tpu.memory_space<vmem>>, vector<8x253xf32>
    tpu.vector_store %arg40[%c0_468, %c5_469], %598 {strides = array<i32>} : memref<8x768xf32, #tpu.memory_space<vmem>>, vector<8x253xf32>,
    %c0_470 = arith.constant 0 : index
    %c0_471 = arith.constant 0 : index
    %604 = vector.load %arg34[%c0_470, %c0_471] : memref<64x253xf32, #tpu.memory_space<vmem>>, vector<64x253xf32>
    %cst_472 = arith.constant dense<0.000000e+00> : vector<8x253xf32>
    %605 = tpu.matmul %596, %604, %cst_472 {dimension_numbers = #tpu.dot_dimension_numbers<[1], [0], [0], [1], [0, 0, 1, 1], [], []>} : vector<8x64xf32>, vector<64x253xf32>, vector<8x253xf32> -> vector<8x253xf32>
    %cst_473 = arith.constant 0.000000e+00 : f32
    %606 = vector.broadcast %cst_473 : f32 to vector<8x5xf32>
    %c0_474 = arith.constant 0 : index
    %c384_475 = arith.constant 384 : index
    %607 = vector.load %arg40[%c0_474, %c384_475] : memref<8x768xf32, #tpu.memory_space<vmem>>, vector<8x5xf32>
    tpu.vector_store %arg40[%c0_474, %c384_475], %606 {strides = array<i32>} : memref<8x768xf32, #tpu.memory_space<vmem>>, vector<8x5xf32>,
    %cst_476 = arith.constant 0.000000e+00 : f32
    %608 = vector.broadcast %cst_476 : f32 to vector<8x5xf32>
    %c0_477 = arith.constant 0 : index
    %c642_478 = arith.constant 642 : index
    %609 = vector.load %arg40[%c0_477, %c642_478] : memref<8x768xf32, #tpu.memory_space<vmem>>, vector<8x5xf32>
    tpu.vector_store %arg40[%c0_477, %c642_478], %608 {strides = array<i32>} : memref<8x768xf32, #tpu.memory_space<vmem>>, vector<8x5xf32>,
    %c0_479 = arith.constant 0 : index
    %c389 = arith.constant 389 : index
    %610 = vector.load %arg40[%c0_479, %c389] : memref<8x768xf32, #tpu.memory_space<vmem>>, vector<8x253xf32>
    tpu.vector_store %arg40[%c0_479, %c389], %605 {strides = array<i32>} : memref<8x768xf32, #tpu.memory_space<vmem>>, vector<8x253xf32>,
    %cst_480 = arith.constant 0.000000e+00 : f32
    %611 = vector.broadcast %cst_480 : f32 to vector<8x640xf32>
    %c0_481 = arith.constant 0 : index
    %c0_482 = arith.constant 0 : index
    %c0_483 = arith.constant 0 : index
    %612 = vector.load %arg30[%c0_481, %c0_482, %c0_483] : memref<8x8x8xf32, #tpu.memory_space<vmem>>, vector<1x8x8xf32>
    %613 = vector.shape_cast %612 : vector<1x8x8xf32> to vector<8x8xf32>
    %c0_484 = arith.constant 0 : index
    %c0_485 = arith.constant 0 : index
    %614 = vector.load %arg40[%c0_484, %c0_485] : memref<8x768xf32, #tpu.memory_space<vmem>>, vector<8x640xf32>
    %cst_486 = arith.constant dense<0.000000e+00> : vector<8x640xf32>
    %615 = tpu.matmul %613, %614, %cst_486 {dimension_numbers = #tpu.dot_dimension_numbers<[1], [0], [0], [1], [0, 0, 1, 1], [], []>} : vector<8x8xf32>, vector<8x640xf32>, vector<8x640xf32> -> vector<8x640xf32>
    %616 = arith.addf %611, %615 : vector<8x640xf32>
    %c1_487 = arith.constant 1 : index
    %c0_488 = arith.constant 0 : index
    %c0_489 = arith.constant 0 : index
    %617 = vector.load %arg30[%c1_487, %c0_488, %c0_489] : memref<8x8x8xf32, #tpu.memory_space<vmem>>, vector<1x8x8xf32>
    %618 = vector.shape_cast %617 : vector<1x8x8xf32> to vector<8x8xf32>
    %c0_490 = arith.constant 0 : index
    %c1_491 = arith.constant 1 : index
    %619 = vector.load %arg40[%c0_490, %c1_491] : memref<8x768xf32, #tpu.memory_space<vmem>>, vector<8x640xf32>
    %cst_492 = arith.constant dense<0.000000e+00> : vector<8x640xf32>
    %620 = tpu.matmul %618, %619, %cst_492 {dimension_numbers = #tpu.dot_dimension_numbers<[1], [0], [0], [1], [0, 0, 1, 1], [], []>} : vector<8x8xf32>, vector<8x640xf32>, vector<8x640xf32> -> vector<8x640xf32>
    %621 = arith.addf %616, %620 : vector<8x640xf32>
    %c2_493 = arith.constant 2 : index
    %c0_494 = arith.constant 0 : index
    %c0_495 = arith.constant 0 : index
    %622 = vector.load %arg30[%c2_493, %c0_494, %c0_495] : memref<8x8x8xf32, #tpu.memory_space<vmem>>, vector<1x8x8xf32>
    %623 = vector.shape_cast %622 : vector<1x8x8xf32> to vector<8x8xf32>
    %c0_496 = arith.constant 0 : index
    %c2_497 = arith.constant 2 : index
    %624 = vector.load %arg40[%c0_496, %c2_497] : memref<8x768xf32, #tpu.memory_space<vmem>>, vector<8x640xf32>
    %cst_498 = arith.constant dense<0.000000e+00> : vector<8x640xf32>
    %625 = tpu.matmul %623, %624, %cst_498 {dimension_numbers = #tpu.dot_dimension_numbers<[1], [0], [0], [1], [0, 0, 1, 1], [], []>} : vector<8x8xf32>, vector<8x640xf32>, vector<8x640xf32> -> vector<8x640xf32>
    %626 = arith.addf %621, %625 : vector<8x640xf32>
    %c3_499 = arith.constant 3 : index
    %c0_500 = arith.constant 0 : index
    %c0_501 = arith.constant 0 : index
    %627 = vector.load %arg30[%c3_499, %c0_500, %c0_501] : memref<8x8x8xf32, #tpu.memory_space<vmem>>, vector<1x8x8xf32>
    %628 = vector.shape_cast %627 : vector<1x8x8xf32> to vector<8x8xf32>
    %c0_502 = arith.constant 0 : index
    %c3_503 = arith.constant 3 : index
    %629 = vector.load %arg40[%c0_502, %c3_503] : memref<8x768xf32, #tpu.memory_space<vmem>>, vector<8x640xf32>
    %cst_504 = arith.constant dense<0.000000e+00> : vector<8x640xf32>
    %630 = tpu.matmul %628, %629, %cst_504 {dimension_numbers = #tpu.dot_dimension_numbers<[1], [0], [0], [1], [0, 0, 1, 1], [], []>} : vector<8x8xf32>, vector<8x640xf32>, vector<8x640xf32> -> vector<8x640xf32>
    %631 = arith.addf %626, %630 : vector<8x640xf32>
    %c4_505 = arith.constant 4 : index
    %c0_506 = arith.constant 0 : index
    %c0_507 = arith.constant 0 : index
    %632 = vector.load %arg30[%c4_505, %c0_506, %c0_507] : memref<8x8x8xf32, #tpu.memory_space<vmem>>, vector<1x8x8xf32>
    %633 = vector.shape_cast %632 : vector<1x8x8xf32> to vector<8x8xf32>
    %c0_508 = arith.constant 0 : index
    %c4_509 = arith.constant 4 : index
    %634 = vector.load %arg40[%c0_508, %c4_509] : memref<8x768xf32, #tpu.memory_space<vmem>>, vector<8x640xf32>
    %cst_510 = arith.constant dense<0.000000e+00> : vector<8x640xf32>
    %635 = tpu.matmul %633, %634, %cst_510 {dimension_numbers = #tpu.dot_dimension_numbers<[1], [0], [0], [1], [0, 0, 1, 1], [], []>} : vector<8x8xf32>, vector<8x640xf32>, vector<8x640xf32> -> vector<8x640xf32>
    %636 = arith.addf %631, %635 : vector<8x640xf32>
    %c5_511 = arith.constant 5 : index
    %c0_512 = arith.constant 0 : index
    %c0_513 = arith.constant 0 : index
    %637 = vector.load %arg30[%c5_511, %c0_512, %c0_513] : memref<8x8x8xf32, #tpu.memory_space<vmem>>, vector<1x8x8xf32>
    %638 = vector.shape_cast %637 : vector<1x8x8xf32> to vector<8x8xf32>
    %c0_514 = arith.constant 0 : index
    %c5_515 = arith.constant 5 : index
    %639 = vector.load %arg40[%c0_514, %c5_515] : memref<8x768xf32, #tpu.memory_space<vmem>>, vector<8x640xf32>
    %cst_516 = arith.constant dense<0.000000e+00> : vector<8x640xf32>
    %640 = tpu.matmul %638, %639, %cst_516 {dimension_numbers = #tpu.dot_dimension_numbers<[1], [0], [0], [1], [0, 0, 1, 1], [], []>} : vector<8x8xf32>, vector<8x640xf32>, vector<8x640xf32> -> vector<8x640xf32>
    %641 = arith.addf %636, %640 : vector<8x640xf32>
    %c6_517 = arith.constant 6 : index
    %c0_518 = arith.constant 0 : index
    %c0_519 = arith.constant 0 : index
    %642 = vector.load %arg30[%c6_517, %c0_518, %c0_519] : memref<8x8x8xf32, #tpu.memory_space<vmem>>, vector<1x8x8xf32>
    %643 = vector.shape_cast %642 : vector<1x8x8xf32> to vector<8x8xf32>
    %c0_520 = arith.constant 0 : index
    %c6_521 = arith.constant 6 : index
    %644 = vector.load %arg40[%c0_520, %c6_521] : memref<8x768xf32, #tpu.memory_space<vmem>>, vector<8x640xf32>
    %cst_522 = arith.constant dense<0.000000e+00> : vector<8x640xf32>
    %645 = tpu.matmul %643, %644, %cst_522 {dimension_numbers = #tpu.dot_dimension_numbers<[1], [0], [0], [1], [0, 0, 1, 1], [], []>} : vector<8x8xf32>, vector<8x640xf32>, vector<8x640xf32> -> vector<8x640xf32>
    %646 = arith.addf %641, %645 : vector<8x640xf32>
    %c7_523 = arith.constant 7 : index
    %c0_524 = arith.constant 0 : index
    %c0_525 = arith.constant 0 : index
    %647 = vector.load %arg30[%c7_523, %c0_524, %c0_525] : memref<8x8x8xf32, #tpu.memory_space<vmem>>, vector<1x8x8xf32>
    %648 = vector.shape_cast %647 : vector<1x8x8xf32> to vector<8x8xf32>
    %c0_526 = arith.constant 0 : index
    %c7_527 = arith.constant 7 : index
    %649 = vector.load %arg40[%c0_526, %c7_527] : memref<8x768xf32, #tpu.memory_space<vmem>>, vector<8x640xf32>
    %cst_528 = arith.constant dense<0.000000e+00> : vector<8x640xf32>
    %650 = tpu.matmul %648, %649, %cst_528 {dimension_numbers = #tpu.dot_dimension_numbers<[1], [0], [0], [1], [0, 0, 1, 1], [], []>} : vector<8x8xf32>, vector<8x640xf32>, vector<8x640xf32> -> vector<8x640xf32>
    %651 = arith.addf %646, %650 : vector<8x640xf32>
    %c0_529 = arith.constant 0 : index
    %c0_530 = arith.constant 0 : index
    %652 = vector.load %arg31[%c0_529, %c0_530] : memref<8x1xf32, #tpu.memory_space<vmem>>, vector<8x1xf32>
    %653 = vector.extract_strided_slice %651 {offsets = [0, 0], sizes = [8, 256], strides = [1, 1]} : vector<8x640xf32> to vector<8x256xf32>
    %654 = vector.broadcast %652 : vector<8x1xf32> to vector<8x256xf32>
    %655 = arith.addf %653, %654 : vector<8x256xf32>
    %cst_531 = arith.constant 0.000000e+00 : f32
    %656 = vector.broadcast %cst_531 : f32 to vector<8x256xf32>
    %657 = arith.cmpf ogt, %655, %656 : vector<8x256xf32>
    %cst_532 = arith.constant 0.00999999977 : f32
    %658 = vector.broadcast %cst_532 : f32 to vector<8x256xf32>
    %659 = arith.mulf %658, %655 : vector<8x256xf32>
    %660 = arith.select %657, %655, %659 : vector<8x256xi1>, vector<8x256xf32>
    %661 = vector.extract_strided_slice %651 {offsets = [0, 384], sizes = [8, 256], strides = [1, 1]} : vector<8x640xf32> to vector<8x256xf32>
    %662 = vector.broadcast %652 : vector<8x1xf32> to vector<8x256xf32>
    %663 = arith.addf %661, %662 : vector<8x256xf32>
    %cst_533 = arith.constant 0.000000e+00 : f32
    %664 = vector.broadcast %cst_533 : f32 to vector<8x256xf32>
    %665 = arith.cmpf ogt, %663, %664 : vector<8x256xf32>
    %cst_534 = arith.constant 0.00999999977 : f32
    %666 = vector.broadcast %cst_534 : f32 to vector<8x256xf32>
    %667 = arith.mulf %666, %663 : vector<8x256xf32>
    %668 = arith.select %665, %663, %667 : vector<8x256xi1>, vector<8x256xf32>
    %c0_535 = arith.constant 0 : index
    %c0_536 = arith.constant 0 : index
    %669 = vector.load %arg32[%c0_535, %c0_536] : memref<8x1xf32, #tpu.memory_space<vmem>>, vector<8x1xf32>
    %c0_537 = arith.constant 0 : index
    %c0_538 = arith.constant 0 : index
    %670 = vector.load %arg33[%c0_537, %c0_538] : memref<8x1xf32, #tpu.memory_space<vmem>>, vector<8x1xf32>
    %cst_539 = arith.constant dense<0.000000e+00> : vector<8xf32>
    %671 = vector.multi_reduction <add>, %660, %cst_539 [1] : vector<8x256xf32> to vector<8xf32>
    %672 = vector.shape_cast %671 : vector<8xf32> to vector<8x1xf32>
    %673 = arith.mulf %660, %660 : vector<8x256xf32>
    %cst_540 = arith.constant dense<0.000000e+00> : vector<8xf32>
    %674 = vector.multi_reduction <add>, %673, %cst_540 [1] : vector<8x256xf32> to vector<8xf32>
    %675 = vector.shape_cast %674 : vector<8xf32> to vector<8x1xf32>
    %cst_541 = arith.constant dense<0.000000e+00> : vector<8xf32>
    %676 = vector.multi_reduction <add>, %668, %cst_541 [1] : vector<8x256xf32> to vector<8xf32>
    %677 = vector.shape_cast %676 : vector<8xf32> to vector<8x1xf32>
    %678 = arith.addf %672, %677 : vector<8x1xf32>
    %679 = arith.mulf %668, %668 : vector<8x256xf32>
    %cst_542 = arith.constant dense<0.000000e+00> : vector<8xf32>
    %680 = vector.multi_reduction <add>, %679, %cst_542 [1] : vector<8x256xf32> to vector<8xf32>
    %681 = vector.shape_cast %680 : vector<8xf32> to vector<8x1xf32>
    %682 = arith.addf %675, %681 : vector<8x1xf32>
    %cst_543 = arith.constant 0.001953125 : f32
    %683 = vector.broadcast %cst_543 : f32 to vector<8x1xf32>
    %684 = arith.mulf %678, %683 : vector<8x1xf32>
    %cst_544 = arith.constant 0.001953125 : f32
    %685 = vector.broadcast %cst_544 : f32 to vector<8x1xf32>
    %686 = arith.mulf %682, %685 : vector<8x1xf32>
    %687 = arith.mulf %684, %684 : vector<8x1xf32>
    %688 = arith.subf %686, %687 : vector<8x1xf32>
    %cst_545 = arith.constant 0.000000e+00 : f32
    %689 = vector.broadcast %cst_545 : f32 to vector<8x1xf32>
    %690 = arith.maximumf %688, %689 : vector<8x1xf32>
    %cst_546 = arith.constant 9.99999974E-6 : f32
    %691 = vector.broadcast %cst_546 : f32 to vector<8x1xf32>
    %692 = arith.addf %690, %691 : vector<8x1xf32>
    %693 = math.rsqrt %692 : vector<8x1xf32>
    %694 = arith.mulf %669, %693 : vector<8x1xf32>
    %695 = arith.mulf %684, %694 : vector<8x1xf32>
    %696 = arith.subf %670, %695 : vector<8x1xf32>
    %697 = vector.broadcast %694 : vector<8x1xf32> to vector<8x256xf32>
    %698 = arith.mulf %660, %697 : vector<8x256xf32>
    %699 = vector.broadcast %696 : vector<8x1xf32> to vector<8x256xf32>
    %700 = arith.addf %698, %699 : vector<8x256xf32>
    %701 = vector.broadcast %694 : vector<8x1xf32> to vector<8x256xf32>
    %702 = arith.mulf %668, %701 : vector<8x256xf32>
    %703 = vector.broadcast %696 : vector<8x1xf32> to vector<8x256xf32>
    %704 = arith.addf %702, %703 : vector<8x256xf32>
    %cst_547 = arith.constant 0.000000e+00 : f32
    %705 = vector.broadcast %cst_547 : f32 to vector<8x4xf32>
    %c0_548 = arith.constant 0 : index
    %c0_549 = arith.constant 0 : index
    %706 = vector.load %arg40[%c0_548, %c0_549] : memref<8x768xf32, #tpu.memory_space<vmem>>, vector<8x4xf32>
    tpu.vector_store %arg40[%c0_548, %c0_549], %705 {strides = array<i32>} : memref<8x768xf32, #tpu.memory_space<vmem>>, vector<8x4xf32>,
    %cst_550 = arith.constant 0.000000e+00 : f32
    %707 = vector.broadcast %cst_550 : f32 to vector<8x4xf32>
    %c0_551 = arith.constant 0 : index
    %c260 = arith.constant 260 : index
    %708 = vector.load %arg40[%c0_551, %c260] : memref<8x768xf32, #tpu.memory_space<vmem>>, vector<8x4xf32>
    tpu.vector_store %arg40[%c0_551, %c260], %707 {strides = array<i32>} : memref<8x768xf32, #tpu.memory_space<vmem>>, vector<8x4xf32>,
    %c0_552 = arith.constant 0 : index
    %c4_553 = arith.constant 4 : index
    %709 = vector.load %arg40[%c0_552, %c4_553] : memref<8x768xf32, #tpu.memory_space<vmem>>, vector<8x256xf32>
    tpu.vector_store %arg40[%c0_552, %c4_553], %700 {strides = array<i32>} : memref<8x768xf32, #tpu.memory_space<vmem>>, vector<8x256xf32>,
    %cst_554 = arith.constant 0.000000e+00 : f32
    %710 = vector.broadcast %cst_554 : f32 to vector<8x4xf32>
    %c0_555 = arith.constant 0 : index
    %c384_556 = arith.constant 384 : index
    %711 = vector.load %arg40[%c0_555, %c384_556] : memref<8x768xf32, #tpu.memory_space<vmem>>, vector<8x4xf32>
    tpu.vector_store %arg40[%c0_555, %c384_556], %710 {strides = array<i32>} : memref<8x768xf32, #tpu.memory_space<vmem>>, vector<8x4xf32>,
    %cst_557 = arith.constant 0.000000e+00 : f32
    %712 = vector.broadcast %cst_557 : f32 to vector<8x4xf32>
    %c0_558 = arith.constant 0 : index
    %c644 = arith.constant 644 : index
    %713 = vector.load %arg40[%c0_558, %c644] : memref<8x768xf32, #tpu.memory_space<vmem>>, vector<8x4xf32>
    tpu.vector_store %arg40[%c0_558, %c644], %712 {strides = array<i32>} : memref<8x768xf32, #tpu.memory_space<vmem>>, vector<8x4xf32>,
    %c0_559 = arith.constant 0 : index
    %c388 = arith.constant 388 : index
    %714 = vector.load %arg40[%c0_559, %c388] : memref<8x768xf32, #tpu.memory_space<vmem>>, vector<8x256xf32>
    tpu.vector_store %arg40[%c0_559, %c388], %704 {strides = array<i32>} : memref<8x768xf32, #tpu.memory_space<vmem>>, vector<8x256xf32>,
    %cst_560 = arith.constant 0.000000e+00 : f32
    %715 = vector.broadcast %cst_560 : f32 to vector<8x640xf32>
    %c0_561 = arith.constant 0 : index
    %c0_562 = arith.constant 0 : index
    %c0_563 = arith.constant 0 : index
    %716 = vector.load %arg35[%c0_561, %c0_562, %c0_563] : memref<9x8x8xf32, #tpu.memory_space<vmem>>, vector<1x8x8xf32>
    %717 = vector.shape_cast %716 : vector<1x8x8xf32> to vector<8x8xf32>
    %c0_564 = arith.constant 0 : index
    %c0_565 = arith.constant 0 : index
    %718 = vector.load %arg40[%c0_564, %c0_565] : memref<8x768xf32, #tpu.memory_space<vmem>>, vector<8x640xf32>
    %cst_566 = arith.constant dense<0.000000e+00> : vector<8x640xf32>
    %719 = tpu.matmul %717, %718, %cst_566 {dimension_numbers = #tpu.dot_dimension_numbers<[1], [0], [0], [1], [0, 0, 1, 1], [], []>} : vector<8x8xf32>, vector<8x640xf32>, vector<8x640xf32> -> vector<8x640xf32>
    %720 = arith.addf %715, %719 : vector<8x640xf32>
    %c1_567 = arith.constant 1 : index
    %c0_568 = arith.constant 0 : index
    %c0_569 = arith.constant 0 : index
    %721 = vector.load %arg35[%c1_567, %c0_568, %c0_569] : memref<9x8x8xf32, #tpu.memory_space<vmem>>, vector<1x8x8xf32>
    %722 = vector.shape_cast %721 : vector<1x8x8xf32> to vector<8x8xf32>
    %c0_570 = arith.constant 0 : index
    %c1_571 = arith.constant 1 : index
    %723 = vector.load %arg40[%c0_570, %c1_571] : memref<8x768xf32, #tpu.memory_space<vmem>>, vector<8x640xf32>
    %cst_572 = arith.constant dense<0.000000e+00> : vector<8x640xf32>
    %724 = tpu.matmul %722, %723, %cst_572 {dimension_numbers = #tpu.dot_dimension_numbers<[1], [0], [0], [1], [0, 0, 1, 1], [], []>} : vector<8x8xf32>, vector<8x640xf32>, vector<8x640xf32> -> vector<8x640xf32>
    %725 = arith.addf %720, %724 : vector<8x640xf32>
    %c2_573 = arith.constant 2 : index
    %c0_574 = arith.constant 0 : index
    %c0_575 = arith.constant 0 : index
    %726 = vector.load %arg35[%c2_573, %c0_574, %c0_575] : memref<9x8x8xf32, #tpu.memory_space<vmem>>, vector<1x8x8xf32>
    %727 = vector.shape_cast %726 : vector<1x8x8xf32> to vector<8x8xf32>
    %c0_576 = arith.constant 0 : index
    %c2_577 = arith.constant 2 : index
    %728 = vector.load %arg40[%c0_576, %c2_577] : memref<8x768xf32, #tpu.memory_space<vmem>>, vector<8x640xf32>
    %cst_578 = arith.constant dense<0.000000e+00> : vector<8x640xf32>
    %729 = tpu.matmul %727, %728, %cst_578 {dimension_numbers = #tpu.dot_dimension_numbers<[1], [0], [0], [1], [0, 0, 1, 1], [], []>} : vector<8x8xf32>, vector<8x640xf32>, vector<8x640xf32> -> vector<8x640xf32>
    %730 = arith.addf %725, %729 : vector<8x640xf32>
    %c3_579 = arith.constant 3 : index
    %c0_580 = arith.constant 0 : index
    %c0_581 = arith.constant 0 : index
    %731 = vector.load %arg35[%c3_579, %c0_580, %c0_581] : memref<9x8x8xf32, #tpu.memory_space<vmem>>, vector<1x8x8xf32>
    %732 = vector.shape_cast %731 : vector<1x8x8xf32> to vector<8x8xf32>
    %c0_582 = arith.constant 0 : index
    %c3_583 = arith.constant 3 : index
    %733 = vector.load %arg40[%c0_582, %c3_583] : memref<8x768xf32, #tpu.memory_space<vmem>>, vector<8x640xf32>
    %cst_584 = arith.constant dense<0.000000e+00> : vector<8x640xf32>
    %734 = tpu.matmul %732, %733, %cst_584 {dimension_numbers = #tpu.dot_dimension_numbers<[1], [0], [0], [1], [0, 0, 1, 1], [], []>} : vector<8x8xf32>, vector<8x640xf32>, vector<8x640xf32> -> vector<8x640xf32>
    %735 = arith.addf %730, %734 : vector<8x640xf32>
    %c4_585 = arith.constant 4 : index
    %c0_586 = arith.constant 0 : index
    %c0_587 = arith.constant 0 : index
    %736 = vector.load %arg35[%c4_585, %c0_586, %c0_587] : memref<9x8x8xf32, #tpu.memory_space<vmem>>, vector<1x8x8xf32>
    %737 = vector.shape_cast %736 : vector<1x8x8xf32> to vector<8x8xf32>
    %c0_588 = arith.constant 0 : index
    %c4_589 = arith.constant 4 : index
    %738 = vector.load %arg40[%c0_588, %c4_589] : memref<8x768xf32, #tpu.memory_space<vmem>>, vector<8x640xf32>
    %cst_590 = arith.constant dense<0.000000e+00> : vector<8x640xf32>
    %739 = tpu.matmul %737, %738, %cst_590 {dimension_numbers = #tpu.dot_dimension_numbers<[1], [0], [0], [1], [0, 0, 1, 1], [], []>} : vector<8x8xf32>, vector<8x640xf32>, vector<8x640xf32> -> vector<8x640xf32>
    %740 = arith.addf %735, %739 : vector<8x640xf32>
    %c5_591 = arith.constant 5 : index
    %c0_592 = arith.constant 0 : index
    %c0_593 = arith.constant 0 : index
    %741 = vector.load %arg35[%c5_591, %c0_592, %c0_593] : memref<9x8x8xf32, #tpu.memory_space<vmem>>, vector<1x8x8xf32>
    %742 = vector.shape_cast %741 : vector<1x8x8xf32> to vector<8x8xf32>
    %c0_594 = arith.constant 0 : index
    %c5_595 = arith.constant 5 : index
    %743 = vector.load %arg40[%c0_594, %c5_595] : memref<8x768xf32, #tpu.memory_space<vmem>>, vector<8x640xf32>
    %cst_596 = arith.constant dense<0.000000e+00> : vector<8x640xf32>
    %744 = tpu.matmul %742, %743, %cst_596 {dimension_numbers = #tpu.dot_dimension_numbers<[1], [0], [0], [1], [0, 0, 1, 1], [], []>} : vector<8x8xf32>, vector<8x640xf32>, vector<8x640xf32> -> vector<8x640xf32>
    %745 = arith.addf %740, %744 : vector<8x640xf32>
    %c6_597 = arith.constant 6 : index
    %c0_598 = arith.constant 0 : index
    %c0_599 = arith.constant 0 : index
    %746 = vector.load %arg35[%c6_597, %c0_598, %c0_599] : memref<9x8x8xf32, #tpu.memory_space<vmem>>, vector<1x8x8xf32>
    %747 = vector.shape_cast %746 : vector<1x8x8xf32> to vector<8x8xf32>
    %c0_600 = arith.constant 0 : index
    %c6_601 = arith.constant 6 : index
    %748 = vector.load %arg40[%c0_600, %c6_601] : memref<8x768xf32, #tpu.memory_space<vmem>>, vector<8x640xf32>
    %cst_602 = arith.constant dense<0.000000e+00> : vector<8x640xf32>
    %749 = tpu.matmul %747, %748, %cst_602 {dimension_numbers = #tpu.dot_dimension_numbers<[1], [0], [0], [1], [0, 0, 1, 1], [], []>} : vector<8x8xf32>, vector<8x640xf32>, vector<8x640xf32> -> vector<8x640xf32>
    %750 = arith.addf %745, %749 : vector<8x640xf32>
    %c7_603 = arith.constant 7 : index
    %c0_604 = arith.constant 0 : index
    %c0_605 = arith.constant 0 : index
    %751 = vector.load %arg35[%c7_603, %c0_604, %c0_605] : memref<9x8x8xf32, #tpu.memory_space<vmem>>, vector<1x8x8xf32>
    %752 = vector.shape_cast %751 : vector<1x8x8xf32> to vector<8x8xf32>
    %c0_606 = arith.constant 0 : index
    %c7_607 = arith.constant 7 : index
    %753 = vector.load %arg40[%c0_606, %c7_607] : memref<8x768xf32, #tpu.memory_space<vmem>>, vector<8x640xf32>
    %cst_608 = arith.constant dense<0.000000e+00> : vector<8x640xf32>
    %754 = tpu.matmul %752, %753, %cst_608 {dimension_numbers = #tpu.dot_dimension_numbers<[1], [0], [0], [1], [0, 0, 1, 1], [], []>} : vector<8x8xf32>, vector<8x640xf32>, vector<8x640xf32> -> vector<8x640xf32>
    %755 = arith.addf %750, %754 : vector<8x640xf32>
    %c8 = arith.constant 8 : index
    %c0_609 = arith.constant 0 : index
    %c0_610 = arith.constant 0 : index
    %756 = vector.load %arg35[%c8, %c0_609, %c0_610] : memref<9x8x8xf32, #tpu.memory_space<vmem>>, vector<1x8x8xf32>
    %757 = vector.shape_cast %756 : vector<1x8x8xf32> to vector<8x8xf32>
    %c0_611 = arith.constant 0 : index
    %c8_612 = arith.constant 8 : index
    %758 = vector.load %arg40[%c0_611, %c8_612] : memref<8x768xf32, #tpu.memory_space<vmem>>, vector<8x640xf32>
    %cst_613 = arith.constant dense<0.000000e+00> : vector<8x640xf32>
    %759 = tpu.matmul %757, %758, %cst_613 {dimension_numbers = #tpu.dot_dimension_numbers<[1], [0], [0], [1], [0, 0, 1, 1], [], []>} : vector<8x8xf32>, vector<8x640xf32>, vector<8x640xf32> -> vector<8x640xf32>
    %760 = arith.addf %755, %759 : vector<8x640xf32>
    %c0_614 = arith.constant 0 : index
    %c0_615 = arith.constant 0 : index
    %761 = vector.load %arg36[%c0_614, %c0_615] : memref<8x1xf32, #tpu.memory_space<vmem>>, vector<8x1xf32>
    %762 = vector.extract_strided_slice %760 {offsets = [0, 0], sizes = [8, 256], strides = [1, 1]} : vector<8x640xf32> to vector<8x256xf32>
    %763 = vector.broadcast %761 : vector<8x1xf32> to vector<8x256xf32>
    %764 = arith.addf %762, %763 : vector<8x256xf32>
    %765 = vector.extract_strided_slice %760 {offsets = [0, 384], sizes = [8, 256], strides = [1, 1]} : vector<8x640xf32> to vector<8x256xf32>
    %766 = vector.broadcast %761 : vector<8x1xf32> to vector<8x256xf32>
    %767 = arith.addf %765, %766 : vector<8x256xf32>
    %cst_616 = arith.constant 5.000000e-01 : f32
    %768 = vector.broadcast %cst_616 : f32 to vector<8x256xf32>
    %769 = arith.mulf %768, %764 : vector<8x256xf32>
    %770 = math.tanh %769 : vector<8x256xf32>
    %cst_617 = arith.constant 1.000000e+00 : f32
    %771 = vector.broadcast %cst_617 : f32 to vector<8x256xf32>
    %772 = arith.addf %770, %771 : vector<8x256xf32>
    %cst_618 = arith.constant 5.000000e-01 : f32
    %773 = vector.broadcast %cst_618 : f32 to vector<8x256xf32>
    %774 = arith.mulf %773, %772 : vector<8x256xf32>
    %cst_619 = arith.constant 5.000000e-01 : f32
    %775 = vector.broadcast %cst_619 : f32 to vector<8x256xf32>
    %776 = arith.mulf %775, %767 : vector<8x256xf32>
    %777 = math.tanh %776 : vector<8x256xf32>
    %cst_620 = arith.constant 1.000000e+00 : f32
    %778 = vector.broadcast %cst_620 : f32 to vector<8x256xf32>
    %779 = arith.addf %777, %778 : vector<8x256xf32>
    %cst_621 = arith.constant 5.000000e-01 : f32
    %780 = vector.broadcast %cst_621 : f32 to vector<8x256xf32>
    %781 = arith.mulf %780, %779 : vector<8x256xf32>
    %c0_622 = arith.constant 0 : index
    %c0_623 = arith.constant 0 : index
    %c0_624 = arith.constant 0 : index
    %782 = vector.load %arg39[%c0_622, %c0_623, %c0_624] : memref<2x8x256xf32, #tpu.memory_space<vmem>>, vector<1x8x256xf32>
    %783 = vector.shape_cast %782 : vector<1x8x256xf32> to vector<8x256xf32>
    %784 = vector.shape_cast %774 : vector<8x256xf32> to vector<1x8x256xf32>
    tpu.vector_store %arg39[%c0_622, %c0_623, %c0_624], %784 {strides = array<i32>} : memref<2x8x256xf32, #tpu.memory_space<vmem>>, vector<1x8x256xf32>,
    %c1_625 = arith.constant 1 : index
    %c0_626 = arith.constant 0 : index
    %c0_627 = arith.constant 0 : index
    %785 = vector.load %arg39[%c1_625, %c0_626, %c0_627] : memref<2x8x256xf32, #tpu.memory_space<vmem>>, vector<1x8x256xf32>
    %786 = vector.shape_cast %785 : vector<1x8x256xf32> to vector<8x256xf32>
    %787 = vector.shape_cast %781 : vector<8x256xf32> to vector<1x8x256xf32>
    tpu.vector_store %arg39[%c1_625, %c0_626, %c0_627], %787 {strides = array<i32>} : memref<2x8x256xf32, #tpu.memory_space<vmem>>, vector<1x8x256xf32>,
    return
  }
}

</mosaic_0001>

<llo_original>
// kernel: convae_forward.1
$region0: #{convae_forward.1}
  #allocation0 [shape = 'u32[]', space=smem, size = 0x4, offset = 0x4, fixed_abs, tag = 'smem constant byte address 0x4 - core index']
  #allocation1 [shape = 'u32[144,128]{1,0:T(1,128)}', space=vmem, size = 0x12000, scoped, tag = 'internal scratch']
  #allocation2 [shape = 'f32[8,768]{1,0:T(8,128)}', space=vmem, size = 0x6000, scoped, tag = 'scratch operand']
  %s0 = inlined_call_operand.smem [shape: u32[40], index: -1, kind: input, shape index: {}]
  %s1 = sld [smem:[%s0]]
  %s2 = scalar_lea.smem %s0, 1
  %s3 = sld [smem:[%s2]]
  %s4 = scalar_lea.smem %s0, 2
  %s5 = sld [smem:[%s4]]
  %s6 = scalar_lea.smem %s0, 3
  %s7 = sld [smem:[%s6]]
  %s8 = scalar_lea.smem %s0, 4
  %s9 = sld [smem:[%s8]]
  %s10 = scalar_lea.smem %s0, 5
  %s11 = sld [smem:[%s10]]
  %s12 = scalar_lea.smem %s0, 6
  %s13 = sld [smem:[%s12]]
  %s14 = scalar_lea.smem %s0, 7
  %s15 = sld [smem:[%s14]]
  %s16 = scalar_lea.smem %s0, 8
  %s17 = sld [smem:[%s16]]
  %s18 = scalar_lea.smem %s0, 9
  %s19 = sld [smem:[%s18]]
  %s20 = scalar_lea.smem %s0, 10
  %s21 = sld [smem:[%s20]]
  %s22 = scalar_lea.smem %s0, 11
  %s23 = sld [smem:[%s22]]
  %s24 = scalar_lea.smem %s0, 12
  %s25 = sld [smem:[%s24]]
  %s26 = scalar_lea.smem %s0, 13
  %s27 = sld [smem:[%s26]]
  %s28 = scalar_lea.smem %s0, 14
  %s29 = sld [smem:[%s28]]
  %s30 = scalar_lea.smem %s0, 15
  %s31 = sld [smem:[%s30]]
  %s32 = scalar_lea.smem %s0, 16
  %s33 = sld [smem:[%s32]]
  %s34 = scalar_lea.smem %s0, 17
  %s35 = sld [smem:[%s34]]
  %s36 = scalar_lea.smem %s0, 18
  %s37 = sld [smem:[%s36]]
  %s38 = scalar_lea.smem %s0, 19
  %s39 = sld [smem:[%s38]]
  %s40 = scalar_lea.smem %s0, 20
  %s41 = sld [smem:[%s40]]
  %s42 = scalar_lea.smem %s0, 21
  %s43 = sld [smem:[%s42]]
  %s44 = scalar_lea.smem %s0, 22
  %s45 = sld [smem:[%s44]]
  %s46 = scalar_lea.smem %s0, 23
  %s47 = sld [smem:[%s46]]
  %s48 = scalar_lea.smem %s0, 24
  %s49 = sld [smem:[%s48]]
  %s50 = scalar_lea.smem %s0, 25
  %s51 = sld [smem:[%s50]]
  %s52 = scalar_lea.smem %s0, 26
  %s53 = sld [smem:[%s52]]
  %s54 = scalar_lea.smem %s0, 27
  %s55 = sld [smem:[%s54]]
  %s56 = scalar_lea.smem %s0, 28
  %s57 = sld [smem:[%s56]]
  %s58 = scalar_lea.smem %s0, 29
  %s59 = sld [smem:[%s58]]
  %s60 = scalar_lea.smem %s0, 30
  %s61 = sld [smem:[%s60]]
  %s62 = scalar_lea.smem %s0, 31
  %s63 = sld [smem:[%s62]]
  %s64 = scalar_lea.smem %s0, 32
  %s65 = sld [smem:[%s64]]
  %s66 = scalar_lea.smem %s0, 33
  %s67 = sld [smem:[%s66]]
  %s68 = scalar_lea.smem %s0, 34
  %s69 = sld [smem:[%s68]]
  %s70 = scalar_lea.smem %s0, 35
  %s71 = sld [smem:[%s70]]
  %s72 = scalar_lea.smem %s0, 36
  %s73 = sld [smem:[%s72]]
  %s74 = scalar_lea.smem %s0, 37
  %s75 = sld [smem:[%s74]]
  %s76 = scalar_lea.smem %s0, 38
  %s77 = sld [smem:[%s76]]
  %s78 = scalar_lea.smem %s0, 39
  %s79 = sld [smem:[%s78]]
  %s80 = sld [smem:[#allocation0]]
  $region166: #{convae_forward.1} parent=0
    _
  %s82 = ssub.s32 1, %s80
  %s83 = scalar_select 0, %s82, %s80
  // Predicated region
  $region2: #{convae_forward.1} parent=0 // pred_check
    _
  $region3: #{convae_forward.1} parent=0 // pred_check_branch
    %85 = sbr.rel (0) target = $region5
  $region4: #{convae_forward.1} parent=0 // pred_region
    _
  $region5: #{convae_forward.1} parent=0 // pred_fallthru
    _
  // Predicated region
  $region6: #{convae_forward.1} parent=0 // pred_check
    _
  $region7: #{convae_forward.1} parent=0 // pred_check_branch
    %87 = sbr.rel (0) target = $region9
  $region8: #{convae_forward.1} parent=0 // pred_region
    _
  $region9: #{convae_forward.1} parent=0 // pred_fallthru
    _
  // Predicated region
  $region10: #{convae_forward.1} parent=0 // pred_check
    _
  $region11: #{convae_forward.1} parent=0 // pred_check_branch
    %89 = sbr.rel (0) target = $region13
  $region12: #{convae_forward.1} parent=0 // pred_region
    _
  $region13: #{convae_forward.1} parent=0 // pred_fallthru
    _
  // Predicated region
  $region14: #{convae_forward.1} parent=0 // pred_check
    _
  $region15: #{convae_forward.1} parent=0 // pred_check_branch
    %91 = sbr.rel (0) target = $region17
  $region16: #{convae_forward.1} parent=0 // pred_region
    _
  $region17: #{convae_forward.1} parent=0 // pred_fallthru
    _
  // Predicated region
  $region18: #{convae_forward.1} parent=0 // pred_check
    _
  $region19: #{convae_forward.1} parent=0 // pred_check_branch
    %93 = sbr.rel (0) target = $region21
  $region20: #{convae_forward.1} parent=0 // pred_region
    _
  $region21: #{convae_forward.1} parent=0 // pred_fallthru
    _
  // Predicated region
  $region22: #{convae_forward.1} parent=0 // pred_check
    _
  $region23: #{convae_forward.1} parent=0 // pred_check_branch
    %95 = sbr.rel (0) target = $region25
  $region24: #{convae_forward.1} parent=0 // pred_region
    _
  $region25: #{convae_forward.1} parent=0 // pred_fallthru
    _
  // Predicated region
  $region26: #{convae_forward.1} parent=0 // pred_check
    _
  $region27: #{convae_forward.1} parent=0 // pred_check_branch
    %97 = sbr.rel (0) target = $region29
  $region28: #{convae_forward.1} parent=0 // pred_region
    _
  $region29: #{convae_forward.1} parent=0 // pred_fallthru
    _
  // Predicated region
  $region30: #{convae_forward.1} parent=0 // pred_check
    _
  $region31: #{convae_forward.1} parent=0 // pred_check_branch
    %99 = sbr.rel (0) target = $region33
  $region32: #{convae_forward.1} parent=0 // pred_region
    _
  $region33: #{convae_forward.1} parent=0 // pred_fallthru
    _
  // Predicated region
  $region34: #{convae_forward.1} parent=0 // pred_check
    _
  $region35: #{convae_forward.1} parent=0 // pred_check_branch
    %101 = sbr.rel (0) target = $region37
  $region36: #{convae_forward.1} parent=0 // pred_region
    _
  $region37: #{convae_forward.1} parent=0 // pred_fallthru
    _
  // Predicated region
  $region38: #{convae_forward.1} parent=0 // pred_check
    _
  $region39: #{convae_forward.1} parent=0 // pred_check_branch
    %103 = sbr.rel (0) target = $region41
  $region40: #{convae_forward.1} parent=0 // pred_region
    _
  $region41: #{convae_forward.1} parent=0 // pred_fallthru
    _
  // Predicated region
  $region42: #{convae_forward.1} parent=0 // pred_check
    _
  $region43: #{convae_forward.1} parent=0 // pred_check_branch
    %105 = sbr.rel (0) target = $region45
  $region44: #{convae_forward.1} parent=0 // pred_region
    _
  $region45: #{convae_forward.1} parent=0 // pred_fallthru
    _
  // Predicated region
  $region46: #{convae_forward.1} parent=0 // pred_check
    _
  $region47: #{convae_forward.1} parent=0 // pred_check_branch
    %107 = sbr.rel (0) target = $region49
  $region48: #{convae_forward.1} parent=0 // pred_region
    _
  $region49: #{convae_forward.1} parent=0 // pred_fallthru
    _
  // Predicated region
  $region50: #{convae_forward.1} parent=0 // pred_check
    _
  $region51: #{convae_forward.1} parent=0 // pred_check_branch
    %109 = sbr.rel (0) target = $region53
  $region52: #{convae_forward.1} parent=0 // pred_region
    _
  $region53: #{convae_forward.1} parent=0 // pred_fallthru
    _
  // Predicated region
  $region54: #{convae_forward.1} parent=0 // pred_check
    _
  $region55: #{convae_forward.1} parent=0 // pred_check_branch
    %111 = sbr.rel (0) target = $region57
  $region56: #{convae_forward.1} parent=0 // pred_region
    _
  $region57: #{convae_forward.1} parent=0 // pred_fallthru
    _
  // Predicated region
  $region58: #{convae_forward.1} parent=0 // pred_check
    _
  $region59: #{convae_forward.1} parent=0 // pred_check_branch
    %113 = sbr.rel (0) target = $region61
  $region60: #{convae_forward.1} parent=0 // pred_region
    _
  $region61: #{convae_forward.1} parent=0 // pred_fallthru
    _
  // Predicated region
  $region62: #{convae_forward.1} parent=0 // pred_check
    _
  $region63: #{convae_forward.1} parent=0 // pred_check_branch
    %115 = sbr.rel (0) target = $region65
  $region64: #{convae_forward.1} parent=0 // pred_region
    _
  $region65: #{convae_forward.1} parent=0 // pred_fallthru
    _
  // Predicated region
  $region66: #{convae_forward.1} parent=0 // pred_check
    _
  $region67: #{convae_forward.1} parent=0 // pred_check_branch
    %117 = sbr.rel (0) target = $region69
  $region68: #{convae_forward.1} parent=0 // pred_region
    _
  $region69: #{convae_forward.1} parent=0 // pred_fallthru
    _
  // Predicated region
  $region70: #{convae_forward.1} parent=0 // pred_check
    _
  $region71: #{convae_forward.1} parent=0 // pred_check_branch
    %119 = sbr.rel (0) target = $region73
  $region72: #{convae_forward.1} parent=0 // pred_region
    _
  $region73: #{convae_forward.1} parent=0 // pred_fallthru
    _
  // Predicated region
  $region74: #{convae_forward.1} parent=0 // pred_check
    _
  $region75: #{convae_forward.1} parent=0 // pred_check_branch
    %121 = sbr.rel (0) target = $region77
  $region76: #{convae_forward.1} parent=0 // pred_region
    _
  $region77: #{convae_forward.1} parent=0 // pred_fallthru
    _
  // Predicated region
  $region78: #{convae_forward.1} parent=0 // pred_check
    _
  $region79: #{convae_forward.1} parent=0 // pred_check_branch
    %123 = sbr.rel (0) target = $region81
  $region80: #{convae_forward.1} parent=0 // pred_region
    _
  $region81: #{convae_forward.1} parent=0 // pred_fallthru
    _
  // Predicated region
  $region82: #{convae_forward.1} parent=0 // pred_check
    _
  $region83: #{convae_forward.1} parent=0 // pred_check_branch
    %125 = sbr.rel (0) target = $region85
  $region84: #{convae_forward.1} parent=0 // pred_region
    _
  $region85: #{convae_forward.1} parent=0 // pred_fallthru
    _
  // Predicated region
  $region86: #{convae_forward.1} parent=0 // pred_check
    _
  $region87: #{convae_forward.1} parent=0 // pred_check_branch
    %127 = sbr.rel (0) target = $region89
  $region88: #{convae_forward.1} parent=0 // pred_region
    _
  $region89: #{convae_forward.1} parent=0 // pred_fallthru
    _
  // Predicated region
  $region90: #{convae_forward.1} parent=0 // pred_check
    _
  $region91: #{convae_forward.1} parent=0 // pred_check_branch
    %129 = sbr.rel (0) target = $region93
  $region92: #{convae_forward.1} parent=0 // pred_region
    _
  $region93: #{convae_forward.1} parent=0 // pred_fallthru
    _
  // Predicated region
  $region94: #{convae_forward.1} parent=0 // pred_check
    _
  $region95: #{convae_forward.1} parent=0 // pred_check_branch
    %131 = sbr.rel (0) target = $region97
  $region96: #{convae_forward.1} parent=0 // pred_region
    _
  $region97: #{convae_forward.1} parent=0 // pred_fallthru
    _
  // Predicated region
  $region98: #{convae_forward.1} parent=0 // pred_check
    _
  $region99: #{convae_forward.1} parent=0 // pred_check_branch
    %133 = sbr.rel (0) target = $region101
  $region100: #{convae_forward.1} parent=0 // pred_region
    _
  $region101: #{convae_forward.1} parent=0 // pred_fallthru
    _
  // Predicated region
  $region102: #{convae_forward.1} parent=0 // pred_check
    _
  $region103: #{convae_forward.1} parent=0 // pred_check_branch
    %135 = sbr.rel (0) target = $region105
  $region104: #{convae_forward.1} parent=0 // pred_region
    _
  $region105: #{convae_forward.1} parent=0 // pred_fallthru
    _
  // Predicated region
  $region106: #{convae_forward.1} parent=0 // pred_check
    _
  $region107: #{convae_forward.1} parent=0 // pred_check_branch
    %137 = sbr.rel (0) target = $region109
  $region108: #{convae_forward.1} parent=0 // pred_region
    _
  $region109: #{convae_forward.1} parent=0 // pred_fallthru
    _
  // Predicated region
  $region110: #{convae_forward.1} parent=0 // pred_check
    _
  $region111: #{convae_forward.1} parent=0 // pred_check_branch
    %139 = sbr.rel (0) target = $region113
  $region112: #{convae_forward.1} parent=0 // pred_region
    _
  $region113: #{convae_forward.1} parent=0 // pred_fallthru
    _
  // Predicated region
  $region114: #{convae_forward.1} parent=0 // pred_check
    _
  $region115: #{convae_forward.1} parent=0 // pred_check_branch
    %141 = sbr.rel (0) target = $region117
  $region116: #{convae_forward.1} parent=0 // pred_region
    _
  $region117: #{convae_forward.1} parent=0 // pred_fallthru
    _
  // Predicated region
  $region118: #{convae_forward.1} parent=0 // pred_check
    _
  $region119: #{convae_forward.1} parent=0 // pred_check_branch
    %143 = sbr.rel (0) target = $region121
  $region120: #{convae_forward.1} parent=0 // pred_region
    _
  $region121: #{convae_forward.1} parent=0 // pred_fallthru
    _
  // Predicated region
  $region122: #{convae_forward.1} parent=0 // pred_check
    _
  $region123: #{convae_forward.1} parent=0 // pred_check_branch
    %145 = sbr.rel (0) target = $region125
  $region124: #{convae_forward.1} parent=0 // pred_region
    _
  $region125: #{convae_forward.1} parent=0 // pred_fallthru
    _
  // Predicated region
  $region126: #{convae_forward.1} parent=0 // pred_check
    _
  $region127: #{convae_forward.1} parent=0 // pred_check_branch
    %147 = sbr.rel (0) target = $region129
  $region128: #{convae_forward.1} parent=0 // pred_region
    _
  $region129: #{convae_forward.1} parent=0 // pred_fallthru
    _
  // Predicated region
  $region130: #{convae_forward.1} parent=0 // pred_check
    _
  $region131: #{convae_forward.1} parent=0 // pred_check_branch
    %149 = sbr.rel (0) target = $region133
  $region132: #{convae_forward.1} parent=0 // pred_region
    _
  $region133: #{convae_forward.1} parent=0 // pred_fallthru
    _
  // Predicated region
  $region134: #{convae_forward.1} parent=0 // pred_check
    _
  $region135: #{convae_forward.1} parent=0 // pred_check_branch
    %151 = sbr.rel (0) target = $region137
  $region136: #{convae_forward.1} parent=0 // pred_region
    _
  $region137: #{convae_forward.1} parent=0 // pred_fallthru
    _
  // Predicated region
  $region138: #{convae_forward.1} parent=0 // pred_check
    _
  $region139: #{convae_forward.1} parent=0 // pred_check_branch
    %153 = sbr.rel (0) target = $region141
  $region140: #{convae_forward.1} parent=0 // pred_region
    _
  $region141: #{convae_forward.1} parent=0 // pred_fallthru
    _
  // Predicated region
  $region142: #{convae_forward.1} parent=0 // pred_check
    _
  $region143: #{convae_forward.1} parent=0 // pred_check_branch
    %155 = sbr.rel (0) target = $region145
  $region144: #{convae_forward.1} parent=0 // pred_region
    _
  $region145: #{convae_forward.1} parent=0 // pred_fallthru
    _
  // Predicated region
  $region146: #{convae_forward.1} parent=0 // pred_check
    _
  $region147: #{convae_forward.1} parent=0 // pred_check_branch
    %157 = sbr.rel (0) target = $region149
  $region148: #{convae_forward.1} parent=0 // pred_region
    _
  $region149: #{convae_forward.1} parent=0 // pred_fallthru
    _
  // Predicated region
  $region150: #{convae_forward.1} parent=0 // pred_check
    _
  $region151: #{convae_forward.1} parent=0 // pred_check_branch
    %159 = sbr.rel (0) target = $region153
  $region152: #{convae_forward.1} parent=0 // pred_region
    _
  $region153: #{convae_forward.1} parent=0 // pred_fallthru
    _
  // Predicated region
  $region154: #{convae_forward.1} parent=0 // pred_check
    _
  $region155: #{convae_forward.1} parent=0 // pred_check_branch
    %161 = sbr.rel (0) target = $region157
  $region156: #{convae_forward.1} parent=0 // pred_region
    _
  $region157: #{convae_forward.1} parent=0 // pred_fallthru
    _
  %162 = vst [vmem:[#allocation2] sm:$0xff] 0.0
  %163 = vst [vmem:[#allocation2 + $0x8] sm:$0xff] 0.0
  %164 = vst [vmem:[#allocation2 + $0x10] sm:$0xff] 0.0
  %165 = vst [vmem:[#allocation2 + $0x18] sm:$0xff] 0.0
  %166 = vst [vmem:[#allocation2 + $0x20] sm:$0xff] 0.0
  %167 = vst [vmem:[#allocation2 + $0x28] sm:$0xff] 0.0
  %v168 = vld [vmem:[%s1] sm:$0xff]
  %v169 = vld [vmem:[%s1 + $0x8] sm:$0xff]
  %s170 = scalar_lea.vmem %s1, 16
  %v171 = vld [vmem:[%s170] sm:$0xff]
  %v172 = vld [vmem:[%s170 + $0x8] sm:$0xff]
  %vm173 = vcmask 15360
  %174 = vst.msk [vmem:[#allocation2] sm:$0xff] %vm173, 0.0
  %vm175 = vcmask 31760
  %176 = vst.msk [vmem:[#allocation2 + $0x10] sm:$0xff] %vm175, 0.0
  %179 = vrot.lane.b32.xlu0 %v168, 2
  %v180 = vpop.permute.xlu0 %179
  %181 = vrot.lane.b32.xlu0 %v169, 2
  %v182 = vpop.permute.xlu0 %181
  %v183 = vsel %vm173, %v180, %v182
  %vm187 = vcmask 1047568
  %188 = vst.msk [vmem:[#allocation2] sm:$0xff] %vm187, %v180
  %189 = vst [vmem:[#allocation2 + $0x8] sm:$0xff] %v183
  %190 = vst.msk [vmem:[#allocation2 + $0x10] sm:$0xff] %vm173, %v182
  %191 = vst.msk [vmem:[#allocation2 + $0x18] sm:$0xff] %vm173, 0.0
  %192 = vst.msk [vmem:[#allocation2 + $0x28] sm:$0xff] %vm175, 0.0
  %195 = vrot.lane.b32.xlu0 %v171, 2
  %v196 = vpop.permute.xlu0 %195
  %197 = vrot.lane.b32.xlu0 %v172, 2
  %v198 = vpop.permute.xlu0 %197
  %v199 = vsel %vm173, %v196, %v198
  %203 = vst.msk [vmem:[#allocation2 + $0x18] sm:$0xff] %vm187, %v196
  %204 = vst [vmem:[#allocation2 + $0x20] sm:$0xff] %v199
  %205 = vst.msk [vmem:[#allocation2 + $0x28] sm:$0xff] %vm173, %v198
  %v206 = vld [vmem:[%s3] sm:$0xff]
  %v207 = vld [vmem:[#allocation2] sm:$0xff]
  %v208 = vld [vmem:[#allocation2 + $0x8] sm:$0xff]
  %v209 = vld [vmem:[#allocation2 + $0x10] sm:$0xff]
  %v210 = vld [vmem:[#allocation2 + $0x18] sm:$0xff]
  %v211 = vld [vmem:[#allocation2 + $0x20] sm:$0xff]
  %s212 = scalar_lea.vmem %s3, 8
  %v213 = vld [vmem:[%s212] sm:$0xff]
  %219 = vrot.lane.b32.xlu0 %v207, 127
  %v220 = vpop.permute.xlu0 %219
  %221 = vrot.lane.b32.xlu0 %v208, 127
  %v222 = vpop.permute.xlu0 %221
  %223 = vrot.lane.b32.xlu0 %v209, 127
  %v224 = vpop.permute.xlu0 %223
  %225 = vrot.lane.b32.xlu0 %v210, 127
  %v226 = vpop.permute.xlu0 %225
  %227 = vrot.lane.b32.xlu0 %v211, 127
  %v228 = vpop.permute.xlu0 %227
  %vm229 = vcmask 1039360
  %v230 = vsel %vm229, %v220, %v222
  %v231 = vsel %vm229, %v222, %v224
  %v232 = vsel %vm229, %v224, %v226
  %v233 = vsel %vm229, %v226, %v228
  %vm239 = vcmask 64512
  %v241 = vsel %vm239, %v213, 0
  %243 = vmatprep.subr.mxu0 0.0
  %244 = vmatpush1.msra.mxu0 0.0
  %245 = vmatprep.subr.mxu0 0.0
  %246 = vmatpush1.msra.mxu0 0.0
  %247 = vmatprep.subr.mxu0 0.0
  %248 = vmatpush1.msra.mxu0 0.0
  %249 = vmatprep.subr.mxu0 0.0
  %250 = vmatpush1.msra.mxu0 0.0
  %251 = vmatprep.subr.mxu0 0.0
  %252 = vmatpush1.msra.mxu0 0.0
  %253 = vmatprep.subr.mxu0 0.0
  %254 = vmatpush1.msra.mxu0 0.0
  %255 = vmatprep.subr.mxu0 0.0
  %256 = vmatpush1.msra.mxu0 0.0
  %257 = vmatprep.subr.mxu0 0.0
  %258 = vmatpush1.msra.mxu0 0.0
  %259 = vmatprep.subr.mxu0 0.0
  %260 = vmatpush1.msra.mxu0 0.0
  %261 = vmatprep.subr.mxu0 0.0
  %262 = vmatpush1.msra.mxu0 0.0
  %263 = vmatprep.subr.mxu0 0.0
  %264 = vmatpush1.msra.mxu0 0.0
  %265 = vmatprep.subr.mxu0 0.0
  %266 = vmatpush1.msra.mxu0 0.0
  %267 = vmatprep.subr.mxu0 0.0
  %268 = vmatpush1.msra.mxu0 0.0
  %269 = vmatprep.subr.mxu0 0.0
  %270 = vmatpush1.msra.mxu0 0.0
  %271 = vmatprep.subr.mxu0 0.0
  %272 = vmatpush1.msra.mxu0 0.0
  %273 = vmatprep.subr.mxu0 %v231
  %274 = vmatpush1.msra.mxu0 %v230
  %275 = vmatprep.subr.mxu0 0.0
  %276 = vmatpush2.msra.mxu0 0.0
  %277 = vmatprep.subr.mxu0 0.0
  %278 = vmatpush2.msra.mxu0 0.0
  %279 = vmatprep.subr.mxu0 0.0
  %280 = vmatpush2.msra.mxu0 0.0
  %281 = vmatprep.subr.mxu0 0.0
  %282 = vmatpush2.msra.mxu0 0.0
  %283 = vmatprep.subr.mxu0 0.0
  %284 = vmatpush2.msra.mxu0 0.0
  %285 = vmatprep.subr.mxu0 0.0
  %286 = vmatpush2.msra.mxu0 0.0
  %287 = vmatprep.subr.mxu0 0.0
  %288 = vmatpush2.msra.mxu0 0.0
  %289 = vmatprep.subr.mxu0 0.0
  %290 = vmatpush2.msra.mxu0 0.0
  %291 = vmatprep.subr.mxu0 0.0
  %292 = vmatpush2.msra.mxu0 0.0
  %293 = vmatprep.subr.mxu0 0.0
  %294 = vmatpush2.msra.mxu0 0.0
  %295 = vmatprep.subr.mxu0 0.0
  %296 = vmatpush2.msra.mxu0 0.0
  %297 = vmatprep.subr.mxu0 0.0
  %298 = vmatpush2.msra.mxu0 0.0
  %299 = vmatprep.subr.mxu0 0.0
  %300 = vmatpush2.msra.mxu0 0.0
  %301 = vmatprep.subr.mxu0 0.0
  %302 = vmatpush2.msra.mxu0 0.0
  %303 = vmatprep.subr.mxu0 0.0
  %304 = vmatpush2.msra.mxu0 0.0
  %305 = vmatprep.subr.mxu0 0.0
  %306 = vmatpush2.msra.mxu0 0.0
  %307 = vmatprep.mubr.f32.mxu0 0.0
  %308 = vmatmul.mubr.f32.gmra.mxu0 %v241
  %v309 = vpop.f32.mrf.mxu0
  %v310 = vadd.f32 0.0, %v309
  %v311 = vpop.f32.mrf.mxu0
  %v312 = vadd.f32 0.0, %v311
  %313 = vdwg.mxu0
  %314 = vmatprep.subr.mxu0 0.0
  %315 = vmatpush1.msra.mxu0 0.0
  %316 = vmatprep.subr.mxu0 0.0
  %317 = vmatpush1.msra.mxu0 0.0
  %318 = vmatprep.subr.mxu0 0.0
  %319 = vmatpush1.msra.mxu0 0.0
  %320 = vmatprep.subr.mxu0 0.0
  %321 = vmatpush1.msra.mxu0 0.0
  %322 = vmatprep.subr.mxu0 0.0
  %323 = vmatpush1.msra.mxu0 0.0
  %324 = vmatprep.subr.mxu0 0.0
  %325 = vmatpush1.msra.mxu0 0.0
  %326 = vmatprep.subr.mxu0 0.0
  %327 = vmatpush1.msra.mxu0 0.0
  %328 = vmatprep.subr.mxu0 0.0
  %329 = vmatpush1.msra.mxu0 0.0
  %330 = vmatprep.subr.mxu0 0.0
  %331 = vmatpush1.msra.mxu0 0.0
  %332 = vmatprep.subr.mxu0 0.0
  %333 = vmatpush1.msra.mxu0 0.0
  %334 = vmatprep.subr.mxu0 0.0
  %335 = vmatpush1.msra.mxu0 0.0
  %336 = vmatprep.subr.mxu0 0.0
  %337 = vmatpush1.msra.mxu0 0.0
  %338 = vmatprep.subr.mxu0 0.0
  %339 = vmatpush1.msra.mxu0 0.0
  %340 = vmatprep.subr.mxu0 0.0
  %341 = vmatpush1.msra.mxu0 0.0
  %342 = vmatprep.subr.mxu0 0.0
  %343 = vmatpush1.msra.mxu0 0.0
  %344 = vmatprep.subr.mxu0 %v233
  %345 = vmatpush1.msra.mxu0 %v232
  %346 = vmatprep.subr.mxu0 0.0
  %347 = vmatpush2.msra.mxu0 0.0
  %348 = vmatprep.subr.mxu0 0.0
  %349 = vmatpush2.msra.mxu0 0.0
  %350 = vmatprep.subr.mxu0 0.0
  %351 = vmatpush2.msra.mxu0 0.0
  %352 = vmatprep.subr.mxu0 0.0
  %353 = vmatpush2.msra.mxu0 0.0
  %354 = vmatprep.subr.mxu0 0.0
  %355 = vmatpush2.msra.mxu0 0.0
  %356 = vmatprep.subr.mxu0 0.0
  %357 = vmatpush2.msra.mxu0 0.0
  %358 = vmatprep.subr.mxu0 0.0
  %359 = vmatpush2.msra.mxu0 0.0
  %360 = vmatprep.subr.mxu0 0.0
  %361 = vmatpush2.msra.mxu0 0.0
  %362 = vmatprep.subr.mxu0 0.0
  %363 = vmatpush2.msra.mxu0 0.0
  %364 = vmatprep.subr.mxu0 0.0
  %365 = vmatpush2.msra.mxu0 0.0
  %366 = vmatprep.subr.mxu0 0.0
  %367 = vmatpush2.msra.mxu0 0.0
  %368 = vmatprep.subr.mxu0 0.0
  %369 = vmatpush2.msra.mxu0 0.0
  %370 = vmatprep.subr.mxu0 0.0
  %371 = vmatpush2.msra.mxu0 0.0
  %372 = vmatprep.subr.mxu0 0.0
  %373 = vmatpush2.msra.mxu0 0.0
  %374 = vmatprep.subr.mxu0 0.0
  %375 = vmatpush2.msra.mxu0 0.0
  %376 = vmatprep.subr.mxu0 0.0
  %377 = vmatpush2.msra.mxu0 0.0
  %378 = vmatprep.mubr.f32.mxu0 0.0
  %379 = vmatmul.mubr.f32.gmra.mxu0 %v241
  %v380 = vpop.f32.mrf.mxu0
  %v381 = vpop.f32.mrf.mxu0
  %v382 = vadd.f32 0.0, %v381
  %383 = vdwg.mxu0
  %384 = vmatprep.subr.mxu0 0.0
  %385 = vmatpush1.msra.mxu0 0.0
  %386 = vmatprep.subr.mxu0 0.0
  %387 = vmatpush1.msra.mxu0 0.0
  %388 = vmatprep.subr.mxu0 0.0
  %389 = vmatpush1.msra.mxu0 0.0
  %390 = vmatprep.subr.mxu0 0.0
  %391 = vmatpush1.msra.mxu0 0.0
  %392 = vmatprep.subr.mxu0 0.0
  %393 = vmatpush1.msra.mxu0 0.0
  %394 = vmatprep.subr.mxu0 0.0
  %395 = vmatpush1.msra.mxu0 0.0
  %396 = vmatprep.subr.mxu0 0.0
  %397 = vmatpush1.msra.mxu0 0.0
  %398 = vmatprep.subr.mxu0 0.0
  %399 = vmatpush1.msra.mxu0 0.0
  %400 = vmatprep.subr.mxu0 0.0
  %401 = vmatpush1.msra.mxu0 0.0
  %402 = vmatprep.subr.mxu0 0.0
  %403 = vmatpush1.msra.mxu0 0.0
  %404 = vmatprep.subr.mxu0 0.0
  %405 = vmatpush1.msra.mxu0 0.0
  %406 = vmatprep.subr.mxu0 0.0
  %407 = vmatpush1.msra.mxu0 0.0
  %408 = vmatprep.subr.mxu0 0.0
  %409 = vmatpush1.msra.mxu0 0.0
  %410 = vmatprep.subr.mxu0 0.0
  %411 = vmatpush1.msra.mxu0 0.0
  %412 = vmatprep.subr.mxu0 0.0
  %413 = vmatpush1.msra.mxu0 0.0
  %414 = vmatprep.subr.mxu0 0.0
  %415 = vmatpush1.msra.mxu0 %v228
  %416 = vmatprep.subr.mxu0 0.0
  %417 = vmatpush2.msra.mxu0 0.0
  %418 = vmatprep.subr.mxu0 0.0
  %419 = vmatpush2.msra.mxu0 0.0
  %420 = vmatprep.subr.mxu0 0.0
  %421 = vmatpush2.msra.mxu0 0.0
  %422 = vmatprep.subr.mxu0 0.0
  %423 = vmatpush2.msra.mxu0 0.0
  %424 = vmatprep.subr.mxu0 0.0
  %425 = vmatpush2.msra.mxu0 0.0
  %426 = vmatprep.subr.mxu0 0.0
  %427 = vmatpush2.msra.mxu0 0.0
  %428 = vmatprep.subr.mxu0 0.0
  %429 = vmatpush2.msra.mxu0 0.0
  %430 = vmatprep.subr.mxu0 0.0
  %431 = vmatpush2.msra.mxu0 0.0
  %432 = vmatprep.subr.mxu0 0.0
  %433 = vmatpush2.msra.mxu0 0.0
  %434 = vmatprep.subr.mxu0 0.0
  %435 = vmatpush2.msra.mxu0 0.0
  %436 = vmatprep.subr.mxu0 0.0
  %437 = vmatpush2.msra.mxu0 0.0
  %438 = vmatprep.subr.mxu0 0.0
  %439 = vmatpush2.msra.mxu0 0.0
  %440 = vmatprep.subr.mxu0 0.0
  %441 = vmatpush2.msra.mxu0 0.0
  %442 = vmatprep.subr.mxu0 0.0
  %443 = vmatpush2.msra.mxu0 0.0
  %444 = vmatprep.subr.mxu0 0.0
  %445 = vmatpush2.msra.mxu0 0.0
  %446 = vmatprep.subr.mxu0 0.0
  %447 = vmatpush2.msra.mxu0 0.0
  %448 = vmatprep.mubr.f32.mxu0 0.0
  %449 = vmatmul.mubr.f32.gmra.mxu0 %v241
  %v450 = vpop.f32.mrf.mxu0
  %v451 = vadd.f32 0.0, %v450
  %v452 = vpop.f32.mrf.mxu0
  %453 = vdwg.mxu0
  %v455 = vsel %vm239, %v206, 0
  %457 = vmatprep.subr.mxu0 0.0
  %458 = vmatpush1.msra.mxu0 0.0
  %459 = vmatprep.subr.mxu0 0.0
  %460 = vmatpush1.msra.mxu0 0.0
  %461 = vmatprep.subr.mxu0 0.0
  %462 = vmatpush1.msra.mxu0 0.0
  %463 = vmatprep.subr.mxu0 0.0
  %464 = vmatpush1.msra.mxu0 0.0
  %465 = vmatprep.subr.mxu0 0.0
  %466 = vmatpush1.msra.mxu0 0.0
  %467 = vmatprep.subr.mxu0 0.0
  %468 = vmatpush1.msra.mxu0 0.0
  %469 = vmatprep.subr.mxu0 0.0
  %470 = vmatpush1.msra.mxu0 0.0
  %471 = vmatprep.subr.mxu0 0.0
  %472 = vmatpush1.msra.mxu0 0.0
  %473 = vmatprep.subr.mxu0 0.0
  %474 = vmatpush1.msra.mxu0 0.0
  %475 = vmatprep.subr.mxu0 0.0
  %476 = vmatpush1.msra.mxu0 0.0
  %477 = vmatprep.subr.mxu0 0.0
  %478 = vmatpush1.msra.mxu0 0.0
  %479 = vmatprep.subr.mxu0 0.0
  %480 = vmatpush1.msra.mxu0 0.0
  %481 = vmatprep.subr.mxu0 0.0
  %482 = vmatpush1.msra.mxu0 0.0
  %483 = vmatprep.subr.mxu0 0.0
  %484 = vmatpush1.msra.mxu0 0.0
  %485 = vmatprep.subr.mxu0 0.0
  %486 = vmatpush1.msra.mxu0 0.0
  %487 = vmatprep.subr.mxu0 %v208
  %488 = vmatpush1.msra.mxu0 %v207
  %489 = vmatprep.subr.mxu0 0.0
  %490 = vmatpush2.msra.mxu0 0.0
  %491 = vmatprep.subr.mxu0 0.0
  %492 = vmatpush2.msra.mxu0 0.0
  %493 = vmatprep.subr.mxu0 0.0
  %494 = vmatpush2.msra.mxu0 0.0
  %495 = vmatprep.subr.mxu0 0.0
  %496 = vmatpush2.msra.mxu0 0.0
  %497 = vmatprep.subr.mxu0 0.0
  %498 = vmatpush2.msra.mxu0 0.0
  %499 = vmatprep.subr.mxu0 0.0
  %500 = vmatpush2.msra.mxu0 0.0
  %501 = vmatprep.subr.mxu0 0.0
  %502 = vmatpush2.msra.mxu0 0.0
  %503 = vmatprep.subr.mxu0 0.0
  %504 = vmatpush2.msra.mxu0 0.0
  %505 = vmatprep.subr.mxu0 0.0
  %506 = vmatpush2.msra.mxu0 0.0
  %507 = vmatprep.subr.mxu0 0.0
  %508 = vmatpush2.msra.mxu0 0.0
  %509 = vmatprep.subr.mxu0 0.0
  %510 = vmatpush2.msra.mxu0 0.0
  %511 = vmatprep.subr.mxu0 0.0
  %512 = vmatpush2.msra.mxu0 0.0
  %513 = vmatprep.subr.mxu0 0.0
  %514 = vmatpush2.msra.mxu0 0.0
  %515 = vmatprep.subr.mxu0 0.0
  %516 = vmatpush2.msra.mxu0 0.0
  %517 = vmatprep.subr.mxu0 0.0
  %518 = vmatpush2.msra.mxu0 0.0
  %519 = vmatprep.subr.mxu0 0.0
  %520 = vmatpush2.msra.mxu0 0.0
  %521 = vmatprep.mubr.f32.mxu0 0.0
  %522 = vmatmul.mubr.f32.gmra.mxu0 %v455
  %v523 = vpop.f32.mrf.mxu0
  %v524 = vadd.f32 %v310, %v523
  %v525 = vpop.f32.mrf.mxu0
  %v526 = vadd.f32 %v312, %v525
  %527 = vdwg.mxu0
  %528 = vmatprep.subr.mxu0 0.0
  %529 = vmatpush1.msra.mxu0 0.0
  %530 = vmatprep.subr.mxu0 0.0
  %531 = vmatpush1.msra.mxu0 0.0
  %532 = vmatprep.subr.mxu0 0.0
  %533 = vmatpush1.msra.mxu0 0.0
  %534 = vmatprep.subr.mxu0 0.0
  %535 = vmatpush1.msra.mxu0 0.0
  %536 = vmatprep.subr.mxu0 0.0
  %537 = vmatpush1.msra.mxu0 0.0
  %538 = vmatprep.subr.mxu0 0.0
  %539 = vmatpush1.msra.mxu0 0.0
  %540 = vmatprep.subr.mxu0 0.0
  %541 = vmatpush1.msra.mxu0 0.0
  %542 = vmatprep.subr.mxu0 0.0
  %543 = vmatpush1.msra.mxu0 0.0
  %544 = vmatprep.subr.mxu0 0.0
  %545 = vmatpush1.msra.mxu0 0.0
  %546 = vmatprep.subr.mxu0 0.0
  %547 = vmatpush1.msra.mxu0 0.0
  %548 = vmatprep.subr.mxu0 0.0
  %549 = vmatpush1.msra.mxu0 0.0
  %550 = vmatprep.subr.mxu0 0.0
  %551 = vmatpush1.msra.mxu0 0.0
  %552 = vmatprep.subr.mxu0 0.0
  %553 = vmatpush1.msra.mxu0 0.0
  %554 = vmatprep.subr.mxu0 0.0
  %555 = vmatpush1.msra.mxu0 0.0
  %556 = vmatprep.subr.mxu0 0.0
  %557 = vmatpush1.msra.mxu0 0.0
  %558 = vmatprep.subr.mxu0 %v210
  %559 = vmatpush1.msra.mxu0 %v209
  %560 = vmatprep.subr.mxu0 0.0
  %561 = vmatpush2.msra.mxu0 0.0
  %562 = vmatprep.subr.mxu0 0.0
  %563 = vmatpush2.msra.mxu0 0.0
  %564 = vmatprep.subr.mxu0 0.0
  %565 = vmatpush2.msra.mxu0 0.0
  %566 = vmatprep.subr.mxu0 0.0
  %567 = vmatpush2.msra.mxu0 0.0
  %568 = vmatprep.subr.mxu0 0.0
  %569 = vmatpush2.msra.mxu0 0.0
  %570 = vmatprep.subr.mxu0 0.0
  %571 = vmatpush2.msra.mxu0 0.0
  %572 = vmatprep.subr.mxu0 0.0
  %573 = vmatpush2.msra.mxu0 0.0
  %574 = vmatprep.subr.mxu0 0.0
  %575 = vmatpush2.msra.mxu0 0.0
  %576 = vmatprep.subr.mxu0 0.0
  %577 = vmatpush2.msra.mxu0 0.0
  %578 = vmatprep.subr.mxu0 0.0
  %579 = vmatpush2.msra.mxu0 0.0
  %580 = vmatprep.subr.mxu0 0.0
  %581 = vmatpush2.msra.mxu0 0.0
  %582 = vmatprep.subr.mxu0 0.0
  %583 = vmatpush2.msra.mxu0 0.0
  %584 = vmatprep.subr.mxu0 0.0
  %585 = vmatpush2.msra.mxu0 0.0
  %586 = vmatprep.subr.mxu0 0.0
  %587 = vmatpush2.msra.mxu0 0.0
  %588 = vmatprep.subr.mxu0 0.0
  %589 = vmatpush2.msra.mxu0 0.0
  %590 = vmatprep.subr.mxu0 0.0
  %591 = vmatpush2.msra.mxu0 0.0
  %592 = vmatprep.mubr.f32.mxu0 0.0
  %593 = vmatmul.mubr.f32.gmra.mxu0 %v455
  %v594 = vpop.f32.mrf.mxu0
  %v595 = vpop.f32.mrf.mxu0
  %v596 = vadd.f32 %v382, %v595
  %597 = vdwg.mxu0
  %598 = vmatprep.subr.mxu0 0.0
  %599 = vmatpush1.msra.mxu0 0.0
  %600 = vmatprep.subr.mxu0 0.0
  %601 = vmatpush1.msra.mxu0 0.0
  %602 = vmatprep.subr.mxu0 0.0
  %603 = vmatpush1.msra.mxu0 0.0
  %604 = vmatprep.subr.mxu0 0.0
  %605 = vmatpush1.msra.mxu0 0.0
  %606 = vmatprep.subr.mxu0 0.0
  %607 = vmatpush1.msra.mxu0 0.0
  %608 = vmatprep.subr.mxu0 0.0
  %609 = vmatpush1.msra.mxu0 0.0
  %610 = vmatprep.subr.mxu0 0.0
  %611 = vmatpush1.msra.mxu0 0.0
  %612 = vmatprep.subr.mxu0 0.0
  %613 = vmatpush1.msra.mxu0 0.0
  %614 = vmatprep.subr.mxu0 0.0
  %615 = vmatpush1.msra.mxu0 0.0
  %616 = vmatprep.subr.mxu0 0.0
  %617 = vmatpush1.msra.mxu0 0.0
  %618 = vmatprep.subr.mxu0 0.0
  %619 = vmatpush1.msra.mxu0 0.0
  %620 = vmatprep.subr.mxu0 0.0
  %621 = vmatpush1.msra.mxu0 0.0
  %622 = vmatprep.subr.mxu0 0.0
  %623 = vmatpush1.msra.mxu0 0.0
  %624 = vmatprep.subr.mxu0 0.0
  %625 = vmatpush1.msra.mxu0 0.0
  %626 = vmatprep.subr.mxu0 0.0
  %627 = vmatpush1.msra.mxu0 0.0
  %628 = vmatprep.subr.mxu0 0.0
  %629 = vmatpush1.msra.mxu0 %v211
  %630 = vmatprep.subr.mxu0 0.0
  %631 = vmatpush2.msra.mxu0 0.0
  %632 = vmatprep.subr.mxu0 0.0
  %633 = vmatpush2.msra.mxu0 0.0
  %634 = vmatprep.subr.mxu0 0.0
  %635 = vmatpush2.msra.mxu0 0.0
  %636 = vmatprep.subr.mxu0 0.0
  %637 = vmatpush2.msra.mxu0 0.0
  %638 = vmatprep.subr.mxu0 0.0
  %639 = vmatpush2.msra.mxu0 0.0
  %640 = vmatprep.subr.mxu0 0.0
  %641 = vmatpush2.msra.mxu0 0.0
  %642 = vmatprep.subr.mxu0 0.0
  %643 = vmatpush2.msra.mxu0 0.0
  %644 = vmatprep.subr.mxu0 0.0
  %645 = vmatpush2.msra.mxu0 0.0
  %646 = vmatprep.subr.mxu0 0.0
  %647 = vmatpush2.msra.mxu0 0.0
  %648 = vmatprep.subr.mxu0 0.0
  %649 = vmatpush2.msra.mxu0 0.0
  %650 = vmatprep.subr.mxu0 0.0
  %651 = vmatpush2.msra.mxu0 0.0
  %652 = vmatprep.subr.mxu0 0.0
  %653 = vmatpush2.msra.mxu0 0.0
  %654 = vmatprep.subr.mxu0 0.0
  %655 = vmatpush2.msra.mxu0 0.0
  %656 = vmatprep.subr.mxu0 0.0
  %657 = vmatpush2.msra.mxu0 0.0
  %658 = vmatprep.subr.mxu0 0.0
  %659 = vmatpush2.msra.mxu0 0.0
  %660 = vmatprep.subr.mxu0 0.0
  %661 = vmatpush2.msra.mxu0 0.0
  %662 = vmatprep.mubr.f32.mxu0 0.0
  %663 = vmatmul.mubr.f32.gmra.mxu0 %v455
  %v664 = vpop.f32.mrf.mxu0
  %v665 = vadd.f32 %v451, %v664
  %v666 = vpop.f32.mrf.mxu0
  %667 = vdwg.mxu0
  %s668 = scalar_lea.vmem %s3, 16
  %v669 = vld [vmem:[%s668] sm:$0xff]
  %670 = vrot.lane.b32.xlu0 %v207, 126
  %v671 = vpop.permute.xlu0 %670
  %672 = vrot.lane.b32.xlu0 %v208, 126
  %v673 = vpop.permute.xlu0 %672
  %674 = vrot.lane.b32.xlu0 %v209, 126
  %v675 = vpop.permute.xlu0 %674
  %676 = vrot.lane.b32.xlu0 %v210, 126
  %v677 = vpop.permute.xlu0 %676
  %678 = vrot.lane.b32.xlu0 %v211, 126
  %v679 = vpop.permute.xlu0 %678
  %vm680 = vcmask 1031168
  %v681 = vsel %vm680, %v671, %v673
  %v682 = vsel %vm680, %v673, %v675
  %v683 = vsel %vm680, %v675, %v677
  %v684 = vsel %vm680, %v677, %v679
  %v691 = vsel %vm239, %v669, 0
  %693 = vmatprep.subr.mxu0 0.0
  %694 = vmatpush1.msra.mxu0 0.0
  %695 = vmatprep.subr.mxu0 0.0
  %696 = vmatpush1.msra.mxu0 0.0
  %697 = vmatprep.subr.mxu0 0.0
  %698 = vmatpush1.msra.mxu0 0.0
  %699 = vmatprep.subr.mxu0 0.0
  %700 = vmatpush1.msra.mxu0 0.0
  %701 = vmatprep.subr.mxu0 0.0
  %702 = vmatpush1.msra.mxu0 0.0
  %703 = vmatprep.subr.mxu0 0.0
  %704 = vmatpush1.msra.mxu0 0.0
  %705 = vmatprep.subr.mxu0 0.0
  %706 = vmatpush1.msra.mxu0 0.0
  %707 = vmatprep.subr.mxu0 0.0
  %708 = vmatpush1.msra.mxu0 0.0
  %709 = vmatprep.subr.mxu0 0.0
  %710 = vmatpush1.msra.mxu0 0.0
  %711 = vmatprep.subr.mxu0 0.0
  %712 = vmatpush1.msra.mxu0 0.0
  %713 = vmatprep.subr.mxu0 0.0
  %714 = vmatpush1.msra.mxu0 0.0
  %715 = vmatprep.subr.mxu0 0.0
  %716 = vmatpush1.msra.mxu0 0.0
  %717 = vmatprep.subr.mxu0 0.0
  %718 = vmatpush1.msra.mxu0 0.0
  %719 = vmatprep.subr.mxu0 0.0
  %720 = vmatpush1.msra.mxu0 0.0
  %721 = vmatprep.subr.mxu0 0.0
  %722 = vmatpush1.msra.mxu0 0.0
  %723 = vmatprep.subr.mxu0 %v682
  %724 = vmatpush1.msra.mxu0 %v681
  %725 = vmatprep.subr.mxu0 0.0
  %726 = vmatpush2.msra.mxu0 0.0
  %727 = vmatprep.subr.mxu0 0.0
  %728 = vmatpush2.msra.mxu0 0.0
  %729 = vmatprep.subr.mxu0 0.0
  %730 = vmatpush2.msra.mxu0 0.0
  %731 = vmatprep.subr.mxu0 0.0
  %732 = vmatpush2.msra.mxu0 0.0
  %733 = vmatprep.subr.mxu0 0.0
  %734 = vmatpush2.msra.mxu0 0.0
  %735 = vmatprep.subr.mxu0 0.0
  %736 = vmatpush2.msra.mxu0 0.0
  %737 = vmatprep.subr.mxu0 0.0
  %738 = vmatpush2.msra.mxu0 0.0
  %739 = vmatprep.subr.mxu0 0.0
  %740 = vmatpush2.msra.mxu0 0.0
  %741 = vmatprep.subr.mxu0 0.0
  %742 = vmatpush2.msra.mxu0 0.0
  %743 = vmatprep.subr.mxu0 0.0
  %744 = vmatpush2.msra.mxu0 0.0
  %745 = vmatprep.subr.mxu0 0.0
  %746 = vmatpush2.msra.mxu0 0.0
  %747 = vmatprep.subr.mxu0 0.0
  %748 = vmatpush2.msra.mxu0 0.0
  %749 = vmatprep.subr.mxu0 0.0
  %750 = vmatpush2.msra.mxu0 0.0
  %751 = vmatprep.subr.mxu0 0.0
  %752 = vmatpush2.msra.mxu0 0.0
  %753 = vmatprep.subr.mxu0 0.0
  %754 = vmatpush2.msra.mxu0 0.0
  %755 = vmatprep.subr.mxu0 0.0
  %756 = vmatpush2.msra.mxu0 0.0
  %757 = vmatprep.mubr.f32.mxu0 0.0
  %758 = vmatmul.mubr.f32.gmra.mxu0 %v691
  %v759 = vpop.f32.mrf.mxu0
  %v760 = vadd.f32 0.0, %v759
  %v761 = vpop.f32.mrf.mxu0
  %v762 = vadd.f32 0.0, %v761
  %763 = vdwg.mxu0
  %764 = vmatprep.subr.mxu0 0.0
  %765 = vmatpush1.msra.mxu0 0.0
  %766 = vmatprep.subr.mxu0 0.0
  %767 = vmatpush1.msra.mxu0 0.0
  %768 = vmatprep.subr.mxu0 0.0
  %769 = vmatpush1.msra.mxu0 0.0
  %770 = vmatprep.subr.mxu0 0.0
  %771 = vmatpush1.msra.mxu0 0.0
  %772 = vmatprep.subr.mxu0 0.0
  %773 = vmatpush1.msra.mxu0 0.0
  %774 = vmatprep.subr.mxu0 0.0
  %775 = vmatpush1.msra.mxu0 0.0
  %776 = vmatprep.subr.mxu0 0.0
  %777 = vmatpush1.msra.mxu0 0.0
  %778 = vmatprep.subr.mxu0 0.0
  %779 = vmatpush1.msra.mxu0 0.0
  %780 = vmatprep.subr.mxu0 0.0
  %781 = vmatpush1.msra.mxu0 0.0
  %782 = vmatprep.subr.mxu0 0.0
  %783 = vmatpush1.msra.mxu0 0.0
  %784 = vmatprep.subr.mxu0 0.0
  %785 = vmatpush1.msra.mxu0 0.0
  %786 = vmatprep.subr.mxu0 0.0
  %787 = vmatpush1.msra.mxu0 0.0
  %788 = vmatprep.subr.mxu0 0.0
  %789 = vmatpush1.msra.mxu0 0.0
  %790 = vmatprep.subr.mxu0 0.0
  %791 = vmatpush1.msra.mxu0 0.0
  %792 = vmatprep.subr.mxu0 0.0
  %793 = vmatpush1.msra.mxu0 0.0
  %794 = vmatprep.subr.mxu0 %v684
  %795 = vmatpush1.msra.mxu0 %v683
  %796 = vmatprep.subr.mxu0 0.0
  %797 = vmatpush2.msra.mxu0 0.0
  %798 = vmatprep.subr.mxu0 0.0
  %799 = vmatpush2.msra.mxu0 0.0
  %800 = vmatprep.subr.mxu0 0.0
  %801 = vmatpush2.msra.mxu0 0.0
  %802 = vmatprep.subr.mxu0 0.0
  %803 = vmatpush2.msra.mxu0 0.0
  %804 = vmatprep.subr.mxu0 0.0
  %805 = vmatpush2.msra.mxu0 0.0
  %806 = vmatprep.subr.mxu0 0.0
  %807 = vmatpush2.msra.mxu0 0.0
  %808 = vmatprep.subr.mxu0 0.0
  %809 = vmatpush2.msra.mxu0 0.0
  %810 = vmatprep.subr.mxu0 0.0
  %811 = vmatpush2.msra.mxu0 0.0
  %812 = vmatprep.subr.mxu0 0.0
  %813 = vmatpush2.msra.mxu0 0.0
  %814 = vmatprep.subr.mxu0 0.0
  %815 = vmatpush2.msra.mxu0 0.0
  %816 = vmatprep.subr.mxu0 0.0
  %817 = vmatpush2.msra.mxu0 0.0
  %818 = vmatprep.subr.mxu0 0.0
  %819 = vmatpush2.msra.mxu0 0.0
  %820 = vmatprep.subr.mxu0 0.0
  %821 = vmatpush2.msra.mxu0 0.0
  %822 = vmatprep.subr.mxu0 0.0
  %823 = vmatpush2.msra.mxu0 0.0
  %824 = vmatprep.subr.mxu0 0.0
  %825 = vmatpush2.msra.mxu0 0.0
  %826 = vmatprep.subr.mxu0 0.0
  %827 = vmatpush2.msra.mxu0 0.0
  %828 = vmatprep.mubr.f32.mxu0 0.0
  %829 = vmatmul.mubr.f32.gmra.mxu0 %v691
  %v830 = vpop.f32.mrf.mxu0
  %v831 = vpop.f32.mrf.mxu0
  %v832 = vadd.f32 0.0, %v831
  %833 = vdwg.mxu0
  %834 = vmatprep.subr.mxu0 0.0
  %835 = vmatpush1.msra.mxu0 0.0
  %836 = vmatprep.subr.mxu0 0.0
  %837 = vmatpush1.msra.mxu0 0.0
  %838 = vmatprep.subr.mxu0 0.0
  %839 = vmatpush1.msra.mxu0 0.0
  %840 = vmatprep.subr.mxu0 0.0
  %841 = vmatpush1.msra.mxu0 0.0
  %842 = vmatprep.subr.mxu0 0.0
  %843 = vmatpush1.msra.mxu0 0.0
  %844 = vmatprep.subr.mxu0 0.0
  %845 = vmatpush1.msra.mxu0 0.0
  %846 = vmatprep.subr.mxu0 0.0
  %847 = vmatpush1.msra.mxu0 0.0
  %848 = vmatprep.subr.mxu0 0.0
  %849 = vmatpush1.msra.mxu0 0.0
  %850 = vmatprep.subr.mxu0 0.0
  %851 = vmatpush1.msra.mxu0 0.0
  %852 = vmatprep.subr.mxu0 0.0
  %853 = vmatpush1.msra.mxu0 0.0
  %854 = vmatprep.subr.mxu0 0.0
  %855 = vmatpush1.msra.mxu0 0.0
  %856 = vmatprep.subr.mxu0 0.0
  %857 = vmatpush1.msra.mxu0 0.0
  %858 = vmatprep.subr.mxu0 0.0
  %859 = vmatpush1.msra.mxu0 0.0
  %860 = vmatprep.subr.mxu0 0.0
  %861 = vmatpush1.msra.mxu0 0.0
  %862 = vmatprep.subr.mxu0 0.0
  %863 = vmatpush1.msra.mxu0 0.0
  %864 = vmatprep.subr.mxu0 0.0
  %865 = vmatpush1.msra.mxu0 %v679
  %866 = vmatprep.subr.mxu0 0.0
  %867 = vmatpush2.msra.mxu0 0.0
  %868 = vmatprep.subr.mxu0 0.0
  %869 = vmatpush2.msra.mxu0 0.0
  %870 = vmatprep.subr.mxu0 0.0
  %871 = vmatpush2.msra.mxu0 0.0
  %872 = vmatprep.subr.mxu0 0.0
  %873 = vmatpush2.msra.mxu0 0.0
  %874 = vmatprep.subr.mxu0 0.0
  %875 = vmatpush2.msra.mxu0 0.0
  %876 = vmatprep.subr.mxu0 0.0
  %877 = vmatpush2.msra.mxu0 0.0
  %878 = vmatprep.subr.mxu0 0.0
  %879 = vmatpush2.msra.mxu0 0.0
  %880 = vmatprep.subr.mxu0 0.0
  %881 = vmatpush2.msra.mxu0 0.0
  %882 = vmatprep.subr.mxu0 0.0
  %883 = vmatpush2.msra.mxu0 0.0
  %884 = vmatprep.subr.mxu0 0.0
  %885 = vmatpush2.msra.mxu0 0.0
  %886 = vmatprep.subr.mxu0 0.0
  %887 = vmatpush2.msra.mxu0 0.0
  %888 = vmatprep.subr.mxu0 0.0
  %889 = vmatpush2.msra.mxu0 0.0
  %890 = vmatprep.subr.mxu0 0.0
  %891 = vmatpush2.msra.mxu0 0.0
  %892 = vmatprep.subr.mxu0 0.0
  %893 = vmatpush2.msra.mxu0 0.0
  %894 = vmatprep.subr.mxu0 0.0
  %895 = vmatpush2.msra.mxu0 0.0
  %896 = vmatprep.subr.mxu0 0.0
  %897 = vmatpush2.msra.mxu0 0.0
  %898 = vmatprep.mubr.f32.mxu0 0.0
  %899 = vmatmul.mubr.f32.gmra.mxu0 %v691
  %v900 = vpop.f32.mrf.mxu0
  %v901 = vadd.f32 0.0, %v900
  %v902 = vpop.f32.mrf.mxu0
  %903 = vdwg.mxu0
  %v904 = vadd.f32 %v524, %v760
  %v905 = vadd.f32 %v526, %v762
  %v906 = vadd.f32 %v596, %v832
  %v907 = vadd.f32 %v665, %v901
  %s908 = scalar_lea.vmem %s3, 24
  %v909 = vld [vmem:[%s908] sm:$0xff]
  %910 = vrot.lane.b32.xlu0 %v207, 125
  %v911 = vpop.permute.xlu0 %910
  %912 = vrot.lane.b32.xlu0 %v208, 125
  %v913 = vpop.permute.xlu0 %912
  %914 = vrot.lane.b32.xlu0 %v209, 125
  %v915 = vpop.permute.xlu0 %914
  %916 = vrot.lane.b32.xlu0 %v210, 125
  %v917 = vpop.permute.xlu0 %916
  %918 = vrot.lane.b32.xlu0 %v211, 125
  %v919 = vpop.permute.xlu0 %918
  %vm920 = vcmask 1022976
  %v921 = vsel %vm920, %v911, %v913
  %v922 = vsel %vm920, %v913, %v915
  %v923 = vsel %vm920, %v915, %v917
  %v924 = vsel %vm920, %v917, %v919
  %v931 = vsel %vm239, %v909, 0
  %933 = vmatprep.subr.mxu0 0.0
  %934 = vmatpush1.msra.mxu0 0.0
  %935 = vmatprep.subr.mxu0 0.0
  %936 = vmatpush1.msra.mxu0 0.0
  %937 = vmatprep.subr.mxu0 0.0
  %938 = vmatpush1.msra.mxu0 0.0
  %939 = vmatprep.subr.mxu0 0.0
  %940 = vmatpush1.msra.mxu0 0.0
  %941 = vmatprep.subr.mxu0 0.0
  %942 = vmatpush1.msra.mxu0 0.0
  %943 = vmatprep.subr.mxu0 0.0
  %944 = vmatpush1.msra.mxu0 0.0
  %945 = vmatprep.subr.mxu0 0.0
  %946 = vmatpush1.msra.mxu0 0.0
  %947 = vmatprep.subr.mxu0 0.0
  %948 = vmatpush1.msra.mxu0 0.0
  %949 = vmatprep.subr.mxu0 0.0
  %950 = vmatpush1.msra.mxu0 0.0
  %951 = vmatprep.subr.mxu0 0.0
  %952 = vmatpush1.msra.mxu0 0.0
  %953 = vmatprep.subr.mxu0 0.0
  %954 = vmatpush1.msra.mxu0 0.0
  %955 = vmatprep.subr.mxu0 0.0
  %956 = vmatpush1.msra.mxu0 0.0
  %957 = vmatprep.subr.mxu0 0.0
  %958 = vmatpush1.msra.mxu0 0.0
  %959 = vmatprep.subr.mxu0 0.0
  %960 = vmatpush1.msra.mxu0 0.0
  %961 = vmatprep.subr.mxu0 0.0
  %962 = vmatpush1.msra.mxu0 0.0
  %963 = vmatprep.subr.mxu0 %v922
  %964 = vmatpush1.msra.mxu0 %v921
  %965 = vmatprep.subr.mxu0 0.0
  %966 = vmatpush2.msra.mxu0 0.0
  %967 = vmatprep.subr.mxu0 0.0
  %968 = vmatpush2.msra.mxu0 0.0
  %969 = vmatprep.subr.mxu0 0.0
  %970 = vmatpush2.msra.mxu0 0.0
  %971 = vmatprep.subr.mxu0 0.0
  %972 = vmatpush2.msra.mxu0 0.0
  %973 = vmatprep.subr.mxu0 0.0
  %974 = vmatpush2.msra.mxu0 0.0
  %975 = vmatprep.subr.mxu0 0.0
  %976 = vmatpush2.msra.mxu0 0.0
  %977 = vmatprep.subr.mxu0 0.0
  %978 = vmatpush2.msra.mxu0 0.0
  %979 = vmatprep.subr.mxu0 0.0
  %980 = vmatpush2.msra.mxu0 0.0
  %981 = vmatprep.subr.mxu0 0.0
  %982 = vmatpush2.msra.mxu0 0.0
  %983 = vmatprep.subr.mxu0 0.0
  %984 = vmatpush2.msra.mxu0 0.0
  %985 = vmatprep.subr.mxu0 0.0
  %986 = vmatpush2.msra.mxu0 0.0
  %987 = vmatprep.subr.mxu0 0.0
  %988 = vmatpush2.msra.mxu0 0.0
  %989 = vmatprep.subr.mxu0 0.0
  %990 = vmatpush2.msra.mxu0 0.0
  %991 = vmatprep.subr.mxu0 0.0
  %992 = vmatpush2.msra.mxu0 0.0
  %993 = vmatprep.subr.mxu0 0.0
  %994 = vmatpush2.msra.mxu0 0.0
  %995 = vmatprep.subr.mxu0 0.0
  %996 = vmatpush2.msra.mxu0 0.0
  %997 = vmatprep.mubr.f32.mxu0 0.0
  %998 = vmatmul.mubr.f32.gmra.mxu0 %v931
  %v999 = vpop.f32.mrf.mxu0
  %v1000 = vadd.f32 0.0, %v999
  %v1001 = vpop.f32.mrf.mxu0
  %v1002 = vadd.f32 0.0, %v1001
  %1003 = vdwg.mxu0
  %1004 = vmatprep.subr.mxu0 0.0
  %1005 = vmatpush1.msra.mxu0 0.0
  %1006 = vmatprep.subr.mxu0 0.0
  %1007 = vmatpush1.msra.mxu0 0.0
  %1008 = vmatprep.subr.mxu0 0.0
  %1009 = vmatpush1.msra.mxu0 0.0
  %1010 = vmatprep.subr.mxu0 0.0
  %1011 = vmatpush1.msra.mxu0 0.0
  %1012 = vmatprep.subr.mxu0 0.0
  %1013 = vmatpush1.msra.mxu0 0.0
  %1014 = vmatprep.subr.mxu0 0.0
  %1015 = vmatpush1.msra.mxu0 0.0
  %1016 = vmatprep.subr.mxu0 0.0
  %1017 = vmatpush1.msra.mxu0 0.0
  %1018 = vmatprep.subr.mxu0 0.0
  %1019 = vmatpush1.msra.mxu0 0.0
  %1020 = vmatprep.subr.mxu0 0.0
  %1021 = vmatpush1.msra.mxu0 0.0
  %1022 = vmatprep.subr.mxu0 0.0
  %1023 = vmatpush1.msra.mxu0 0.0
  %1024 = vmatprep.subr.mxu0 0.0
  %1025 = vmatpush1.msra.mxu0 0.0
  %1026 = vmatprep.subr.mxu0 0.0
  %1027 = vmatpush1.msra.mxu0 0.0
  %1028 = vmatprep.subr.mxu0 0.0
  %1029 = vmatpush1.msra.mxu0 0.0
  %1030 = vmatprep.subr.mxu0 0.0
  %1031 = vmatpush1.msra.mxu0 0.0
  %1032 = vmatprep.subr.mxu0 0.0
  %1033 = vmatpush1.msra.mxu0 0.0
  %1034 = vmatprep.subr.mxu0 %v924
  %1035 = vmatpush1.msra.mxu0 %v923
  %1036 = vmatprep.subr.mxu0 0.0
  %1037 = vmatpush2.msra.mxu0 0.0
  %1038 = vmatprep.subr.mxu0 0.0
  %1039 = vmatpush2.msra.mxu0 0.0
  %1040 = vmatprep.subr.mxu0 0.0
  %1041 = vmatpush2.msra.mxu0 0.0
  %1042 = vmatprep.subr.mxu0 0.0
  %1043 = vmatpush2.msra.mxu0 0.0
  %1044 = vmatprep.subr.mxu0 0.0
  %1045 = vmatpush2.msra.mxu0 0.0
  %1046 = vmatprep.subr.mxu0 0.0
  %1047 = vmatpush2.msra.mxu0 0.0
  %1048 = vmatprep.subr.mxu0 0.0
  %1049 = vmatpush2.msra.mxu0 0.0
  %1050 = vmatprep.subr.mxu0 0.0
  %1051 = vmatpush2.msra.mxu0 0.0
  %1052 = vmatprep.subr.mxu0 0.0
  %1053 = vmatpush2.msra.mxu0 0.0
  %1054 = vmatprep.subr.mxu0 0.0
  %1055 = vmatpush2.msra.mxu0 0.0
  %1056 = vmatprep.subr.mxu0 0.0
  %1057 = vmatpush2.msra.mxu0 0.0
  %1058 = vmatprep.subr.mxu0 0.0
  %1059 = vmatpush2.msra.mxu0 0.0
  %1060 = vmatprep.subr.mxu0 0.0
  %1061 = vmatpush2.msra.mxu0 0.0
  %1062 = vmatprep.subr.mxu0 0.0
  %1063 = vmatpush2.msra.mxu0 0.0
  %1064 = vmatprep.subr.mxu0 0.0
  %1065 = vmatpush2.msra.mxu0 0.0
  %1066 = vmatprep.subr.mxu0 0.0
  %1067 = vmatpush2.msra.mxu0 0.0
  %1068 = vmatprep.mubr.f32.mxu0 0.0
  %1069 = vmatmul.mubr.f32.gmra.mxu0 %v931
  %v1070 = vpop.f32.mrf.mxu0
  %v1071 = vpop.f32.mrf.mxu0
  %v1072 = vadd.f32 0.0, %v1071
  %1073 = vdwg.mxu0
  %1074 = vmatprep.subr.mxu0 0.0
  %1075 = vmatpush1.msra.mxu0 0.0
  %1076 = vmatprep.subr.mxu0 0.0
  %1077 = vmatpush1.msra.mxu0 0.0
  %1078 = vmatprep.subr.mxu0 0.0
  %1079 = vmatpush1.msra.mxu0 0.0
  %1080 = vmatprep.subr.mxu0 0.0
  %1081 = vmatpush1.msra.mxu0 0.0
  %1082 = vmatprep.subr.mxu0 0.0
  %1083 = vmatpush1.msra.mxu0 0.0
  %1084 = vmatprep.subr.mxu0 0.0
  %1085 = vmatpush1.msra.mxu0 0.0
  %1086 = vmatprep.subr.mxu0 0.0
  %1087 = vmatpush1.msra.mxu0 0.0
  %1088 = vmatprep.subr.mxu0 0.0
  %1089 = vmatpush1.msra.mxu0 0.0
  %1090 = vmatprep.subr.mxu0 0.0
  %1091 = vmatpush1.msra.mxu0 0.0
  %1092 = vmatprep.subr.mxu0 0.0
  %1093 = vmatpush1.msra.mxu0 0.0
  %1094 = vmatprep.subr.mxu0 0.0
  %1095 = vmatpush1.msra.mxu0 0.0
  %1096 = vmatprep.subr.mxu0 0.0
  %1097 = vmatpush1.msra.mxu0 0.0
  %1098 = vmatprep.subr.mxu0 0.0
  %1099 = vmatpush1.msra.mxu0 0.0
  %1100 = vmatprep.subr.mxu0 0.0
  %1101 = vmatpush1.msra.mxu0 0.0
  %1102 = vmatprep.subr.mxu0 0.0
  %1103 = vmatpush1.msra.mxu0 0.0
  %1104 = vmatprep.subr.mxu0 0.0
  %1105 = vmatpush1.msra.mxu0 %v919
  %1106 = vmatprep.subr.mxu0 0.0
  %1107 = vmatpush2.msra.mxu0 0.0
  %1108 = vmatprep.subr.mxu0 0.0
  %1109 = vmatpush2.msra.mxu0 0.0
  %1110 = vmatprep.subr.mxu0 0.0
  %1111 = vmatpush2.msra.mxu0 0.0
  %1112 = vmatprep.subr.mxu0 0.0
  %1113 = vmatpush2.msra.mxu0 0.0
  %1114 = vmatprep.subr.mxu0 0.0
  %1115 = vmatpush2.msra.mxu0 0.0
  %1116 = vmatprep.subr.mxu0 0.0
  %1117 = vmatpush2.msra.mxu0 0.0
  %1118 = vmatprep.subr.mxu0 0.0
  %1119 = vmatpush2.msra.mxu0 0.0
  %1120 = vmatprep.subr.mxu0 0.0
  %1121 = vmatpush2.msra.mxu0 0.0
  %1122 = vmatprep.subr.mxu0 0.0
  %1123 = vmatpush2.msra.mxu0 0.0
  %1124 = vmatprep.subr.mxu0 0.0
  %1125 = vmatpush2.msra.mxu0 0.0
  %1126 = vmatprep.subr.mxu0 0.0
  %1127 = vmatpush2.msra.mxu0 0.0
  %1128 = vmatprep.subr.mxu0 0.0
  %1129 = vmatpush2.msra.mxu0 0.0
  %1130 = vmatprep.subr.mxu0 0.0
  %1131 = vmatpush2.msra.mxu0 0.0
  %1132 = vmatprep.subr.mxu0 0.0
  %1133 = vmatpush2.msra.mxu0 0.0
  %1134 = vmatprep.subr.mxu0 0.0
  %1135 = vmatpush2.msra.mxu0 0.0
  %1136 = vmatprep.subr.mxu0 0.0
  %1137 = vmatpush2.msra.mxu0 0.0
  %1138 = vmatprep.mubr.f32.mxu0 0.0
  %1139 = vmatmul.mubr.f32.gmra.mxu0 %v931
  %v1140 = vpop.f32.mrf.mxu0
  %v1141 = vadd.f32 0.0, %v1140
  %v1142 = vpop.f32.mrf.mxu0
  %1143 = vdwg.mxu0
  %v1144 = vadd.f32 %v904, %v1000
  %v1145 = vadd.f32 %v905, %v1002
  %v1146 = vadd.f32 %v906, %v1072
  %v1147 = vadd.f32 %v907, %v1141
  %s1148 = scalar_lea.vmem %s3, 32
  %v1149 = vld [vmem:[%s1148] sm:$0xff]
  %v1150 = vld [vmem:[#allocation2] sm:$0xff]
  %v1151 = vld [vmem:[#allocation2 + $0x8] sm:$0xff]
  %v1152 = vld [vmem:[#allocation2 + $0x10] sm:$0xff]
  %v1153 = vld [vmem:[#allocation2 + $0x18] sm:$0xff]
  %v1154 = vld [vmem:[#allocation2 + $0x20] sm:$0xff]
  %v1155 = vld [vmem:[#allocation2 + $0x28] sm:$0xff]
  %1162 = vrot.lane.b32.xlu0 %v1150, 124
  %v1163 = vpop.permute.xlu0 %1162
  %1164 = vrot.lane.b32.xlu0 %v1151, 124
  %v1165 = vpop.permute.xlu0 %1164
  %1166 = vrot.lane.b32.xlu0 %v1152, 124
  %v1167 = vpop.permute.xlu0 %1166
  %1168 = vrot.lane.b32.xlu0 %v1153, 124
  %v1169 = vpop.permute.xlu0 %1168
  %1170 = vrot.lane.b32.xlu0 %v1154, 124
  %v1171 = vpop.permute.xlu0 %1170
  %1172 = vrot.lane.b32.xlu0 %v1155, 124
  %v1173 = vpop.permute.xlu0 %1172
  %vm1174 = vcmask 1014784
  %v1175 = vsel %vm1174, %v1163, %v1165
  %v1176 = vsel %vm1174, %v1165, %v1167
  %v1177 = vsel %vm1174, %v1167, %v1169
  %v1178 = vsel %vm1174, %v1169, %v1171
  %v1179 = vsel %vm1174, %v1171, %v1173
  %v1186 = vsel %vm239, %v1149, 0
  %1188 = vmatprep.subr.mxu0 0.0
  %1189 = vmatpush1.msra.mxu0 0.0
  %1190 = vmatprep.subr.mxu0 0.0
  %1191 = vmatpush1.msra.mxu0 0.0
  %1192 = vmatprep.subr.mxu0 0.0
  %1193 = vmatpush1.msra.mxu0 0.0
  %1194 = vmatprep.subr.mxu0 0.0
  %1195 = vmatpush1.msra.mxu0 0.0
  %1196 = vmatprep.subr.mxu0 0.0
  %1197 = vmatpush1.msra.mxu0 0.0
  %1198 = vmatprep.subr.mxu0 0.0
  %1199 = vmatpush1.msra.mxu0 0.0
  %1200 = vmatprep.subr.mxu0 0.0
  %1201 = vmatpush1.msra.mxu0 0.0
  %1202 = vmatprep.subr.mxu0 0.0
  %1203 = vmatpush1.msra.mxu0 0.0
  %1204 = vmatprep.subr.mxu0 0.0
  %1205 = vmatpush1.msra.mxu0 0.0
  %1206 = vmatprep.subr.mxu0 0.0
  %1207 = vmatpush1.msra.mxu0 0.0
  %1208 = vmatprep.subr.mxu0 0.0
  %1209 = vmatpush1.msra.mxu0 0.0
  %1210 = vmatprep.subr.mxu0 0.0
  %1211 = vmatpush1.msra.mxu0 0.0
  %1212 = vmatprep.subr.mxu0 0.0
  %1213 = vmatpush1.msra.mxu0 0.0
  %1214 = vmatprep.subr.mxu0 0.0
  %1215 = vmatpush1.msra.mxu0 0.0
  %1216 = vmatprep.subr.mxu0 0.0
  %1217 = vmatpush1.msra.mxu0 0.0
  %1218 = vmatprep.subr.mxu0 %v1176
  %1219 = vmatpush1.msra.mxu0 %v1175
  %1220 = vmatprep.subr.mxu0 0.0
  %1221 = vmatpush2.msra.mxu0 0.0
  %1222 = vmatprep.subr.mxu0 0.0
  %1223 = vmatpush2.msra.mxu0 0.0
  %1224 = vmatprep.subr.mxu0 0.0
  %1225 = vmatpush2.msra.mxu0 0.0
  %1226 = vmatprep.subr.mxu0 0.0
  %1227 = vmatpush2.msra.mxu0 0.0
  %1228 = vmatprep.subr.mxu0 0.0
  %1229 = vmatpush2.msra.mxu0 0.0
  %1230 = vmatprep.subr.mxu0 0.0
  %1231 = vmatpush2.msra.mxu0 0.0
  %1232 = vmatprep.subr.mxu0 0.0
  %1233 = vmatpush2.msra.mxu0 0.0
  %1234 = vmatprep.subr.mxu0 0.0
  %1235 = vmatpush2.msra.mxu0 0.0
  %1236 = vmatprep.subr.mxu0 0.0
  %1237 = vmatpush2.msra.mxu0 0.0
  %1238 = vmatprep.subr.mxu0 0.0
  %1239 = vmatpush2.msra.mxu0 0.0
  %1240 = vmatprep.subr.mxu0 0.0
  %1241 = vmatpush2.msra.mxu0 0.0
  %1242 = vmatprep.subr.mxu0 0.0
  %1243 = vmatpush2.msra.mxu0 0.0
  %1244 = vmatprep.subr.mxu0 0.0
  %1245 = vmatpush2.msra.mxu0 0.0
  %1246 = vmatprep.subr.mxu0 0.0
  %1247 = vmatpush2.msra.mxu0 0.0
  %1248 = vmatprep.subr.mxu0 0.0
  %1249 = vmatpush2.msra.mxu0 0.0
  %1250 = vmatprep.subr.mxu0 0.0
  %1251 = vmatpush2.msra.mxu0 0.0
  %1252 = vmatprep.mubr.f32.mxu0 0.0
  %1253 = vmatmul.mubr.f32.gmra.mxu0 %v1186
  %v1254 = vpop.f32.mrf.mxu0
  %v1255 = vadd.f32 0.0, %v1254
  %v1256 = vpop.f32.mrf.mxu0
  %v1257 = vadd.f32 0.0, %v1256
  %1258 = vdwg.mxu0
  %1259 = vmatprep.subr.mxu0 0.0
  %1260 = vmatpush1.msra.mxu0 0.0
  %1261 = vmatprep.subr.mxu0 0.0
  %1262 = vmatpush1.msra.mxu0 0.0
  %1263 = vmatprep.subr.mxu0 0.0
  %1264 = vmatpush1.msra.mxu0 0.0
  %1265 = vmatprep.subr.mxu0 0.0
  %1266 = vmatpush1.msra.mxu0 0.0
  %1267 = vmatprep.subr.mxu0 0.0
  %1268 = vmatpush1.msra.mxu0 0.0
  %1269 = vmatprep.subr.mxu0 0.0
  %1270 = vmatpush1.msra.mxu0 0.0
  %1271 = vmatprep.subr.mxu0 0.0
  %1272 = vmatpush1.msra.mxu0 0.0
  %1273 = vmatprep.subr.mxu0 0.0
  %1274 = vmatpush1.msra.mxu0 0.0
  %1275 = vmatprep.subr.mxu0 0.0
  %1276 = vmatpush1.msra.mxu0 0.0
  %1277 = vmatprep.subr.mxu0 0.0
  %1278 = vmatpush1.msra.mxu0 0.0
  %1279 = vmatprep.subr.mxu0 0.0
  %1280 = vmatpush1.msra.mxu0 0.0
  %1281 = vmatprep.subr.mxu0 0.0
  %1282 = vmatpush1.msra.mxu0 0.0
  %1283 = vmatprep.subr.mxu0 0.0
  %1284 = vmatpush1.msra.mxu0 0.0
  %1285 = vmatprep.subr.mxu0 0.0
  %1286 = vmatpush1.msra.mxu0 0.0
  %1287 = vmatprep.subr.mxu0 0.0
  %1288 = vmatpush1.msra.mxu0 0.0
  %1289 = vmatprep.subr.mxu0 %v1178
  %1290 = vmatpush1.msra.mxu0 %v1177
  %1291 = vmatprep.subr.mxu0 0.0
  %1292 = vmatpush2.msra.mxu0 0.0
  %1293 = vmatprep.subr.mxu0 0.0
  %1294 = vmatpush2.msra.mxu0 0.0
  %1295 = vmatprep.subr.mxu0 0.0
  %1296 = vmatpush2.msra.mxu0 0.0
  %1297 = vmatprep.subr.mxu0 0.0
  %1298 = vmatpush2.msra.mxu0 0.0
  %1299 = vmatprep.subr.mxu0 0.0
  %1300 = vmatpush2.msra.mxu0 0.0
  %1301 = vmatprep.subr.mxu0 0.0
  %1302 = vmatpush2.msra.mxu0 0.0
  %1303 = vmatprep.subr.mxu0 0.0
  %1304 = vmatpush2.msra.mxu0 0.0
  %1305 = vmatprep.subr.mxu0 0.0
  %1306 = vmatpush2.msra.mxu0 0.0
  %1307 = vmatprep.subr.mxu0 0.0
  %1308 = vmatpush2.msra.mxu0 0.0
  %1309 = vmatprep.subr.mxu0 0.0
  %1310 = vmatpush2.msra.mxu0 0.0
  %1311 = vmatprep.subr.mxu0 0.0
  %1312 = vmatpush2.msra.mxu0 0.0
  %1313 = vmatprep.subr.mxu0 0.0
  %1314 = vmatpush2.msra.mxu0 0.0
  %1315 = vmatprep.subr.mxu0 0.0
  %1316 = vmatpush2.msra.mxu0 0.0
  %1317 = vmatprep.subr.mxu0 0.0
  %1318 = vmatpush2.msra.mxu0 0.0
  %1319 = vmatprep.subr.mxu0 0.0
  %1320 = vmatpush2.msra.mxu0 0.0
  %1321 = vmatprep.subr.mxu0 0.0
  %1322 = vmatpush2.msra.mxu0 0.0
  %1323 = vmatprep.mubr.f32.mxu0 0.0
  %1324 = vmatmul.mubr.f32.gmra.mxu0 %v1186
  %v1325 = vpop.f32.mrf.mxu0
  %v1326 = vpop.f32.mrf.mxu0
  %v1327 = vadd.f32 0.0, %v1326
  %1328 = vdwg.mxu0
  %1329 = vmatprep.subr.mxu0 0.0
  %1330 = vmatpush1.msra.mxu0 0.0
  %1331 = vmatprep.subr.mxu0 0.0
  %1332 = vmatpush1.msra.mxu0 0.0
  %1333 = vmatprep.subr.mxu0 0.0
  %1334 = vmatpush1.msra.mxu0 0.0
  %1335 = vmatprep.subr.mxu0 0.0
  %1336 = vmatpush1.msra.mxu0 0.0
  %1337 = vmatprep.subr.mxu0 0.0
  %1338 = vmatpush1.msra.mxu0 0.0
  %1339 = vmatprep.subr.mxu0 0.0
  %1340 = vmatpush1.msra.mxu0 0.0
  %1341 = vmatprep.subr.mxu0 0.0
  %1342 = vmatpush1.msra.mxu0 0.0
  %1343 = vmatprep.subr.mxu0 0.0
  %1344 = vmatpush1.msra.mxu0 0.0
  %1345 = vmatprep.subr.mxu0 0.0
  %1346 = vmatpush1.msra.mxu0 0.0
  %1347 = vmatprep.subr.mxu0 0.0
  %1348 = vmatpush1.msra.mxu0 0.0
  %1349 = vmatprep.subr.mxu0 0.0
  %1350 = vmatpush1.msra.mxu0 0.0
  %1351 = vmatprep.subr.mxu0 0.0
  %1352 = vmatpush1.msra.mxu0 0.0
  %1353 = vmatprep.subr.mxu0 0.0
  %1354 = vmatpush1.msra.mxu0 0.0
  %1355 = vmatprep.subr.mxu0 0.0
  %1356 = vmatpush1.msra.mxu0 0.0
  %1357 = vmatprep.subr.mxu0 0.0
  %1358 = vmatpush1.msra.mxu0 0.0
  %1359 = vmatprep.subr.mxu0 0.0
  %1360 = vmatpush1.msra.mxu0 %v1179
  %1361 = vmatprep.subr.mxu0 0.0
  %1362 = vmatpush2.msra.mxu0 0.0
  %1363 = vmatprep.subr.mxu0 0.0
  %1364 = vmatpush2.msra.mxu0 0.0
  %1365 = vmatprep.subr.mxu0 0.0
  %1366 = vmatpush2.msra.mxu0 0.0
  %1367 = vmatprep.subr.mxu0 0.0
  %1368 = vmatpush2.msra.mxu0 0.0
  %1369 = vmatprep.subr.mxu0 0.0
  %1370 = vmatpush2.msra.mxu0 0.0
  %1371 = vmatprep.subr.mxu0 0.0
  %1372 = vmatpush2.msra.mxu0 0.0
  %1373 = vmatprep.subr.mxu0 0.0
  %1374 = vmatpush2.msra.mxu0 0.0
  %1375 = vmatprep.subr.mxu0 0.0
  %1376 = vmatpush2.msra.mxu0 0.0
  %1377 = vmatprep.subr.mxu0 0.0
  %1378 = vmatpush2.msra.mxu0 0.0
  %1379 = vmatprep.subr.mxu0 0.0
  %1380 = vmatpush2.msra.mxu0 0.0
  %1381 = vmatprep.subr.mxu0 0.0
  %1382 = vmatpush2.msra.mxu0 0.0
  %1383 = vmatprep.subr.mxu0 0.0
  %1384 = vmatpush2.msra.mxu0 0.0
  %1385 = vmatprep.subr.mxu0 0.0
  %1386 = vmatpush2.msra.mxu0 0.0
  %1387 = vmatprep.subr.mxu0 0.0
  %1388 = vmatpush2.msra.mxu0 0.0
  %1389 = vmatprep.subr.mxu0 0.0
  %1390 = vmatpush2.msra.mxu0 0.0
  %1391 = vmatprep.subr.mxu0 0.0
  %1392 = vmatpush2.msra.mxu0 0.0
  %1393 = vmatprep.mubr.f32.mxu0 0.0
  %1394 = vmatmul.mubr.f32.gmra.mxu0 %v1186
  %v1395 = vpop.f32.mrf.mxu0
  %v1396 = vadd.f32 0.0, %v1395
  %v1397 = vpop.f32.mrf.mxu0
  %1398 = vdwg.mxu0
  %v1399 = vadd.f32 %v1144, %v1255
  %v1400 = vadd.f32 %v1145, %v1257
  %v1401 = vadd.f32 %v1146, %v1327
  %v1402 = vadd.f32 %v1147, %v1396
  %s1403 = scalar_lea.vmem %s3, 40
  %v1404 = vld [vmem:[%s1403] sm:$0xff]
  %1405 = vrot.lane.b32.xlu0 %v1150, 123
  %v1406 = vpop.permute.xlu0 %1405
  %1407 = vrot.lane.b32.xlu0 %v1151, 123
  %v1408 = vpop.permute.xlu0 %1407
  %1409 = vrot.lane.b32.xlu0 %v1152, 123
  %v1410 = vpop.permute.xlu0 %1409
  %1411 = vrot.lane.b32.xlu0 %v1153, 123
  %v1412 = vpop.permute.xlu0 %1411
  %1413 = vrot.lane.b32.xlu0 %v1154, 123
  %v1414 = vpop.permute.xlu0 %1413
  %1415 = vrot.lane.b32.xlu0 %v1155, 123
  %v1416 = vpop.permute.xlu0 %1415
  %vm1417 = vcmask 1006592
  %v1418 = vsel %vm1417, %v1406, %v1408
  %v1419 = vsel %vm1417, %v1408, %v1410
  %v1420 = vsel %vm1417, %v1410, %v1412
  %v1421 = vsel %vm1417, %v1412, %v1414
  %v1422 = vsel %vm1417, %v1414, %v1416
  %v1429 = vsel %vm239, %v1404, 0
  %1431 = vmatprep.subr.mxu0 0.0
  %1432 = vmatpush1.msra.mxu0 0.0
  %1433 = vmatprep.subr.mxu0 0.0
  %1434 = vmatpush1.msra.mxu0 0.0
  %1435 = vmatprep.subr.mxu0 0.0
  %1436 = vmatpush1.msra.mxu0 0.0
  %1437 = vmatprep.subr.mxu0 0.0
  %1438 = vmatpush1.msra.mxu0 0.0
  %1439 = vmatprep.subr.mxu0 0.0
  %1440 = vmatpush1.msra.mxu0 0.0
  %1441 = vmatprep.subr.mxu0 0.0
  %1442 = vmatpush1.msra.mxu0 0.0
  %1443 = vmatprep.subr.mxu0 0.0
  %1444 = vmatpush1.msra.mxu0 0.0
  %1445 = vmatprep.subr.mxu0 0.0
  %1446 = vmatpush1.msra.mxu0 0.0
  %1447 = vmatprep.subr.mxu0 0.0
  %1448 = vmatpush1.msra.mxu0 0.0
  %1449 = vmatprep.subr.mxu0 0.0
  %1450 = vmatpush1.msra.mxu0 0.0
  %1451 = vmatprep.subr.mxu0 0.0
  %1452 = vmatpush1.msra.mxu0 0.0
  %1453 = vmatprep.subr.mxu0 0.0
  %1454 = vmatpush1.msra.mxu0 0.0
  %1455 = vmatprep.subr.mxu0 0.0
  %1456 = vmatpush1.msra.mxu0 0.0
  %1457 = vmatprep.subr.mxu0 0.0
  %1458 = vmatpush1.msra.mxu0 0.0
  %1459 = vmatprep.subr.mxu0 0.0
  %1460 = vmatpush1.msra.mxu0 0.0
  %1461 = vmatprep.subr.mxu0 %v1419
  %1462 = vmatpush1.msra.mxu0 %v1418
  %1463 = vmatprep.subr.mxu0 0.0
  %1464 = vmatpush2.msra.mxu0 0.0
  %1465 = vmatprep.subr.mxu0 0.0
  %1466 = vmatpush2.msra.mxu0 0.0
  %1467 = vmatprep.subr.mxu0 0.0
  %1468 = vmatpush2.msra.mxu0 0.0
  %1469 = vmatprep.subr.mxu0 0.0
  %1470 = vmatpush2.msra.mxu0 0.0
  %1471 = vmatprep.subr.mxu0 0.0
  %1472 = vmatpush2.msra.mxu0 0.0
  %1473 = vmatprep.subr.mxu0 0.0
  %1474 = vmatpush2.msra.mxu0 0.0
  %1475 = vmatprep.subr.mxu0 0.0
  %1476 = vmatpush2.msra.mxu0 0.0
  %1477 = vmatprep.subr.mxu0 0.0
  %1478 = vmatpush2.msra.mxu0 0.0
  %1479 = vmatprep.subr.mxu0 0.0
  %1480 = vmatpush2.msra.mxu0 0.0
  %1481 = vmatprep.subr.mxu0 0.0
  %1482 = vmatpush2.msra.mxu0 0.0
  %1483 = vmatprep.subr.mxu0 0.0
  %1484 = vmatpush2.msra.mxu0 0.0
  %1485 = vmatprep.subr.mxu0 0.0
  %1486 = vmatpush2.msra.mxu0 0.0
  %1487 = vmatprep.subr.mxu0 0.0
  %1488 = vmatpush2.msra.mxu0 0.0
  %1489 = vmatprep.subr.mxu0 0.0
  %1490 = vmatpush2.msra.mxu0 0.0
  %1491 = vmatprep.subr.mxu0 0.0
  %1492 = vmatpush2.msra.mxu0 0.0
  %1493 = vmatprep.subr.mxu0 0.0
  %1494 = vmatpush2.msra.mxu0 0.0
  %1495 = vmatprep.mubr.f32.mxu0 0.0
  %1496 = vmatmul.mubr.f32.gmra.mxu0 %v1429
  %v1497 = vpop.f32.mrf.mxu0
  %v1498 = vadd.f32 0.0, %v1497
  %v1499 = vpop.f32.mrf.mxu0
  %v1500 = vadd.f32 0.0, %v1499
  %1501 = vdwg.mxu0
  %1502 = vmatprep.subr.mxu0 0.0
  %1503 = vmatpush1.msra.mxu0 0.0
  %1504 = vmatprep.subr.mxu0 0.0
  %1505 = vmatpush1.msra.mxu0 0.0
  %1506 = vmatprep.subr.mxu0 0.0
  %1507 = vmatpush1.msra.mxu0 0.0
  %1508 = vmatprep.subr.mxu0 0.0
  %1509 = vmatpush1.msra.mxu0 0.0
  %1510 = vmatprep.subr.mxu0 0.0
  %1511 = vmatpush1.msra.mxu0 0.0
  %1512 = vmatprep.subr.mxu0 0.0
  %1513 = vmatpush1.msra.mxu0 0.0
  %1514 = vmatprep.subr.mxu0 0.0
  %1515 = vmatpush1.msra.mxu0 0.0
  %1516 = vmatprep.subr.mxu0 0.0
  %1517 = vmatpush1.msra.mxu0 0.0
  %1518 = vmatprep.subr.mxu0 0.0
  %1519 = vmatpush1.msra.mxu0 0.0
  %1520 = vmatprep.subr.mxu0 0.0
  %1521 = vmatpush1.msra.mxu0 0.0
  %1522 = vmatprep.subr.mxu0 0.0
  %1523 = vmatpush1.msra.mxu0 0.0
  %1524 = vmatprep.subr.mxu0 0.0
  %1525 = vmatpush1.msra.mxu0 0.0
  %1526 = vmatprep.subr.mxu0 0.0
  %1527 = vmatpush1.msra.mxu0 0.0
  %1528 = vmatprep.subr.mxu0 0.0
  %1529 = vmatpush1.msra.mxu0 0.0
  %1530 = vmatprep.subr.mxu0 0.0
  %1531 = vmatpush1.msra.mxu0 0.0
  %1532 = vmatprep.subr.mxu0 %v1421
  %1533 = vmatpush1.msra.mxu0 %v1420
  %1534 = vmatprep.subr.mxu0 0.0
  %1535 = vmatpush2.msra.mxu0 0.0
  %1536 = vmatprep.subr.mxu0 0.0
  %1537 = vmatpush2.msra.mxu0 0.0
  %1538 = vmatprep.subr.mxu0 0.0
  %1539 = vmatpush2.msra.mxu0 0.0
  %1540 = vmatprep.subr.mxu0 0.0
  %1541 = vmatpush2.msra.mxu0 0.0
  %1542 = vmatprep.subr.mxu0 0.0
  %1543 = vmatpush2.msra.mxu0 0.0
  %1544 = vmatprep.subr.mxu0 0.0
  %1545 = vmatpush2.msra.mxu0 0.0
  %1546 = vmatprep.subr.mxu0 0.0
  %1547 = vmatpush2.msra.mxu0 0.0
  %1548 = vmatprep.subr.mxu0 0.0
  %1549 = vmatpush2.msra.mxu0 0.0
  %1550 = vmatprep.subr.mxu0 0.0
  %1551 = vmatpush2.msra.mxu0 0.0
  %1552 = vmatprep.subr.mxu0 0.0
  %1553 = vmatpush2.msra.mxu0 0.0
  %1554 = vmatprep.subr.mxu0 0.0
  %1555 = vmatpush2.msra.mxu0 0.0
  %1556 = vmatprep.subr.mxu0 0.0
  %1557 = vmatpush2.msra.mxu0 0.0
  %1558 = vmatprep.subr.mxu0 0.0
  %1559 = vmatpush2.msra.mxu0 0.0
  %1560 = vmatprep.subr.mxu0 0.0
  %1561 = vmatpush2.msra.mxu0 0.0
  %1562 = vmatprep.subr.mxu0 0.0
  %1563 = vmatpush2.msra.mxu0 0.0
  %1564 = vmatprep.subr.mxu0 0.0
  %1565 = vmatpush2.msra.mxu0 0.0
  %1566 = vmatprep.mubr.f32.mxu0 0.0
  %1567 = vmatmul.mubr.f32.gmra.mxu0 %v1429
  %v1568 = vpop.f32.mrf.mxu0
  %v1569 = vpop.f32.mrf.mxu0
  %v1570 = vadd.f32 0.0, %v1569
  %1571 = vdwg.mxu0
  %1572 = vmatprep.subr.mxu0 0.0
  %1573 = vmatpush1.msra.mxu0 0.0
  %1574 = vmatprep.subr.mxu0 0.0
  %1575 = vmatpush1.msra.mxu0 0.0
  %1576 = vmatprep.subr.mxu0 0.0
  %1577 = vmatpush1.msra.mxu0 0.0
  %1578 = vmatprep.subr.mxu0 0.0
  %1579 = vmatpush1.msra.mxu0 0.0
  %1580 = vmatprep.subr.mxu0 0.0
  %1581 = vmatpush1.msra.mxu0 0.0
  %1582 = vmatprep.subr.mxu0 0.0
  %1583 = vmatpush1.msra.mxu0 0.0
  %1584 = vmatprep.subr.mxu0 0.0
  %1585 = vmatpush1.msra.mxu0 0.0
  %1586 = vmatprep.subr.mxu0 0.0
  %1587 = vmatpush1.msra.mxu0 0.0
  %1588 = vmatprep.subr.mxu0 0.0
  %1589 = vmatpush1.msra.mxu0 0.0
  %1590 = vmatprep.subr.mxu0 0.0
  %1591 = vmatpush1.msra.mxu0 0.0
  %1592 = vmatprep.subr.mxu0 0.0
  %1593 = vmatpush1.msra.mxu0 0.0
  %1594 = vmatprep.subr.mxu0 0.0
  %1595 = vmatpush1.msra.mxu0 0.0
  %1596 = vmatprep.subr.mxu0 0.0
  %1597 = vmatpush1.msra.mxu0 0.0
  %1598 = vmatprep.subr.mxu0 0.0
  %1599 = vmatpush1.msra.mxu0 0.0
  %1600 = vmatprep.subr.mxu0 0.0
  %1601 = vmatpush1.msra.mxu0 0.0
  %1602 = vmatprep.subr.mxu0 0.0
  %1603 = vmatpush1.msra.mxu0 %v1422
  %1604 = vmatprep.subr.mxu0 0.0
  %1605 = vmatpush2.msra.mxu0 0.0
  %1606 = vmatprep.subr.mxu0 0.0
  %1607 = vmatpush2.msra.mxu0 0.0
  %1608 = vmatprep.subr.mxu0 0.0
  %1609 = vmatpush2.msra.mxu0 0.0
  %1610 = vmatprep.subr.mxu0 0.0
  %1611 = vmatpush2.msra.mxu0 0.0
  %1612 = vmatprep.subr.mxu0 0.0
  %1613 = vmatpush2.msra.mxu0 0.0
  %1614 = vmatprep.subr.mxu0 0.0
  %1615 = vmatpush2.msra.mxu0 0.0
  %1616 = vmatprep.subr.mxu0 0.0
  %1617 = vmatpush2.msra.mxu0 0.0
  %1618 = vmatprep.subr.mxu0 0.0
  %1619 = vmatpush2.msra.mxu0 0.0
  %1620 = vmatprep.subr.mxu0 0.0
  %1621 = vmatpush2.msra.mxu0 0.0
  %1622 = vmatprep.subr.mxu0 0.0
  %1623 = vmatpush2.msra.mxu0 0.0
  %1624 = vmatprep.subr.mxu0 0.0
  %1625 = vmatpush2.msra.mxu0 0.0
  %1626 = vmatprep.subr.mxu0 0.0
  %1627 = vmatpush2.msra.mxu0 0.0
  %1628 = vmatprep.subr.mxu0 0.0
  %1629 = vmatpush2.msra.mxu0 0.0
  %1630 = vmatprep.subr.mxu0 0.0
  %1631 = vmatpush2.msra.mxu0 0.0
  %1632 = vmatprep.subr.mxu0 0.0
  %1633 = vmatpush2.msra.mxu0 0.0
  %1634 = vmatprep.subr.mxu0 0.0
  %1635 = vmatpush2.msra.mxu0 0.0
  %1636 = vmatprep.mubr.f32.mxu0 0.0
  %1637 = vmatmul.mubr.f32.gmra.mxu0 %v1429
  %v1638 = vpop.f32.mrf.mxu0
  %v1639 = vadd.f32 0.0, %v1638
  %v1640 = vpop.f32.mrf.mxu0
  %1641 = vdwg.mxu0
  %v1642 = vadd.f32 %v1399, %v1498
  %v1643 = vadd.f32 %v1400, %v1500
  %v1644 = vadd.f32 %v1401, %v1570
  %v1645 = vadd.f32 %v1402, %v1639
  %s1646 = scalar_lea.vmem %s3, 48
  %v1647 = vld [vmem:[%s1646] sm:$0xff]
  %1648 = vrot.lane.b32.xlu0 %v1150, 122
  %v1649 = vpop.permute.xlu0 %1648
  %1650 = vrot.lane.b32.xlu0 %v1151, 122
  %v1651 = vpop.permute.xlu0 %1650
  %1652 = vrot.lane.b32.xlu0 %v1152, 122
  %v1653 = vpop.permute.xlu0 %1652
  %1654 = vrot.lane.b32.xlu0 %v1153, 122
  %v1655 = vpop.permute.xlu0 %1654
  %1656 = vrot.lane.b32.xlu0 %v1154, 122
  %v1657 = vpop.permute.xlu0 %1656
  %1658 = vrot.lane.b32.xlu0 %v1155, 122
  %v1659 = vpop.permute.xlu0 %1658
  %vm1660 = vcmask 998400
  %v1661 = vsel %vm1660, %v1649, %v1651
  %v1662 = vsel %vm1660, %v1651, %v1653
  %v1663 = vsel %vm1660, %v1653, %v1655
  %v1664 = vsel %vm1660, %v1655, %v1657
  %v1665 = vsel %vm1660, %v1657, %v1659
  %v1672 = vsel %vm239, %v1647, 0
  %1674 = vmatprep.subr.mxu0 0.0
  %1675 = vmatpush1.msra.mxu0 0.0
  %1676 = vmatprep.subr.mxu0 0.0
  %1677 = vmatpush1.msra.mxu0 0.0
  %1678 = vmatprep.subr.mxu0 0.0
  %1679 = vmatpush1.msra.mxu0 0.0
  %1680 = vmatprep.subr.mxu0 0.0
  %1681 = vmatpush1.msra.mxu0 0.0
  %1682 = vmatprep.subr.mxu0 0.0
  %1683 = vmatpush1.msra.mxu0 0.0
  %1684 = vmatprep.subr.mxu0 0.0
  %1685 = vmatpush1.msra.mxu0 0.0
  %1686 = vmatprep.subr.mxu0 0.0
  %1687 = vmatpush1.msra.mxu0 0.0
  %1688 = vmatprep.subr.mxu0 0.0
  %1689 = vmatpush1.msra.mxu0 0.0
  %1690 = vmatprep.subr.mxu0 0.0
  %1691 = vmatpush1.msra.mxu0 0.0
  %1692 = vmatprep.subr.mxu0 0.0
  %1693 = vmatpush1.msra.mxu0 0.0
  %1694 = vmatprep.subr.mxu0 0.0
  %1695 = vmatpush1.msra.mxu0 0.0
  %1696 = vmatprep.subr.mxu0 0.0
  %1697 = vmatpush1.msra.mxu0 0.0
  %1698 = vmatprep.subr.mxu0 0.0
  %1699 = vmatpush1.msra.mxu0 0.0
  %1700 = vmatprep.subr.mxu0 0.0
  %1701 = vmatpush1.msra.mxu0 0.0
  %1702 = vmatprep.subr.mxu0 0.0
  %1703 = vmatpush1.msra.mxu0 0.0
  %1704 = vmatprep.subr.mxu0 %v1662
  %1705 = vmatpush1.msra.mxu0 %v1661
  %1706 = vmatprep.subr.mxu0 0.0
  %1707 = vmatpush2.msra.mxu0 0.0
  %1708 = vmatprep.subr.mxu0 0.0
  %1709 = vmatpush2.msra.mxu0 0.0
  %1710 = vmatprep.subr.mxu0 0.0
  %1711 = vmatpush2.msra.mxu0 0.0
  %1712 = vmatprep.subr.mxu0 0.0
  %1713 = vmatpush2.msra.mxu0 0.0
  %1714 = vmatprep.subr.mxu0 0.0
  %1715 = vmatpush2.msra.mxu0 0.0
  %1716 = vmatprep.subr.mxu0 0.0
  %1717 = vmatpush2.msra.mxu0 0.0
  %1718 = vmatprep.subr.mxu0 0.0
  %1719 = vmatpush2.msra.mxu0 0.0
  %1720 = vmatprep.subr.mxu0 0.0
  %1721 = vmatpush2.msra.mxu0 0.0
  %1722 = vmatprep.subr.mxu0 0.0
  %1723 = vmatpush2.msra.mxu0 0.0
  %1724 = vmatprep.subr.mxu0 0.0
  %1725 = vmatpush2.msra.mxu0 0.0
  %1726 = vmatprep.subr.mxu0 0.0
  %1727 = vmatpush2.msra.mxu0 0.0
  %1728 = vmatprep.subr.mxu0 0.0
  %1729 = vmatpush2.msra.mxu0 0.0
  %1730 = vmatprep.subr.mxu0 0.0
  %1731 = vmatpush2.msra.mxu0 0.0
  %1732 = vmatprep.subr.mxu0 0.0
  %1733 = vmatpush2.msra.mxu0 0.0
  %1734 = vmatprep.subr.mxu0 0.0
  %1735 = vmatpush2.msra.mxu0 0.0
  %1736 = vmatprep.subr.mxu0 0.0
  %1737 = vmatpush2.msra.mxu0 0.0
  %1738 = vmatprep.mubr.f32.mxu0 0.0
  %1739 = vmatmul.mubr.f32.gmra.mxu0 %v1672
  %v1740 = vpop.f32.mrf.mxu0
  %v1741 = vadd.f32 0.0, %v1740
  %v1742 = vpop.f32.mrf.mxu0
  %v1743 = vadd.f32 0.0, %v1742
  %1744 = vdwg.mxu0
  %1745 = vmatprep.subr.mxu0 0.0
  %1746 = vmatpush1.msra.mxu0 0.0
  %1747 = vmatprep.subr.mxu0 0.0
  %1748 = vmatpush1.msra.mxu0 0.0
  %1749 = vmatprep.subr.mxu0 0.0
  %1750 = vmatpush1.msra.mxu0 0.0
  %1751 = vmatprep.subr.mxu0 0.0
  %1752 = vmatpush1.msra.mxu0 0.0
  %1753 = vmatprep.subr.mxu0 0.0
  %1754 = vmatpush1.msra.mxu0 0.0
  %1755 = vmatprep.subr.mxu0 0.0
  %1756 = vmatpush1.msra.mxu0 0.0
  %1757 = vmatprep.subr.mxu0 0.0
  %1758 = vmatpush1.msra.mxu0 0.0
  %1759 = vmatprep.subr.mxu0 0.0
  %1760 = vmatpush1.msra.mxu0 0.0
  %1761 = vmatprep.subr.mxu0 0.0
  %1762 = vmatpush1.msra.mxu0 0.0
  %1763 = vmatprep.subr.mxu0 0.0
  %1764 = vmatpush1.msra.mxu0 0.0
  %1765 = vmatprep.subr.mxu0 0.0
  %1766 = vmatpush1.msra.mxu0 0.0
  %1767 = vmatprep.subr.mxu0 0.0
  %1768 = vmatpush1.msra.mxu0 0.0
  %1769 = vmatprep.subr.mxu0 0.0
  %1770 = vmatpush1.msra.mxu0 0.0
  %1771 = vmatprep.subr.mxu0 0.0
  %1772 = vmatpush1.msra.mxu0 0.0
  %1773 = vmatprep.subr.mxu0 0.0
  %1774 = vmatpush1.msra.mxu0 0.0
  %1775 = vmatprep.subr.mxu0 %v1664
  %1776 = vmatpush1.msra.mxu0 %v1663
  %1777 = vmatprep.subr.mxu0 0.0
  %1778 = vmatpush2.msra.mxu0 0.0
  %1779 = vmatprep.subr.mxu0 0.0
  %1780 = vmatpush2.msra.mxu0 0.0
  %1781 = vmatprep.subr.mxu0 0.0
  %1782 = vmatpush2.msra.mxu0 0.0
  %1783 = vmatprep.subr.mxu0 0.0
  %1784 = vmatpush2.msra.mxu0 0.0
  %1785 = vmatprep.subr.mxu0 0.0
  %1786 = vmatpush2.msra.mxu0 0.0
  %1787 = vmatprep.subr.mxu0 0.0
  %1788 = vmatpush2.msra.mxu0 0.0
  %1789 = vmatprep.subr.mxu0 0.0
  %1790 = vmatpush2.msra.mxu0 0.0
  %1791 = vmatprep.subr.mxu0 0.0
  %1792 = vmatpush2.msra.mxu0 0.0
  %1793 = vmatprep.subr.mxu0 0.0
  %1794 = vmatpush2.msra.mxu0 0.0
  %1795 = vmatprep.subr.mxu0 0.0
  %1796 = vmatpush2.msra.mxu0 0.0
  %1797 = vmatprep.subr.mxu0 0.0
  %1798 = vmatpush2.msra.mxu0 0.0
  %1799 = vmatprep.subr.mxu0 0.0
  %1800 = vmatpush2.msra.mxu0 0.0
  %1801 = vmatprep.subr.mxu0 0.0
  %1802 = vmatpush2.msra.mxu0 0.0
  %1803 = vmatprep.subr.mxu0 0.0
  %1804 = vmatpush2.msra.mxu0 0.0
  %1805 = vmatprep.subr.mxu0 0.0
  %1806 = vmatpush2.msra.mxu0 0.0
  %1807 = vmatprep.subr.mxu0 0.0
  %1808 = vmatpush2.msra.mxu0 0.0
  %1809 = vmatprep.mubr.f32.mxu0 0.0
  %1810 = vmatmul.mubr.f32.gmra.mxu0 %v1672
  %v1811 = vpop.f32.mrf.mxu0
  %v1812 = vpop.f32.mrf.mxu0
  %v1813 = vadd.f32 0.0, %v1812
  %1814 = vdwg.mxu0
  %1815 = vmatprep.subr.mxu0 0.0
  %1816 = vmatpush1.msra.mxu0 0.0
  %1817 = vmatprep.subr.mxu0 0.0
  %1818 = vmatpush1.msra.mxu0 0.0
  %1819 = vmatprep.subr.mxu0 0.0
  %1820 = vmatpush1.msra.mxu0 0.0
  %1821 = vmatprep.subr.mxu0 0.0
  %1822 = vmatpush1.msra.mxu0 0.0
  %1823 = vmatprep.subr.mxu0 0.0
  %1824 = vmatpush1.msra.mxu0 0.0
  %1825 = vmatprep.subr.mxu0 0.0
  %1826 = vmatpush1.msra.mxu0 0.0
  %1827 = vmatprep.subr.mxu0 0.0
  %1828 = vmatpush1.msra.mxu0 0.0
  %1829 = vmatprep.subr.mxu0 0.0
  %1830 = vmatpush1.msra.mxu0 0.0
  %1831 = vmatprep.subr.mxu0 0.0
  %1832 = vmatpush1.msra.mxu0 0.0
  %1833 = vmatprep.subr.mxu0 0.0
  %1834 = vmatpush1.msra.mxu0 0.0
  %1835 = vmatprep.subr.mxu0 0.0
  %1836 = vmatpush1.msra.mxu0 0.0
  %1837 = vmatprep.subr.mxu0 0.0
  %1838 = vmatpush1.msra.mxu0 0.0
  %1839 = vmatprep.subr.mxu0 0.0
  %1840 = vmatpush1.msra.mxu0 0.0
  %1841 = vmatprep.subr.mxu0 0.0
  %1842 = vmatpush1.msra.mxu0 0.0
  %1843 = vmatprep.subr.mxu0 0.0
  %1844 = vmatpush1.msra.mxu0 0.0
  %1845 = vmatprep.subr.mxu0 0.0
  %1846 = vmatpush1.msra.mxu0 %v1665
  %1847 = vmatprep.subr.mxu0 0.0
  %1848 = vmatpush2.msra.mxu0 0.0
  %1849 = vmatprep.subr.mxu0 0.0
  %1850 = vmatpush2.msra.mxu0 0.0
  %1851 = vmatprep.subr.mxu0 0.0
  %1852 = vmatpush2.msra.mxu0 0.0
  %1853 = vmatprep.subr.mxu0 0.0
  %1854 = vmatpush2.msra.mxu0 0.0
  %1855 = vmatprep.subr.mxu0 0.0
  %1856 = vmatpush2.msra.mxu0 0.0
  %1857 = vmatprep.subr.mxu0 0.0
  %1858 = vmatpush2.msra.mxu0 0.0
  %1859 = vmatprep.subr.mxu0 0.0
  %1860 = vmatpush2.msra.mxu0 0.0
  %1861 = vmatprep.subr.mxu0 0.0
  %1862 = vmatpush2.msra.mxu0 0.0
  %1863 = vmatprep.subr.mxu0 0.0
  %1864 = vmatpush2.msra.mxu0 0.0
  %1865 = vmatprep.subr.mxu0 0.0
  %1866 = vmatpush2.msra.mxu0 0.0
  %1867 = vmatprep.subr.mxu0 0.0
  %1868 = vmatpush2.msra.mxu0 0.0
  %1869 = vmatprep.subr.mxu0 0.0
  %1870 = vmatpush2.msra.mxu0 0.0
  %1871 = vmatprep.subr.mxu0 0.0
  %1872 = vmatpush2.msra.mxu0 0.0
  %1873 = vmatprep.subr.mxu0 0.0
  %1874 = vmatpush2.msra.mxu0 0.0
  %1875 = vmatprep.subr.mxu0 0.0
  %1876 = vmatpush2.msra.mxu0 0.0
  %1877 = vmatprep.subr.mxu0 0.0
  %1878 = vmatpush2.msra.mxu0 0.0
  %1879 = vmatprep.mubr.f32.mxu0 0.0
  %1880 = vmatmul.mubr.f32.gmra.mxu0 %v1672
  %v1881 = vpop.f32.mrf.mxu0
  %v1882 = vadd.f32 0.0, %v1881
  %v1883 = vpop.f32.mrf.mxu0
  %1884 = vdwg.mxu0
  %v1885 = vadd.f32 %v1642, %v1741
  %v1886 = vadd.f32 %v1643, %v1743
  %v1887 = vadd.f32 %v1644, %v1813
  %v1888 = vadd.f32 %v1645, %v1882
  %s1889 = scalar_lea.vmem %s3, 56
  %v1890 = vld [vmem:[%s1889] sm:$0xff]
  %1891 = vrot.lane.b32.xlu0 %v1150, 121
  %v1892 = vpop.permute.xlu0 %1891
  %1893 = vrot.lane.b32.xlu0 %v1151, 121
  %v1894 = vpop.permute.xlu0 %1893
  %1895 = vrot.lane.b32.xlu0 %v1152, 121
  %v1896 = vpop.permute.xlu0 %1895
  %1897 = vrot.lane.b32.xlu0 %v1153, 121
  %v1898 = vpop.permute.xlu0 %1897
  %1899 = vrot.lane.b32.xlu0 %v1154, 121
  %v1900 = vpop.permute.xlu0 %1899
  %1901 = vrot.lane.b32.xlu0 %v1155, 121
  %v1902 = vpop.permute.xlu0 %1901
  %vm1903 = vcmask 990208
  %v1904 = vsel %vm1903, %v1892, %v1894
  %v1905 = vsel %vm1903, %v1894, %v1896
  %v1906 = vsel %vm1903, %v1896, %v1898
  %v1907 = vsel %vm1903, %v1898, %v1900
  %v1908 = vsel %vm1903, %v1900, %v1902
  %v1915 = vsel %vm239, %v1890, 0
  %1917 = vmatprep.subr.mxu0 0.0
  %1918 = vmatpush1.msra.mxu0 0.0
  %1919 = vmatprep.subr.mxu0 0.0
  %1920 = vmatpush1.msra.mxu0 0.0
  %1921 = vmatprep.subr.mxu0 0.0
  %1922 = vmatpush1.msra.mxu0 0.0
  %1923 = vmatprep.subr.mxu0 0.0
  %1924 = vmatpush1.msra.mxu0 0.0
  %1925 = vmatprep.subr.mxu0 0.0
  %1926 = vmatpush1.msra.mxu0 0.0
  %1927 = vmatprep.subr.mxu0 0.0
  %1928 = vmatpush1.msra.mxu0 0.0
  %1929 = vmatprep.subr.mxu0 0.0
  %1930 = vmatpush1.msra.mxu0 0.0
  %1931 = vmatprep.subr.mxu0 0.0
  %1932 = vmatpush1.msra.mxu0 0.0
  %1933 = vmatprep.subr.mxu0 0.0
  %1934 = vmatpush1.msra.mxu0 0.0
  %1935 = vmatprep.subr.mxu0 0.0
  %1936 = vmatpush1.msra.mxu0 0.0
  %1937 = vmatprep.subr.mxu0 0.0
  %1938 = vmatpush1.msra.mxu0 0.0
  %1939 = vmatprep.subr.mxu0 0.0
  %1940 = vmatpush1.msra.mxu0 0.0
  %1941 = vmatprep.subr.mxu0 0.0
  %1942 = vmatpush1.msra.mxu0 0.0
  %1943 = vmatprep.subr.mxu0 0.0
  %1944 = vmatpush1.msra.mxu0 0.0
  %1945 = vmatprep.subr.mxu0 0.0
  %1946 = vmatpush1.msra.mxu0 0.0
  %1947 = vmatprep.subr.mxu0 %v1905
  %1948 = vmatpush1.msra.mxu0 %v1904
  %1949 = vmatprep.subr.mxu0 0.0
  %1950 = vmatpush2.msra.mxu0 0.0
  %1951 = vmatprep.subr.mxu0 0.0
  %1952 = vmatpush2.msra.mxu0 0.0
  %1953 = vmatprep.subr.mxu0 0.0
  %1954 = vmatpush2.msra.mxu0 0.0
  %1955 = vmatprep.subr.mxu0 0.0
  %1956 = vmatpush2.msra.mxu0 0.0
  %1957 = vmatprep.subr.mxu0 0.0
  %1958 = vmatpush2.msra.mxu0 0.0
  %1959 = vmatprep.subr.mxu0 0.0
  %1960 = vmatpush2.msra.mxu0 0.0
  %1961 = vmatprep.subr.mxu0 0.0
  %1962 = vmatpush2.msra.mxu0 0.0
  %1963 = vmatprep.subr.mxu0 0.0
  %1964 = vmatpush2.msra.mxu0 0.0
  %1965 = vmatprep.subr.mxu0 0.0
  %1966 = vmatpush2.msra.mxu0 0.0
  %1967 = vmatprep.subr.mxu0 0.0
  %1968 = vmatpush2.msra.mxu0 0.0
  %1969 = vmatprep.subr.mxu0 0.0
  %1970 = vmatpush2.msra.mxu0 0.0
  %1971 = vmatprep.subr.mxu0 0.0
  %1972 = vmatpush2.msra.mxu0 0.0
  %1973 = vmatprep.subr.mxu0 0.0
  %1974 = vmatpush2.msra.mxu0 0.0
  %1975 = vmatprep.subr.mxu0 0.0
  %1976 = vmatpush2.msra.mxu0 0.0
  %1977 = vmatprep.subr.mxu0 0.0
  %1978 = vmatpush2.msra.mxu0 0.0
  %1979 = vmatprep.subr.mxu0 0.0
  %1980 = vmatpush2.msra.mxu0 0.0
  %1981 = vmatprep.mubr.f32.mxu0 0.0
  %1982 = vmatmul.mubr.f32.gmra.mxu0 %v1915
  %v1983 = vpop.f32.mrf.mxu0
  %v1984 = vadd.f32 0.0, %v1983
  %v1985 = vpop.f32.mrf.mxu0
  %v1986 = vadd.f32 0.0, %v1985
  %1987 = vdwg.mxu0
  %1988 = vmatprep.subr.mxu0 0.0
  %1989 = vmatpush1.msra.mxu0 0.0
  %1990 = vmatprep.subr.mxu0 0.0
  %1991 = vmatpush1.msra.mxu0 0.0
  %1992 = vmatprep.subr.mxu0 0.0
  %1993 = vmatpush1.msra.mxu0 0.0
  %1994 = vmatprep.subr.mxu0 0.0
  %1995 = vmatpush1.msra.mxu0 0.0
  %1996 = vmatprep.subr.mxu0 0.0
  %1997 = vmatpush1.msra.mxu0 0.0
  %1998 = vmatprep.subr.mxu0 0.0
  %1999 = vmatpush1.msra.mxu0 0.0
  %2000 = vmatprep.subr.mxu0 0.0
  %2001 = vmatpush1.msra.mxu0 0.0
  %2002 = vmatprep.subr.mxu0 0.0
  %2003 = vmatpush1.msra.mxu0 0.0
  %2004 = vmatprep.subr.mxu0 0.0
  %2005 = vmatpush1.msra.mxu0 0.0
  %2006 = vmatprep.subr.mxu0 0.0
  %2007 = vmatpush1.msra.mxu0 0.0
  %2008 = vmatprep.subr.mxu0 0.0
  %2009 = vmatpush1.msra.mxu0 0.0
  %2010 = vmatprep.subr.mxu0 0.0
  %2011 = vmatpush1.msra.mxu0 0.0
  %2012 = vmatprep.subr.mxu0 0.0
  %2013 = vmatpush1.msra.mxu0 0.0
  %2014 = vmatprep.subr.mxu0 0.0
  %2015 = vmatpush1.msra.mxu0 0.0
  %2016 = vmatprep.subr.mxu0 0.0
  %2017 = vmatpush1.msra.mxu0 0.0
  %2018 = vmatprep.subr.mxu0 %v1907
  %2019 = vmatpush1.msra.mxu0 %v1906
  %2020 = vmatprep.subr.mxu0 0.0
  %2021 = vmatpush2.msra.mxu0 0.0
  %2022 = vmatprep.subr.mxu0 0.0
  %2023 = vmatpush2.msra.mxu0 0.0
  %2024 = vmatprep.subr.mxu0 0.0
  %2025 = vmatpush2.msra.mxu0 0.0
  %2026 = vmatprep.subr.mxu0 0.0
  %2027 = vmatpush2.msra.mxu0 0.0
  %2028 = vmatprep.subr.mxu0 0.0
  %2029 = vmatpush2.msra.mxu0 0.0
  %2030 = vmatprep.subr.mxu0 0.0
  %2031 = vmatpush2.msra.mxu0 0.0
  %2032 = vmatprep.subr.mxu0 0.0
  %2033 = vmatpush2.msra.mxu0 0.0
  %2034 = vmatprep.subr.mxu0 0.0
  %2035 = vmatpush2.msra.mxu0 0.0
  %2036 = vmatprep.subr.mxu0 0.0
  %2037 = vmatpush2.msra.mxu0 0.0
  %2038 = vmatprep.subr.mxu0 0.0
  %2039 = vmatpush2.msra.mxu0 0.0
  %2040 = vmatprep.subr.mxu0 0.0
  %2041 = vmatpush2.msra.mxu0 0.0
  %2042 = vmatprep.subr.mxu0 0.0
  %2043 = vmatpush2.msra.mxu0 0.0
  %2044 = vmatprep.subr.mxu0 0.0
  %2045 = vmatpush2.msra.mxu0 0.0
  %2046 = vmatprep.subr.mxu0 0.0
  %2047 = vmatpush2.msra.mxu0 0.0
  %2048 = vmatprep.subr.mxu0 0.0
  %2049 = vmatpush2.msra.mxu0 0.0
  %2050 = vmatprep.subr.mxu0 0.0
  %2051 = vmatpush2.msra.mxu0 0.0
  %2052 = vmatprep.mubr.f32.mxu0 0.0
  %2053 = vmatmul.mubr.f32.gmra.mxu0 %v1915
  %v2054 = vpop.f32.mrf.mxu0
  %v2055 = vpop.f32.mrf.mxu0
  %v2056 = vadd.f32 0.0, %v2055
  %2057 = vdwg.mxu0
  %2058 = vmatprep.subr.mxu0 0.0
  %2059 = vmatpush1.msra.mxu0 0.0
  %2060 = vmatprep.subr.mxu0 0.0
  %2061 = vmatpush1.msra.mxu0 0.0
  %2062 = vmatprep.subr.mxu0 0.0
  %2063 = vmatpush1.msra.mxu0 0.0
  %2064 = vmatprep.subr.mxu0 0.0
  %2065 = vmatpush1.msra.mxu0 0.0
  %2066 = vmatprep.subr.mxu0 0.0
  %2067 = vmatpush1.msra.mxu0 0.0
  %2068 = vmatprep.subr.mxu0 0.0
  %2069 = vmatpush1.msra.mxu0 0.0
  %2070 = vmatprep.subr.mxu0 0.0
  %2071 = vmatpush1.msra.mxu0 0.0
  %2072 = vmatprep.subr.mxu0 0.0
  %2073 = vmatpush1.msra.mxu0 0.0
  %2074 = vmatprep.subr.mxu0 0.0
  %2075 = vmatpush1.msra.mxu0 0.0
  %2076 = vmatprep.subr.mxu0 0.0
  %2077 = vmatpush1.msra.mxu0 0.0
  %2078 = vmatprep.subr.mxu0 0.0
  %2079 = vmatpush1.msra.mxu0 0.0
  %2080 = vmatprep.subr.mxu0 0.0
  %2081 = vmatpush1.msra.mxu0 0.0
  %2082 = vmatprep.subr.mxu0 0.0
  %2083 = vmatpush1.msra.mxu0 0.0
  %2084 = vmatprep.subr.mxu0 0.0
  %2085 = vmatpush1.msra.mxu0 0.0
  %2086 = vmatprep.subr.mxu0 0.0
  %2087 = vmatpush1.msra.mxu0 0.0
  %2088 = vmatprep.subr.mxu0 0.0
  %2089 = vmatpush1.msra.mxu0 %v1908
  %2090 = vmatprep.subr.mxu0 0.0
  %2091 = vmatpush2.msra.mxu0 0.0
  %2092 = vmatprep.subr.mxu0 0.0
  %2093 = vmatpush2.msra.mxu0 0.0
  %2094 = vmatprep.subr.mxu0 0.0
  %2095 = vmatpush2.msra.mxu0 0.0
  %2096 = vmatprep.subr.mxu0 0.0
  %2097 = vmatpush2.msra.mxu0 0.0
  %2098 = vmatprep.subr.mxu0 0.0
  %2099 = vmatpush2.msra.mxu0 0.0
  %2100 = vmatprep.subr.mxu0 0.0
  %2101 = vmatpush2.msra.mxu0 0.0
  %2102 = vmatprep.subr.mxu0 0.0
  %2103 = vmatpush2.msra.mxu0 0.0
  %2104 = vmatprep.subr.mxu0 0.0
  %2105 = vmatpush2.msra.mxu0 0.0
  %2106 = vmatprep.subr.mxu0 0.0
  %2107 = vmatpush2.msra.mxu0 0.0
  %2108 = vmatprep.subr.mxu0 0.0
  %2109 = vmatpush2.msra.mxu0 0.0
  %2110 = vmatprep.subr.mxu0 0.0
  %2111 = vmatpush2.msra.mxu0 0.0
  %2112 = vmatprep.subr.mxu0 0.0
  %2113 = vmatpush2.msra.mxu0 0.0
  %2114 = vmatprep.subr.mxu0 0.0
  %2115 = vmatpush2.msra.mxu0 0.0
  %2116 = vmatprep.subr.mxu0 0.0
  %2117 = vmatpush2.msra.mxu0 0.0
  %2118 = vmatprep.subr.mxu0 0.0
  %2119 = vmatpush2.msra.mxu0 0.0
  %2120 = vmatprep.subr.mxu0 0.0
  %2121 = vmatpush2.msra.mxu0 0.0
  %2122 = vmatprep.mubr.f32.mxu0 0.0
  %2123 = vmatmul.mubr.f32.gmra.mxu0 %v1915
  %v2124 = vpop.f32.mrf.mxu0
  %v2125 = vadd.f32 0.0, %v2124
  %v2126 = vpop.f32.mrf.mxu0
  %2127 = vdwg.mxu0
  %v2128 = vadd.f32 %v1885, %v1984
  %v2129 = vadd.f32 %v1886, %v1986
  %v2130 = vadd.f32 %v1887, %v2056
  %v2131 = vadd.f32 %v1888, %v2125
  %v2132 = vld [vmem:[%s5] sm:$0xff]
  %v2133 = vld [vmem:[%s11] sm:$0xff]
  %v2134 = vld [vmem:[%s11 + $0x8] sm:$0xff]
  %v2135 = vld [vmem:[%s11 + $0x10] sm:$0xff]
  %v2136 = vld [vmem:[%s11 + $0x18] sm:$0xff]
  %v2137 = vld [vmem:[%s11 + $0x20] sm:$0xff]
  %v2138 = vld [vmem:[%s11 + $0x28] sm:$0xff]
  %v2139 = vld [vmem:[%s11 + $0x30] sm:$0xff]
  %v2140 = vld [vmem:[%s11 + $0x38] sm:$0xff]
  %v2141 = vld [vmem:[%s11 + $0x40] sm:$0xff]
  %v2142 = vld [vmem:[%s11 + $0x48] sm:$0xff]
  %v2143 = vld [vmem:[%s11 + $0x50] sm:$0xff]
  %v2144 = vld [vmem:[%s11 + $0x58] sm:$0xff]
  %v2145 = vld [vmem:[%s11 + $0x60] sm:$0xff]
  %v2146 = vld [vmem:[%s11 + $0x68] sm:$0xff]
  %v2147 = vld [vmem:[%s11 + $0x70] sm:$0xff]
  %v2148 = vld [vmem:[%s11 + $0x78] sm:$0xff]
  %v2149 = vld [vmem:[%s11 + $0x80] sm:$0xff]
  %v2150 = vld [vmem:[%s11 + $0x88] sm:$0xff]
  %v2151 = vld [vmem:[%s11 + $0x90] sm:$0xff]
  %v2152 = vld [vmem:[%s11 + $0x98] sm:$0xff]
  %v2153 = vld [vmem:[%s11 + $0xa0] sm:$0xff]
  %v2154 = vld [vmem:[%s11 + $0xa8] sm:$0xff]
  %v2155 = vld [vmem:[%s11 + $0xb0] sm:$0xff]
  %v2156 = vld [vmem:[%s11 + $0xb8] sm:$0xff]
  %v2157 = vld [vmem:[%s11 + $0xc0] sm:$0xff]
  %v2158 = vld [vmem:[%s11 + $0xc8] sm:$0xff]
  %v2159 = vld [vmem:[%s11 + $0xd0] sm:$0xff]
  %v2160 = vld [vmem:[%s11 + $0xd8] sm:$0xff]
  %v2161 = vld [vmem:[%s11 + $0xe0] sm:$0xff]
  %v2162 = vld [vmem:[%s11 + $0xe8] sm:$0xff]
  %v2163 = vld [vmem:[%s11 + $0xf0] sm:$0xff]
  %v2164 = vld [vmem:[%s11 + $0xf8] sm:$0x1f]
  %2166 = vset.pattern.permute.xlu0 0
  %2167 = vperm.xlu0 %2166, %v2132
  %v2168 = vpop.permute.xlu0 %2167
  %v2171 = vsel %vm920, %v2129, 0
  %vm2173 = vcmask 1044480
  %v2175 = vsel %vm2173, %v2164, 0
  %2177 = vmatprep.subr.mxu0 0.0
  %2178 = vmatpush1.msra.mxu0 %v2148
  %2179 = vmatprep.subr.mxu0 0.0
  %2180 = vmatpush1.msra.mxu0 %v2147
  %2181 = vmatprep.subr.mxu0 0.0
  %2182 = vmatpush1.msra.mxu0 %v2146
  %2183 = vmatprep.subr.mxu0 0.0
  %2184 = vmatpush1.msra.mxu0 %v2145
  %2185 = vmatprep.subr.mxu0 0.0
  %2186 = vmatpush1.msra.mxu0 %v2144
  %2187 = vmatprep.subr.mxu0 0.0
  %2188 = vmatpush1.msra.mxu0 %v2143
  %2189 = vmatprep.subr.mxu0 0.0
  %2190 = vmatpush1.msra.mxu0 %v2142
  %2191 = vmatprep.subr.mxu0 0.0
  %2192 = vmatpush1.msra.mxu0 %v2141
  %2193 = vmatprep.subr.mxu0 0.0
  %2194 = vmatpush1.msra.mxu0 %v2140
  %2195 = vmatprep.subr.mxu0 0.0
  %2196 = vmatpush1.msra.mxu0 %v2139
  %2197 = vmatprep.subr.mxu0 0.0
  %2198 = vmatpush1.msra.mxu0 %v2138
  %2199 = vmatprep.subr.mxu0 0.0
  %2200 = vmatpush1.msra.mxu0 %v2137
  %2201 = vmatprep.subr.mxu0 0.0
  %2202 = vmatpush1.msra.mxu0 %v2136
  %2203 = vmatprep.subr.mxu0 0.0
  %2204 = vmatpush1.msra.mxu0 %v2135
  %2205 = vmatprep.subr.mxu0 0.0
  %2206 = vmatpush1.msra.mxu0 %v2134
  %2207 = vmatprep.subr.mxu0 0.0
  %2208 = vmatpush1.msra.mxu0 %v2133
  %2209 = vmatprep.subr.mxu0 0.0
  %2210 = vmatpush2.msra.mxu0 %v2175
  %2211 = vmatprep.subr.mxu0 0.0
  %2212 = vmatpush2.msra.mxu0 %v2163
  %2213 = vmatprep.subr.mxu0 0.0
  %2214 = vmatpush2.msra.mxu0 %v2162
  %2215 = vmatprep.subr.mxu0 0.0
  %2216 = vmatpush2.msra.mxu0 %v2161
  %2217 = vmatprep.subr.mxu0 0.0
  %2218 = vmatpush2.msra.mxu0 %v2160
  %2219 = vmatprep.subr.mxu0 0.0
  %2220 = vmatpush2.msra.mxu0 %v2159
  %2221 = vmatprep.subr.mxu0 0.0
  %2222 = vmatpush2.msra.mxu0 %v2158
  %2223 = vmatprep.subr.mxu0 0.0
  %2224 = vmatpush2.msra.mxu0 %v2157
  %2225 = vmatprep.subr.mxu0 0.0
  %2226 = vmatpush2.msra.mxu0 %v2156
  %2227 = vmatprep.subr.mxu0 0.0
  %2228 = vmatpush2.msra.mxu0 %v2155
  %2229 = vmatprep.subr.mxu0 0.0
  %2230 = vmatpush2.msra.mxu0 %v2154
  %2231 = vmatprep.subr.mxu0 0.0
  %2232 = vmatpush2.msra.mxu0 %v2153
  %2233 = vmatprep.subr.mxu0 0.0
  %2234 = vmatpush2.msra.mxu0 %v2152
  %2235 = vmatprep.subr.mxu0 0.0
  %2236 = vmatpush2.msra.mxu0 %v2151
  %2237 = vmatprep.subr.mxu0 0.0
  %2238 = vmatpush2.msra.mxu0 %v2150
  %2239 = vmatprep.subr.mxu0 0.0
  %2240 = vmatpush2.msra.mxu0 %v2149
  %2241 = vmatprep.mubr.f32.mxu0 %v2171
  %2242 = vmatmul.mubr.f32.gmra.mxu0 %v2128
  %v2243 = vpop.f32.mrf.mxu0
  %v2244 = vadd.f32 %v2168, %v2243
  %v2245 = vpop.f32.mrf.mxu0
  %2246 = vdwg.mxu0
  %vm2247 = vcmp.gt.f32.partialorder %v2244, 0.0
  %v2248 = vmul.f32 %v2244, 0.01
  %v2249 = vsel %vm2247, %v2244, %v2248
  %v2251 = vsel %vm920, %v2131, 0
  %2253 = vmatprep.subr.mxu0 0.0
  %2254 = vmatpush1.msra.mxu0 %v2148
  %2255 = vmatprep.subr.mxu0 0.0
  %2256 = vmatpush1.msra.mxu0 %v2147
  %2257 = vmatprep.subr.mxu0 0.0
  %2258 = vmatpush1.msra.mxu0 %v2146
  %2259 = vmatprep.subr.mxu0 0.0
  %2260 = vmatpush1.msra.mxu0 %v2145
  %2261 = vmatprep.subr.mxu0 0.0
  %2262 = vmatpush1.msra.mxu0 %v2144
  %2263 = vmatprep.subr.mxu0 0.0
  %2264 = vmatpush1.msra.mxu0 %v2143
  %2265 = vmatprep.subr.mxu0 0.0
  %2266 = vmatpush1.msra.mxu0 %v2142
  %2267 = vmatprep.subr.mxu0 0.0
  %2268 = vmatpush1.msra.mxu0 %v2141
  %2269 = vmatprep.subr.mxu0 0.0
  %2270 = vmatpush1.msra.mxu0 %v2140
  %2271 = vmatprep.subr.mxu0 0.0
  %2272 = vmatpush1.msra.mxu0 %v2139
  %2273 = vmatprep.subr.mxu0 0.0
  %2274 = vmatpush1.msra.mxu0 %v2138
  %2275 = vmatprep.subr.mxu0 0.0
  %2276 = vmatpush1.msra.mxu0 %v2137
  %2277 = vmatprep.subr.mxu0 0.0
  %2278 = vmatpush1.msra.mxu0 %v2136
  %2279 = vmatprep.subr.mxu0 0.0
  %2280 = vmatpush1.msra.mxu0 %v2135
  %2281 = vmatprep.subr.mxu0 0.0
  %2282 = vmatpush1.msra.mxu0 %v2134
  %2283 = vmatprep.subr.mxu0 0.0
  %2284 = vmatpush1.msra.mxu0 %v2133
  %2285 = vmatprep.subr.mxu0 0.0
  %2286 = vmatpush2.msra.mxu0 %v2175
  %2287 = vmatprep.subr.mxu0 0.0
  %2288 = vmatpush2.msra.mxu0 %v2163
  %2289 = vmatprep.subr.mxu0 0.0
  %2290 = vmatpush2.msra.mxu0 %v2162
  %2291 = vmatprep.subr.mxu0 0.0
  %2292 = vmatpush2.msra.mxu0 %v2161
  %2293 = vmatprep.subr.mxu0 0.0
  %2294 = vmatpush2.msra.mxu0 %v2160
  %2295 = vmatprep.subr.mxu0 0.0
  %2296 = vmatpush2.msra.mxu0 %v2159
  %2297 = vmatprep.subr.mxu0 0.0
  %2298 = vmatpush2.msra.mxu0 %v2158
  %2299 = vmatprep.subr.mxu0 0.0
  %2300 = vmatpush2.msra.mxu0 %v2157
  %2301 = vmatprep.subr.mxu0 0.0
  %2302 = vmatpush2.msra.mxu0 %v2156
  %2303 = vmatprep.subr.mxu0 0.0
  %2304 = vmatpush2.msra.mxu0 %v2155
  %2305 = vmatprep.subr.mxu0 0.0
  %2306 = vmatpush2.msra.mxu0 %v2154
  %2307 = vmatprep.subr.mxu0 0.0
  %2308 = vmatpush2.msra.mxu0 %v2153
  %2309 = vmatprep.subr.mxu0 0.0
  %2310 = vmatpush2.msra.mxu0 %v2152
  %2311 = vmatprep.subr.mxu0 0.0
  %2312 = vmatpush2.msra.mxu0 %v2151
  %2313 = vmatprep.subr.mxu0 0.0
  %2314 = vmatpush2.msra.mxu0 %v2150
  %2315 = vmatprep.subr.mxu0 0.0
  %2316 = vmatpush2.msra.mxu0 %v2149
  %2317 = vmatprep.mubr.f32.mxu0 %v2251
  %2318 = vmatmul.mubr.f32.gmra.mxu0 %v2130
  %v2319 = vpop.f32.mrf.mxu0
  %v2320 = vadd.f32 %v2168, %v2319
  %v2321 = vpop.f32.mrf.mxu0
  %2322 = vdwg.mxu0
  %vm2323 = vcmp.gt.f32.partialorder %v2320, 0.0
  %v2324 = vmul.f32 %v2320, 0.01
  %v2325 = vsel %vm2323, %v2320, %v2324
  %v2326 = vld [vmem:[%s7] sm:$0xff]
  %v2327 = vld [vmem:[%s9] sm:$0xff]
  %vm2328 = vcmask 523264
  %v2329 = vsel %vm2328, %v2249, 0.0
  %2330 = vadd.xlane.f32.xlu0 %v2329
  %v2331 = vpop.xlane.xlu0 %2330
  %v2332 = vmul.f32 %v2249, %v2249
  %v2333 = vsel %vm2328, %v2332, 0.0
  %2334 = vadd.xlane.f32.xlu0 %v2333
  %v2335 = vpop.xlane.xlu0 %2334
  %v2336 = vsel %vm2328, %v2325, 0.0
  %2337 = vadd.xlane.f32.xlu0 %v2336
  %v2338 = vpop.xlane.xlu0 %2337
  %v2339 = vadd.f32 %v2331, %v2338
  %v2340 = vmul.f32 %v2325, %v2325
  %v2341 = vsel %vm2328, %v2340, 0.0
  %2342 = vadd.xlane.f32.xlu0 %v2341
  %v2343 = vpop.xlane.xlu0 %2342
  %v2344 = vadd.f32 %v2335, %v2343
  %v2345 = vmul.f32 %v2339, 0.0078125
  %v2346 = vmul.f32 %v2344, 0.0078125
  %v2347 = vmul.f32 %v2345, %v2345
  %v2348 = vsub.f32 %v2346, %v2347
  %v2349 = vmax.f32 %v2348, 0.0
  %v2350 = vadd.f32 %v2349, 1e-05
  %v2351 = vrsqrt.pop %v2350
  %v2352 = vmul.f32 %v2326, %v2351
  %v2353 = vmul.f32 %v2345, %v2352
  %v2354 = vsub.f32 %v2327, %v2353
  %2356 = vset.pattern.permute.xlu0 0
  %2357 = vperm.xlu0 %2356, %v2352
  %v2358 = vpop.permute.xlu0 %2357
  %v2360 = vmul.f32 %v2249, %v2358
  %2362 = vset.pattern.permute.xlu0 0
  %2363 = vperm.xlu0 %2362, %v2354
  %v2364 = vpop.permute.xlu0 %2363
  %v2366 = vadd.f32 %v2360, %v2364
  %v2367 = vmul.f32 %v2325, %v2358
  %v2368 = vadd.f32 %v2367, %v2364
  %vm2369 = vcmask 23552
  %2370 = vst.msk [vmem:[#allocation2] sm:$0xff] %vm2369, 0.0
  %vm2371 = vcmask 572952
  %2372 = vst.msk [vmem:[#allocation2] sm:$0xff] %vm2371, 0.0
  %2374 = vrot.lane.b32.xlu0 %v2366, 3
  %v2375 = vpop.permute.xlu0 %2374
  %vm2377 = vcmask 547864
  %2378 = vst.msk [vmem:[#allocation2] sm:$0xff] %vm2377, %v2375
  %2379 = vst.msk [vmem:[#allocation2 + $0x8] sm:$0xff] %vm2369, 0.0
  %2380 = vst.msk [vmem:[#allocation2 + $0x8] sm:$0xff] %vm2371, 0.0
  %2382 = vrot.lane.b32.xlu0 %v2368, 3
  %v2383 = vpop.permute.xlu0 %2382
  %2385 = vst.msk [vmem:[#allocation2 + $0x8] sm:$0xff] %vm2377, %v2383
  %v2386 = vld [vmem:[%s13] sm:$0xff]
  %v2387 = vld [vmem:[#allocation2] sm:$0xff]
  %v2388 = vld [vmem:[#allocation2 + $0x8] sm:$0xff]
  %s2389 = scalar_lea.vmem %s13, 8
  %v2390 = vld [vmem:[%s2389] sm:$0xff]
  %2393 = vrot.lane.b32.xlu0 %v2387, 127
  %v2394 = vpop.permute.xlu0 %2393
  %2395 = vrot.lane.b32.xlu0 %v2388, 127
  %v2396 = vpop.permute.xlu0 %2395
  %v2397 = vsel %vm229, %v2394, %v2396
  %v2401 = vsel %vm239, %v2390, 0
  %2403 = vmatprep.subr.mxu0 0.0
  %2404 = vmatpush1.msra.mxu0 0.0
  %2405 = vmatprep.subr.mxu0 0.0
  %2406 = vmatpush1.msra.mxu0 0.0
  %2407 = vmatprep.subr.mxu0 0.0
  %2408 = vmatpush1.msra.mxu0 0.0
  %2409 = vmatprep.subr.mxu0 0.0
  %2410 = vmatpush1.msra.mxu0 0.0
  %2411 = vmatprep.subr.mxu0 0.0
  %2412 = vmatpush1.msra.mxu0 0.0
  %2413 = vmatprep.subr.mxu0 0.0
  %2414 = vmatpush1.msra.mxu0 0.0
  %2415 = vmatprep.subr.mxu0 0.0
  %2416 = vmatpush1.msra.mxu0 0.0
  %2417 = vmatprep.subr.mxu0 0.0
  %2418 = vmatpush1.msra.mxu0 0.0
  %2419 = vmatprep.subr.mxu0 0.0
  %2420 = vmatpush1.msra.mxu0 0.0
  %2421 = vmatprep.subr.mxu0 0.0
  %2422 = vmatpush1.msra.mxu0 0.0
  %2423 = vmatprep.subr.mxu0 0.0
  %2424 = vmatpush1.msra.mxu0 0.0
  %2425 = vmatprep.subr.mxu0 0.0
  %2426 = vmatpush1.msra.mxu0 0.0
  %2427 = vmatprep.subr.mxu0 0.0
  %2428 = vmatpush1.msra.mxu0 0.0
  %2429 = vmatprep.subr.mxu0 0.0
  %2430 = vmatpush1.msra.mxu0 0.0
  %2431 = vmatprep.subr.mxu0 0.0
  %2432 = vmatpush1.msra.mxu0 0.0
  %2433 = vmatprep.subr.mxu0 %v2396
  %2434 = vmatpush1.msra.mxu0 %v2397
  %2435 = vmatprep.subr.mxu0 0.0
  %2436 = vmatpush2.msra.mxu0 0.0
  %2437 = vmatprep.subr.mxu0 0.0
  %2438 = vmatpush2.msra.mxu0 0.0
  %2439 = vmatprep.subr.mxu0 0.0
  %2440 = vmatpush2.msra.mxu0 0.0
  %2441 = vmatprep.subr.mxu0 0.0
  %2442 = vmatpush2.msra.mxu0 0.0
  %2443 = vmatprep.subr.mxu0 0.0
  %2444 = vmatpush2.msra.mxu0 0.0
  %2445 = vmatprep.subr.mxu0 0.0
  %2446 = vmatpush2.msra.mxu0 0.0
  %2447 = vmatprep.subr.mxu0 0.0
  %2448 = vmatpush2.msra.mxu0 0.0
  %2449 = vmatprep.subr.mxu0 0.0
  %2450 = vmatpush2.msra.mxu0 0.0
  %2451 = vmatprep.subr.mxu0 0.0
  %2452 = vmatpush2.msra.mxu0 0.0
  %2453 = vmatprep.subr.mxu0 0.0
  %2454 = vmatpush2.msra.mxu0 0.0
  %2455 = vmatprep.subr.mxu0 0.0
  %2456 = vmatpush2.msra.mxu0 0.0
  %2457 = vmatprep.subr.mxu0 0.0
  %2458 = vmatpush2.msra.mxu0 0.0
  %2459 = vmatprep.subr.mxu0 0.0
  %2460 = vmatpush2.msra.mxu0 0.0
  %2461 = vmatprep.subr.mxu0 0.0
  %2462 = vmatpush2.msra.mxu0 0.0
  %2463 = vmatprep.subr.mxu0 0.0
  %2464 = vmatpush2.msra.mxu0 0.0
  %2465 = vmatprep.subr.mxu0 0.0
  %2466 = vmatpush2.msra.mxu0 0.0
  %2467 = vmatprep.mubr.f32.mxu0 0.0
  %2468 = vmatmul.mubr.f32.gmra.mxu0 %v2401
  %v2469 = vpop.f32.mrf.mxu0
  %v2470 = vadd.f32 0.0, %v2469
  %v2471 = vpop.f32.mrf.mxu0
  %v2472 = vadd.f32 0.0, %v2471
  %2473 = vdwg.mxu0
  %v2475 = vsel %vm239, %v2386, 0
  %2477 = vmatprep.subr.mxu0 0.0
  %2478 = vmatpush1.msra.mxu0 0.0
  %2479 = vmatprep.subr.mxu0 0.0
  %2480 = vmatpush1.msra.mxu0 0.0
  %2481 = vmatprep.subr.mxu0 0.0
  %2482 = vmatpush1.msra.mxu0 0.0
  %2483 = vmatprep.subr.mxu0 0.0
  %2484 = vmatpush1.msra.mxu0 0.0
  %2485 = vmatprep.subr.mxu0 0.0
  %2486 = vmatpush1.msra.mxu0 0.0
  %2487 = vmatprep.subr.mxu0 0.0
  %2488 = vmatpush1.msra.mxu0 0.0
  %2489 = vmatprep.subr.mxu0 0.0
  %2490 = vmatpush1.msra.mxu0 0.0
  %2491 = vmatprep.subr.mxu0 0.0
  %2492 = vmatpush1.msra.mxu0 0.0
  %2493 = vmatprep.subr.mxu0 0.0
  %2494 = vmatpush1.msra.mxu0 0.0
  %2495 = vmatprep.subr.mxu0 0.0
  %2496 = vmatpush1.msra.mxu0 0.0
  %2497 = vmatprep.subr.mxu0 0.0
  %2498 = vmatpush1.msra.mxu0 0.0
  %2499 = vmatprep.subr.mxu0 0.0
  %2500 = vmatpush1.msra.mxu0 0.0
  %2501 = vmatprep.subr.mxu0 0.0
  %2502 = vmatpush1.msra.mxu0 0.0
  %2503 = vmatprep.subr.mxu0 0.0
  %2504 = vmatpush1.msra.mxu0 0.0
  %2505 = vmatprep.subr.mxu0 0.0
  %2506 = vmatpush1.msra.mxu0 0.0
  %2507 = vmatprep.subr.mxu0 %v2388
  %2508 = vmatpush1.msra.mxu0 %v2387
  %2509 = vmatprep.subr.mxu0 0.0
  %2510 = vmatpush2.msra.mxu0 0.0
  %2511 = vmatprep.subr.mxu0 0.0
  %2512 = vmatpush2.msra.mxu0 0.0
  %2513 = vmatprep.subr.mxu0 0.0
  %2514 = vmatpush2.msra.mxu0 0.0
  %2515 = vmatprep.subr.mxu0 0.0
  %2516 = vmatpush2.msra.mxu0 0.0
  %2517 = vmatprep.subr.mxu0 0.0
  %2518 = vmatpush2.msra.mxu0 0.0
  %2519 = vmatprep.subr.mxu0 0.0
  %2520 = vmatpush2.msra.mxu0 0.0
  %2521 = vmatprep.subr.mxu0 0.0
  %2522 = vmatpush2.msra.mxu0 0.0
  %2523 = vmatprep.subr.mxu0 0.0
  %2524 = vmatpush2.msra.mxu0 0.0
  %2525 = vmatprep.subr.mxu0 0.0
  %2526 = vmatpush2.msra.mxu0 0.0
  %2527 = vmatprep.subr.mxu0 0.0
  %2528 = vmatpush2.msra.mxu0 0.0
  %2529 = vmatprep.subr.mxu0 0.0
  %2530 = vmatpush2.msra.mxu0 0.0
  %2531 = vmatprep.subr.mxu0 0.0
  %2532 = vmatpush2.msra.mxu0 0.0
  %2533 = vmatprep.subr.mxu0 0.0
  %2534 = vmatpush2.msra.mxu0 0.0
  %2535 = vmatprep.subr.mxu0 0.0
  %2536 = vmatpush2.msra.mxu0 0.0
  %2537 = vmatprep.subr.mxu0 0.0
  %2538 = vmatpush2.msra.mxu0 0.0
  %2539 = vmatprep.subr.mxu0 0.0
  %2540 = vmatpush2.msra.mxu0 0.0
  %2541 = vmatprep.mubr.f32.mxu0 0.0
  %2542 = vmatmul.mubr.f32.gmra.mxu0 %v2475
  %v2543 = vpop.f32.mrf.mxu0
  %v2544 = vadd.f32 %v2470, %v2543
  %v2545 = vpop.f32.mrf.mxu0
  %v2546 = vadd.f32 %v2472, %v2545
  %2547 = vdwg.mxu0
  %s2548 = scalar_lea.vmem %s13, 16
  %v2549 = vld [vmem:[%s2548] sm:$0xff]
  %2550 = vrot.lane.b32.xlu0 %v2387, 126
  %v2551 = vpop.permute.xlu0 %2550
  %2552 = vrot.lane.b32.xlu0 %v2388, 126
  %v2553 = vpop.permute.xlu0 %2552
  %v2554 = vsel %vm680, %v2551, %v2553
  %v2558 = vsel %vm239, %v2549, 0
  %2560 = vmatprep.subr.mxu0 0.0
  %2561 = vmatpush1.msra.mxu0 0.0
  %2562 = vmatprep.subr.mxu0 0.0
  %2563 = vmatpush1.msra.mxu0 0.0
  %2564 = vmatprep.subr.mxu0 0.0
  %2565 = vmatpush1.msra.mxu0 0.0
  %2566 = vmatprep.subr.mxu0 0.0
  %2567 = vmatpush1.msra.mxu0 0.0
  %2568 = vmatprep.subr.mxu0 0.0
  %2569 = vmatpush1.msra.mxu0 0.0
  %2570 = vmatprep.subr.mxu0 0.0
  %2571 = vmatpush1.msra.mxu0 0.0
  %2572 = vmatprep.subr.mxu0 0.0
  %2573 = vmatpush1.msra.mxu0 0.0
  %2574 = vmatprep.subr.mxu0 0.0
  %2575 = vmatpush1.msra.mxu0 0.0
  %2576 = vmatprep.subr.mxu0 0.0
  %2577 = vmatpush1.msra.mxu0 0.0
  %2578 = vmatprep.subr.mxu0 0.0
  %2579 = vmatpush1.msra.mxu0 0.0
  %2580 = vmatprep.subr.mxu0 0.0
  %2581 = vmatpush1.msra.mxu0 0.0
  %2582 = vmatprep.subr.mxu0 0.0
  %2583 = vmatpush1.msra.mxu0 0.0
  %2584 = vmatprep.subr.mxu0 0.0
  %2585 = vmatpush1.msra.mxu0 0.0
  %2586 = vmatprep.subr.mxu0 0.0
  %2587 = vmatpush1.msra.mxu0 0.0
  %2588 = vmatprep.subr.mxu0 0.0
  %2589 = vmatpush1.msra.mxu0 0.0
  %2590 = vmatprep.subr.mxu0 %v2553
  %2591 = vmatpush1.msra.mxu0 %v2554
  %2592 = vmatprep.subr.mxu0 0.0
  %2593 = vmatpush2.msra.mxu0 0.0
  %2594 = vmatprep.subr.mxu0 0.0
  %2595 = vmatpush2.msra.mxu0 0.0
  %2596 = vmatprep.subr.mxu0 0.0
  %2597 = vmatpush2.msra.mxu0 0.0
  %2598 = vmatprep.subr.mxu0 0.0
  %2599 = vmatpush2.msra.mxu0 0.0
  %2600 = vmatprep.subr.mxu0 0.0
  %2601 = vmatpush2.msra.mxu0 0.0
  %2602 = vmatprep.subr.mxu0 0.0
  %2603 = vmatpush2.msra.mxu0 0.0
  %2604 = vmatprep.subr.mxu0 0.0
  %2605 = vmatpush2.msra.mxu0 0.0
  %2606 = vmatprep.subr.mxu0 0.0
  %2607 = vmatpush2.msra.mxu0 0.0
  %2608 = vmatprep.subr.mxu0 0.0
  %2609 = vmatpush2.msra.mxu0 0.0
  %2610 = vmatprep.subr.mxu0 0.0
  %2611 = vmatpush2.msra.mxu0 0.0
  %2612 = vmatprep.subr.mxu0 0.0
  %2613 = vmatpush2.msra.mxu0 0.0
  %2614 = vmatprep.subr.mxu0 0.0
  %2615 = vmatpush2.msra.mxu0 0.0
  %2616 = vmatprep.subr.mxu0 0.0
  %2617 = vmatpush2.msra.mxu0 0.0
  %2618 = vmatprep.subr.mxu0 0.0
  %2619 = vmatpush2.msra.mxu0 0.0
  %2620 = vmatprep.subr.mxu0 0.0
  %2621 = vmatpush2.msra.mxu0 0.0
  %2622 = vmatprep.subr.mxu0 0.0
  %2623 = vmatpush2.msra.mxu0 0.0
  %2624 = vmatprep.mubr.f32.mxu0 0.0
  %2625 = vmatmul.mubr.f32.gmra.mxu0 %v2558
  %v2626 = vpop.f32.mrf.mxu0
  %v2627 = vadd.f32 0.0, %v2626
  %v2628 = vpop.f32.mrf.mxu0
  %v2629 = vadd.f32 0.0, %v2628
  %2630 = vdwg.mxu0
  %v2631 = vadd.f32 %v2544, %v2627
  %v2632 = vadd.f32 %v2546, %v2629
  %s2633 = scalar_lea.vmem %s13, 24
  %v2634 = vld [vmem:[%s2633] sm:$0xff]
  %2635 = vrot.lane.b32.xlu0 %v2387, 125
  %v2636 = vpop.permute.xlu0 %2635
  %2637 = vrot.lane.b32.xlu0 %v2388, 125
  %v2638 = vpop.permute.xlu0 %2637
  %v2639 = vsel %vm920, %v2636, %v2638
  %v2643 = vsel %vm239, %v2634, 0
  %2645 = vmatprep.subr.mxu0 0.0
  %2646 = vmatpush1.msra.mxu0 0.0
  %2647 = vmatprep.subr.mxu0 0.0
  %2648 = vmatpush1.msra.mxu0 0.0
  %2649 = vmatprep.subr.mxu0 0.0
  %2650 = vmatpush1.msra.mxu0 0.0
  %2651 = vmatprep.subr.mxu0 0.0
  %2652 = vmatpush1.msra.mxu0 0.0
  %2653 = vmatprep.subr.mxu0 0.0
  %2654 = vmatpush1.msra.mxu0 0.0
  %2655 = vmatprep.subr.mxu0 0.0
  %2656 = vmatpush1.msra.mxu0 0.0
  %2657 = vmatprep.subr.mxu0 0.0
  %2658 = vmatpush1.msra.mxu0 0.0
  %2659 = vmatprep.subr.mxu0 0.0
  %2660 = vmatpush1.msra.mxu0 0.0
  %2661 = vmatprep.subr.mxu0 0.0
  %2662 = vmatpush1.msra.mxu0 0.0
  %2663 = vmatprep.subr.mxu0 0.0
  %2664 = vmatpush1.msra.mxu0 0.0
  %2665 = vmatprep.subr.mxu0 0.0
  %2666 = vmatpush1.msra.mxu0 0.0
  %2667 = vmatprep.subr.mxu0 0.0
  %2668 = vmatpush1.msra.mxu0 0.0
  %2669 = vmatprep.subr.mxu0 0.0
  %2670 = vmatpush1.msra.mxu0 0.0
  %2671 = vmatprep.subr.mxu0 0.0
  %2672 = vmatpush1.msra.mxu0 0.0
  %2673 = vmatprep.subr.mxu0 0.0
  %2674 = vmatpush1.msra.mxu0 0.0
  %2675 = vmatprep.subr.mxu0 %v2638
  %2676 = vmatpush1.msra.mxu0 %v2639
  %2677 = vmatprep.subr.mxu0 0.0
  %2678 = vmatpush2.msra.mxu0 0.0
  %2679 = vmatprep.subr.mxu0 0.0
  %2680 = vmatpush2.msra.mxu0 0.0
  %2681 = vmatprep.subr.mxu0 0.0
  %2682 = vmatpush2.msra.mxu0 0.0
  %2683 = vmatprep.subr.mxu0 0.0
  %2684 = vmatpush2.msra.mxu0 0.0
  %2685 = vmatprep.subr.mxu0 0.0
  %2686 = vmatpush2.msra.mxu0 0.0
  %2687 = vmatprep.subr.mxu0 0.0
  %2688 = vmatpush2.msra.mxu0 0.0
  %2689 = vmatprep.subr.mxu0 0.0
  %2690 = vmatpush2.msra.mxu0 0.0
  %2691 = vmatprep.subr.mxu0 0.0
  %2692 = vmatpush2.msra.mxu0 0.0
  %2693 = vmatprep.subr.mxu0 0.0
  %2694 = vmatpush2.msra.mxu0 0.0
  %2695 = vmatprep.subr.mxu0 0.0
  %2696 = vmatpush2.msra.mxu0 0.0
  %2697 = vmatprep.subr.mxu0 0.0
  %2698 = vmatpush2.msra.mxu0 0.0
  %2699 = vmatprep.subr.mxu0 0.0
  %2700 = vmatpush2.msra.mxu0 0.0
  %2701 = vmatprep.subr.mxu0 0.0
  %2702 = vmatpush2.msra.mxu0 0.0
  %2703 = vmatprep.subr.mxu0 0.0
  %2704 = vmatpush2.msra.mxu0 0.0
  %2705 = vmatprep.subr.mxu0 0.0
  %2706 = vmatpush2.msra.mxu0 0.0
  %2707 = vmatprep.subr.mxu0 0.0
  %2708 = vmatpush2.msra.mxu0 0.0
  %2709 = vmatprep.mubr.f32.mxu0 0.0
  %2710 = vmatmul.mubr.f32.gmra.mxu0 %v2643
  %v2711 = vpop.f32.mrf.mxu0
  %v2712 = vadd.f32 0.0, %v2711
  %v2713 = vpop.f32.mrf.mxu0
  %v2714 = vadd.f32 0.0, %v2713
  %2715 = vdwg.mxu0
  %v2716 = vadd.f32 %v2631, %v2712
  %v2717 = vadd.f32 %v2632, %v2714
  %s2718 = scalar_lea.vmem %s13, 32
  %v2719 = vld [vmem:[%s2718] sm:$0xff]
  %2720 = vrot.lane.b32.xlu0 %v2387, 124
  %v2721 = vpop.permute.xlu0 %2720
  %2722 = vrot.lane.b32.xlu0 %v2388, 124
  %v2723 = vpop.permute.xlu0 %2722
  %v2724 = vsel %vm1174, %v2721, %v2723
  %v2728 = vsel %vm239, %v2719, 0
  %2730 = vmatprep.subr.mxu0 0.0
  %2731 = vmatpush1.msra.mxu0 0.0
  %2732 = vmatprep.subr.mxu0 0.0
  %2733 = vmatpush1.msra.mxu0 0.0
  %2734 = vmatprep.subr.mxu0 0.0
  %2735 = vmatpush1.msra.mxu0 0.0
  %2736 = vmatprep.subr.mxu0 0.0
  %2737 = vmatpush1.msra.mxu0 0.0
  %2738 = vmatprep.subr.mxu0 0.0
  %2739 = vmatpush1.msra.mxu0 0.0
  %2740 = vmatprep.subr.mxu0 0.0
  %2741 = vmatpush1.msra.mxu0 0.0
  %2742 = vmatprep.subr.mxu0 0.0
  %2743 = vmatpush1.msra.mxu0 0.0
  %2744 = vmatprep.subr.mxu0 0.0
  %2745 = vmatpush1.msra.mxu0 0.0
  %2746 = vmatprep.subr.mxu0 0.0
  %2747 = vmatpush1.msra.mxu0 0.0
  %2748 = vmatprep.subr.mxu0 0.0
  %2749 = vmatpush1.msra.mxu0 0.0
  %2750 = vmatprep.subr.mxu0 0.0
  %2751 = vmatpush1.msra.mxu0 0.0
  %2752 = vmatprep.subr.mxu0 0.0
  %2753 = vmatpush1.msra.mxu0 0.0
  %2754 = vmatprep.subr.mxu0 0.0
  %2755 = vmatpush1.msra.mxu0 0.0
  %2756 = vmatprep.subr.mxu0 0.0
  %2757 = vmatpush1.msra.mxu0 0.0
  %2758 = vmatprep.subr.mxu0 0.0
  %2759 = vmatpush1.msra.mxu0 0.0
  %2760 = vmatprep.subr.mxu0 %v2723
  %2761 = vmatpush1.msra.mxu0 %v2724
  %2762 = vmatprep.subr.mxu0 0.0
  %2763 = vmatpush2.msra.mxu0 0.0
  %2764 = vmatprep.subr.mxu0 0.0
  %2765 = vmatpush2.msra.mxu0 0.0
  %2766 = vmatprep.subr.mxu0 0.0
  %2767 = vmatpush2.msra.mxu0 0.0
  %2768 = vmatprep.subr.mxu0 0.0
  %2769 = vmatpush2.msra.mxu0 0.0
  %2770 = vmatprep.subr.mxu0 0.0
  %2771 = vmatpush2.msra.mxu0 0.0
  %2772 = vmatprep.subr.mxu0 0.0
  %2773 = vmatpush2.msra.mxu0 0.0
  %2774 = vmatprep.subr.mxu0 0.0
  %2775 = vmatpush2.msra.mxu0 0.0
  %2776 = vmatprep.subr.mxu0 0.0
  %2777 = vmatpush2.msra.mxu0 0.0
  %2778 = vmatprep.subr.mxu0 0.0
  %2779 = vmatpush2.msra.mxu0 0.0
  %2780 = vmatprep.subr.mxu0 0.0
  %2781 = vmatpush2.msra.mxu0 0.0
  %2782 = vmatprep.subr.mxu0 0.0
  %2783 = vmatpush2.msra.mxu0 0.0
  %2784 = vmatprep.subr.mxu0 0.0
  %2785 = vmatpush2.msra.mxu0 0.0
  %2786 = vmatprep.subr.mxu0 0.0
  %2787 = vmatpush2.msra.mxu0 0.0
  %2788 = vmatprep.subr.mxu0 0.0
  %2789 = vmatpush2.msra.mxu0 0.0
  %2790 = vmatprep.subr.mxu0 0.0
  %2791 = vmatpush2.msra.mxu0 0.0
  %2792 = vmatprep.subr.mxu0 0.0
  %2793 = vmatpush2.msra.mxu0 0.0
  %2794 = vmatprep.mubr.f32.mxu0 0.0
  %2795 = vmatmul.mubr.f32.gmra.mxu0 %v2728
  %v2796 = vpop.f32.mrf.mxu0
  %v2797 = vadd.f32 0.0, %v2796
  %v2798 = vpop.f32.mrf.mxu0
  %v2799 = vadd.f32 0.0, %v2798
  %2800 = vdwg.mxu0
  %v2801 = vadd.f32 %v2716, %v2797
  %v2802 = vadd.f32 %v2717, %v2799
  %s2803 = scalar_lea.vmem %s13, 40
  %v2804 = vld [vmem:[%s2803] sm:$0xff]
  %2805 = vrot.lane.b32.xlu0 %v2387, 123
  %v2806 = vpop.permute.xlu0 %2805
  %2807 = vrot.lane.b32.xlu0 %v2388, 123
  %v2808 = vpop.permute.xlu0 %2807
  %v2809 = vsel %vm1417, %v2806, %v2808
  %v2813 = vsel %vm239, %v2804, 0
  %2815 = vmatprep.subr.mxu0 0.0
  %2816 = vmatpush1.msra.mxu0 0.0
  %2817 = vmatprep.subr.mxu0 0.0
  %2818 = vmatpush1.msra.mxu0 0.0
  %2819 = vmatprep.subr.mxu0 0.0
  %2820 = vmatpush1.msra.mxu0 0.0
  %2821 = vmatprep.subr.mxu0 0.0
  %2822 = vmatpush1.msra.mxu0 0.0
  %2823 = vmatprep.subr.mxu0 0.0
  %2824 = vmatpush1.msra.mxu0 0.0
  %2825 = vmatprep.subr.mxu0 0.0
  %2826 = vmatpush1.msra.mxu0 0.0
  %2827 = vmatprep.subr.mxu0 0.0
  %2828 = vmatpush1.msra.mxu0 0.0
  %2829 = vmatprep.subr.mxu0 0.0
  %2830 = vmatpush1.msra.mxu0 0.0
  %2831 = vmatprep.subr.mxu0 0.0
  %2832 = vmatpush1.msra.mxu0 0.0
  %2833 = vmatprep.subr.mxu0 0.0
  %2834 = vmatpush1.msra.mxu0 0.0
  %2835 = vmatprep.subr.mxu0 0.0
  %2836 = vmatpush1.msra.mxu0 0.0
  %2837 = vmatprep.subr.mxu0 0.0
  %2838 = vmatpush1.msra.mxu0 0.0
  %2839 = vmatprep.subr.mxu0 0.0
  %2840 = vmatpush1.msra.mxu0 0.0
  %2841 = vmatprep.subr.mxu0 0.0
  %2842 = vmatpush1.msra.mxu0 0.0
  %2843 = vmatprep.subr.mxu0 0.0
  %2844 = vmatpush1.msra.mxu0 0.0
  %2845 = vmatprep.subr.mxu0 %v2808
  %2846 = vmatpush1.msra.mxu0 %v2809
  %2847 = vmatprep.subr.mxu0 0.0
  %2848 = vmatpush2.msra.mxu0 0.0
  %2849 = vmatprep.subr.mxu0 0.0
  %2850 = vmatpush2.msra.mxu0 0.0
  %2851 = vmatprep.subr.mxu0 0.0
  %2852 = vmatpush2.msra.mxu0 0.0
  %2853 = vmatprep.subr.mxu0 0.0
  %2854 = vmatpush2.msra.mxu0 0.0
  %2855 = vmatprep.subr.mxu0 0.0
  %2856 = vmatpush2.msra.mxu0 0.0
  %2857 = vmatprep.subr.mxu0 0.0
  %2858 = vmatpush2.msra.mxu0 0.0
  %2859 = vmatprep.subr.mxu0 0.0
  %2860 = vmatpush2.msra.mxu0 0.0
  %2861 = vmatprep.subr.mxu0 0.0
  %2862 = vmatpush2.msra.mxu0 0.0
  %2863 = vmatprep.subr.mxu0 0.0
  %2864 = vmatpush2.msra.mxu0 0.0
  %2865 = vmatprep.subr.mxu0 0.0
  %2866 = vmatpush2.msra.mxu0 0.0
  %2867 = vmatprep.subr.mxu0 0.0
  %2868 = vmatpush2.msra.mxu0 0.0
  %2869 = vmatprep.subr.mxu0 0.0
  %2870 = vmatpush2.msra.mxu0 0.0
  %2871 = vmatprep.subr.mxu0 0.0
  %2872 = vmatpush2.msra.mxu0 0.0
  %2873 = vmatprep.subr.mxu0 0.0
  %2874 = vmatpush2.msra.mxu0 0.0
  %2875 = vmatprep.subr.mxu0 0.0
  %2876 = vmatpush2.msra.mxu0 0.0
  %2877 = vmatprep.subr.mxu0 0.0
  %2878 = vmatpush2.msra.mxu0 0.0
  %2879 = vmatprep.mubr.f32.mxu0 0.0
  %2880 = vmatmul.mubr.f32.gmra.mxu0 %v2813
  %v2881 = vpop.f32.mrf.mxu0
  %v2882 = vadd.f32 0.0, %v2881
  %v2883 = vpop.f32.mrf.mxu0
  %v2884 = vadd.f32 0.0, %v2883
  %2885 = vdwg.mxu0
  %v2886 = vadd.f32 %v2801, %v2882
  %v2887 = vadd.f32 %v2802, %v2884
  %s2888 = scalar_lea.vmem %s13, 48
  %v2889 = vld [vmem:[%s2888] sm:$0xff]
  %2890 = vrot.lane.b32.xlu0 %v2387, 122
  %v2891 = vpop.permute.xlu0 %2890
  %2892 = vrot.lane.b32.xlu0 %v2388, 122
  %v2893 = vpop.permute.xlu0 %2892
  %v2894 = vsel %vm1660, %v2891, %v2893
  %v2898 = vsel %vm239, %v2889, 0
  %2900 = vmatprep.subr.mxu0 0.0
  %2901 = vmatpush1.msra.mxu0 0.0
  %2902 = vmatprep.subr.mxu0 0.0
  %2903 = vmatpush1.msra.mxu0 0.0
  %2904 = vmatprep.subr.mxu0 0.0
  %2905 = vmatpush1.msra.mxu0 0.0
  %2906 = vmatprep.subr.mxu0 0.0
  %2907 = vmatpush1.msra.mxu0 0.0
  %2908 = vmatprep.subr.mxu0 0.0
  %2909 = vmatpush1.msra.mxu0 0.0
  %2910 = vmatprep.subr.mxu0 0.0
  %2911 = vmatpush1.msra.mxu0 0.0
  %2912 = vmatprep.subr.mxu0 0.0
  %2913 = vmatpush1.msra.mxu0 0.0
  %2914 = vmatprep.subr.mxu0 0.0
  %2915 = vmatpush1.msra.mxu0 0.0
  %2916 = vmatprep.subr.mxu0 0.0
  %2917 = vmatpush1.msra.mxu0 0.0
  %2918 = vmatprep.subr.mxu0 0.0
  %2919 = vmatpush1.msra.mxu0 0.0
  %2920 = vmatprep.subr.mxu0 0.0
  %2921 = vmatpush1.msra.mxu0 0.0
  %2922 = vmatprep.subr.mxu0 0.0
  %2923 = vmatpush1.msra.mxu0 0.0
  %2924 = vmatprep.subr.mxu0 0.0
  %2925 = vmatpush1.msra.mxu0 0.0
  %2926 = vmatprep.subr.mxu0 0.0
  %2927 = vmatpush1.msra.mxu0 0.0
  %2928 = vmatprep.subr.mxu0 0.0
  %2929 = vmatpush1.msra.mxu0 0.0
  %2930 = vmatprep.subr.mxu0 %v2893
  %2931 = vmatpush1.msra.mxu0 %v2894
  %2932 = vmatprep.subr.mxu0 0.0
  %2933 = vmatpush2.msra.mxu0 0.0
  %2934 = vmatprep.subr.mxu0 0.0
  %2935 = vmatpush2.msra.mxu0 0.0
  %2936 = vmatprep.subr.mxu0 0.0
  %2937 = vmatpush2.msra.mxu0 0.0
  %2938 = vmatprep.subr.mxu0 0.0
  %2939 = vmatpush2.msra.mxu0 0.0
  %2940 = vmatprep.subr.mxu0 0.0
  %2941 = vmatpush2.msra.mxu0 0.0
  %2942 = vmatprep.subr.mxu0 0.0
  %2943 = vmatpush2.msra.mxu0 0.0
  %2944 = vmatprep.subr.mxu0 0.0
  %2945 = vmatpush2.msra.mxu0 0.0
  %2946 = vmatprep.subr.mxu0 0.0
  %2947 = vmatpush2.msra.mxu0 0.0
  %2948 = vmatprep.subr.mxu0 0.0
  %2949 = vmatpush2.msra.mxu0 0.0
  %2950 = vmatprep.subr.mxu0 0.0
  %2951 = vmatpush2.msra.mxu0 0.0
  %2952 = vmatprep.subr.mxu0 0.0
  %2953 = vmatpush2.msra.mxu0 0.0
  %2954 = vmatprep.subr.mxu0 0.0
  %2955 = vmatpush2.msra.mxu0 0.0
  %2956 = vmatprep.subr.mxu0 0.0
  %2957 = vmatpush2.msra.mxu0 0.0
  %2958 = vmatprep.subr.mxu0 0.0
  %2959 = vmatpush2.msra.mxu0 0.0
  %2960 = vmatprep.subr.mxu0 0.0
  %2961 = vmatpush2.msra.mxu0 0.0
  %2962 = vmatprep.subr.mxu0 0.0
  %2963 = vmatpush2.msra.mxu0 0.0
  %2964 = vmatprep.mubr.f32.mxu0 0.0
  %2965 = vmatmul.mubr.f32.gmra.mxu0 %v2898
  %v2966 = vpop.f32.mrf.mxu0
  %v2967 = vadd.f32 0.0, %v2966
  %v2968 = vpop.f32.mrf.mxu0
  %v2969 = vadd.f32 0.0, %v2968
  %2970 = vdwg.mxu0
  %v2971 = vadd.f32 %v2886, %v2967
  %v2972 = vadd.f32 %v2887, %v2969
  %s2973 = scalar_lea.vmem %s13, 56
  %v2974 = vld [vmem:[%s2973] sm:$0xff]
  %2975 = vrot.lane.b32.xlu0 %v2387, 121
  %v2976 = vpop.permute.xlu0 %2975
  %2977 = vrot.lane.b32.xlu0 %v2388, 121
  %v2978 = vpop.permute.xlu0 %2977
  %v2979 = vsel %vm1903, %v2976, %v2978
  %v2983 = vsel %vm239, %v2974, 0
  %2985 = vmatprep.subr.mxu0 0.0
  %2986 = vmatpush1.msra.mxu0 0.0
  %2987 = vmatprep.subr.mxu0 0.0
  %2988 = vmatpush1.msra.mxu0 0.0
  %2989 = vmatprep.subr.mxu0 0.0
  %2990 = vmatpush1.msra.mxu0 0.0
  %2991 = vmatprep.subr.mxu0 0.0
  %2992 = vmatpush1.msra.mxu0 0.0
  %2993 = vmatprep.subr.mxu0 0.0
  %2994 = vmatpush1.msra.mxu0 0.0
  %2995 = vmatprep.subr.mxu0 0.0
  %2996 = vmatpush1.msra.mxu0 0.0
  %2997 = vmatprep.subr.mxu0 0.0
  %2998 = vmatpush1.msra.mxu0 0.0
  %2999 = vmatprep.subr.mxu0 0.0
  %3000 = vmatpush1.msra.mxu0 0.0
  %3001 = vmatprep.subr.mxu0 0.0
  %3002 = vmatpush1.msra.mxu0 0.0
  %3003 = vmatprep.subr.mxu0 0.0
  %3004 = vmatpush1.msra.mxu0 0.0
  %3005 = vmatprep.subr.mxu0 0.0
  %3006 = vmatpush1.msra.mxu0 0.0
  %3007 = vmatprep.subr.mxu0 0.0
  %3008 = vmatpush1.msra.mxu0 0.0
  %3009 = vmatprep.subr.mxu0 0.0
  %3010 = vmatpush1.msra.mxu0 0.0
  %3011 = vmatprep.subr.mxu0 0.0
  %3012 = vmatpush1.msra.mxu0 0.0
  %3013 = vmatprep.subr.mxu0 0.0
  %3014 = vmatpush1.msra.mxu0 0.0
  %3015 = vmatprep.subr.mxu0 %v2978
  %3016 = vmatpush1.msra.mxu0 %v2979
  %3017 = vmatprep.subr.mxu0 0.0
  %3018 = vmatpush2.msra.mxu0 0.0
  %3019 = vmatprep.subr.mxu0 0.0
  %3020 = vmatpush2.msra.mxu0 0.0
  %3021 = vmatprep.subr.mxu0 0.0
  %3022 = vmatpush2.msra.mxu0 0.0
  %3023 = vmatprep.subr.mxu0 0.0
  %3024 = vmatpush2.msra.mxu0 0.0
  %3025 = vmatprep.subr.mxu0 0.0
  %3026 = vmatpush2.msra.mxu0 0.0
  %3027 = vmatprep.subr.mxu0 0.0
  %3028 = vmatpush2.msra.mxu0 0.0
  %3029 = vmatprep.subr.mxu0 0.0
  %3030 = vmatpush2.msra.mxu0 0.0
  %3031 = vmatprep.subr.mxu0 0.0
  %3032 = vmatpush2.msra.mxu0 0.0
  %3033 = vmatprep.subr.mxu0 0.0
  %3034 = vmatpush2.msra.mxu0 0.0
  %3035 = vmatprep.subr.mxu0 0.0
  %3036 = vmatpush2.msra.mxu0 0.0
  %3037 = vmatprep.subr.mxu0 0.0
  %3038 = vmatpush2.msra.mxu0 0.0
  %3039 = vmatprep.subr.mxu0 0.0
  %3040 = vmatpush2.msra.mxu0 0.0
  %3041 = vmatprep.subr.mxu0 0.0
  %3042 = vmatpush2.msra.mxu0 0.0
  %3043 = vmatprep.subr.mxu0 0.0
  %3044 = vmatpush2.msra.mxu0 0.0
  %3045 = vmatprep.subr.mxu0 0.0
  %3046 = vmatpush2.msra.mxu0 0.0
  %3047 = vmatprep.subr.mxu0 0.0
  %3048 = vmatpush2.msra.mxu0 0.0
  %3049 = vmatprep.mubr.f32.mxu0 0.0
  %3050 = vmatmul.mubr.f32.gmra.mxu0 %v2983
  %v3051 = vpop.f32.mrf.mxu0
  %v3052 = vadd.f32 0.0, %v3051
  %v3053 = vpop.f32.mrf.mxu0
  %v3054 = vadd.f32 0.0, %v3053
  %3055 = vdwg.mxu0
  %v3056 = vadd.f32 %v2971, %v3052
  %v3057 = vadd.f32 %v2972, %v3054
  %v3058 = vld [vmem:[%s15] sm:$0xff]
  %v3059 = vld [vmem:[%s21] sm:$0xff]
  %v3060 = vld [vmem:[%s21 + $0x8] sm:$0xff]
  %v3061 = vld [vmem:[%s21 + $0x10] sm:$0xff]
  %v3062 = vld [vmem:[%s21 + $0x18] sm:$0xff]
  %v3063 = vld [vmem:[%s21 + $0x20] sm:$0xff]
  %v3064 = vld [vmem:[%s21 + $0x28] sm:$0xff]
  %v3065 = vld [vmem:[%s21 + $0x30] sm:$0xff]
  %v3066 = vld [vmem:[%s21 + $0x38] sm:$0x7f]
  %3068 = vset.pattern.permute.xlu0 0
  %3069 = vperm.xlu0 %3068, %v3058
  %v3070 = vpop.permute.xlu0 %3069
  %vm3072 = vcmask 515072
  %v3074 = vsel %vm3072, %v3056, 0
  %vm3076 = vcmask 1046528
  %v3078 = vsel %vm3076, %v3066, 0
  %3080 = vmatprep.subr.mxu0 0.0
  %3081 = vmatpush1.msra.mxu0 0.0
  %3082 = vmatprep.subr.mxu0 0.0
  %3083 = vmatpush1.msra.mxu0 0.0
  %3084 = vmatprep.subr.mxu0 0.0
  %3085 = vmatpush1.msra.mxu0 0.0
  %3086 = vmatprep.subr.mxu0 0.0
  %3087 = vmatpush1.msra.mxu0 0.0
  %3088 = vmatprep.subr.mxu0 0.0
  %3089 = vmatpush1.msra.mxu0 0.0
  %3090 = vmatprep.subr.mxu0 0.0
  %3091 = vmatpush1.msra.mxu0 0.0
  %3092 = vmatprep.subr.mxu0 0.0
  %3093 = vmatpush1.msra.mxu0 0.0
  %3094 = vmatprep.subr.mxu0 0.0
  %3095 = vmatpush1.msra.mxu0 0.0
  %3096 = vmatprep.subr.mxu0 0.0
  %3097 = vmatpush1.msra.mxu0 %v3078
  %3098 = vmatprep.subr.mxu0 0.0
  %3099 = vmatpush1.msra.mxu0 %v3065
  %3100 = vmatprep.subr.mxu0 0.0
  %3101 = vmatpush1.msra.mxu0 %v3064
  %3102 = vmatprep.subr.mxu0 0.0
  %3103 = vmatpush1.msra.mxu0 %v3063
  %3104 = vmatprep.subr.mxu0 0.0
  %3105 = vmatpush1.msra.mxu0 %v3062
  %3106 = vmatprep.subr.mxu0 0.0
  %3107 = vmatpush1.msra.mxu0 %v3061
  %3108 = vmatprep.subr.mxu0 0.0
  %3109 = vmatpush1.msra.mxu0 %v3060
  %3110 = vmatprep.subr.mxu0 0.0
  %3111 = vmatpush1.msra.mxu0 %v3059
  %3112 = vmatprep.subr.mxu0 0.0
  %3113 = vmatpush2.msra.mxu0 0.0
  %3114 = vmatprep.subr.mxu0 0.0
  %3115 = vmatpush2.msra.mxu0 0.0
  %3116 = vmatprep.subr.mxu0 0.0
  %3117 = vmatpush2.msra.mxu0 0.0
  %3118 = vmatprep.subr.mxu0 0.0
  %3119 = vmatpush2.msra.mxu0 0.0
  %3120 = vmatprep.subr.mxu0 0.0
  %3121 = vmatpush2.msra.mxu0 0.0
  %3122 = vmatprep.subr.mxu0 0.0
  %3123 = vmatpush2.msra.mxu0 0.0
  %3124 = vmatprep.subr.mxu0 0.0
  %3125 = vmatpush2.msra.mxu0 0.0
  %3126 = vmatprep.subr.mxu0 0.0
  %3127 = vmatpush2.msra.mxu0 0.0
  %3128 = vmatprep.subr.mxu0 0.0
  %3129 = vmatpush2.msra.mxu0 0.0
  %3130 = vmatprep.subr.mxu0 0.0
  %3131 = vmatpush2.msra.mxu0 0.0
  %3132 = vmatprep.subr.mxu0 0.0
  %3133 = vmatpush2.msra.mxu0 0.0
  %3134 = vmatprep.subr.mxu0 0.0
  %3135 = vmatpush2.msra.mxu0 0.0
  %3136 = vmatprep.subr.mxu0 0.0
  %3137 = vmatpush2.msra.mxu0 0.0
  %3138 = vmatprep.subr.mxu0 0.0
  %3139 = vmatpush2.msra.mxu0 0.0
  %3140 = vmatprep.subr.mxu0 0.0
  %3141 = vmatpush2.msra.mxu0 0.0
  %3142 = vmatprep.subr.mxu0 0.0
  %3143 = vmatpush2.msra.mxu0 0.0
  %3144 = vmatprep.mubr.f32.mxu0 0.0
  %3145 = vmatmul.mubr.f32.gmra.mxu0 %v3074
  %v3146 = vpop.f32.mrf.mxu0
  %v3147 = vadd.f32 %v3070, %v3146
  %v3148 = vpop.f32.mrf.mxu0
  %3149 = vdwg.mxu0
  %vm3150 = vcmp.gt.f32.partialorder %v3147, 0.0
  %v3151 = vmul.f32 %v3147, 0.01
  %v3152 = vsel %vm3150, %v3147, %v3151
  %v3154 = vsel %vm3072, %v3057, 0
  %3156 = vmatprep.subr.mxu0 0.0
  %3157 = vmatpush1.msra.mxu0 0.0
  %3158 = vmatprep.subr.mxu0 0.0
  %3159 = vmatpush1.msra.mxu0 0.0
  %3160 = vmatprep.subr.mxu0 0.0
  %3161 = vmatpush1.msra.mxu0 0.0
  %3162 = vmatprep.subr.mxu0 0.0
  %3163 = vmatpush1.msra.mxu0 0.0
  %3164 = vmatprep.subr.mxu0 0.0
  %3165 = vmatpush1.msra.mxu0 0.0
  %3166 = vmatprep.subr.mxu0 0.0
  %3167 = vmatpush1.msra.mxu0 0.0
  %3168 = vmatprep.subr.mxu0 0.0
  %3169 = vmatpush1.msra.mxu0 0.0
  %3170 = vmatprep.subr.mxu0 0.0
  %3171 = vmatpush1.msra.mxu0 0.0
  %3172 = vmatprep.subr.mxu0 0.0
  %3173 = vmatpush1.msra.mxu0 %v3078
  %3174 = vmatprep.subr.mxu0 0.0
  %3175 = vmatpush1.msra.mxu0 %v3065
  %3176 = vmatprep.subr.mxu0 0.0
  %3177 = vmatpush1.msra.mxu0 %v3064
  %3178 = vmatprep.subr.mxu0 0.0
  %3179 = vmatpush1.msra.mxu0 %v3063
  %3180 = vmatprep.subr.mxu0 0.0
  %3181 = vmatpush1.msra.mxu0 %v3062
  %3182 = vmatprep.subr.mxu0 0.0
  %3183 = vmatpush1.msra.mxu0 %v3061
  %3184 = vmatprep.subr.mxu0 0.0
  %3185 = vmatpush1.msra.mxu0 %v3060
  %3186 = vmatprep.subr.mxu0 0.0
  %3187 = vmatpush1.msra.mxu0 %v3059
  %3188 = vmatprep.subr.mxu0 0.0
  %3189 = vmatpush2.msra.mxu0 0.0
  %3190 = vmatprep.subr.mxu0 0.0
  %3191 = vmatpush2.msra.mxu0 0.0
  %3192 = vmatprep.subr.mxu0 0.0
  %3193 = vmatpush2.msra.mxu0 0.0
  %3194 = vmatprep.subr.mxu0 0.0
  %3195 = vmatpush2.msra.mxu0 0.0
  %3196 = vmatprep.subr.mxu0 0.0
  %3197 = vmatpush2.msra.mxu0 0.0
  %3198 = vmatprep.subr.mxu0 0.0
  %3199 = vmatpush2.msra.mxu0 0.0
  %3200 = vmatprep.subr.mxu0 0.0
  %3201 = vmatpush2.msra.mxu0 0.0
  %3202 = vmatprep.subr.mxu0 0.0
  %3203 = vmatpush2.msra.mxu0 0.0
  %3204 = vmatprep.subr.mxu0 0.0
  %3205 = vmatpush2.msra.mxu0 0.0
  %3206 = vmatprep.subr.mxu0 0.0
  %3207 = vmatpush2.msra.mxu0 0.0
  %3208 = vmatprep.subr.mxu0 0.0
  %3209 = vmatpush2.msra.mxu0 0.0
  %3210 = vmatprep.subr.mxu0 0.0
  %3211 = vmatpush2.msra.mxu0 0.0
  %3212 = vmatprep.subr.mxu0 0.0
  %3213 = vmatpush2.msra.mxu0 0.0
  %3214 = vmatprep.subr.mxu0 0.0
  %3215 = vmatpush2.msra.mxu0 0.0
  %3216 = vmatprep.subr.mxu0 0.0
  %3217 = vmatpush2.msra.mxu0 0.0
  %3218 = vmatprep.subr.mxu0 0.0
  %3219 = vmatpush2.msra.mxu0 0.0
  %3220 = vmatprep.mubr.f32.mxu0 0.0
  %3221 = vmatmul.mubr.f32.gmra.mxu0 %v3154
  %v3222 = vpop.f32.mrf.mxu0
  %v3223 = vadd.f32 %v3070, %v3222
  %v3224 = vpop.f32.mrf.mxu0
  %3225 = vdwg.mxu0
  %vm3226 = vcmp.gt.f32.partialorder %v3223, 0.0
  %v3227 = vmul.f32 %v3223, 0.01
  %v3228 = vsel %vm3226, %v3223, %v3227
  %v3229 = vld [vmem:[%s17] sm:$0xff]
  %v3230 = vld [vmem:[%s19] sm:$0xff]
  %vm3231 = vcmask 261120
  %v3232 = vsel %vm3231, %v3152, 0.0
  %3233 = vadd.xlane.f32.xlu0 %v3232
  %v3234 = vpop.xlane.xlu0 %3233
  %v3235 = vmul.f32 %v3152, %v3152
  %v3236 = vsel %vm3231, %v3235, 0.0
  %3237 = vadd.xlane.f32.xlu0 %v3236
  %v3238 = vpop.xlane.xlu0 %3237
  %v3239 = vsel %vm3231, %v3228, 0.0
  %3240 = vadd.xlane.f32.xlu0 %v3239
  %v3241 = vpop.xlane.xlu0 %3240
  %v3242 = vadd.f32 %v3234, %v3241
  %v3243 = vmul.f32 %v3228, %v3228
  %v3244 = vsel %vm3231, %v3243, 0.0
  %3245 = vadd.xlane.f32.xlu0 %v3244
  %v3246 = vpop.xlane.xlu0 %3245
  %v3247 = vadd.f32 %v3238, %v3246
  %v3248 = vmul.f32 %v3242, 0.015625
  %v3249 = vmul.f32 %v3247, 0.015625
  %v3250 = vmul.f32 %v3248, %v3248
  %v3251 = vsub.f32 %v3249, %v3250
  %v3252 = vmax.f32 %v3251, 0.0
  %v3253 = vadd.f32 %v3252, 1e-05
  %v3254 = vrsqrt.pop %v3253
  %v3255 = vmul.f32 %v3229, %v3254
  %v3256 = vmul.f32 %v3248, %v3255
  %v3257 = vsub.f32 %v3230, %v3256
  %3259 = vset.pattern.permute.xlu0 0
  %3260 = vperm.xlu0 %3259, %v3255
  %v3261 = vpop.permute.xlu0 %3260
  %v3263 = vmul.f32 %v3152, %v3261
  %3265 = vset.pattern.permute.xlu0 0
  %3266 = vperm.xlu0 %3265, %v3257
  %v3267 = vpop.permute.xlu0 %3266
  %v3269 = vadd.f32 %v3263, %v3267
  %v3270 = vmul.f32 %v3228, %v3261
  %v3271 = vadd.f32 %v3270, %v3267
  %3272 = vst.msk [vmem:[#allocation2] sm:$0xff] %vm2369, 0.0
  %vm3273 = vcmask 310552
  %3274 = vst.msk [vmem:[#allocation2] sm:$0xff] %vm3273, 0.0
  %3276 = vrot.lane.b32.xlu0 %v3269, 3
  %v3277 = vpop.permute.xlu0 %3276
  %vm3279 = vcmask 285720
  %3280 = vst.msk [vmem:[#allocation2] sm:$0xff] %vm3279, %v3277
  %3281 = vst.msk [vmem:[#allocation2 + $0x8] sm:$0xff] %vm2369, 0.0
  %3282 = vst.msk [vmem:[#allocation2 + $0x8] sm:$0xff] %vm3273, 0.0
  %3284 = vrot.lane.b32.xlu0 %v3271, 3
  %v3285 = vpop.permute.xlu0 %3284
  %3287 = vst.msk [vmem:[#allocation2 + $0x8] sm:$0xff] %vm3279, %v3285
  %v3288 = vld [vmem:[%s23] sm:$0xff]
  %v3289 = vld [vmem:[#allocation2] sm:$0xff]
  %v3290 = vld [vmem:[#allocation2 + $0x8] sm:$0xff]
  %s3291 = scalar_lea.vmem %s23, 8
  %v3292 = vld [vmem:[%s3291] sm:$0xff]
  %3295 = vrot.lane.b32.xlu0 %v3289, 127
  %v3296 = vpop.permute.xlu0 %3295
  %3297 = vrot.lane.b32.xlu0 %v3290, 127
  %v3298 = vpop.permute.xlu0 %3297
  %v3299 = vsel %vm229, %v3296, %v3298
  %v3303 = vsel %vm239, %v3292, 0
  %3305 = vmatprep.subr.mxu0 0.0
  %3306 = vmatpush1.msra.mxu0 0.0
  %3307 = vmatprep.subr.mxu0 0.0
  %3308 = vmatpush1.msra.mxu0 0.0
  %3309 = vmatprep.subr.mxu0 0.0
  %3310 = vmatpush1.msra.mxu0 0.0
  %3311 = vmatprep.subr.mxu0 0.0
  %3312 = vmatpush1.msra.mxu0 0.0
  %3313 = vmatprep.subr.mxu0 0.0
  %3314 = vmatpush1.msra.mxu0 0.0
  %3315 = vmatprep.subr.mxu0 0.0
  %3316 = vmatpush1.msra.mxu0 0.0
  %3317 = vmatprep.subr.mxu0 0.0
  %3318 = vmatpush1.msra.mxu0 0.0
  %3319 = vmatprep.subr.mxu0 0.0
  %3320 = vmatpush1.msra.mxu0 0.0
  %3321 = vmatprep.subr.mxu0 0.0
  %3322 = vmatpush1.msra.mxu0 0.0
  %3323 = vmatprep.subr.mxu0 0.0
  %3324 = vmatpush1.msra.mxu0 0.0
  %3325 = vmatprep.subr.mxu0 0.0
  %3326 = vmatpush1.msra.mxu0 0.0
  %3327 = vmatprep.subr.mxu0 0.0
  %3328 = vmatpush1.msra.mxu0 0.0
  %3329 = vmatprep.subr.mxu0 0.0
  %3330 = vmatpush1.msra.mxu0 0.0
  %3331 = vmatprep.subr.mxu0 0.0
  %3332 = vmatpush1.msra.mxu0 0.0
  %3333 = vmatprep.subr.mxu0 0.0
  %3334 = vmatpush1.msra.mxu0 0.0
  %3335 = vmatprep.subr.mxu0 %v3298
  %3336 = vmatpush1.msra.mxu0 %v3299
  %3337 = vmatprep.subr.mxu0 0.0
  %3338 = vmatpush2.msra.mxu0 0.0
  %3339 = vmatprep.subr.mxu0 0.0
  %3340 = vmatpush2.msra.mxu0 0.0
  %3341 = vmatprep.subr.mxu0 0.0
  %3342 = vmatpush2.msra.mxu0 0.0
  %3343 = vmatprep.subr.mxu0 0.0
  %3344 = vmatpush2.msra.mxu0 0.0
  %3345 = vmatprep.subr.mxu0 0.0
  %3346 = vmatpush2.msra.mxu0 0.0
  %3347 = vmatprep.subr.mxu0 0.0
  %3348 = vmatpush2.msra.mxu0 0.0
  %3349 = vmatprep.subr.mxu0 0.0
  %3350 = vmatpush2.msra.mxu0 0.0
  %3351 = vmatprep.subr.mxu0 0.0
  %3352 = vmatpush2.msra.mxu0 0.0
  %3353 = vmatprep.subr.mxu0 0.0
  %3354 = vmatpush2.msra.mxu0 0.0
  %3355 = vmatprep.subr.mxu0 0.0
  %3356 = vmatpush2.msra.mxu0 0.0
  %3357 = vmatprep.subr.mxu0 0.0
  %3358 = vmatpush2.msra.mxu0 0.0
  %3359 = vmatprep.subr.mxu0 0.0
  %3360 = vmatpush2.msra.mxu0 0.0
  %3361 = vmatprep.subr.mxu0 0.0
  %3362 = vmatpush2.msra.mxu0 0.0
  %3363 = vmatprep.subr.mxu0 0.0
  %3364 = vmatpush2.msra.mxu0 0.0
  %3365 = vmatprep.subr.mxu0 0.0
  %3366 = vmatpush2.msra.mxu0 0.0
  %3367 = vmatprep.subr.mxu0 0.0
  %3368 = vmatpush2.msra.mxu0 0.0
  %3369 = vmatprep.mubr.f32.mxu0 0.0
  %3370 = vmatmul.mubr.f32.gmra.mxu0 %v3303
  %v3371 = vpop.f32.mrf.mxu0
  %v3372 = vadd.f32 0.0, %v3371
  %v3373 = vpop.f32.mrf.mxu0
  %v3374 = vadd.f32 0.0, %v3373
  %3375 = vdwg.mxu0
  %v3377 = vsel %vm239, %v3288, 0
  %3379 = vmatprep.subr.mxu0 0.0
  %3380 = vmatpush1.msra.mxu0 0.0
  %3381 = vmatprep.subr.mxu0 0.0
  %3382 = vmatpush1.msra.mxu0 0.0
  %3383 = vmatprep.subr.mxu0 0.0
  %3384 = vmatpush1.msra.mxu0 0.0
  %3385 = vmatprep.subr.mxu0 0.0
  %3386 = vmatpush1.msra.mxu0 0.0
  %3387 = vmatprep.subr.mxu0 0.0
  %3388 = vmatpush1.msra.mxu0 0.0
  %3389 = vmatprep.subr.mxu0 0.0
  %3390 = vmatpush1.msra.mxu0 0.0
  %3391 = vmatprep.subr.mxu0 0.0
  %3392 = vmatpush1.msra.mxu0 0.0
  %3393 = vmatprep.subr.mxu0 0.0
  %3394 = vmatpush1.msra.mxu0 0.0
  %3395 = vmatprep.subr.mxu0 0.0
  %3396 = vmatpush1.msra.mxu0 0.0
  %3397 = vmatprep.subr.mxu0 0.0
  %3398 = vmatpush1.msra.mxu0 0.0
  %3399 = vmatprep.subr.mxu0 0.0
  %3400 = vmatpush1.msra.mxu0 0.0
  %3401 = vmatprep.subr.mxu0 0.0
  %3402 = vmatpush1.msra.mxu0 0.0
  %3403 = vmatprep.subr.mxu0 0.0
  %3404 = vmatpush1.msra.mxu0 0.0
  %3405 = vmatprep.subr.mxu0 0.0
  %3406 = vmatpush1.msra.mxu0 0.0
  %3407 = vmatprep.subr.mxu0 0.0
  %3408 = vmatpush1.msra.mxu0 0.0
  %3409 = vmatprep.subr.mxu0 %v3290
  %3410 = vmatpush1.msra.mxu0 %v3289
  %3411 = vmatprep.subr.mxu0 0.0
  %3412 = vmatpush2.msra.mxu0 0.0
  %3413 = vmatprep.subr.mxu0 0.0
  %3414 = vmatpush2.msra.mxu0 0.0
  %3415 = vmatprep.subr.mxu0 0.0
  %3416 = vmatpush2.msra.mxu0 0.0
  %3417 = vmatprep.subr.mxu0 0.0
  %3418 = vmatpush2.msra.mxu0 0.0
  %3419 = vmatprep.subr.mxu0 0.0
  %3420 = vmatpush2.msra.mxu0 0.0
  %3421 = vmatprep.subr.mxu0 0.0
  %3422 = vmatpush2.msra.mxu0 0.0
  %3423 = vmatprep.subr.mxu0 0.0
  %3424 = vmatpush2.msra.mxu0 0.0
  %3425 = vmatprep.subr.mxu0 0.0
  %3426 = vmatpush2.msra.mxu0 0.0
  %3427 = vmatprep.subr.mxu0 0.0
  %3428 = vmatpush2.msra.mxu0 0.0
  %3429 = vmatprep.subr.mxu0 0.0
  %3430 = vmatpush2.msra.mxu0 0.0
  %3431 = vmatprep.subr.mxu0 0.0
  %3432 = vmatpush2.msra.mxu0 0.0
  %3433 = vmatprep.subr.mxu0 0.0
  %3434 = vmatpush2.msra.mxu0 0.0
  %3435 = vmatprep.subr.mxu0 0.0
  %3436 = vmatpush2.msra.mxu0 0.0
  %3437 = vmatprep.subr.mxu0 0.0
  %3438 = vmatpush2.msra.mxu0 0.0
  %3439 = vmatprep.subr.mxu0 0.0
  %3440 = vmatpush2.msra.mxu0 0.0
  %3441 = vmatprep.subr.mxu0 0.0
  %3442 = vmatpush2.msra.mxu0 0.0
  %3443 = vmatprep.mubr.f32.mxu0 0.0
  %3444 = vmatmul.mubr.f32.gmra.mxu0 %v3377
  %v3445 = vpop.f32.mrf.mxu0
  %v3446 = vadd.f32 %v3372, %v3445
  %v3447 = vpop.f32.mrf.mxu0
  %v3448 = vadd.f32 %v3374, %v3447
  %3449 = vdwg.mxu0
  %s3450 = scalar_lea.vmem %s23, 16
  %v3451 = vld [vmem:[%s3450] sm:$0xff]
  %3452 = vrot.lane.b32.xlu0 %v3289, 126
  %v3453 = vpop.permute.xlu0 %3452
  %3454 = vrot.lane.b32.xlu0 %v3290, 126
  %v3455 = vpop.permute.xlu0 %3454
  %v3456 = vsel %vm680, %v3453, %v3455
  %v3460 = vsel %vm239, %v3451, 0
  %3462 = vmatprep.subr.mxu0 0.0
  %3463 = vmatpush1.msra.mxu0 0.0
  %3464 = vmatprep.subr.mxu0 0.0
  %3465 = vmatpush1.msra.mxu0 0.0
  %3466 = vmatprep.subr.mxu0 0.0
  %3467 = vmatpush1.msra.mxu0 0.0
  %3468 = vmatprep.subr.mxu0 0.0
  %3469 = vmatpush1.msra.mxu0 0.0
  %3470 = vmatprep.subr.mxu0 0.0
  %3471 = vmatpush1.msra.mxu0 0.0
  %3472 = vmatprep.subr.mxu0 0.0
  %3473 = vmatpush1.msra.mxu0 0.0
  %3474 = vmatprep.subr.mxu0 0.0
  %3475 = vmatpush1.msra.mxu0 0.0
  %3476 = vmatprep.subr.mxu0 0.0
  %3477 = vmatpush1.msra.mxu0 0.0
  %3478 = vmatprep.subr.mxu0 0.0
  %3479 = vmatpush1.msra.mxu0 0.0
  %3480 = vmatprep.subr.mxu0 0.0
  %3481 = vmatpush1.msra.mxu0 0.0
  %3482 = vmatprep.subr.mxu0 0.0
  %3483 = vmatpush1.msra.mxu0 0.0
  %3484 = vmatprep.subr.mxu0 0.0
  %3485 = vmatpush1.msra.mxu0 0.0
  %3486 = vmatprep.subr.mxu0 0.0
  %3487 = vmatpush1.msra.mxu0 0.0
  %3488 = vmatprep.subr.mxu0 0.0
  %3489 = vmatpush1.msra.mxu0 0.0
  %3490 = vmatprep.subr.mxu0 0.0
  %3491 = vmatpush1.msra.mxu0 0.0
  %3492 = vmatprep.subr.mxu0 %v3455
  %3493 = vmatpush1.msra.mxu0 %v3456
  %3494 = vmatprep.subr.mxu0 0.0
  %3495 = vmatpush2.msra.mxu0 0.0
  %3496 = vmatprep.subr.mxu0 0.0
  %3497 = vmatpush2.msra.mxu0 0.0
  %3498 = vmatprep.subr.mxu0 0.0
  %3499 = vmatpush2.msra.mxu0 0.0
  %3500 = vmatprep.subr.mxu0 0.0
  %3501 = vmatpush2.msra.mxu0 0.0
  %3502 = vmatprep.subr.mxu0 0.0
  %3503 = vmatpush2.msra.mxu0 0.0
  %3504 = vmatprep.subr.mxu0 0.0
  %3505 = vmatpush2.msra.mxu0 0.0
  %3506 = vmatprep.subr.mxu0 0.0
  %3507 = vmatpush2.msra.mxu0 0.0
  %3508 = vmatprep.subr.mxu0 0.0
  %3509 = vmatpush2.msra.mxu0 0.0
  %3510 = vmatprep.subr.mxu0 0.0
  %3511 = vmatpush2.msra.mxu0 0.0
  %3512 = vmatprep.subr.mxu0 0.0
  %3513 = vmatpush2.msra.mxu0 0.0
  %3514 = vmatprep.subr.mxu0 0.0
  %3515 = vmatpush2.msra.mxu0 0.0
  %3516 = vmatprep.subr.mxu0 0.0
  %3517 = vmatpush2.msra.mxu0 0.0
  %3518 = vmatprep.subr.mxu0 0.0
  %3519 = vmatpush2.msra.mxu0 0.0
  %3520 = vmatprep.subr.mxu0 0.0
  %3521 = vmatpush2.msra.mxu0 0.0
  %3522 = vmatprep.subr.mxu0 0.0
  %3523 = vmatpush2.msra.mxu0 0.0
  %3524 = vmatprep.subr.mxu0 0.0
  %3525 = vmatpush2.msra.mxu0 0.0
  %3526 = vmatprep.mubr.f32.mxu0 0.0
  %3527 = vmatmul.mubr.f32.gmra.mxu0 %v3460
  %v3528 = vpop.f32.mrf.mxu0
  %v3529 = vadd.f32 0.0, %v3528
  %v3530 = vpop.f32.mrf.mxu0
  %v3531 = vadd.f32 0.0, %v3530
  %3532 = vdwg.mxu0
  %v3533 = vadd.f32 %v3446, %v3529
  %v3534 = vadd.f32 %v3448, %v3531
  %s3535 = scalar_lea.vmem %s23, 24
  %v3536 = vld [vmem:[%s3535] sm:$0xff]
  %3537 = vrot.lane.b32.xlu0 %v3289, 125
  %v3538 = vpop.permute.xlu0 %3537
  %3539 = vrot.lane.b32.xlu0 %v3290, 125
  %v3540 = vpop.permute.xlu0 %3539
  %v3541 = vsel %vm920, %v3538, %v3540
  %v3545 = vsel %vm239, %v3536, 0
  %3547 = vmatprep.subr.mxu0 0.0
  %3548 = vmatpush1.msra.mxu0 0.0
  %3549 = vmatprep.subr.mxu0 0.0
  %3550 = vmatpush1.msra.mxu0 0.0
  %3551 = vmatprep.subr.mxu0 0.0
  %3552 = vmatpush1.msra.mxu0 0.0
  %3553 = vmatprep.subr.mxu0 0.0
  %3554 = vmatpush1.msra.mxu0 0.0
  %3555 = vmatprep.subr.mxu0 0.0
  %3556 = vmatpush1.msra.mxu0 0.0
  %3557 = vmatprep.subr.mxu0 0.0
  %3558 = vmatpush1.msra.mxu0 0.0
  %3559 = vmatprep.subr.mxu0 0.0
  %3560 = vmatpush1.msra.mxu0 0.0
  %3561 = vmatprep.subr.mxu0 0.0
  %3562 = vmatpush1.msra.mxu0 0.0
  %3563 = vmatprep.subr.mxu0 0.0
  %3564 = vmatpush1.msra.mxu0 0.0
  %3565 = vmatprep.subr.mxu0 0.0
  %3566 = vmatpush1.msra.mxu0 0.0
  %3567 = vmatprep.subr.mxu0 0.0
  %3568 = vmatpush1.msra.mxu0 0.0
  %3569 = vmatprep.subr.mxu0 0.0
  %3570 = vmatpush1.msra.mxu0 0.0
  %3571 = vmatprep.subr.mxu0 0.0
  %3572 = vmatpush1.msra.mxu0 0.0
  %3573 = vmatprep.subr.mxu0 0.0
  %3574 = vmatpush1.msra.mxu0 0.0
  %3575 = vmatprep.subr.mxu0 0.0
  %3576 = vmatpush1.msra.mxu0 0.0
  %3577 = vmatprep.subr.mxu0 %v3540
  %3578 = vmatpush1.msra.mxu0 %v3541
  %3579 = vmatprep.subr.mxu0 0.0
  %3580 = vmatpush2.msra.mxu0 0.0
  %3581 = vmatprep.subr.mxu0 0.0
  %3582 = vmatpush2.msra.mxu0 0.0
  %3583 = vmatprep.subr.mxu0 0.0
  %3584 = vmatpush2.msra.mxu0 0.0
  %3585 = vmatprep.subr.mxu0 0.0
  %3586 = vmatpush2.msra.mxu0 0.0
  %3587 = vmatprep.subr.mxu0 0.0
  %3588 = vmatpush2.msra.mxu0 0.0
  %3589 = vmatprep.subr.mxu0 0.0
  %3590 = vmatpush2.msra.mxu0 0.0
  %3591 = vmatprep.subr.mxu0 0.0
  %3592 = vmatpush2.msra.mxu0 0.0
  %3593 = vmatprep.subr.mxu0 0.0
  %3594 = vmatpush2.msra.mxu0 0.0
  %3595 = vmatprep.subr.mxu0 0.0
  %3596 = vmatpush2.msra.mxu0 0.0
  %3597 = vmatprep.subr.mxu0 0.0
  %3598 = vmatpush2.msra.mxu0 0.0
  %3599 = vmatprep.subr.mxu0 0.0
  %3600 = vmatpush2.msra.mxu0 0.0
  %3601 = vmatprep.subr.mxu0 0.0
  %3602 = vmatpush2.msra.mxu0 0.0
  %3603 = vmatprep.subr.mxu0 0.0
  %3604 = vmatpush2.msra.mxu0 0.0
  %3605 = vmatprep.subr.mxu0 0.0
  %3606 = vmatpush2.msra.mxu0 0.0
  %3607 = vmatprep.subr.mxu0 0.0
  %3608 = vmatpush2.msra.mxu0 0.0
  %3609 = vmatprep.subr.mxu0 0.0
  %3610 = vmatpush2.msra.mxu0 0.0
  %3611 = vmatprep.mubr.f32.mxu0 0.0
  %3612 = vmatmul.mubr.f32.gmra.mxu0 %v3545
  %v3613 = vpop.f32.mrf.mxu0
  %v3614 = vadd.f32 0.0, %v3613
  %v3615 = vpop.f32.mrf.mxu0
  %v3616 = vadd.f32 0.0, %v3615
  %3617 = vdwg.mxu0
  %v3618 = vadd.f32 %v3533, %v3614
  %v3619 = vadd.f32 %v3534, %v3616
  %s3620 = scalar_lea.vmem %s23, 32
  %v3621 = vld [vmem:[%s3620] sm:$0xff]
  %3622 = vrot.lane.b32.xlu0 %v3289, 124
  %v3623 = vpop.permute.xlu0 %3622
  %3624 = vrot.lane.b32.xlu0 %v3290, 124
  %v3625 = vpop.permute.xlu0 %3624
  %v3626 = vsel %vm1174, %v3623, %v3625
  %v3630 = vsel %vm239, %v3621, 0
  %3632 = vmatprep.subr.mxu0 0.0
  %3633 = vmatpush1.msra.mxu0 0.0
  %3634 = vmatprep.subr.mxu0 0.0
  %3635 = vmatpush1.msra.mxu0 0.0
  %3636 = vmatprep.subr.mxu0 0.0
  %3637 = vmatpush1.msra.mxu0 0.0
  %3638 = vmatprep.subr.mxu0 0.0
  %3639 = vmatpush1.msra.mxu0 0.0
  %3640 = vmatprep.subr.mxu0 0.0
  %3641 = vmatpush1.msra.mxu0 0.0
  %3642 = vmatprep.subr.mxu0 0.0
  %3643 = vmatpush1.msra.mxu0 0.0
  %3644 = vmatprep.subr.mxu0 0.0
  %3645 = vmatpush1.msra.mxu0 0.0
  %3646 = vmatprep.subr.mxu0 0.0
  %3647 = vmatpush1.msra.mxu0 0.0
  %3648 = vmatprep.subr.mxu0 0.0
  %3649 = vmatpush1.msra.mxu0 0.0
  %3650 = vmatprep.subr.mxu0 0.0
  %3651 = vmatpush1.msra.mxu0 0.0
  %3652 = vmatprep.subr.mxu0 0.0
  %3653 = vmatpush1.msra.mxu0 0.0
  %3654 = vmatprep.subr.mxu0 0.0
  %3655 = vmatpush1.msra.mxu0 0.0
  %3656 = vmatprep.subr.mxu0 0.0
  %3657 = vmatpush1.msra.mxu0 0.0
  %3658 = vmatprep.subr.mxu0 0.0
  %3659 = vmatpush1.msra.mxu0 0.0
  %3660 = vmatprep.subr.mxu0 0.0
  %3661 = vmatpush1.msra.mxu0 0.0
  %3662 = vmatprep.subr.mxu0 %v3625
  %3663 = vmatpush1.msra.mxu0 %v3626
  %3664 = vmatprep.subr.mxu0 0.0
  %3665 = vmatpush2.msra.mxu0 0.0
  %3666 = vmatprep.subr.mxu0 0.0
  %3667 = vmatpush2.msra.mxu0 0.0
  %3668 = vmatprep.subr.mxu0 0.0
  %3669 = vmatpush2.msra.mxu0 0.0
  %3670 = vmatprep.subr.mxu0 0.0
  %3671 = vmatpush2.msra.mxu0 0.0
  %3672 = vmatprep.subr.mxu0 0.0
  %3673 = vmatpush2.msra.mxu0 0.0
  %3674 = vmatprep.subr.mxu0 0.0
  %3675 = vmatpush2.msra.mxu0 0.0
  %3676 = vmatprep.subr.mxu0 0.0
  %3677 = vmatpush2.msra.mxu0 0.0
  %3678 = vmatprep.subr.mxu0 0.0
  %3679 = vmatpush2.msra.mxu0 0.0
  %3680 = vmatprep.subr.mxu0 0.0
  %3681 = vmatpush2.msra.mxu0 0.0
  %3682 = vmatprep.subr.mxu0 0.0
  %3683 = vmatpush2.msra.mxu0 0.0
  %3684 = vmatprep.subr.mxu0 0.0
  %3685 = vmatpush2.msra.mxu0 0.0
  %3686 = vmatprep.subr.mxu0 0.0
  %3687 = vmatpush2.msra.mxu0 0.0
  %3688 = vmatprep.subr.mxu0 0.0
  %3689 = vmatpush2.msra.mxu0 0.0
  %3690 = vmatprep.subr.mxu0 0.0
  %3691 = vmatpush2.msra.mxu0 0.0
  %3692 = vmatprep.subr.mxu0 0.0
  %3693 = vmatpush2.msra.mxu0 0.0
  %3694 = vmatprep.subr.mxu0 0.0
  %3695 = vmatpush2.msra.mxu0 0.0
  %3696 = vmatprep.mubr.f32.mxu0 0.0
  %3697 = vmatmul.mubr.f32.gmra.mxu0 %v3630
  %v3698 = vpop.f32.mrf.mxu0
  %v3699 = vadd.f32 0.0, %v3698
  %v3700 = vpop.f32.mrf.mxu0
  %v3701 = vadd.f32 0.0, %v3700
  %3702 = vdwg.mxu0
  %v3703 = vadd.f32 %v3618, %v3699
  %v3704 = vadd.f32 %v3619, %v3701
  %s3705 = scalar_lea.vmem %s23, 40
  %v3706 = vld [vmem:[%s3705] sm:$0xff]
  %3707 = vrot.lane.b32.xlu0 %v3289, 123
  %v3708 = vpop.permute.xlu0 %3707
  %3709 = vrot.lane.b32.xlu0 %v3290, 123
  %v3710 = vpop.permute.xlu0 %3709
  %v3711 = vsel %vm1417, %v3708, %v3710
  %v3715 = vsel %vm239, %v3706, 0
  %3717 = vmatprep.subr.mxu0 0.0
  %3718 = vmatpush1.msra.mxu0 0.0
  %3719 = vmatprep.subr.mxu0 0.0
  %3720 = vmatpush1.msra.mxu0 0.0
  %3721 = vmatprep.subr.mxu0 0.0
  %3722 = vmatpush1.msra.mxu0 0.0
  %3723 = vmatprep.subr.mxu0 0.0
  %3724 = vmatpush1.msra.mxu0 0.0
  %3725 = vmatprep.subr.mxu0 0.0
  %3726 = vmatpush1.msra.mxu0 0.0
  %3727 = vmatprep.subr.mxu0 0.0
  %3728 = vmatpush1.msra.mxu0 0.0
  %3729 = vmatprep.subr.mxu0 0.0
  %3730 = vmatpush1.msra.mxu0 0.0
  %3731 = vmatprep.subr.mxu0 0.0
  %3732 = vmatpush1.msra.mxu0 0.0
  %3733 = vmatprep.subr.mxu0 0.0
  %3734 = vmatpush1.msra.mxu0 0.0
  %3735 = vmatprep.subr.mxu0 0.0
  %3736 = vmatpush1.msra.mxu0 0.0
  %3737 = vmatprep.subr.mxu0 0.0
  %3738 = vmatpush1.msra.mxu0 0.0
  %3739 = vmatprep.subr.mxu0 0.0
  %3740 = vmatpush1.msra.mxu0 0.0
  %3741 = vmatprep.subr.mxu0 0.0
  %3742 = vmatpush1.msra.mxu0 0.0
  %3743 = vmatprep.subr.mxu0 0.0
  %3744 = vmatpush1.msra.mxu0 0.0
  %3745 = vmatprep.subr.mxu0 0.0
  %3746 = vmatpush1.msra.mxu0 0.0
  %3747 = vmatprep.subr.mxu0 %v3710
  %3748 = vmatpush1.msra.mxu0 %v3711
  %3749 = vmatprep.subr.mxu0 0.0
  %3750 = vmatpush2.msra.mxu0 0.0
  %3751 = vmatprep.subr.mxu0 0.0
  %3752 = vmatpush2.msra.mxu0 0.0
  %3753 = vmatprep.subr.mxu0 0.0
  %3754 = vmatpush2.msra.mxu0 0.0
  %3755 = vmatprep.subr.mxu0 0.0
  %3756 = vmatpush2.msra.mxu0 0.0
  %3757 = vmatprep.subr.mxu0 0.0
  %3758 = vmatpush2.msra.mxu0 0.0
  %3759 = vmatprep.subr.mxu0 0.0
  %3760 = vmatpush2.msra.mxu0 0.0
  %3761 = vmatprep.subr.mxu0 0.0
  %3762 = vmatpush2.msra.mxu0 0.0
  %3763 = vmatprep.subr.mxu0 0.0
  %3764 = vmatpush2.msra.mxu0 0.0
  %3765 = vmatprep.subr.mxu0 0.0
  %3766 = vmatpush2.msra.mxu0 0.0
  %3767 = vmatprep.subr.mxu0 0.0
  %3768 = vmatpush2.msra.mxu0 0.0
  %3769 = vmatprep.subr.mxu0 0.0
  %3770 = vmatpush2.msra.mxu0 0.0
  %3771 = vmatprep.subr.mxu0 0.0
  %3772 = vmatpush2.msra.mxu0 0.0
  %3773 = vmatprep.subr.mxu0 0.0
  %3774 = vmatpush2.msra.mxu0 0.0
  %3775 = vmatprep.subr.mxu0 0.0
  %3776 = vmatpush2.msra.mxu0 0.0
  %3777 = vmatprep.subr.mxu0 0.0
  %3778 = vmatpush2.msra.mxu0 0.0
  %3779 = vmatprep.subr.mxu0 0.0
  %3780 = vmatpush2.msra.mxu0 0.0
  %3781 = vmatprep.mubr.f32.mxu0 0.0
  %3782 = vmatmul.mubr.f32.gmra.mxu0 %v3715
  %v3783 = vpop.f32.mrf.mxu0
  %v3784 = vadd.f32 0.0, %v3783
  %v3785 = vpop.f32.mrf.mxu0
  %v3786 = vadd.f32 0.0, %v3785
  %3787 = vdwg.mxu0
  %v3788 = vadd.f32 %v3703, %v3784
  %v3789 = vadd.f32 %v3704, %v3786
  %s3790 = scalar_lea.vmem %s23, 48
  %v3791 = vld [vmem:[%s3790] sm:$0xff]
  %3792 = vrot.lane.b32.xlu0 %v3289, 122
  %v3793 = vpop.permute.xlu0 %3792
  %3794 = vrot.lane.b32.xlu0 %v3290, 122
  %v3795 = vpop.permute.xlu0 %3794
  %v3796 = vsel %vm1660, %v3793, %v3795
  %v3800 = vsel %vm239, %v3791, 0
  %3802 = vmatprep.subr.mxu0 0.0
  %3803 = vmatpush1.msra.mxu0 0.0
  %3804 = vmatprep.subr.mxu0 0.0
  %3805 = vmatpush1.msra.mxu0 0.0
  %3806 = vmatprep.subr.mxu0 0.0
  %3807 = vmatpush1.msra.mxu0 0.0
  %3808 = vmatprep.subr.mxu0 0.0
  %3809 = vmatpush1.msra.mxu0 0.0
  %3810 = vmatprep.subr.mxu0 0.0
  %3811 = vmatpush1.msra.mxu0 0.0
  %3812 = vmatprep.subr.mxu0 0.0
  %3813 = vmatpush1.msra.mxu0 0.0
  %3814 = vmatprep.subr.mxu0 0.0
  %3815 = vmatpush1.msra.mxu0 0.0
  %3816 = vmatprep.subr.mxu0 0.0
  %3817 = vmatpush1.msra.mxu0 0.0
  %3818 = vmatprep.subr.mxu0 0.0
  %3819 = vmatpush1.msra.mxu0 0.0
  %3820 = vmatprep.subr.mxu0 0.0
  %3821 = vmatpush1.msra.mxu0 0.0
  %3822 = vmatprep.subr.mxu0 0.0
  %3823 = vmatpush1.msra.mxu0 0.0
  %3824 = vmatprep.subr.mxu0 0.0
  %3825 = vmatpush1.msra.mxu0 0.0
  %3826 = vmatprep.subr.mxu0 0.0
  %3827 = vmatpush1.msra.mxu0 0.0
  %3828 = vmatprep.subr.mxu0 0.0
  %3829 = vmatpush1.msra.mxu0 0.0
  %3830 = vmatprep.subr.mxu0 0.0
  %3831 = vmatpush1.msra.mxu0 0.0
  %3832 = vmatprep.subr.mxu0 %v3795
  %3833 = vmatpush1.msra.mxu0 %v3796
  %3834 = vmatprep.subr.mxu0 0.0
  %3835 = vmatpush2.msra.mxu0 0.0
  %3836 = vmatprep.subr.mxu0 0.0
  %3837 = vmatpush2.msra.mxu0 0.0
  %3838 = vmatprep.subr.mxu0 0.0
  %3839 = vmatpush2.msra.mxu0 0.0
  %3840 = vmatprep.subr.mxu0 0.0
  %3841 = vmatpush2.msra.mxu0 0.0
  %3842 = vmatprep.subr.mxu0 0.0
  %3843 = vmatpush2.msra.mxu0 0.0
  %3844 = vmatprep.subr.mxu0 0.0
  %3845 = vmatpush2.msra.mxu0 0.0
  %3846 = vmatprep.subr.mxu0 0.0
  %3847 = vmatpush2.msra.mxu0 0.0
  %3848 = vmatprep.subr.mxu0 0.0
  %3849 = vmatpush2.msra.mxu0 0.0
  %3850 = vmatprep.subr.mxu0 0.0
  %3851 = vmatpush2.msra.mxu0 0.0
  %3852 = vmatprep.subr.mxu0 0.0
  %3853 = vmatpush2.msra.mxu0 0.0
  %3854 = vmatprep.subr.mxu0 0.0
  %3855 = vmatpush2.msra.mxu0 0.0
  %3856 = vmatprep.subr.mxu0 0.0
  %3857 = vmatpush2.msra.mxu0 0.0
  %3858 = vmatprep.subr.mxu0 0.0
  %3859 = vmatpush2.msra.mxu0 0.0
  %3860 = vmatprep.subr.mxu0 0.0
  %3861 = vmatpush2.msra.mxu0 0.0
  %3862 = vmatprep.subr.mxu0 0.0
  %3863 = vmatpush2.msra.mxu0 0.0
  %3864 = vmatprep.subr.mxu0 0.0
  %3865 = vmatpush2.msra.mxu0 0.0
  %3866 = vmatprep.mubr.f32.mxu0 0.0
  %3867 = vmatmul.mubr.f32.gmra.mxu0 %v3800
  %v3868 = vpop.f32.mrf.mxu0
  %v3869 = vadd.f32 0.0, %v3868
  %v3870 = vpop.f32.mrf.mxu0
  %v3871 = vadd.f32 0.0, %v3870
  %3872 = vdwg.mxu0
  %v3873 = vadd.f32 %v3788, %v3869
  %v3874 = vadd.f32 %v3789, %v3871
  %s3875 = scalar_lea.vmem %s23, 56
  %v3876 = vld [vmem:[%s3875] sm:$0xff]
  %3877 = vrot.lane.b32.xlu0 %v3289, 121
  %v3878 = vpop.permute.xlu0 %3877
  %3879 = vrot.lane.b32.xlu0 %v3290, 121
  %v3880 = vpop.permute.xlu0 %3879
  %v3881 = vsel %vm1903, %v3878, %v3880
  %v3885 = vsel %vm239, %v3876, 0
  %3887 = vmatprep.subr.mxu0 0.0
  %3888 = vmatpush1.msra.mxu0 0.0
  %3889 = vmatprep.subr.mxu0 0.0
  %3890 = vmatpush1.msra.mxu0 0.0
  %3891 = vmatprep.subr.mxu0 0.0
  %3892 = vmatpush1.msra.mxu0 0.0
  %3893 = vmatprep.subr.mxu0 0.0
  %3894 = vmatpush1.msra.mxu0 0.0
  %3895 = vmatprep.subr.mxu0 0.0
  %3896 = vmatpush1.msra.mxu0 0.0
  %3897 = vmatprep.subr.mxu0 0.0
  %3898 = vmatpush1.msra.mxu0 0.0
  %3899 = vmatprep.subr.mxu0 0.0
  %3900 = vmatpush1.msra.mxu0 0.0
  %3901 = vmatprep.subr.mxu0 0.0
  %3902 = vmatpush1.msra.mxu0 0.0
  %3903 = vmatprep.subr.mxu0 0.0
  %3904 = vmatpush1.msra.mxu0 0.0
  %3905 = vmatprep.subr.mxu0 0.0
  %3906 = vmatpush1.msra.mxu0 0.0
  %3907 = vmatprep.subr.mxu0 0.0
  %3908 = vmatpush1.msra.mxu0 0.0
  %3909 = vmatprep.subr.mxu0 0.0
  %3910 = vmatpush1.msra.mxu0 0.0
  %3911 = vmatprep.subr.mxu0 0.0
  %3912 = vmatpush1.msra.mxu0 0.0
  %3913 = vmatprep.subr.mxu0 0.0
  %3914 = vmatpush1.msra.mxu0 0.0
  %3915 = vmatprep.subr.mxu0 0.0
  %3916 = vmatpush1.msra.mxu0 0.0
  %3917 = vmatprep.subr.mxu0 %v3880
  %3918 = vmatpush1.msra.mxu0 %v3881
  %3919 = vmatprep.subr.mxu0 0.0
  %3920 = vmatpush2.msra.mxu0 0.0
  %3921 = vmatprep.subr.mxu0 0.0
  %3922 = vmatpush2.msra.mxu0 0.0
  %3923 = vmatprep.subr.mxu0 0.0
  %3924 = vmatpush2.msra.mxu0 0.0
  %3925 = vmatprep.subr.mxu0 0.0
  %3926 = vmatpush2.msra.mxu0 0.0
  %3927 = vmatprep.subr.mxu0 0.0
  %3928 = vmatpush2.msra.mxu0 0.0
  %3929 = vmatprep.subr.mxu0 0.0
  %3930 = vmatpush2.msra.mxu0 0.0
  %3931 = vmatprep.subr.mxu0 0.0
  %3932 = vmatpush2.msra.mxu0 0.0
  %3933 = vmatprep.subr.mxu0 0.0
  %3934 = vmatpush2.msra.mxu0 0.0
  %3935 = vmatprep.subr.mxu0 0.0
  %3936 = vmatpush2.msra.mxu0 0.0
  %3937 = vmatprep.subr.mxu0 0.0
  %3938 = vmatpush2.msra.mxu0 0.0
  %3939 = vmatprep.subr.mxu0 0.0
  %3940 = vmatpush2.msra.mxu0 0.0
  %3941 = vmatprep.subr.mxu0 0.0
  %3942 = vmatpush2.msra.mxu0 0.0
  %3943 = vmatprep.subr.mxu0 0.0
  %3944 = vmatpush2.msra.mxu0 0.0
  %3945 = vmatprep.subr.mxu0 0.0
  %3946 = vmatpush2.msra.mxu0 0.0
  %3947 = vmatprep.subr.mxu0 0.0
  %3948 = vmatpush2.msra.mxu0 0.0
  %3949 = vmatprep.subr.mxu0 0.0
  %3950 = vmatpush2.msra.mxu0 0.0
  %3951 = vmatprep.mubr.f32.mxu0 0.0
  %3952 = vmatmul.mubr.f32.gmra.mxu0 %v3885
  %v3953 = vpop.f32.mrf.mxu0
  %v3954 = vadd.f32 0.0, %v3953
  %v3955 = vpop.f32.mrf.mxu0
  %v3956 = vadd.f32 0.0, %v3955
  %3957 = vdwg.mxu0
  %v3958 = vadd.f32 %v3873, %v3954
  %v3959 = vadd.f32 %v3874, %v3956
  %v3960 = vld [vmem:[%s25] sm:$0xff]
  %v3961 = vld [vmem:[%s31] sm:$0xff]
  %v3962 = vld [vmem:[%s31 + $0x8] sm:$0xff]
  %v3963 = vld [vmem:[%s31 + $0x10] sm:$0xff]
  %v3964 = vld [vmem:[%s31 + $0x18] sm:$0x7f]
  %3966 = vset.pattern.permute.xlu0 0
  %3967 = vperm.xlu0 %3966, %v3960
  %v3968 = vpop.permute.xlu0 %3967
  %vm3970 = vcmask 252928
  %v3972 = vsel %vm3970, %v3958, 0
  %v3975 = vsel %vm3076, %v3964, 0
  %3977 = vmatprep.subr.mxu0 0.0
  %3978 = vmatpush1.msra.mxu0 0.0
  %3979 = vmatprep.subr.mxu0 0.0
  %3980 = vmatpush1.msra.mxu0 0.0
  %3981 = vmatprep.subr.mxu0 0.0
  %3982 = vmatpush1.msra.mxu0 0.0
  %3983 = vmatprep.subr.mxu0 0.0
  %3984 = vmatpush1.msra.mxu0 0.0
  %3985 = vmatprep.subr.mxu0 0.0
  %3986 = vmatpush1.msra.mxu0 0.0
  %3987 = vmatprep.subr.mxu0 0.0
  %3988 = vmatpush1.msra.mxu0 0.0
  %3989 = vmatprep.subr.mxu0 0.0
  %3990 = vmatpush1.msra.mxu0 0.0
  %3991 = vmatprep.subr.mxu0 0.0
  %3992 = vmatpush1.msra.mxu0 0.0
  %3993 = vmatprep.subr.mxu0 0.0
  %3994 = vmatpush1.msra.mxu0 0.0
  %3995 = vmatprep.subr.mxu0 0.0
  %3996 = vmatpush1.msra.mxu0 0.0
  %3997 = vmatprep.subr.mxu0 0.0
  %3998 = vmatpush1.msra.mxu0 0.0
  %3999 = vmatprep.subr.mxu0 0.0
  %4000 = vmatpush1.msra.mxu0 0.0
  %4001 = vmatprep.subr.mxu0 0.0
  %4002 = vmatpush1.msra.mxu0 %v3975
  %4003 = vmatprep.subr.mxu0 0.0
  %4004 = vmatpush1.msra.mxu0 %v3963
  %4005 = vmatprep.subr.mxu0 0.0
  %4006 = vmatpush1.msra.mxu0 %v3962
  %4007 = vmatprep.subr.mxu0 0.0
  %4008 = vmatpush1.msra.mxu0 %v3961
  %4009 = vmatprep.subr.mxu0 0.0
  %4010 = vmatpush2.msra.mxu0 0.0
  %4011 = vmatprep.subr.mxu0 0.0
  %4012 = vmatpush2.msra.mxu0 0.0
  %4013 = vmatprep.subr.mxu0 0.0
  %4014 = vmatpush2.msra.mxu0 0.0
  %4015 = vmatprep.subr.mxu0 0.0
  %4016 = vmatpush2.msra.mxu0 0.0
  %4017 = vmatprep.subr.mxu0 0.0
  %4018 = vmatpush2.msra.mxu0 0.0
  %4019 = vmatprep.subr.mxu0 0.0
  %4020 = vmatpush2.msra.mxu0 0.0
  %4021 = vmatprep.subr.mxu0 0.0
  %4022 = vmatpush2.msra.mxu0 0.0
  %4023 = vmatprep.subr.mxu0 0.0
  %4024 = vmatpush2.msra.mxu0 0.0
  %4025 = vmatprep.subr.mxu0 0.0
  %4026 = vmatpush2.msra.mxu0 0.0
  %4027 = vmatprep.subr.mxu0 0.0
  %4028 = vmatpush2.msra.mxu0 0.0
  %4029 = vmatprep.subr.mxu0 0.0
  %4030 = vmatpush2.msra.mxu0 0.0
  %4031 = vmatprep.subr.mxu0 0.0
  %4032 = vmatpush2.msra.mxu0 0.0
  %4033 = vmatprep.subr.mxu0 0.0
  %4034 = vmatpush2.msra.mxu0 0.0
  %4035 = vmatprep.subr.mxu0 0.0
  %4036 = vmatpush2.msra.mxu0 0.0
  %4037 = vmatprep.subr.mxu0 0.0
  %4038 = vmatpush2.msra.mxu0 0.0
  %4039 = vmatprep.subr.mxu0 0.0
  %4040 = vmatpush2.msra.mxu0 0.0
  %4041 = vmatprep.mubr.f32.mxu0 0.0
  %4042 = vmatmul.mubr.f32.gmra.mxu0 %v3972
  %v4043 = vpop.f32.mrf.mxu0
  %v4044 = vadd.f32 %v3968, %v4043
  %v4045 = vpop.f32.mrf.mxu0
  %4046 = vdwg.mxu0
  %vm4047 = vcmp.gt.f32.partialorder %v4044, 0.0
  %v4048 = vmul.f32 %v4044, 0.01
  %v4049 = vsel %vm4047, %v4044, %v4048
  %v4051 = vsel %vm3970, %v3959, 0
  %4053 = vmatprep.subr.mxu0 0.0
  %4054 = vmatpush1.msra.mxu0 0.0
  %4055 = vmatprep.subr.mxu0 0.0
  %4056 = vmatpush1.msra.mxu0 0.0
  %4057 = vmatprep.subr.mxu0 0.0
  %4058 = vmatpush1.msra.mxu0 0.0
  %4059 = vmatprep.subr.mxu0 0.0
  %4060 = vmatpush1.msra.mxu0 0.0
  %4061 = vmatprep.subr.mxu0 0.0
  %4062 = vmatpush1.msra.mxu0 0.0
  %4063 = vmatprep.subr.mxu0 0.0
  %4064 = vmatpush1.msra.mxu0 0.0
  %4065 = vmatprep.subr.mxu0 0.0
  %4066 = vmatpush1.msra.mxu0 0.0
  %4067 = vmatprep.subr.mxu0 0.0
  %4068 = vmatpush1.msra.mxu0 0.0
  %4069 = vmatprep.subr.mxu0 0.0
  %4070 = vmatpush1.msra.mxu0 0.0
  %4071 = vmatprep.subr.mxu0 0.0
  %4072 = vmatpush1.msra.mxu0 0.0
  %4073 = vmatprep.subr.mxu0 0.0
  %4074 = vmatpush1.msra.mxu0 0.0
  %4075 = vmatprep.subr.mxu0 0.0
  %4076 = vmatpush1.msra.mxu0 0.0
  %4077 = vmatprep.subr.mxu0 0.0
  %4078 = vmatpush1.msra.mxu0 %v3975
  %4079 = vmatprep.subr.mxu0 0.0
  %4080 = vmatpush1.msra.mxu0 %v3963
  %4081 = vmatprep.subr.mxu0 0.0
  %4082 = vmatpush1.msra.mxu0 %v3962
  %4083 = vmatprep.subr.mxu0 0.0
  %4084 = vmatpush1.msra.mxu0 %v3961
  %4085 = vmatprep.subr.mxu0 0.0
  %4086 = vmatpush2.msra.mxu0 0.0
  %4087 = vmatprep.subr.mxu0 0.0
  %4088 = vmatpush2.msra.mxu0 0.0
  %4089 = vmatprep.subr.mxu0 0.0
  %4090 = vmatpush2.msra.mxu0 0.0
  %4091 = vmatprep.subr.mxu0 0.0
  %4092 = vmatpush2.msra.mxu0 0.0
  %4093 = vmatprep.subr.mxu0 0.0
  %4094 = vmatpush2.msra.mxu0 0.0
  %4095 = vmatprep.subr.mxu0 0.0
  %4096 = vmatpush2.msra.mxu0 0.0
  %4097 = vmatprep.subr.mxu0 0.0
  %4098 = vmatpush2.msra.mxu0 0.0
  %4099 = vmatprep.subr.mxu0 0.0
  %4100 = vmatpush2.msra.mxu0 0.0
  %4101 = vmatprep.subr.mxu0 0.0
  %4102 = vmatpush2.msra.mxu0 0.0
  %4103 = vmatprep.subr.mxu0 0.0
  %4104 = vmatpush2.msra.mxu0 0.0
  %4105 = vmatprep.subr.mxu0 0.0
  %4106 = vmatpush2.msra.mxu0 0.0
  %4107 = vmatprep.subr.mxu0 0.0
  %4108 = vmatpush2.msra.mxu0 0.0
  %4109 = vmatprep.subr.mxu0 0.0
  %4110 = vmatpush2.msra.mxu0 0.0
  %4111 = vmatprep.subr.mxu0 0.0
  %4112 = vmatpush2.msra.mxu0 0.0
  %4113 = vmatprep.subr.mxu0 0.0
  %4114 = vmatpush2.msra.mxu0 0.0
  %4115 = vmatprep.subr.mxu0 0.0
  %4116 = vmatpush2.msra.mxu0 0.0
  %4117 = vmatprep.mubr.f32.mxu0 0.0
  %4118 = vmatmul.mubr.f32.gmra.mxu0 %v4051
  %v4119 = vpop.f32.mrf.mxu0
  %v4120 = vadd.f32 %v3968, %v4119
  %v4121 = vpop.f32.mrf.mxu0
  %4122 = vdwg.mxu0
  %vm4123 = vcmp.gt.f32.partialorder %v4120, 0.0
  %v4124 = vmul.f32 %v4120, 0.01
  %v4125 = vsel %vm4123, %v4120, %v4124
  %v4126 = vld [vmem:[%s27] sm:$0xff]
  %v4127 = vld [vmem:[%s29] sm:$0xff]
  %vm4128 = vcmask 130048
  %v4129 = vsel %vm4128, %v4049, 0.0
  %4130 = vadd.xlane.f32.xlu0 %v4129
  %v4131 = vpop.xlane.xlu0 %4130
  %v4132 = vmul.f32 %v4049, %v4049
  %v4133 = vsel %vm4128, %v4132, 0.0
  %4134 = vadd.xlane.f32.xlu0 %v4133
  %v4135 = vpop.xlane.xlu0 %4134
  %v4136 = vsel %vm4128, %v4125, 0.0
  %4137 = vadd.xlane.f32.xlu0 %v4136
  %v4138 = vpop.xlane.xlu0 %4137
  %v4139 = vadd.f32 %v4131, %v4138
  %v4140 = vmul.f32 %v4125, %v4125
  %v4141 = vsel %vm4128, %v4140, 0.0
  %4142 = vadd.xlane.f32.xlu0 %v4141
  %v4143 = vpop.xlane.xlu0 %4142
  %v4144 = vadd.f32 %v4135, %v4143
  %v4145 = vmul.f32 %v4139, 0.03125
  %v4146 = vmul.f32 %v4144, 0.03125
  %v4147 = vmul.f32 %v4145, %v4145
  %v4148 = vsub.f32 %v4146, %v4147
  %v4149 = vmax.f32 %v4148, 0.0
  %v4150 = vadd.f32 %v4149, 1e-05
  %v4151 = vrsqrt.pop %v4150
  %v4152 = vmul.f32 %v4126, %v4151
  %v4153 = vmul.f32 %v4145, %v4152
  %v4154 = vsub.f32 %v4127, %v4153
  %4156 = vset.pattern.permute.xlu0 0
  %4157 = vperm.xlu0 %4156, %v4152
  %v4158 = vpop.permute.xlu0 %4157
  %v4160 = vmul.f32 %v4049, %v4158
  %4162 = vset.pattern.permute.xlu0 0
  %4163 = vperm.xlu0 %4162, %v4154
  %v4164 = vpop.permute.xlu0 %4163
  %v4166 = vadd.f32 %v4160, %v4164
  %v4167 = vmul.f32 %v4125, %v4158
  %v4168 = vadd.f32 %v4167, %v4164
  %4169 = vst.msk [vmem:[#allocation2] sm:$0xff] %vm4128, %v4166
  %4170 = vst.msk [vmem:[#allocation2 + $0x8] sm:$0xff] %vm4128, %v4168
  %v4171 = vld [vmem:[%s33] sm:$0xff]
  %v4172 = vld [vmem:[#allocation2] sm:$0xff]
  %v4173 = vld [vmem:[#allocation2 + $0x8] sm:$0xff]
  %v4175 = vsel %vm239, %v4171, 0
  %4177 = vmatprep.subr.mxu0 0.0
  %4178 = vmatpush1.msra.mxu0 0.0
  %4179 = vmatprep.subr.mxu0 0.0
  %4180 = vmatpush1.msra.mxu0 0.0
  %4181 = vmatprep.subr.mxu0 0.0
  %4182 = vmatpush1.msra.mxu0 0.0
  %4183 = vmatprep.subr.mxu0 0.0
  %4184 = vmatpush1.msra.mxu0 0.0
  %4185 = vmatprep.subr.mxu0 0.0
  %4186 = vmatpush1.msra.mxu0 0.0
  %4187 = vmatprep.subr.mxu0 0.0
  %4188 = vmatpush1.msra.mxu0 0.0
  %4189 = vmatprep.subr.mxu0 0.0
  %4190 = vmatpush1.msra.mxu0 0.0
  %4191 = vmatprep.subr.mxu0 0.0
  %4192 = vmatpush1.msra.mxu0 0.0
  %4193 = vmatprep.subr.mxu0 0.0
  %4194 = vmatpush1.msra.mxu0 0.0
  %4195 = vmatprep.subr.mxu0 0.0
  %4196 = vmatpush1.msra.mxu0 0.0
  %4197 = vmatprep.subr.mxu0 0.0
  %4198 = vmatpush1.msra.mxu0 0.0
  %4199 = vmatprep.subr.mxu0 0.0
  %4200 = vmatpush1.msra.mxu0 0.0
  %4201 = vmatprep.subr.mxu0 0.0
  %4202 = vmatpush1.msra.mxu0 0.0
  %4203 = vmatprep.subr.mxu0 0.0
  %4204 = vmatpush1.msra.mxu0 0.0
  %4205 = vmatprep.subr.mxu0 0.0
  %4206 = vmatpush1.msra.mxu0 0.0
  %4207 = vmatprep.subr.mxu0 %v4173
  %4208 = vmatpush1.msra.mxu0 %v4172
  %4209 = vmatprep.subr.mxu0 0.0
  %4210 = vmatpush2.msra.mxu0 0.0
  %4211 = vmatprep.subr.mxu0 0.0
  %4212 = vmatpush2.msra.mxu0 0.0
  %4213 = vmatprep.subr.mxu0 0.0
  %4214 = vmatpush2.msra.mxu0 0.0
  %4215 = vmatprep.subr.mxu0 0.0
  %4216 = vmatpush2.msra.mxu0 0.0
  %4217 = vmatprep.subr.mxu0 0.0
  %4218 = vmatpush2.msra.mxu0 0.0
  %4219 = vmatprep.subr.mxu0 0.0
  %4220 = vmatpush2.msra.mxu0 0.0
  %4221 = vmatprep.subr.mxu0 0.0
  %4222 = vmatpush2.msra.mxu0 0.0
  %4223 = vmatprep.subr.mxu0 0.0
  %4224 = vmatpush2.msra.mxu0 0.0
  %4225 = vmatprep.subr.mxu0 0.0
  %4226 = vmatpush2.msra.mxu0 0.0
  %4227 = vmatprep.subr.mxu0 0.0
  %4228 = vmatpush2.msra.mxu0 0.0
  %4229 = vmatprep.subr.mxu0 0.0
  %4230 = vmatpush2.msra.mxu0 0.0
  %4231 = vmatprep.subr.mxu0 0.0
  %4232 = vmatpush2.msra.mxu0 0.0
  %4233 = vmatprep.subr.mxu0 0.0
  %4234 = vmatpush2.msra.mxu0 0.0
  %4235 = vmatprep.subr.mxu0 0.0
  %4236 = vmatpush2.msra.mxu0 0.0
  %4237 = vmatprep.subr.mxu0 0.0
  %4238 = vmatpush2.msra.mxu0 0.0
  %4239 = vmatprep.subr.mxu0 0.0
  %4240 = vmatpush2.msra.mxu0 0.0
  %4241 = vmatprep.mubr.f32.mxu0 0.0
  %4242 = vmatmul.mubr.f32.gmra.mxu0 %v4175
  %v4243 = vpop.f32.mrf.mxu0
  %v4244 = vadd.f32 0.0, %v4243
  %v4245 = vpop.f32.mrf.mxu0
  %v4246 = vadd.f32 0.0, %v4245
  %4247 = vdwg.mxu0
  %v4248 = vld [vmem:[%s35] sm:$0xff]
  %4250 = vset.pattern.permute.xlu0 0
  %4251 = vperm.xlu0 %4250, %v4248
  %v4252 = vpop.permute.xlu0 %4251
  %v4254 = vadd.f32 %v4244, %v4252
  %v4255 = vadd.f32 %v4246, %v4252
  %v4256 = vld [vmem:[%s37] sm:$0xff]
  %v4257 = vld [vmem:[%s39] sm:$0xff]
  %v4258 = vsel %vm4128, %v4254, 0.0
  %4259 = vadd.xlane.f32.xlu0 %v4258
  %v4260 = vpop.xlane.xlu0 %4259
  %v4261 = vmul.f32 %v4254, %v4254
  %v4262 = vsel %vm4128, %v4261, 0.0
  %4263 = vadd.xlane.f32.xlu0 %v4262
  %v4264 = vpop.xlane.xlu0 %4263
  %v4265 = vsel %vm4128, %v4255, 0.0
  %4266 = vadd.xlane.f32.xlu0 %v4265
  %v4267 = vpop.xlane.xlu0 %4266
  %v4268 = vadd.f32 %v4260, %v4267
  %v4269 = vmul.f32 %v4255, %v4255
  %v4270 = vsel %vm4128, %v4269, 0.0
  %4271 = vadd.xlane.f32.xlu0 %v4270
  %v4272 = vpop.xlane.xlu0 %4271
  %v4273 = vadd.f32 %v4264, %v4272
  %v4274 = vmul.f32 %v4268, 0.03125
  %v4275 = vmul.f32 %v4273, 0.03125
  %v4276 = vmul.f32 %v4274, %v4274
  %v4277 = vsub.f32 %v4275, %v4276
  %v4278 = vmax.f32 %v4277, 0.0
  %v4279 = vadd.f32 %v4278, 1e-05
  %v4280 = vrsqrt.pop %v4279
  %v4281 = vmul.f32 %v4256, %v4280
  %v4282 = vmul.f32 %v4274, %v4281
  %v4283 = vsub.f32 %v4257, %v4282
  %4285 = vset.pattern.permute.xlu0 0
  %4286 = vperm.xlu0 %4285, %v4281
  %v4287 = vpop.permute.xlu0 %4286
  %v4289 = vmul.f32 %v4254, %v4287
  %4291 = vset.pattern.permute.xlu0 0
  %4292 = vperm.xlu0 %4291, %v4283
  %v4293 = vpop.permute.xlu0 %4292
  %v4295 = vadd.f32 %v4289, %v4293
  %v4296 = vmul.f32 %v4255, %v4287
  %v4297 = vadd.f32 %v4296, %v4293
  %v4298 = vld [vmem:[%s49] sm:$0xff]
  %v4299 = vld [vmem:[%s49 + $0x8] sm:$0xff]
  %v4301 = vsel %vm4128, %v4295, 0
  %4303 = vmatprep.subr.mxu0 0.0
  %4304 = vmatpush1.msra.mxu0 0.0
  %4305 = vmatprep.subr.mxu0 0.0
  %4306 = vmatpush1.msra.mxu0 0.0
  %4307 = vmatprep.subr.mxu0 0.0
  %4308 = vmatpush1.msra.mxu0 0.0
  %4309 = vmatprep.subr.mxu0 0.0
  %4310 = vmatpush1.msra.mxu0 0.0
  %4311 = vmatprep.subr.mxu0 0.0
  %4312 = vmatpush1.msra.mxu0 0.0
  %4313 = vmatprep.subr.mxu0 0.0
  %4314 = vmatpush1.msra.mxu0 0.0
  %4315 = vmatprep.subr.mxu0 0.0
  %4316 = vmatpush1.msra.mxu0 0.0
  %4317 = vmatprep.subr.mxu0 0.0
  %4318 = vmatpush1.msra.mxu0 0.0
  %4319 = vmatprep.subr.mxu0 0.0
  %4320 = vmatpush1.msra.mxu0 0.0
  %4321 = vmatprep.subr.mxu0 0.0
  %4322 = vmatpush1.msra.mxu0 0.0
  %4323 = vmatprep.subr.mxu0 0.0
  %4324 = vmatpush1.msra.mxu0 0.0
  %4325 = vmatprep.subr.mxu0 0.0
  %4326 = vmatpush1.msra.mxu0 0.0
  %4327 = vmatprep.subr.mxu0 0.0
  %4328 = vmatpush1.msra.mxu0 0.0
  %4329 = vmatprep.subr.mxu0 0.0
  %4330 = vmatpush1.msra.mxu0 0.0
  %4331 = vmatprep.subr.mxu0 0.0
  %4332 = vmatpush1.msra.mxu0 %v4299
  %4333 = vmatprep.subr.mxu0 0.0
  %4334 = vmatpush1.msra.mxu0 %v4298
  %4335 = vmatprep.subr.mxu0 0.0
  %4336 = vmatpush2.msra.mxu0 0.0
  %4337 = vmatprep.subr.mxu0 0.0
  %4338 = vmatpush2.msra.mxu0 0.0
  %4339 = vmatprep.subr.mxu0 0.0
  %4340 = vmatpush2.msra.mxu0 0.0
  %4341 = vmatprep.subr.mxu0 0.0
  %4342 = vmatpush2.msra.mxu0 0.0
  %4343 = vmatprep.subr.mxu0 0.0
  %4344 = vmatpush2.msra.mxu0 0.0
  %4345 = vmatprep.subr.mxu0 0.0
  %4346 = vmatpush2.msra.mxu0 0.0
  %4347 = vmatprep.subr.mxu0 0.0
  %4348 = vmatpush2.msra.mxu0 0.0
  %4349 = vmatprep.subr.mxu0 0.0
  %4350 = vmatpush2.msra.mxu0 0.0
  %4351 = vmatprep.subr.mxu0 0.0
  %4352 = vmatpush2.msra.mxu0 0.0
  %4353 = vmatprep.subr.mxu0 0.0
  %4354 = vmatpush2.msra.mxu0 0.0
  %4355 = vmatprep.subr.mxu0 0.0
  %4356 = vmatpush2.msra.mxu0 0.0
  %4357 = vmatprep.subr.mxu0 0.0
  %4358 = vmatpush2.msra.mxu0 0.0
  %4359 = vmatprep.subr.mxu0 0.0
  %4360 = vmatpush2.msra.mxu0 0.0
  %4361 = vmatprep.subr.mxu0 0.0
  %4362 = vmatpush2.msra.mxu0 0.0
  %4363 = vmatprep.subr.mxu0 0.0
  %4364 = vmatpush2.msra.mxu0 0.0
  %4365 = vmatprep.subr.mxu0 0.0
  %4366 = vmatpush2.msra.mxu0 0.0
  %4367 = vmatprep.mubr.f32.mxu0 0.0
  %4368 = vmatmul.mubr.f32.gmra.mxu0 %v4301
  %v4369 = vpop.f32.mrf.mxu0
  %v4370 = vadd.f32 0.0, %v4369
  %v4371 = vpop.f32.mrf.mxu0
  %4372 = vdwg.mxu0
  %vm4373 = vcmask 31744
  %4374 = vst.msk [vmem:[#allocation2] sm:$0xff] %vm4373, 0.0
  %vm4375 = vcmask 318744
  %4376 = vst.msk [vmem:[#allocation2] sm:$0xff] %vm4375, 0.0
  %4378 = vrot.lane.b32.xlu0 %v4370, 4
  %v4379 = vpop.permute.xlu0 %4378
  %vm4381 = vcmask 285728
  %4382 = vst.msk [vmem:[#allocation2] sm:$0xff] %vm4381, %v4379
  %v4383 = vld [vmem:[%s49] sm:$0xff]
  %v4384 = vld [vmem:[%s49 + $0x8] sm:$0xff]
  %v4386 = vsel %vm4128, %v4297, 0
  %4388 = vmatprep.subr.mxu0 0.0
  %4389 = vmatpush1.msra.mxu0 0.0
  %4390 = vmatprep.subr.mxu0 0.0
  %4391 = vmatpush1.msra.mxu0 0.0
  %4392 = vmatprep.subr.mxu0 0.0
  %4393 = vmatpush1.msra.mxu0 0.0
  %4394 = vmatprep.subr.mxu0 0.0
  %4395 = vmatpush1.msra.mxu0 0.0
  %4396 = vmatprep.subr.mxu0 0.0
  %4397 = vmatpush1.msra.mxu0 0.0
  %4398 = vmatprep.subr.mxu0 0.0
  %4399 = vmatpush1.msra.mxu0 0.0
  %4400 = vmatprep.subr.mxu0 0.0
  %4401 = vmatpush1.msra.mxu0 0.0
  %4402 = vmatprep.subr.mxu0 0.0
  %4403 = vmatpush1.msra.mxu0 0.0
  %4404 = vmatprep.subr.mxu0 0.0
  %4405 = vmatpush1.msra.mxu0 0.0
  %4406 = vmatprep.subr.mxu0 0.0
  %4407 = vmatpush1.msra.mxu0 0.0
  %4408 = vmatprep.subr.mxu0 0.0
  %4409 = vmatpush1.msra.mxu0 0.0
  %4410 = vmatprep.subr.mxu0 0.0
  %4411 = vmatpush1.msra.mxu0 0.0
  %4412 = vmatprep.subr.mxu0 0.0
  %4413 = vmatpush1.msra.mxu0 0.0
  %4414 = vmatprep.subr.mxu0 0.0
  %4415 = vmatpush1.msra.mxu0 0.0
  %4416 = vmatprep.subr.mxu0 0.0
  %4417 = vmatpush1.msra.mxu0 %v4384
  %4418 = vmatprep.subr.mxu0 0.0
  %4419 = vmatpush1.msra.mxu0 %v4383
  %4420 = vmatprep.subr.mxu0 0.0
  %4421 = vmatpush2.msra.mxu0 0.0
  %4422 = vmatprep.subr.mxu0 0.0
  %4423 = vmatpush2.msra.mxu0 0.0
  %4424 = vmatprep.subr.mxu0 0.0
  %4425 = vmatpush2.msra.mxu0 0.0
  %4426 = vmatprep.subr.mxu0 0.0
  %4427 = vmatpush2.msra.mxu0 0.0
  %4428 = vmatprep.subr.mxu0 0.0
  %4429 = vmatpush2.msra.mxu0 0.0
  %4430 = vmatprep.subr.mxu0 0.0
  %4431 = vmatpush2.msra.mxu0 0.0
  %4432 = vmatprep.subr.mxu0 0.0
  %4433 = vmatpush2.msra.mxu0 0.0
  %4434 = vmatprep.subr.mxu0 0.0
  %4435 = vmatpush2.msra.mxu0 0.0
  %4436 = vmatprep.subr.mxu0 0.0
  %4437 = vmatpush2.msra.mxu0 0.0
  %4438 = vmatprep.subr.mxu0 0.0
  %4439 = vmatpush2.msra.mxu0 0.0
  %4440 = vmatprep.subr.mxu0 0.0
  %4441 = vmatpush2.msra.mxu0 0.0
  %4442 = vmatprep.subr.mxu0 0.0
  %4443 = vmatpush2.msra.mxu0 0.0
  %4444 = vmatprep.subr.mxu0 0.0
  %4445 = vmatpush2.msra.mxu0 0.0
  %4446 = vmatprep.subr.mxu0 0.0
  %4447 = vmatpush2.msra.mxu0 0.0
  %4448 = vmatprep.subr.mxu0 0.0
  %4449 = vmatpush2.msra.mxu0 0.0
  %4450 = vmatprep.subr.mxu0 0.0
  %4451 = vmatpush2.msra.mxu0 0.0
  %4452 = vmatprep.mubr.f32.mxu0 0.0
  %4453 = vmatmul.mubr.f32.gmra.mxu0 %v4386
  %v4454 = vpop.f32.mrf.mxu0
  %v4455 = vadd.f32 0.0, %v4454
  %v4456 = vpop.f32.mrf.mxu0
  %4457 = vdwg.mxu0
  %4458 = vst.msk [vmem:[#allocation2 + $0x8] sm:$0xff] %vm4373, 0.0
  %4459 = vst.msk [vmem:[#allocation2 + $0x8] sm:$0xff] %vm4375, 0.0
  %4461 = vrot.lane.b32.xlu0 %v4455, 4
  %v4462 = vpop.permute.xlu0 %4461
  %4464 = vst.msk [vmem:[#allocation2 + $0x8] sm:$0xff] %vm4381, %v4462
  %v4465 = vld [vmem:[%s41] sm:$0xff]
  %v4466 = vld [vmem:[#allocation2] sm:$0xff]
  %v4467 = vld [vmem:[#allocation2 + $0x8] sm:$0xff]
  %s4468 = scalar_lea.vmem %s41, 8
  %v4469 = vld [vmem:[%s4468] sm:$0xff]
  %4472 = vrot.lane.b32.xlu0 %v4466, 127
  %v4473 = vpop.permute.xlu0 %4472
  %4474 = vrot.lane.b32.xlu0 %v4467, 127
  %v4475 = vpop.permute.xlu0 %4474
  %v4476 = vsel %vm229, %v4473, %v4475
  %v4480 = vsel %vm239, %v4469, 0
  %4482 = vmatprep.subr.mxu0 0.0
  %4483 = vmatpush1.msra.mxu0 0.0
  %4484 = vmatprep.subr.mxu0 0.0
  %4485 = vmatpush1.msra.mxu0 0.0
  %4486 = vmatprep.subr.mxu0 0.0
  %4487 = vmatpush1.msra.mxu0 0.0
  %4488 = vmatprep.subr.mxu0 0.0
  %4489 = vmatpush1.msra.mxu0 0.0
  %4490 = vmatprep.subr.mxu0 0.0
  %4491 = vmatpush1.msra.mxu0 0.0
  %4492 = vmatprep.subr.mxu0 0.0
  %4493 = vmatpush1.msra.mxu0 0.0
  %4494 = vmatprep.subr.mxu0 0.0
  %4495 = vmatpush1.msra.mxu0 0.0
  %4496 = vmatprep.subr.mxu0 0.0
  %4497 = vmatpush1.msra.mxu0 0.0
  %4498 = vmatprep.subr.mxu0 0.0
  %4499 = vmatpush1.msra.mxu0 0.0
  %4500 = vmatprep.subr.mxu0 0.0
  %4501 = vmatpush1.msra.mxu0 0.0
  %4502 = vmatprep.subr.mxu0 0.0
  %4503 = vmatpush1.msra.mxu0 0.0
  %4504 = vmatprep.subr.mxu0 0.0
  %4505 = vmatpush1.msra.mxu0 0.0
  %4506 = vmatprep.subr.mxu0 0.0
  %4507 = vmatpush1.msra.mxu0 0.0
  %4508 = vmatprep.subr.mxu0 0.0
  %4509 = vmatpush1.msra.mxu0 0.0
  %4510 = vmatprep.subr.mxu0 0.0
  %4511 = vmatpush1.msra.mxu0 0.0
  %4512 = vmatprep.subr.mxu0 %v4475
  %4513 = vmatpush1.msra.mxu0 %v4476
  %4514 = vmatprep.subr.mxu0 0.0
  %4515 = vmatpush2.msra.mxu0 0.0
  %4516 = vmatprep.subr.mxu0 0.0
  %4517 = vmatpush2.msra.mxu0 0.0
  %4518 = vmatprep.subr.mxu0 0.0
  %4519 = vmatpush2.msra.mxu0 0.0
  %4520 = vmatprep.subr.mxu0 0.0
  %4521 = vmatpush2.msra.mxu0 0.0
  %4522 = vmatprep.subr.mxu0 0.0
  %4523 = vmatpush2.msra.mxu0 0.0
  %4524 = vmatprep.subr.mxu0 0.0
  %4525 = vmatpush2.msra.mxu0 0.0
  %4526 = vmatprep.subr.mxu0 0.0
  %4527 = vmatpush2.msra.mxu0 0.0
  %4528 = vmatprep.subr.mxu0 0.0
  %4529 = vmatpush2.msra.mxu0 0.0
  %4530 = vmatprep.subr.mxu0 0.0
  %4531 = vmatpush2.msra.mxu0 0.0
  %4532 = vmatprep.subr.mxu0 0.0
  %4533 = vmatpush2.msra.mxu0 0.0
  %4534 = vmatprep.subr.mxu0 0.0
  %4535 = vmatpush2.msra.mxu0 0.0
  %4536 = vmatprep.subr.mxu0 0.0
  %4537 = vmatpush2.msra.mxu0 0.0
  %4538 = vmatprep.subr.mxu0 0.0
  %4539 = vmatpush2.msra.mxu0 0.0
  %4540 = vmatprep.subr.mxu0 0.0
  %4541 = vmatpush2.msra.mxu0 0.0
  %4542 = vmatprep.subr.mxu0 0.0
  %4543 = vmatpush2.msra.mxu0 0.0
  %4544 = vmatprep.subr.mxu0 0.0
  %4545 = vmatpush2.msra.mxu0 0.0
  %4546 = vmatprep.mubr.f32.mxu0 0.0
  %4547 = vmatmul.mubr.f32.gmra.mxu0 %v4480
  %v4548 = vpop.f32.mrf.mxu0
  %v4549 = vadd.f32 0.0, %v4548
  %v4550 = vpop.f32.mrf.mxu0
  %v4551 = vadd.f32 0.0, %v4550
  %4552 = vdwg.mxu0
  %v4554 = vsel %vm239, %v4465, 0
  %4556 = vmatprep.subr.mxu0 0.0
  %4557 = vmatpush1.msra.mxu0 0.0
  %4558 = vmatprep.subr.mxu0 0.0
  %4559 = vmatpush1.msra.mxu0 0.0
  %4560 = vmatprep.subr.mxu0 0.0
  %4561 = vmatpush1.msra.mxu0 0.0
  %4562 = vmatprep.subr.mxu0 0.0
  %4563 = vmatpush1.msra.mxu0 0.0
  %4564 = vmatprep.subr.mxu0 0.0
  %4565 = vmatpush1.msra.mxu0 0.0
  %4566 = vmatprep.subr.mxu0 0.0
  %4567 = vmatpush1.msra.mxu0 0.0
  %4568 = vmatprep.subr.mxu0 0.0
  %4569 = vmatpush1.msra.mxu0 0.0
  %4570 = vmatprep.subr.mxu0 0.0
  %4571 = vmatpush1.msra.mxu0 0.0
  %4572 = vmatprep.subr.mxu0 0.0
  %4573 = vmatpush1.msra.mxu0 0.0
  %4574 = vmatprep.subr.mxu0 0.0
  %4575 = vmatpush1.msra.mxu0 0.0
  %4576 = vmatprep.subr.mxu0 0.0
  %4577 = vmatpush1.msra.mxu0 0.0
  %4578 = vmatprep.subr.mxu0 0.0
  %4579 = vmatpush1.msra.mxu0 0.0
  %4580 = vmatprep.subr.mxu0 0.0
  %4581 = vmatpush1.msra.mxu0 0.0
  %4582 = vmatprep.subr.mxu0 0.0
  %4583 = vmatpush1.msra.mxu0 0.0
  %4584 = vmatprep.subr.mxu0 0.0
  %4585 = vmatpush1.msra.mxu0 0.0
  %4586 = vmatprep.subr.mxu0 %v4467
  %4587 = vmatpush1.msra.mxu0 %v4466
  %4588 = vmatprep.subr.mxu0 0.0
  %4589 = vmatpush2.msra.mxu0 0.0
  %4590 = vmatprep.subr.mxu0 0.0
  %4591 = vmatpush2.msra.mxu0 0.0
  %4592 = vmatprep.subr.mxu0 0.0
  %4593 = vmatpush2.msra.mxu0 0.0
  %4594 = vmatprep.subr.mxu0 0.0
  %4595 = vmatpush2.msra.mxu0 0.0
  %4596 = vmatprep.subr.mxu0 0.0
  %4597 = vmatpush2.msra.mxu0 0.0
  %4598 = vmatprep.subr.mxu0 0.0
  %4599 = vmatpush2.msra.mxu0 0.0
  %4600 = vmatprep.subr.mxu0 0.0
  %4601 = vmatpush2.msra.mxu0 0.0
  %4602 = vmatprep.subr.mxu0 0.0
  %4603 = vmatpush2.msra.mxu0 0.0
  %4604 = vmatprep.subr.mxu0 0.0
  %4605 = vmatpush2.msra.mxu0 0.0
  %4606 = vmatprep.subr.mxu0 0.0
  %4607 = vmatpush2.msra.mxu0 0.0
  %4608 = vmatprep.subr.mxu0 0.0
  %4609 = vmatpush2.msra.mxu0 0.0
  %4610 = vmatprep.subr.mxu0 0.0
  %4611 = vmatpush2.msra.mxu0 0.0
  %4612 = vmatprep.subr.mxu0 0.0
  %4613 = vmatpush2.msra.mxu0 0.0
  %4614 = vmatprep.subr.mxu0 0.0
  %4615 = vmatpush2.msra.mxu0 0.0
  %4616 = vmatprep.subr.mxu0 0.0
  %4617 = vmatpush2.msra.mxu0 0.0
  %4618 = vmatprep.subr.mxu0 0.0
  %4619 = vmatpush2.msra.mxu0 0.0
  %4620 = vmatprep.mubr.f32.mxu0 0.0
  %4621 = vmatmul.mubr.f32.gmra.mxu0 %v4554
  %v4622 = vpop.f32.mrf.mxu0
  %v4623 = vadd.f32 %v4549, %v4622
  %v4624 = vpop.f32.mrf.mxu0
  %v4625 = vadd.f32 %v4551, %v4624
  %4626 = vdwg.mxu0
  %s4627 = scalar_lea.vmem %s41, 16
  %v4628 = vld [vmem:[%s4627] sm:$0xff]
  %4629 = vrot.lane.b32.xlu0 %v4466, 126
  %v4630 = vpop.permute.xlu0 %4629
  %4631 = vrot.lane.b32.xlu0 %v4467, 126
  %v4632 = vpop.permute.xlu0 %4631
  %v4633 = vsel %vm680, %v4630, %v4632
  %v4637 = vsel %vm239, %v4628, 0
  %4639 = vmatprep.subr.mxu0 0.0
  %4640 = vmatpush1.msra.mxu0 0.0
  %4641 = vmatprep.subr.mxu0 0.0
  %4642 = vmatpush1.msra.mxu0 0.0
  %4643 = vmatprep.subr.mxu0 0.0
  %4644 = vmatpush1.msra.mxu0 0.0
  %4645 = vmatprep.subr.mxu0 0.0
  %4646 = vmatpush1.msra.mxu0 0.0
  %4647 = vmatprep.subr.mxu0 0.0
  %4648 = vmatpush1.msra.mxu0 0.0
  %4649 = vmatprep.subr.mxu0 0.0
  %4650 = vmatpush1.msra.mxu0 0.0
  %4651 = vmatprep.subr.mxu0 0.0
  %4652 = vmatpush1.msra.mxu0 0.0
  %4653 = vmatprep.subr.mxu0 0.0
  %4654 = vmatpush1.msra.mxu0 0.0
  %4655 = vmatprep.subr.mxu0 0.0
  %4656 = vmatpush1.msra.mxu0 0.0
  %4657 = vmatprep.subr.mxu0 0.0
  %4658 = vmatpush1.msra.mxu0 0.0
  %4659 = vmatprep.subr.mxu0 0.0
  %4660 = vmatpush1.msra.mxu0 0.0
  %4661 = vmatprep.subr.mxu0 0.0
  %4662 = vmatpush1.msra.mxu0 0.0
  %4663 = vmatprep.subr.mxu0 0.0
  %4664 = vmatpush1.msra.mxu0 0.0
  %4665 = vmatprep.subr.mxu0 0.0
  %4666 = vmatpush1.msra.mxu0 0.0
  %4667 = vmatprep.subr.mxu0 0.0
  %4668 = vmatpush1.msra.mxu0 0.0
  %4669 = vmatprep.subr.mxu0 %v4632
  %4670 = vmatpush1.msra.mxu0 %v4633
  %4671 = vmatprep.subr.mxu0 0.0
  %4672 = vmatpush2.msra.mxu0 0.0
  %4673 = vmatprep.subr.mxu0 0.0
  %4674 = vmatpush2.msra.mxu0 0.0
  %4675 = vmatprep.subr.mxu0 0.0
  %4676 = vmatpush2.msra.mxu0 0.0
  %4677 = vmatprep.subr.mxu0 0.0
  %4678 = vmatpush2.msra.mxu0 0.0
  %4679 = vmatprep.subr.mxu0 0.0
  %4680 = vmatpush2.msra.mxu0 0.0
  %4681 = vmatprep.subr.mxu0 0.0
  %4682 = vmatpush2.msra.mxu0 0.0
  %4683 = vmatprep.subr.mxu0 0.0
  %4684 = vmatpush2.msra.mxu0 0.0
  %4685 = vmatprep.subr.mxu0 0.0
  %4686 = vmatpush2.msra.mxu0 0.0
  %4687 = vmatprep.subr.mxu0 0.0
  %4688 = vmatpush2.msra.mxu0 0.0
  %4689 = vmatprep.subr.mxu0 0.0
  %4690 = vmatpush2.msra.mxu0 0.0
  %4691 = vmatprep.subr.mxu0 0.0
  %4692 = vmatpush2.msra.mxu0 0.0
  %4693 = vmatprep.subr.mxu0 0.0
  %4694 = vmatpush2.msra.mxu0 0.0
  %4695 = vmatprep.subr.mxu0 0.0
  %4696 = vmatpush2.msra.mxu0 0.0
  %4697 = vmatprep.subr.mxu0 0.0
  %4698 = vmatpush2.msra.mxu0 0.0
  %4699 = vmatprep.subr.mxu0 0.0
  %4700 = vmatpush2.msra.mxu0 0.0
  %4701 = vmatprep.subr.mxu0 0.0
  %4702 = vmatpush2.msra.mxu0 0.0
  %4703 = vmatprep.mubr.f32.mxu0 0.0
  %4704 = vmatmul.mubr.f32.gmra.mxu0 %v4637
  %v4705 = vpop.f32.mrf.mxu0
  %v4706 = vadd.f32 0.0, %v4705
  %v4707 = vpop.f32.mrf.mxu0
  %v4708 = vadd.f32 0.0, %v4707
  %4709 = vdwg.mxu0
  %v4710 = vadd.f32 %v4623, %v4706
  %v4711 = vadd.f32 %v4625, %v4708
  %s4712 = scalar_lea.vmem %s41, 24
  %v4713 = vld [vmem:[%s4712] sm:$0xff]
  %4714 = vrot.lane.b32.xlu0 %v4466, 125
  %v4715 = vpop.permute.xlu0 %4714
  %4716 = vrot.lane.b32.xlu0 %v4467, 125
  %v4717 = vpop.permute.xlu0 %4716
  %v4718 = vsel %vm920, %v4715, %v4717
  %v4722 = vsel %vm239, %v4713, 0
  %4724 = vmatprep.subr.mxu0 0.0
  %4725 = vmatpush1.msra.mxu0 0.0
  %4726 = vmatprep.subr.mxu0 0.0
  %4727 = vmatpush1.msra.mxu0 0.0
  %4728 = vmatprep.subr.mxu0 0.0
  %4729 = vmatpush1.msra.mxu0 0.0
  %4730 = vmatprep.subr.mxu0 0.0
  %4731 = vmatpush1.msra.mxu0 0.0
  %4732 = vmatprep.subr.mxu0 0.0
  %4733 = vmatpush1.msra.mxu0 0.0
  %4734 = vmatprep.subr.mxu0 0.0
  %4735 = vmatpush1.msra.mxu0 0.0
  %4736 = vmatprep.subr.mxu0 0.0
  %4737 = vmatpush1.msra.mxu0 0.0
  %4738 = vmatprep.subr.mxu0 0.0
  %4739 = vmatpush1.msra.mxu0 0.0
  %4740 = vmatprep.subr.mxu0 0.0
  %4741 = vmatpush1.msra.mxu0 0.0
  %4742 = vmatprep.subr.mxu0 0.0
  %4743 = vmatpush1.msra.mxu0 0.0
  %4744 = vmatprep.subr.mxu0 0.0
  %4745 = vmatpush1.msra.mxu0 0.0
  %4746 = vmatprep.subr.mxu0 0.0
  %4747 = vmatpush1.msra.mxu0 0.0
  %4748 = vmatprep.subr.mxu0 0.0
  %4749 = vmatpush1.msra.mxu0 0.0
  %4750 = vmatprep.subr.mxu0 0.0
  %4751 = vmatpush1.msra.mxu0 0.0
  %4752 = vmatprep.subr.mxu0 0.0
  %4753 = vmatpush1.msra.mxu0 0.0
  %4754 = vmatprep.subr.mxu0 %v4717
  %4755 = vmatpush1.msra.mxu0 %v4718
  %4756 = vmatprep.subr.mxu0 0.0
  %4757 = vmatpush2.msra.mxu0 0.0
  %4758 = vmatprep.subr.mxu0 0.0
  %4759 = vmatpush2.msra.mxu0 0.0
  %4760 = vmatprep.subr.mxu0 0.0
  %4761 = vmatpush2.msra.mxu0 0.0
  %4762 = vmatprep.subr.mxu0 0.0
  %4763 = vmatpush2.msra.mxu0 0.0
  %4764 = vmatprep.subr.mxu0 0.0
  %4765 = vmatpush2.msra.mxu0 0.0
  %4766 = vmatprep.subr.mxu0 0.0
  %4767 = vmatpush2.msra.mxu0 0.0
  %4768 = vmatprep.subr.mxu0 0.0
  %4769 = vmatpush2.msra.mxu0 0.0
  %4770 = vmatprep.subr.mxu0 0.0
  %4771 = vmatpush2.msra.mxu0 0.0
  %4772 = vmatprep.subr.mxu0 0.0
  %4773 = vmatpush2.msra.mxu0 0.0
  %4774 = vmatprep.subr.mxu0 0.0
  %4775 = vmatpush2.msra.mxu0 0.0
  %4776 = vmatprep.subr.mxu0 0.0
  %4777 = vmatpush2.msra.mxu0 0.0
  %4778 = vmatprep.subr.mxu0 0.0
  %4779 = vmatpush2.msra.mxu0 0.0
  %4780 = vmatprep.subr.mxu0 0.0
  %4781 = vmatpush2.msra.mxu0 0.0
  %4782 = vmatprep.subr.mxu0 0.0
  %4783 = vmatpush2.msra.mxu0 0.0
  %4784 = vmatprep.subr.mxu0 0.0
  %4785 = vmatpush2.msra.mxu0 0.0
  %4786 = vmatprep.subr.mxu0 0.0
  %4787 = vmatpush2.msra.mxu0 0.0
  %4788 = vmatprep.mubr.f32.mxu0 0.0
  %4789 = vmatmul.mubr.f32.gmra.mxu0 %v4722
  %v4790 = vpop.f32.mrf.mxu0
  %v4791 = vadd.f32 0.0, %v4790
  %v4792 = vpop.f32.mrf.mxu0
  %v4793 = vadd.f32 0.0, %v4792
  %4794 = vdwg.mxu0
  %v4795 = vadd.f32 %v4710, %v4791
  %v4796 = vadd.f32 %v4711, %v4793
  %s4797 = scalar_lea.vmem %s41, 32
  %v4798 = vld [vmem:[%s4797] sm:$0xff]
  %4799 = vrot.lane.b32.xlu0 %v4466, 124
  %v4800 = vpop.permute.xlu0 %4799
  %4801 = vrot.lane.b32.xlu0 %v4467, 124
  %v4802 = vpop.permute.xlu0 %4801
  %v4803 = vsel %vm1174, %v4800, %v4802
  %v4807 = vsel %vm239, %v4798, 0
  %4809 = vmatprep.subr.mxu0 0.0
  %4810 = vmatpush1.msra.mxu0 0.0
  %4811 = vmatprep.subr.mxu0 0.0
  %4812 = vmatpush1.msra.mxu0 0.0
  %4813 = vmatprep.subr.mxu0 0.0
  %4814 = vmatpush1.msra.mxu0 0.0
  %4815 = vmatprep.subr.mxu0 0.0
  %4816 = vmatpush1.msra.mxu0 0.0
  %4817 = vmatprep.subr.mxu0 0.0
  %4818 = vmatpush1.msra.mxu0 0.0
  %4819 = vmatprep.subr.mxu0 0.0
  %4820 = vmatpush1.msra.mxu0 0.0
  %4821 = vmatprep.subr.mxu0 0.0
  %4822 = vmatpush1.msra.mxu0 0.0
  %4823 = vmatprep.subr.mxu0 0.0
  %4824 = vmatpush1.msra.mxu0 0.0
  %4825 = vmatprep.subr.mxu0 0.0
  %4826 = vmatpush1.msra.mxu0 0.0
  %4827 = vmatprep.subr.mxu0 0.0
  %4828 = vmatpush1.msra.mxu0 0.0
  %4829 = vmatprep.subr.mxu0 0.0
  %4830 = vmatpush1.msra.mxu0 0.0
  %4831 = vmatprep.subr.mxu0 0.0
  %4832 = vmatpush1.msra.mxu0 0.0
  %4833 = vmatprep.subr.mxu0 0.0
  %4834 = vmatpush1.msra.mxu0 0.0
  %4835 = vmatprep.subr.mxu0 0.0
  %4836 = vmatpush1.msra.mxu0 0.0
  %4837 = vmatprep.subr.mxu0 0.0
  %4838 = vmatpush1.msra.mxu0 0.0
  %4839 = vmatprep.subr.mxu0 %v4802
  %4840 = vmatpush1.msra.mxu0 %v4803
  %4841 = vmatprep.subr.mxu0 0.0
  %4842 = vmatpush2.msra.mxu0 0.0
  %4843 = vmatprep.subr.mxu0 0.0
  %4844 = vmatpush2.msra.mxu0 0.0
  %4845 = vmatprep.subr.mxu0 0.0
  %4846 = vmatpush2.msra.mxu0 0.0
  %4847 = vmatprep.subr.mxu0 0.0
  %4848 = vmatpush2.msra.mxu0 0.0
  %4849 = vmatprep.subr.mxu0 0.0
  %4850 = vmatpush2.msra.mxu0 0.0
  %4851 = vmatprep.subr.mxu0 0.0
  %4852 = vmatpush2.msra.mxu0 0.0
  %4853 = vmatprep.subr.mxu0 0.0
  %4854 = vmatpush2.msra.mxu0 0.0
  %4855 = vmatprep.subr.mxu0 0.0
  %4856 = vmatpush2.msra.mxu0 0.0
  %4857 = vmatprep.subr.mxu0 0.0
  %4858 = vmatpush2.msra.mxu0 0.0
  %4859 = vmatprep.subr.mxu0 0.0
  %4860 = vmatpush2.msra.mxu0 0.0
  %4861 = vmatprep.subr.mxu0 0.0
  %4862 = vmatpush2.msra.mxu0 0.0
  %4863 = vmatprep.subr.mxu0 0.0
  %4864 = vmatpush2.msra.mxu0 0.0
  %4865 = vmatprep.subr.mxu0 0.0
  %4866 = vmatpush2.msra.mxu0 0.0
  %4867 = vmatprep.subr.mxu0 0.0
  %4868 = vmatpush2.msra.mxu0 0.0
  %4869 = vmatprep.subr.mxu0 0.0
  %4870 = vmatpush2.msra.mxu0 0.0
  %4871 = vmatprep.subr.mxu0 0.0
  %4872 = vmatpush2.msra.mxu0 0.0
  %4873 = vmatprep.mubr.f32.mxu0 0.0
  %4874 = vmatmul.mubr.f32.gmra.mxu0 %v4807
  %v4875 = vpop.f32.mrf.mxu0
  %v4876 = vadd.f32 0.0, %v4875
  %v4877 = vpop.f32.mrf.mxu0
  %v4878 = vadd.f32 0.0, %v4877
  %4879 = vdwg.mxu0
  %v4880 = vadd.f32 %v4795, %v4876
  %v4881 = vadd.f32 %v4796, %v4878
  %s4882 = scalar_lea.vmem %s41, 40
  %v4883 = vld [vmem:[%s4882] sm:$0xff]
  %4884 = vrot.lane.b32.xlu0 %v4466, 123
  %v4885 = vpop.permute.xlu0 %4884
  %4886 = vrot.lane.b32.xlu0 %v4467, 123
  %v4887 = vpop.permute.xlu0 %4886
  %v4888 = vsel %vm1417, %v4885, %v4887
  %v4892 = vsel %vm239, %v4883, 0
  %4894 = vmatprep.subr.mxu0 0.0
  %4895 = vmatpush1.msra.mxu0 0.0
  %4896 = vmatprep.subr.mxu0 0.0
  %4897 = vmatpush1.msra.mxu0 0.0
  %4898 = vmatprep.subr.mxu0 0.0
  %4899 = vmatpush1.msra.mxu0 0.0
  %4900 = vmatprep.subr.mxu0 0.0
  %4901 = vmatpush1.msra.mxu0 0.0
  %4902 = vmatprep.subr.mxu0 0.0
  %4903 = vmatpush1.msra.mxu0 0.0
  %4904 = vmatprep.subr.mxu0 0.0
  %4905 = vmatpush1.msra.mxu0 0.0
  %4906 = vmatprep.subr.mxu0 0.0
  %4907 = vmatpush1.msra.mxu0 0.0
  %4908 = vmatprep.subr.mxu0 0.0
  %4909 = vmatpush1.msra.mxu0 0.0
  %4910 = vmatprep.subr.mxu0 0.0
  %4911 = vmatpush1.msra.mxu0 0.0
  %4912 = vmatprep.subr.mxu0 0.0
  %4913 = vmatpush1.msra.mxu0 0.0
  %4914 = vmatprep.subr.mxu0 0.0
  %4915 = vmatpush1.msra.mxu0 0.0
  %4916 = vmatprep.subr.mxu0 0.0
  %4917 = vmatpush1.msra.mxu0 0.0
  %4918 = vmatprep.subr.mxu0 0.0
  %4919 = vmatpush1.msra.mxu0 0.0
  %4920 = vmatprep.subr.mxu0 0.0
  %4921 = vmatpush1.msra.mxu0 0.0
  %4922 = vmatprep.subr.mxu0 0.0
  %4923 = vmatpush1.msra.mxu0 0.0
  %4924 = vmatprep.subr.mxu0 %v4887
  %4925 = vmatpush1.msra.mxu0 %v4888
  %4926 = vmatprep.subr.mxu0 0.0
  %4927 = vmatpush2.msra.mxu0 0.0
  %4928 = vmatprep.subr.mxu0 0.0
  %4929 = vmatpush2.msra.mxu0 0.0
  %4930 = vmatprep.subr.mxu0 0.0
  %4931 = vmatpush2.msra.mxu0 0.0
  %4932 = vmatprep.subr.mxu0 0.0
  %4933 = vmatpush2.msra.mxu0 0.0
  %4934 = vmatprep.subr.mxu0 0.0
  %4935 = vmatpush2.msra.mxu0 0.0
  %4936 = vmatprep.subr.mxu0 0.0
  %4937 = vmatpush2.msra.mxu0 0.0
  %4938 = vmatprep.subr.mxu0 0.0
  %4939 = vmatpush2.msra.mxu0 0.0
  %4940 = vmatprep.subr.mxu0 0.0
  %4941 = vmatpush2.msra.mxu0 0.0
  %4942 = vmatprep.subr.mxu0 0.0
  %4943 = vmatpush2.msra.mxu0 0.0
  %4944 = vmatprep.subr.mxu0 0.0
  %4945 = vmatpush2.msra.mxu0 0.0
  %4946 = vmatprep.subr.mxu0 0.0
  %4947 = vmatpush2.msra.mxu0 0.0
  %4948 = vmatprep.subr.mxu0 0.0
  %4949 = vmatpush2.msra.mxu0 0.0
  %4950 = vmatprep.subr.mxu0 0.0
  %4951 = vmatpush2.msra.mxu0 0.0
  %4952 = vmatprep.subr.mxu0 0.0
  %4953 = vmatpush2.msra.mxu0 0.0
  %4954 = vmatprep.subr.mxu0 0.0
  %4955 = vmatpush2.msra.mxu0 0.0
  %4956 = vmatprep.subr.mxu0 0.0
  %4957 = vmatpush2.msra.mxu0 0.0
  %4958 = vmatprep.mubr.f32.mxu0 0.0
  %4959 = vmatmul.mubr.f32.gmra.mxu0 %v4892
  %v4960 = vpop.f32.mrf.mxu0
  %v4961 = vadd.f32 0.0, %v4960
  %v4962 = vpop.f32.mrf.mxu0
  %v4963 = vadd.f32 0.0, %v4962
  %4964 = vdwg.mxu0
  %v4965 = vadd.f32 %v4880, %v4961
  %v4966 = vadd.f32 %v4881, %v4963
  %s4967 = scalar_lea.vmem %s41, 48
  %v4968 = vld [vmem:[%s4967] sm:$0xff]
  %4969 = vrot.lane.b32.xlu0 %v4466, 122
  %v4970 = vpop.permute.xlu0 %4969
  %4971 = vrot.lane.b32.xlu0 %v4467, 122
  %v4972 = vpop.permute.xlu0 %4971
  %v4973 = vsel %vm1660, %v4970, %v4972
  %v4977 = vsel %vm239, %v4968, 0
  %4979 = vmatprep.subr.mxu0 0.0
  %4980 = vmatpush1.msra.mxu0 0.0
  %4981 = vmatprep.subr.mxu0 0.0
  %4982 = vmatpush1.msra.mxu0 0.0
  %4983 = vmatprep.subr.mxu0 0.0
  %4984 = vmatpush1.msra.mxu0 0.0
  %4985 = vmatprep.subr.mxu0 0.0
  %4986 = vmatpush1.msra.mxu0 0.0
  %4987 = vmatprep.subr.mxu0 0.0
  %4988 = vmatpush1.msra.mxu0 0.0
  %4989 = vmatprep.subr.mxu0 0.0
  %4990 = vmatpush1.msra.mxu0 0.0
  %4991 = vmatprep.subr.mxu0 0.0
  %4992 = vmatpush1.msra.mxu0 0.0
  %4993 = vmatprep.subr.mxu0 0.0
  %4994 = vmatpush1.msra.mxu0 0.0
  %4995 = vmatprep.subr.mxu0 0.0
  %4996 = vmatpush1.msra.mxu0 0.0
  %4997 = vmatprep.subr.mxu0 0.0
  %4998 = vmatpush1.msra.mxu0 0.0
  %4999 = vmatprep.subr.mxu0 0.0
  %5000 = vmatpush1.msra.mxu0 0.0
  %5001 = vmatprep.subr.mxu0 0.0
  %5002 = vmatpush1.msra.mxu0 0.0
  %5003 = vmatprep.subr.mxu0 0.0
  %5004 = vmatpush1.msra.mxu0 0.0
  %5005 = vmatprep.subr.mxu0 0.0
  %5006 = vmatpush1.msra.mxu0 0.0
  %5007 = vmatprep.subr.mxu0 0.0
  %5008 = vmatpush1.msra.mxu0 0.0
  %5009 = vmatprep.subr.mxu0 %v4972
  %5010 = vmatpush1.msra.mxu0 %v4973
  %5011 = vmatprep.subr.mxu0 0.0
  %5012 = vmatpush2.msra.mxu0 0.0
  %5013 = vmatprep.subr.mxu0 0.0
  %5014 = vmatpush2.msra.mxu0 0.0
  %5015 = vmatprep.subr.mxu0 0.0
  %5016 = vmatpush2.msra.mxu0 0.0
  %5017 = vmatprep.subr.mxu0 0.0
  %5018 = vmatpush2.msra.mxu0 0.0
  %5019 = vmatprep.subr.mxu0 0.0
  %5020 = vmatpush2.msra.mxu0 0.0
  %5021 = vmatprep.subr.mxu0 0.0
  %5022 = vmatpush2.msra.mxu0 0.0
  %5023 = vmatprep.subr.mxu0 0.0
  %5024 = vmatpush2.msra.mxu0 0.0
  %5025 = vmatprep.subr.mxu0 0.0
  %5026 = vmatpush2.msra.mxu0 0.0
  %5027 = vmatprep.subr.mxu0 0.0
  %5028 = vmatpush2.msra.mxu0 0.0
  %5029 = vmatprep.subr.mxu0 0.0
  %5030 = vmatpush2.msra.mxu0 0.0
  %5031 = vmatprep.subr.mxu0 0.0
  %5032 = vmatpush2.msra.mxu0 0.0
  %5033 = vmatprep.subr.mxu0 0.0
  %5034 = vmatpush2.msra.mxu0 0.0
  %5035 = vmatprep.subr.mxu0 0.0
  %5036 = vmatpush2.msra.mxu0 0.0
  %5037 = vmatprep.subr.mxu0 0.0
  %5038 = vmatpush2.msra.mxu0 0.0
  %5039 = vmatprep.subr.mxu0 0.0
  %5040 = vmatpush2.msra.mxu0 0.0
  %5041 = vmatprep.subr.mxu0 0.0
  %5042 = vmatpush2.msra.mxu0 0.0
  %5043 = vmatprep.mubr.f32.mxu0 0.0
  %5044 = vmatmul.mubr.f32.gmra.mxu0 %v4977
  %v5045 = vpop.f32.mrf.mxu0
  %v5046 = vadd.f32 0.0, %v5045
  %v5047 = vpop.f32.mrf.mxu0
  %v5048 = vadd.f32 0.0, %v5047
  %5049 = vdwg.mxu0
  %v5050 = vadd.f32 %v4965, %v5046
  %v5051 = vadd.f32 %v4966, %v5048
  %s5052 = scalar_lea.vmem %s41, 56
  %v5053 = vld [vmem:[%s5052] sm:$0xff]
  %5054 = vrot.lane.b32.xlu0 %v4466, 121
  %v5055 = vpop.permute.xlu0 %5054
  %5056 = vrot.lane.b32.xlu0 %v4467, 121
  %v5057 = vpop.permute.xlu0 %5056
  %v5058 = vsel %vm1903, %v5055, %v5057
  %v5062 = vsel %vm239, %v5053, 0
  %5064 = vmatprep.subr.mxu0 0.0
  %5065 = vmatpush1.msra.mxu0 0.0
  %5066 = vmatprep.subr.mxu0 0.0
  %5067 = vmatpush1.msra.mxu0 0.0
  %5068 = vmatprep.subr.mxu0 0.0
  %5069 = vmatpush1.msra.mxu0 0.0
  %5070 = vmatprep.subr.mxu0 0.0
  %5071 = vmatpush1.msra.mxu0 0.0
  %5072 = vmatprep.subr.mxu0 0.0
  %5073 = vmatpush1.msra.mxu0 0.0
  %5074 = vmatprep.subr.mxu0 0.0
  %5075 = vmatpush1.msra.mxu0 0.0
  %5076 = vmatprep.subr.mxu0 0.0
  %5077 = vmatpush1.msra.mxu0 0.0
  %5078 = vmatprep.subr.mxu0 0.0
  %5079 = vmatpush1.msra.mxu0 0.0
  %5080 = vmatprep.subr.mxu0 0.0
  %5081 = vmatpush1.msra.mxu0 0.0
  %5082 = vmatprep.subr.mxu0 0.0
  %5083 = vmatpush1.msra.mxu0 0.0
  %5084 = vmatprep.subr.mxu0 0.0
  %5085 = vmatpush1.msra.mxu0 0.0
  %5086 = vmatprep.subr.mxu0 0.0
  %5087 = vmatpush1.msra.mxu0 0.0
  %5088 = vmatprep.subr.mxu0 0.0
  %5089 = vmatpush1.msra.mxu0 0.0
  %5090 = vmatprep.subr.mxu0 0.0
  %5091 = vmatpush1.msra.mxu0 0.0
  %5092 = vmatprep.subr.mxu0 0.0
  %5093 = vmatpush1.msra.mxu0 0.0
  %5094 = vmatprep.subr.mxu0 %v5057
  %5095 = vmatpush1.msra.mxu0 %v5058
  %5096 = vmatprep.subr.mxu0 0.0
  %5097 = vmatpush2.msra.mxu0 0.0
  %5098 = vmatprep.subr.mxu0 0.0
  %5099 = vmatpush2.msra.mxu0 0.0
  %5100 = vmatprep.subr.mxu0 0.0
  %5101 = vmatpush2.msra.mxu0 0.0
  %5102 = vmatprep.subr.mxu0 0.0
  %5103 = vmatpush2.msra.mxu0 0.0
  %5104 = vmatprep.subr.mxu0 0.0
  %5105 = vmatpush2.msra.mxu0 0.0
  %5106 = vmatprep.subr.mxu0 0.0
  %5107 = vmatpush2.msra.mxu0 0.0
  %5108 = vmatprep.subr.mxu0 0.0
  %5109 = vmatpush2.msra.mxu0 0.0
  %5110 = vmatprep.subr.mxu0 0.0
  %5111 = vmatpush2.msra.mxu0 0.0
  %5112 = vmatprep.subr.mxu0 0.0
  %5113 = vmatpush2.msra.mxu0 0.0
  %5114 = vmatprep.subr.mxu0 0.0
  %5115 = vmatpush2.msra.mxu0 0.0
  %5116 = vmatprep.subr.mxu0 0.0
  %5117 = vmatpush2.msra.mxu0 0.0
  %5118 = vmatprep.subr.mxu0 0.0
  %5119 = vmatpush2.msra.mxu0 0.0
  %5120 = vmatprep.subr.mxu0 0.0
  %5121 = vmatpush2.msra.mxu0 0.0
  %5122 = vmatprep.subr.mxu0 0.0
  %5123 = vmatpush2.msra.mxu0 0.0
  %5124 = vmatprep.subr.mxu0 0.0
  %5125 = vmatpush2.msra.mxu0 0.0
  %5126 = vmatprep.subr.mxu0 0.0
  %5127 = vmatpush2.msra.mxu0 0.0
  %5128 = vmatprep.mubr.f32.mxu0 0.0
  %5129 = vmatmul.mubr.f32.gmra.mxu0 %v5062
  %v5130 = vpop.f32.mrf.mxu0
  %v5131 = vadd.f32 0.0, %v5130
  %v5132 = vpop.f32.mrf.mxu0
  %v5133 = vadd.f32 0.0, %v5132
  %5134 = vdwg.mxu0
  %v5135 = vadd.f32 %v5050, %v5131
  %v5136 = vadd.f32 %v5051, %v5133
  %v5137 = vld [vmem:[%s43] sm:$0xff]
  %5139 = vset.pattern.permute.xlu0 0
  %5140 = vperm.xlu0 %5139, %v5137
  %v5141 = vpop.permute.xlu0 %5140
  %v5143 = vadd.f32 %v5135, %v5141
  %vm5144 = vcmp.gt.f32.partialorder %v5143, 0.0
  %v5145 = vmul.f32 %v5143, 0.01
  %v5146 = vsel %vm5144, %v5143, %v5145
  %v5147 = vadd.f32 %v5136, %v5141
  %vm5148 = vcmp.gt.f32.partialorder %v5147, 0.0
  %v5149 = vmul.f32 %v5147, 0.01
  %v5150 = vsel %vm5148, %v5147, %v5149
  %v5151 = vld [vmem:[%s45] sm:$0xff]
  %v5152 = vld [vmem:[%s47] sm:$0xff]
  %v5153 = vsel %vm3231, %v5146, 0.0
  %5154 = vadd.xlane.f32.xlu0 %v5153
  %v5155 = vpop.xlane.xlu0 %5154
  %v5156 = vmul.f32 %v5146, %v5146
  %v5157 = vsel %vm3231, %v5156, 0.0
  %5158 = vadd.xlane.f32.xlu0 %v5157
  %v5159 = vpop.xlane.xlu0 %5158
  %v5160 = vsel %vm3231, %v5150, 0.0
  %5161 = vadd.xlane.f32.xlu0 %v5160
  %v5162 = vpop.xlane.xlu0 %5161
  %v5163 = vadd.f32 %v5155, %v5162
  %v5164 = vmul.f32 %v5150, %v5150
  %v5165 = vsel %vm3231, %v5164, 0.0
  %5166 = vadd.xlane.f32.xlu0 %v5165
  %v5167 = vpop.xlane.xlu0 %5166
  %v5168 = vadd.f32 %v5159, %v5167
  %v5169 = vmul.f32 %v5163, 0.015625
  %v5170 = vmul.f32 %v5168, 0.015625
  %v5171 = vmul.f32 %v5169, %v5169
  %v5172 = vsub.f32 %v5170, %v5171
  %v5173 = vmax.f32 %v5172, 0.0
  %v5174 = vadd.f32 %v5173, 1e-05
  %v5175 = vrsqrt.pop %v5174
  %v5176 = vmul.f32 %v5151, %v5175
  %v5177 = vmul.f32 %v5169, %v5176
  %v5178 = vsub.f32 %v5152, %v5177
  %5180 = vset.pattern.permute.xlu0 0
  %5181 = vperm.xlu0 %5180, %v5176
  %v5182 = vpop.permute.xlu0 %5181
  %v5184 = vmul.f32 %v5146, %v5182
  %5186 = vset.pattern.permute.xlu0 0
  %5187 = vperm.xlu0 %5186, %v5178
  %v5188 = vpop.permute.xlu0 %5187
  %v5190 = vadd.f32 %v5184, %v5188
  %v5191 = vmul.f32 %v5150, %v5182
  %v5192 = vadd.f32 %v5191, %v5188
  %v5193 = vld [vmem:[%s59] sm:$0xff]
  %v5194 = vld [vmem:[%s59 + $0x8] sm:$0xff]
  %v5195 = vld [vmem:[%s59 + $0x10] sm:$0xff]
  %v5196 = vld [vmem:[%s59 + $0x18] sm:$0xff]
  %v5198 = vsel %vm3231, %v5190, 0
  %5200 = vmatprep.subr.mxu0 0.0
  %5201 = vmatpush1.msra.mxu0 0.0
  %5202 = vmatprep.subr.mxu0 0.0
  %5203 = vmatpush1.msra.mxu0 0.0
  %5204 = vmatprep.subr.mxu0 0.0
  %5205 = vmatpush1.msra.mxu0 0.0
  %5206 = vmatprep.subr.mxu0 0.0
  %5207 = vmatpush1.msra.mxu0 0.0
  %5208 = vmatprep.subr.mxu0 0.0
  %5209 = vmatpush1.msra.mxu0 0.0
  %5210 = vmatprep.subr.mxu0 0.0
  %5211 = vmatpush1.msra.mxu0 0.0
  %5212 = vmatprep.subr.mxu0 0.0
  %5213 = vmatpush1.msra.mxu0 0.0
  %5214 = vmatprep.subr.mxu0 0.0
  %5215 = vmatpush1.msra.mxu0 0.0
  %5216 = vmatprep.subr.mxu0 0.0
  %5217 = vmatpush1.msra.mxu0 0.0
  %5218 = vmatprep.subr.mxu0 0.0
  %5219 = vmatpush1.msra.mxu0 0.0
  %5220 = vmatprep.subr.mxu0 0.0
  %5221 = vmatpush1.msra.mxu0 0.0
  %5222 = vmatprep.subr.mxu0 0.0
  %5223 = vmatpush1.msra.mxu0 0.0
  %5224 = vmatprep.subr.mxu0 0.0
  %5225 = vmatpush1.msra.mxu0 %v5196
  %5226 = vmatprep.subr.mxu0 0.0
  %5227 = vmatpush1.msra.mxu0 %v5195
  %5228 = vmatprep.subr.mxu0 0.0
  %5229 = vmatpush1.msra.mxu0 %v5194
  %5230 = vmatprep.subr.mxu0 0.0
  %5231 = vmatpush1.msra.mxu0 %v5193
  %5232 = vmatprep.subr.mxu0 0.0
  %5233 = vmatpush2.msra.mxu0 0.0
  %5234 = vmatprep.subr.mxu0 0.0
  %5235 = vmatpush2.msra.mxu0 0.0
  %5236 = vmatprep.subr.mxu0 0.0
  %5237 = vmatpush2.msra.mxu0 0.0
  %5238 = vmatprep.subr.mxu0 0.0
  %5239 = vmatpush2.msra.mxu0 0.0
  %5240 = vmatprep.subr.mxu0 0.0
  %5241 = vmatpush2.msra.mxu0 0.0
  %5242 = vmatprep.subr.mxu0 0.0
  %5243 = vmatpush2.msra.mxu0 0.0
  %5244 = vmatprep.subr.mxu0 0.0
  %5245 = vmatpush2.msra.mxu0 0.0
  %5246 = vmatprep.subr.mxu0 0.0
  %5247 = vmatpush2.msra.mxu0 0.0
  %5248 = vmatprep.subr.mxu0 0.0
  %5249 = vmatpush2.msra.mxu0 0.0
  %5250 = vmatprep.subr.mxu0 0.0
  %5251 = vmatpush2.msra.mxu0 0.0
  %5252 = vmatprep.subr.mxu0 0.0
  %5253 = vmatpush2.msra.mxu0 0.0
  %5254 = vmatprep.subr.mxu0 0.0
  %5255 = vmatpush2.msra.mxu0 0.0
  %5256 = vmatprep.subr.mxu0 0.0
  %5257 = vmatpush2.msra.mxu0 0.0
  %5258 = vmatprep.subr.mxu0 0.0
  %5259 = vmatpush2.msra.mxu0 0.0
  %5260 = vmatprep.subr.mxu0 0.0
  %5261 = vmatpush2.msra.mxu0 0.0
  %5262 = vmatprep.subr.mxu0 0.0
  %5263 = vmatpush2.msra.mxu0 0.0
  %5264 = vmatprep.mubr.f32.mxu0 0.0
  %5265 = vmatmul.mubr.f32.gmra.mxu0 %v5198
  %v5266 = vpop.f32.mrf.mxu0
  %v5267 = vadd.f32 0.0, %v5266
  %v5268 = vpop.f32.mrf.mxu0
  %5269 = vdwg.mxu0
  %5270 = vst.msk [vmem:[#allocation2] sm:$0xff] %vm4373, 0.0
  %vm5271 = vcmask 581144
  %5272 = vst.msk [vmem:[#allocation2] sm:$0xff] %vm5271, 0.0
  %5274 = vrot.lane.b32.xlu0 %v5267, 4
  %v5275 = vpop.permute.xlu0 %5274
  %vm5277 = vcmask 547872
  %5278 = vst.msk [vmem:[#allocation2] sm:$0xff] %vm5277, %v5275
  %v5279 = vld [vmem:[%s59] sm:$0xff]
  %v5280 = vld [vmem:[%s59 + $0x8] sm:$0xff]
  %v5281 = vld [vmem:[%s59 + $0x10] sm:$0xff]
  %v5282 = vld [vmem:[%s59 + $0x18] sm:$0xff]
  %v5284 = vsel %vm3231, %v5192, 0
  %5286 = vmatprep.subr.mxu0 0.0
  %5287 = vmatpush1.msra.mxu0 0.0
  %5288 = vmatprep.subr.mxu0 0.0
  %5289 = vmatpush1.msra.mxu0 0.0
  %5290 = vmatprep.subr.mxu0 0.0
  %5291 = vmatpush1.msra.mxu0 0.0
  %5292 = vmatprep.subr.mxu0 0.0
  %5293 = vmatpush1.msra.mxu0 0.0
  %5294 = vmatprep.subr.mxu0 0.0
  %5295 = vmatpush1.msra.mxu0 0.0
  %5296 = vmatprep.subr.mxu0 0.0
  %5297 = vmatpush1.msra.mxu0 0.0
  %5298 = vmatprep.subr.mxu0 0.0
  %5299 = vmatpush1.msra.mxu0 0.0
  %5300 = vmatprep.subr.mxu0 0.0
  %5301 = vmatpush1.msra.mxu0 0.0
  %5302 = vmatprep.subr.mxu0 0.0
  %5303 = vmatpush1.msra.mxu0 0.0
  %5304 = vmatprep.subr.mxu0 0.0
  %5305 = vmatpush1.msra.mxu0 0.0
  %5306 = vmatprep.subr.mxu0 0.0
  %5307 = vmatpush1.msra.mxu0 0.0
  %5308 = vmatprep.subr.mxu0 0.0
  %5309 = vmatpush1.msra.mxu0 0.0
  %5310 = vmatprep.subr.mxu0 0.0
  %5311 = vmatpush1.msra.mxu0 %v5282
  %5312 = vmatprep.subr.mxu0 0.0
  %5313 = vmatpush1.msra.mxu0 %v5281
  %5314 = vmatprep.subr.mxu0 0.0
  %5315 = vmatpush1.msra.mxu0 %v5280
  %5316 = vmatprep.subr.mxu0 0.0
  %5317 = vmatpush1.msra.mxu0 %v5279
  %5318 = vmatprep.subr.mxu0 0.0
  %5319 = vmatpush2.msra.mxu0 0.0
  %5320 = vmatprep.subr.mxu0 0.0
  %5321 = vmatpush2.msra.mxu0 0.0
  %5322 = vmatprep.subr.mxu0 0.0
  %5323 = vmatpush2.msra.mxu0 0.0
  %5324 = vmatprep.subr.mxu0 0.0
  %5325 = vmatpush2.msra.mxu0 0.0
  %5326 = vmatprep.subr.mxu0 0.0
  %5327 = vmatpush2.msra.mxu0 0.0
  %5328 = vmatprep.subr.mxu0 0.0
  %5329 = vmatpush2.msra.mxu0 0.0
  %5330 = vmatprep.subr.mxu0 0.0
  %5331 = vmatpush2.msra.mxu0 0.0
  %5332 = vmatprep.subr.mxu0 0.0
  %5333 = vmatpush2.msra.mxu0 0.0
  %5334 = vmatprep.subr.mxu0 0.0
  %5335 = vmatpush2.msra.mxu0 0.0
  %5336 = vmatprep.subr.mxu0 0.0
  %5337 = vmatpush2.msra.mxu0 0.0
  %5338 = vmatprep.subr.mxu0 0.0
  %5339 = vmatpush2.msra.mxu0 0.0
  %5340 = vmatprep.subr.mxu0 0.0
  %5341 = vmatpush2.msra.mxu0 0.0
  %5342 = vmatprep.subr.mxu0 0.0
  %5343 = vmatpush2.msra.mxu0 0.0
  %5344 = vmatprep.subr.mxu0 0.0
  %5345 = vmatpush2.msra.mxu0 0.0
  %5346 = vmatprep.subr.mxu0 0.0
  %5347 = vmatpush2.msra.mxu0 0.0
  %5348 = vmatprep.subr.mxu0 0.0
  %5349 = vmatpush2.msra.mxu0 0.0
  %5350 = vmatprep.mubr.f32.mxu0 0.0
  %5351 = vmatmul.mubr.f32.gmra.mxu0 %v5284
  %v5352 = vpop.f32.mrf.mxu0
  %v5353 = vadd.f32 0.0, %v5352
  %v5354 = vpop.f32.mrf.mxu0
  %5355 = vdwg.mxu0
  %5356 = vst.msk [vmem:[#allocation2 + $0x8] sm:$0xff] %vm4373, 0.0
  %5357 = vst.msk [vmem:[#allocation2 + $0x8] sm:$0xff] %vm5271, 0.0
  %5359 = vrot.lane.b32.xlu0 %v5353, 4
  %v5360 = vpop.permute.xlu0 %5359
  %5362 = vst.msk [vmem:[#allocation2 + $0x8] sm:$0xff] %vm5277, %v5360
  %v5363 = vld [vmem:[%s51] sm:$0xff]
  %v5364 = vld [vmem:[#allocation2] sm:$0xff]
  %v5365 = vld [vmem:[#allocation2 + $0x8] sm:$0xff]
  %s5366 = scalar_lea.vmem %s51, 8
  %v5367 = vld [vmem:[%s5366] sm:$0xff]
  %5370 = vrot.lane.b32.xlu0 %v5364, 127
  %v5371 = vpop.permute.xlu0 %5370
  %5372 = vrot.lane.b32.xlu0 %v5365, 127
  %v5373 = vpop.permute.xlu0 %5372
  %v5374 = vsel %vm229, %v5371, %v5373
  %v5378 = vsel %vm239, %v5367, 0
  %5380 = vmatprep.subr.mxu0 0.0
  %5381 = vmatpush1.msra.mxu0 0.0
  %5382 = vmatprep.subr.mxu0 0.0
  %5383 = vmatpush1.msra.mxu0 0.0
  %5384 = vmatprep.subr.mxu0 0.0
  %5385 = vmatpush1.msra.mxu0 0.0
  %5386 = vmatprep.subr.mxu0 0.0
  %5387 = vmatpush1.msra.mxu0 0.0
  %5388 = vmatprep.subr.mxu0 0.0
  %5389 = vmatpush1.msra.mxu0 0.0
  %5390 = vmatprep.subr.mxu0 0.0
  %5391 = vmatpush1.msra.mxu0 0.0
  %5392 = vmatprep.subr.mxu0 0.0
  %5393 = vmatpush1.msra.mxu0 0.0
  %5394 = vmatprep.subr.mxu0 0.0
  %5395 = vmatpush1.msra.mxu0 0.0
  %5396 = vmatprep.subr.mxu0 0.0
  %5397 = vmatpush1.msra.mxu0 0.0
  %5398 = vmatprep.subr.mxu0 0.0
  %5399 = vmatpush1.msra.mxu0 0.0
  %5400 = vmatprep.subr.mxu0 0.0
  %5401 = vmatpush1.msra.mxu0 0.0
  %5402 = vmatprep.subr.mxu0 0.0
  %5403 = vmatpush1.msra.mxu0 0.0
  %5404 = vmatprep.subr.mxu0 0.0
  %5405 = vmatpush1.msra.mxu0 0.0
  %5406 = vmatprep.subr.mxu0 0.0
  %5407 = vmatpush1.msra.mxu0 0.0
  %5408 = vmatprep.subr.mxu0 0.0
  %5409 = vmatpush1.msra.mxu0 0.0
  %5410 = vmatprep.subr.mxu0 %v5373
  %5411 = vmatpush1.msra.mxu0 %v5374
  %5412 = vmatprep.subr.mxu0 0.0
  %5413 = vmatpush2.msra.mxu0 0.0
  %5414 = vmatprep.subr.mxu0 0.0
  %5415 = vmatpush2.msra.mxu0 0.0
  %5416 = vmatprep.subr.mxu0 0.0
  %5417 = vmatpush2.msra.mxu0 0.0
  %5418 = vmatprep.subr.mxu0 0.0
  %5419 = vmatpush2.msra.mxu0 0.0
  %5420 = vmatprep.subr.mxu0 0.0
  %5421 = vmatpush2.msra.mxu0 0.0
  %5422 = vmatprep.subr.mxu0 0.0
  %5423 = vmatpush2.msra.mxu0 0.0
  %5424 = vmatprep.subr.mxu0 0.0
  %5425 = vmatpush2.msra.mxu0 0.0
  %5426 = vmatprep.subr.mxu0 0.0
  %5427 = vmatpush2.msra.mxu0 0.0
  %5428 = vmatprep.subr.mxu0 0.0
  %5429 = vmatpush2.msra.mxu0 0.0
  %5430 = vmatprep.subr.mxu0 0.0
  %5431 = vmatpush2.msra.mxu0 0.0
  %5432 = vmatprep.subr.mxu0 0.0
  %5433 = vmatpush2.msra.mxu0 0.0
  %5434 = vmatprep.subr.mxu0 0.0
  %5435 = vmatpush2.msra.mxu0 0.0
  %5436 = vmatprep.subr.mxu0 0.0
  %5437 = vmatpush2.msra.mxu0 0.0
  %5438 = vmatprep.subr.mxu0 0.0
  %5439 = vmatpush2.msra.mxu0 0.0
  %5440 = vmatprep.subr.mxu0 0.0
  %5441 = vmatpush2.msra.mxu0 0.0
  %5442 = vmatprep.subr.mxu0 0.0
  %5443 = vmatpush2.msra.mxu0 0.0
  %5444 = vmatprep.mubr.f32.mxu0 0.0
  %5445 = vmatmul.mubr.f32.gmra.mxu0 %v5378
  %v5446 = vpop.f32.mrf.mxu0
  %v5447 = vadd.f32 0.0, %v5446
  %v5448 = vpop.f32.mrf.mxu0
  %v5449 = vadd.f32 0.0, %v5448
  %5450 = vdwg.mxu0
  %v5452 = vsel %vm239, %v5363, 0
  %5454 = vmatprep.subr.mxu0 0.0
  %5455 = vmatpush1.msra.mxu0 0.0
  %5456 = vmatprep.subr.mxu0 0.0
  %5457 = vmatpush1.msra.mxu0 0.0
  %5458 = vmatprep.subr.mxu0 0.0
  %5459 = vmatpush1.msra.mxu0 0.0
  %5460 = vmatprep.subr.mxu0 0.0
  %5461 = vmatpush1.msra.mxu0 0.0
  %5462 = vmatprep.subr.mxu0 0.0
  %5463 = vmatpush1.msra.mxu0 0.0
  %5464 = vmatprep.subr.mxu0 0.0
  %5465 = vmatpush1.msra.mxu0 0.0
  %5466 = vmatprep.subr.mxu0 0.0
  %5467 = vmatpush1.msra.mxu0 0.0
  %5468 = vmatprep.subr.mxu0 0.0
  %5469 = vmatpush1.msra.mxu0 0.0
  %5470 = vmatprep.subr.mxu0 0.0
  %5471 = vmatpush1.msra.mxu0 0.0
  %5472 = vmatprep.subr.mxu0 0.0
  %5473 = vmatpush1.msra.mxu0 0.0
  %5474 = vmatprep.subr.mxu0 0.0
  %5475 = vmatpush1.msra.mxu0 0.0
  %5476 = vmatprep.subr.mxu0 0.0
  %5477 = vmatpush1.msra.mxu0 0.0
  %5478 = vmatprep.subr.mxu0 0.0
  %5479 = vmatpush1.msra.mxu0 0.0
  %5480 = vmatprep.subr.mxu0 0.0
  %5481 = vmatpush1.msra.mxu0 0.0
  %5482 = vmatprep.subr.mxu0 0.0
  %5483 = vmatpush1.msra.mxu0 0.0
  %5484 = vmatprep.subr.mxu0 %v5365
  %5485 = vmatpush1.msra.mxu0 %v5364
  %5486 = vmatprep.subr.mxu0 0.0
  %5487 = vmatpush2.msra.mxu0 0.0
  %5488 = vmatprep.subr.mxu0 0.0
  %5489 = vmatpush2.msra.mxu0 0.0
  %5490 = vmatprep.subr.mxu0 0.0
  %5491 = vmatpush2.msra.mxu0 0.0
  %5492 = vmatprep.subr.mxu0 0.0
  %5493 = vmatpush2.msra.mxu0 0.0
  %5494 = vmatprep.subr.mxu0 0.0
  %5495 = vmatpush2.msra.mxu0 0.0
  %5496 = vmatprep.subr.mxu0 0.0
  %5497 = vmatpush2.msra.mxu0 0.0
  %5498 = vmatprep.subr.mxu0 0.0
  %5499 = vmatpush2.msra.mxu0 0.0
  %5500 = vmatprep.subr.mxu0 0.0
  %5501 = vmatpush2.msra.mxu0 0.0
  %5502 = vmatprep.subr.mxu0 0.0
  %5503 = vmatpush2.msra.mxu0 0.0
  %5504 = vmatprep.subr.mxu0 0.0
  %5505 = vmatpush2.msra.mxu0 0.0
  %5506 = vmatprep.subr.mxu0 0.0
  %5507 = vmatpush2.msra.mxu0 0.0
  %5508 = vmatprep.subr.mxu0 0.0
  %5509 = vmatpush2.msra.mxu0 0.0
  %5510 = vmatprep.subr.mxu0 0.0
  %5511 = vmatpush2.msra.mxu0 0.0
  %5512 = vmatprep.subr.mxu0 0.0
  %5513 = vmatpush2.msra.mxu0 0.0
  %5514 = vmatprep.subr.mxu0 0.0
  %5515 = vmatpush2.msra.mxu0 0.0
  %5516 = vmatprep.subr.mxu0 0.0
  %5517 = vmatpush2.msra.mxu0 0.0
  %5518 = vmatprep.mubr.f32.mxu0 0.0
  %5519 = vmatmul.mubr.f32.gmra.mxu0 %v5452
  %v5520 = vpop.f32.mrf.mxu0
  %v5521 = vadd.f32 %v5447, %v5520
  %v5522 = vpop.f32.mrf.mxu0
  %v5523 = vadd.f32 %v5449, %v5522
  %5524 = vdwg.mxu0
  %s5525 = scalar_lea.vmem %s51, 16
  %v5526 = vld [vmem:[%s5525] sm:$0xff]
  %5527 = vrot.lane.b32.xlu0 %v5364, 126
  %v5528 = vpop.permute.xlu0 %5527
  %5529 = vrot.lane.b32.xlu0 %v5365, 126
  %v5530 = vpop.permute.xlu0 %5529
  %v5531 = vsel %vm680, %v5528, %v5530
  %v5535 = vsel %vm239, %v5526, 0
  %5537 = vmatprep.subr.mxu0 0.0
  %5538 = vmatpush1.msra.mxu0 0.0
  %5539 = vmatprep.subr.mxu0 0.0
  %5540 = vmatpush1.msra.mxu0 0.0
  %5541 = vmatprep.subr.mxu0 0.0
  %5542 = vmatpush1.msra.mxu0 0.0
  %5543 = vmatprep.subr.mxu0 0.0
  %5544 = vmatpush1.msra.mxu0 0.0
  %5545 = vmatprep.subr.mxu0 0.0
  %5546 = vmatpush1.msra.mxu0 0.0
  %5547 = vmatprep.subr.mxu0 0.0
  %5548 = vmatpush1.msra.mxu0 0.0
  %5549 = vmatprep.subr.mxu0 0.0
  %5550 = vmatpush1.msra.mxu0 0.0
  %5551 = vmatprep.subr.mxu0 0.0
  %5552 = vmatpush1.msra.mxu0 0.0
  %5553 = vmatprep.subr.mxu0 0.0
  %5554 = vmatpush1.msra.mxu0 0.0
  %5555 = vmatprep.subr.mxu0 0.0
  %5556 = vmatpush1.msra.mxu0 0.0
  %5557 = vmatprep.subr.mxu0 0.0
  %5558 = vmatpush1.msra.mxu0 0.0
  %5559 = vmatprep.subr.mxu0 0.0
  %5560 = vmatpush1.msra.mxu0 0.0
  %5561 = vmatprep.subr.mxu0 0.0
  %5562 = vmatpush1.msra.mxu0 0.0
  %5563 = vmatprep.subr.mxu0 0.0
  %5564 = vmatpush1.msra.mxu0 0.0
  %5565 = vmatprep.subr.mxu0 0.0
  %5566 = vmatpush1.msra.mxu0 0.0
  %5567 = vmatprep.subr.mxu0 %v5530
  %5568 = vmatpush1.msra.mxu0 %v5531
  %5569 = vmatprep.subr.mxu0 0.0
  %5570 = vmatpush2.msra.mxu0 0.0
  %5571 = vmatprep.subr.mxu0 0.0
  %5572 = vmatpush2.msra.mxu0 0.0
  %5573 = vmatprep.subr.mxu0 0.0
  %5574 = vmatpush2.msra.mxu0 0.0
  %5575 = vmatprep.subr.mxu0 0.0
  %5576 = vmatpush2.msra.mxu0 0.0
  %5577 = vmatprep.subr.mxu0 0.0
  %5578 = vmatpush2.msra.mxu0 0.0
  %5579 = vmatprep.subr.mxu0 0.0
  %5580 = vmatpush2.msra.mxu0 0.0
  %5581 = vmatprep.subr.mxu0 0.0
  %5582 = vmatpush2.msra.mxu0 0.0
  %5583 = vmatprep.subr.mxu0 0.0
  %5584 = vmatpush2.msra.mxu0 0.0
  %5585 = vmatprep.subr.mxu0 0.0
  %5586 = vmatpush2.msra.mxu0 0.0
  %5587 = vmatprep.subr.mxu0 0.0
  %5588 = vmatpush2.msra.mxu0 0.0
  %5589 = vmatprep.subr.mxu0 0.0
  %5590 = vmatpush2.msra.mxu0 0.0
  %5591 = vmatprep.subr.mxu0 0.0
  %5592 = vmatpush2.msra.mxu0 0.0
  %5593 = vmatprep.subr.mxu0 0.0
  %5594 = vmatpush2.msra.mxu0 0.0
  %5595 = vmatprep.subr.mxu0 0.0
  %5596 = vmatpush2.msra.mxu0 0.0
  %5597 = vmatprep.subr.mxu0 0.0
  %5598 = vmatpush2.msra.mxu0 0.0
  %5599 = vmatprep.subr.mxu0 0.0
  %5600 = vmatpush2.msra.mxu0 0.0
  %5601 = vmatprep.mubr.f32.mxu0 0.0
  %5602 = vmatmul.mubr.f32.gmra.mxu0 %v5535
  %v5603 = vpop.f32.mrf.mxu0
  %v5604 = vadd.f32 0.0, %v5603
  %v5605 = vpop.f32.mrf.mxu0
  %v5606 = vadd.f32 0.0, %v5605
  %5607 = vdwg.mxu0
  %v5608 = vadd.f32 %v5521, %v5604
  %v5609 = vadd.f32 %v5523, %v5606
  %s5610 = scalar_lea.vmem %s51, 24
  %v5611 = vld [vmem:[%s5610] sm:$0xff]
  %5612 = vrot.lane.b32.xlu0 %v5364, 125
  %v5613 = vpop.permute.xlu0 %5612
  %5614 = vrot.lane.b32.xlu0 %v5365, 125
  %v5615 = vpop.permute.xlu0 %5614
  %v5616 = vsel %vm920, %v5613, %v5615
  %v5620 = vsel %vm239, %v5611, 0
  %5622 = vmatprep.subr.mxu0 0.0
  %5623 = vmatpush1.msra.mxu0 0.0
  %5624 = vmatprep.subr.mxu0 0.0
  %5625 = vmatpush1.msra.mxu0 0.0
  %5626 = vmatprep.subr.mxu0 0.0
  %5627 = vmatpush1.msra.mxu0 0.0
  %5628 = vmatprep.subr.mxu0 0.0
  %5629 = vmatpush1.msra.mxu0 0.0
  %5630 = vmatprep.subr.mxu0 0.0
  %5631 = vmatpush1.msra.mxu0 0.0
  %5632 = vmatprep.subr.mxu0 0.0
  %5633 = vmatpush1.msra.mxu0 0.0
  %5634 = vmatprep.subr.mxu0 0.0
  %5635 = vmatpush1.msra.mxu0 0.0
  %5636 = vmatprep.subr.mxu0 0.0
  %5637 = vmatpush1.msra.mxu0 0.0
  %5638 = vmatprep.subr.mxu0 0.0
  %5639 = vmatpush1.msra.mxu0 0.0
  %5640 = vmatprep.subr.mxu0 0.0
  %5641 = vmatpush1.msra.mxu0 0.0
  %5642 = vmatprep.subr.mxu0 0.0
  %5643 = vmatpush1.msra.mxu0 0.0
  %5644 = vmatprep.subr.mxu0 0.0
  %5645 = vmatpush1.msra.mxu0 0.0
  %5646 = vmatprep.subr.mxu0 0.0
  %5647 = vmatpush1.msra.mxu0 0.0
  %5648 = vmatprep.subr.mxu0 0.0
  %5649 = vmatpush1.msra.mxu0 0.0
  %5650 = vmatprep.subr.mxu0 0.0
  %5651 = vmatpush1.msra.mxu0 0.0
  %5652 = vmatprep.subr.mxu0 %v5615
  %5653 = vmatpush1.msra.mxu0 %v5616
  %5654 = vmatprep.subr.mxu0 0.0
  %5655 = vmatpush2.msra.mxu0 0.0
  %5656 = vmatprep.subr.mxu0 0.0
  %5657 = vmatpush2.msra.mxu0 0.0
  %5658 = vmatprep.subr.mxu0 0.0
  %5659 = vmatpush2.msra.mxu0 0.0
  %5660 = vmatprep.subr.mxu0 0.0
  %5661 = vmatpush2.msra.mxu0 0.0
  %5662 = vmatprep.subr.mxu0 0.0
  %5663 = vmatpush2.msra.mxu0 0.0
  %5664 = vmatprep.subr.mxu0 0.0
  %5665 = vmatpush2.msra.mxu0 0.0
  %5666 = vmatprep.subr.mxu0 0.0
  %5667 = vmatpush2.msra.mxu0 0.0
  %5668 = vmatprep.subr.mxu0 0.0
  %5669 = vmatpush2.msra.mxu0 0.0
  %5670 = vmatprep.subr.mxu0 0.0
  %5671 = vmatpush2.msra.mxu0 0.0
  %5672 = vmatprep.subr.mxu0 0.0
  %5673 = vmatpush2.msra.mxu0 0.0
  %5674 = vmatprep.subr.mxu0 0.0
  %5675 = vmatpush2.msra.mxu0 0.0
  %5676 = vmatprep.subr.mxu0 0.0
  %5677 = vmatpush2.msra.mxu0 0.0
  %5678 = vmatprep.subr.mxu0 0.0
  %5679 = vmatpush2.msra.mxu0 0.0
  %5680 = vmatprep.subr.mxu0 0.0
  %5681 = vmatpush2.msra.mxu0 0.0
  %5682 = vmatprep.subr.mxu0 0.0
  %5683 = vmatpush2.msra.mxu0 0.0
  %5684 = vmatprep.subr.mxu0 0.0
  %5685 = vmatpush2.msra.mxu0 0.0
  %5686 = vmatprep.mubr.f32.mxu0 0.0
  %5687 = vmatmul.mubr.f32.gmra.mxu0 %v5620
  %v5688 = vpop.f32.mrf.mxu0
  %v5689 = vadd.f32 0.0, %v5688
  %v5690 = vpop.f32.mrf.mxu0
  %v5691 = vadd.f32 0.0, %v5690
  %5692 = vdwg.mxu0
  %v5693 = vadd.f32 %v5608, %v5689
  %v5694 = vadd.f32 %v5609, %v5691
  %s5695 = scalar_lea.vmem %s51, 32
  %v5696 = vld [vmem:[%s5695] sm:$0xff]
  %5697 = vrot.lane.b32.xlu0 %v5364, 124
  %v5698 = vpop.permute.xlu0 %5697
  %5699 = vrot.lane.b32.xlu0 %v5365, 124
  %v5700 = vpop.permute.xlu0 %5699
  %v5701 = vsel %vm1174, %v5698, %v5700
  %v5705 = vsel %vm239, %v5696, 0
  %5707 = vmatprep.subr.mxu0 0.0
  %5708 = vmatpush1.msra.mxu0 0.0
  %5709 = vmatprep.subr.mxu0 0.0
  %5710 = vmatpush1.msra.mxu0 0.0
  %5711 = vmatprep.subr.mxu0 0.0
  %5712 = vmatpush1.msra.mxu0 0.0
  %5713 = vmatprep.subr.mxu0 0.0
  %5714 = vmatpush1.msra.mxu0 0.0
  %5715 = vmatprep.subr.mxu0 0.0
  %5716 = vmatpush1.msra.mxu0 0.0
  %5717 = vmatprep.subr.mxu0 0.0
  %5718 = vmatpush1.msra.mxu0 0.0
  %5719 = vmatprep.subr.mxu0 0.0
  %5720 = vmatpush1.msra.mxu0 0.0
  %5721 = vmatprep.subr.mxu0 0.0
  %5722 = vmatpush1.msra.mxu0 0.0
  %5723 = vmatprep.subr.mxu0 0.0
  %5724 = vmatpush1.msra.mxu0 0.0
  %5725 = vmatprep.subr.mxu0 0.0
  %5726 = vmatpush1.msra.mxu0 0.0
  %5727 = vmatprep.subr.mxu0 0.0
  %5728 = vmatpush1.msra.mxu0 0.0
  %5729 = vmatprep.subr.mxu0 0.0
  %5730 = vmatpush1.msra.mxu0 0.0
  %5731 = vmatprep.subr.mxu0 0.0
  %5732 = vmatpush1.msra.mxu0 0.0
  %5733 = vmatprep.subr.mxu0 0.0
  %5734 = vmatpush1.msra.mxu0 0.0
  %5735 = vmatprep.subr.mxu0 0.0
  %5736 = vmatpush1.msra.mxu0 0.0
  %5737 = vmatprep.subr.mxu0 %v5700
  %5738 = vmatpush1.msra.mxu0 %v5701
  %5739 = vmatprep.subr.mxu0 0.0
  %5740 = vmatpush2.msra.mxu0 0.0
  %5741 = vmatprep.subr.mxu0 0.0
  %5742 = vmatpush2.msra.mxu0 0.0
  %5743 = vmatprep.subr.mxu0 0.0
  %5744 = vmatpush2.msra.mxu0 0.0
  %5745 = vmatprep.subr.mxu0 0.0
  %5746 = vmatpush2.msra.mxu0 0.0
  %5747 = vmatprep.subr.mxu0 0.0
  %5748 = vmatpush2.msra.mxu0 0.0
  %5749 = vmatprep.subr.mxu0 0.0
  %5750 = vmatpush2.msra.mxu0 0.0
  %5751 = vmatprep.subr.mxu0 0.0
  %5752 = vmatpush2.msra.mxu0 0.0
  %5753 = vmatprep.subr.mxu0 0.0
  %5754 = vmatpush2.msra.mxu0 0.0
  %5755 = vmatprep.subr.mxu0 0.0
  %5756 = vmatpush2.msra.mxu0 0.0
  %5757 = vmatprep.subr.mxu0 0.0
  %5758 = vmatpush2.msra.mxu0 0.0
  %5759 = vmatprep.subr.mxu0 0.0
  %5760 = vmatpush2.msra.mxu0 0.0
  %5761 = vmatprep.subr.mxu0 0.0
  %5762 = vmatpush2.msra.mxu0 0.0
  %5763 = vmatprep.subr.mxu0 0.0
  %5764 = vmatpush2.msra.mxu0 0.0
  %5765 = vmatprep.subr.mxu0 0.0
  %5766 = vmatpush2.msra.mxu0 0.0
  %5767 = vmatprep.subr.mxu0 0.0
  %5768 = vmatpush2.msra.mxu0 0.0
  %5769 = vmatprep.subr.mxu0 0.0
  %5770 = vmatpush2.msra.mxu0 0.0
  %5771 = vmatprep.mubr.f32.mxu0 0.0
  %5772 = vmatmul.mubr.f32.gmra.mxu0 %v5705
  %v5773 = vpop.f32.mrf.mxu0
  %v5774 = vadd.f32 0.0, %v5773
  %v5775 = vpop.f32.mrf.mxu0
  %v5776 = vadd.f32 0.0, %v5775
  %5777 = vdwg.mxu0
  %v5778 = vadd.f32 %v5693, %v5774
  %v5779 = vadd.f32 %v5694, %v5776
  %s5780 = scalar_lea.vmem %s51, 40
  %v5781 = vld [vmem:[%s5780] sm:$0xff]
  %5782 = vrot.lane.b32.xlu0 %v5364, 123
  %v5783 = vpop.permute.xlu0 %5782
  %5784 = vrot.lane.b32.xlu0 %v5365, 123
  %v5785 = vpop.permute.xlu0 %5784
  %v5786 = vsel %vm1417, %v5783, %v5785
  %v5790 = vsel %vm239, %v5781, 0
  %5792 = vmatprep.subr.mxu0 0.0
  %5793 = vmatpush1.msra.mxu0 0.0
  %5794 = vmatprep.subr.mxu0 0.0
  %5795 = vmatpush1.msra.mxu0 0.0
  %5796 = vmatprep.subr.mxu0 0.0
  %5797 = vmatpush1.msra.mxu0 0.0
  %5798 = vmatprep.subr.mxu0 0.0
  %5799 = vmatpush1.msra.mxu0 0.0
  %5800 = vmatprep.subr.mxu0 0.0
  %5801 = vmatpush1.msra.mxu0 0.0
  %5802 = vmatprep.subr.mxu0 0.0
  %5803 = vmatpush1.msra.mxu0 0.0
  %5804 = vmatprep.subr.mxu0 0.0
  %5805 = vmatpush1.msra.mxu0 0.0
  %5806 = vmatprep.subr.mxu0 0.0
  %5807 = vmatpush1.msra.mxu0 0.0
  %5808 = vmatprep.subr.mxu0 0.0
  %5809 = vmatpush1.msra.mxu0 0.0
  %5810 = vmatprep.subr.mxu0 0.0
  %5811 = vmatpush1.msra.mxu0 0.0
  %5812 = vmatprep.subr.mxu0 0.0
  %5813 = vmatpush1.msra.mxu0 0.0
  %5814 = vmatprep.subr.mxu0 0.0
  %5815 = vmatpush1.msra.mxu0 0.0
  %5816 = vmatprep.subr.mxu0 0.0
  %5817 = vmatpush1.msra.mxu0 0.0
  %5818 = vmatprep.subr.mxu0 0.0
  %5819 = vmatpush1.msra.mxu0 0.0
  %5820 = vmatprep.subr.mxu0 0.0
  %5821 = vmatpush1.msra.mxu0 0.0
  %5822 = vmatprep.subr.mxu0 %v5785
  %5823 = vmatpush1.msra.mxu0 %v5786
  %5824 = vmatprep.subr.mxu0 0.0
  %5825 = vmatpush2.msra.mxu0 0.0
  %5826 = vmatprep.subr.mxu0 0.0
  %5827 = vmatpush2.msra.mxu0 0.0
  %5828 = vmatprep.subr.mxu0 0.0
  %5829 = vmatpush2.msra.mxu0 0.0
  %5830 = vmatprep.subr.mxu0 0.0
  %5831 = vmatpush2.msra.mxu0 0.0
  %5832 = vmatprep.subr.mxu0 0.0
  %5833 = vmatpush2.msra.mxu0 0.0
  %5834 = vmatprep.subr.mxu0 0.0
  %5835 = vmatpush2.msra.mxu0 0.0
  %5836 = vmatprep.subr.mxu0 0.0
  %5837 = vmatpush2.msra.mxu0 0.0
  %5838 = vmatprep.subr.mxu0 0.0
  %5839 = vmatpush2.msra.mxu0 0.0
  %5840 = vmatprep.subr.mxu0 0.0
  %5841 = vmatpush2.msra.mxu0 0.0
  %5842 = vmatprep.subr.mxu0 0.0
  %5843 = vmatpush2.msra.mxu0 0.0
  %5844 = vmatprep.subr.mxu0 0.0
  %5845 = vmatpush2.msra.mxu0 0.0
  %5846 = vmatprep.subr.mxu0 0.0
  %5847 = vmatpush2.msra.mxu0 0.0
  %5848 = vmatprep.subr.mxu0 0.0
  %5849 = vmatpush2.msra.mxu0 0.0
  %5850 = vmatprep.subr.mxu0 0.0
  %5851 = vmatpush2.msra.mxu0 0.0
  %5852 = vmatprep.subr.mxu0 0.0
  %5853 = vmatpush2.msra.mxu0 0.0
  %5854 = vmatprep.subr.mxu0 0.0
  %5855 = vmatpush2.msra.mxu0 0.0
  %5856 = vmatprep.mubr.f32.mxu0 0.0
  %5857 = vmatmul.mubr.f32.gmra.mxu0 %v5790
  %v5858 = vpop.f32.mrf.mxu0
  %v5859 = vadd.f32 0.0, %v5858
  %v5860 = vpop.f32.mrf.mxu0
  %v5861 = vadd.f32 0.0, %v5860
  %5862 = vdwg.mxu0
  %v5863 = vadd.f32 %v5778, %v5859
  %v5864 = vadd.f32 %v5779, %v5861
  %s5865 = scalar_lea.vmem %s51, 48
  %v5866 = vld [vmem:[%s5865] sm:$0xff]
  %5867 = vrot.lane.b32.xlu0 %v5364, 122
  %v5868 = vpop.permute.xlu0 %5867
  %5869 = vrot.lane.b32.xlu0 %v5365, 122
  %v5870 = vpop.permute.xlu0 %5869
  %v5871 = vsel %vm1660, %v5868, %v5870
  %v5875 = vsel %vm239, %v5866, 0
  %5877 = vmatprep.subr.mxu0 0.0
  %5878 = vmatpush1.msra.mxu0 0.0
  %5879 = vmatprep.subr.mxu0 0.0
  %5880 = vmatpush1.msra.mxu0 0.0
  %5881 = vmatprep.subr.mxu0 0.0
  %5882 = vmatpush1.msra.mxu0 0.0
  %5883 = vmatprep.subr.mxu0 0.0
  %5884 = vmatpush1.msra.mxu0 0.0
  %5885 = vmatprep.subr.mxu0 0.0
  %5886 = vmatpush1.msra.mxu0 0.0
  %5887 = vmatprep.subr.mxu0 0.0
  %5888 = vmatpush1.msra.mxu0 0.0
  %5889 = vmatprep.subr.mxu0 0.0
  %5890 = vmatpush1.msra.mxu0 0.0
  %5891 = vmatprep.subr.mxu0 0.0
  %5892 = vmatpush1.msra.mxu0 0.0
  %5893 = vmatprep.subr.mxu0 0.0
  %5894 = vmatpush1.msra.mxu0 0.0
  %5895 = vmatprep.subr.mxu0 0.0
  %5896 = vmatpush1.msra.mxu0 0.0
  %5897 = vmatprep.subr.mxu0 0.0
  %5898 = vmatpush1.msra.mxu0 0.0
  %5899 = vmatprep.subr.mxu0 0.0
  %5900 = vmatpush1.msra.mxu0 0.0
  %5901 = vmatprep.subr.mxu0 0.0
  %5902 = vmatpush1.msra.mxu0 0.0
  %5903 = vmatprep.subr.mxu0 0.0
  %5904 = vmatpush1.msra.mxu0 0.0
  %5905 = vmatprep.subr.mxu0 0.0
  %5906 = vmatpush1.msra.mxu0 0.0
  %5907 = vmatprep.subr.mxu0 %v5870
  %5908 = vmatpush1.msra.mxu0 %v5871
  %5909 = vmatprep.subr.mxu0 0.0
  %5910 = vmatpush2.msra.mxu0 0.0
  %5911 = vmatprep.subr.mxu0 0.0
  %5912 = vmatpush2.msra.mxu0 0.0
  %5913 = vmatprep.subr.mxu0 0.0
  %5914 = vmatpush2.msra.mxu0 0.0
  %5915 = vmatprep.subr.mxu0 0.0
  %5916 = vmatpush2.msra.mxu0 0.0
  %5917 = vmatprep.subr.mxu0 0.0
  %5918 = vmatpush2.msra.mxu0 0.0
  %5919 = vmatprep.subr.mxu0 0.0
  %5920 = vmatpush2.msra.mxu0 0.0
  %5921 = vmatprep.subr.mxu0 0.0
  %5922 = vmatpush2.msra.mxu0 0.0
  %5923 = vmatprep.subr.mxu0 0.0
  %5924 = vmatpush2.msra.mxu0 0.0
  %5925 = vmatprep.subr.mxu0 0.0
  %5926 = vmatpush2.msra.mxu0 0.0
  %5927 = vmatprep.subr.mxu0 0.0
  %5928 = vmatpush2.msra.mxu0 0.0
  %5929 = vmatprep.subr.mxu0 0.0
  %5930 = vmatpush2.msra.mxu0 0.0
  %5931 = vmatprep.subr.mxu0 0.0
  %5932 = vmatpush2.msra.mxu0 0.0
  %5933 = vmatprep.subr.mxu0 0.0
  %5934 = vmatpush2.msra.mxu0 0.0
  %5935 = vmatprep.subr.mxu0 0.0
  %5936 = vmatpush2.msra.mxu0 0.0
  %5937 = vmatprep.subr.mxu0 0.0
  %5938 = vmatpush2.msra.mxu0 0.0
  %5939 = vmatprep.subr.mxu0 0.0
  %5940 = vmatpush2.msra.mxu0 0.0
  %5941 = vmatprep.mubr.f32.mxu0 0.0
  %5942 = vmatmul.mubr.f32.gmra.mxu0 %v5875
  %v5943 = vpop.f32.mrf.mxu0
  %v5944 = vadd.f32 0.0, %v5943
  %v5945 = vpop.f32.mrf.mxu0
  %v5946 = vadd.f32 0.0, %v5945
  %5947 = vdwg.mxu0
  %v5948 = vadd.f32 %v5863, %v5944
  %v5949 = vadd.f32 %v5864, %v5946
  %s5950 = scalar_lea.vmem %s51, 56
  %v5951 = vld [vmem:[%s5950] sm:$0xff]
  %5952 = vrot.lane.b32.xlu0 %v5364, 121
  %v5953 = vpop.permute.xlu0 %5952
  %5954 = vrot.lane.b32.xlu0 %v5365, 121
  %v5955 = vpop.permute.xlu0 %5954
  %v5956 = vsel %vm1903, %v5953, %v5955
  %v5960 = vsel %vm239, %v5951, 0
  %5962 = vmatprep.subr.mxu0 0.0
  %5963 = vmatpush1.msra.mxu0 0.0
  %5964 = vmatprep.subr.mxu0 0.0
  %5965 = vmatpush1.msra.mxu0 0.0
  %5966 = vmatprep.subr.mxu0 0.0
  %5967 = vmatpush1.msra.mxu0 0.0
  %5968 = vmatprep.subr.mxu0 0.0
  %5969 = vmatpush1.msra.mxu0 0.0
  %5970 = vmatprep.subr.mxu0 0.0
  %5971 = vmatpush1.msra.mxu0 0.0
  %5972 = vmatprep.subr.mxu0 0.0
  %5973 = vmatpush1.msra.mxu0 0.0
  %5974 = vmatprep.subr.mxu0 0.0
  %5975 = vmatpush1.msra.mxu0 0.0
  %5976 = vmatprep.subr.mxu0 0.0
  %5977 = vmatpush1.msra.mxu0 0.0
  %5978 = vmatprep.subr.mxu0 0.0
  %5979 = vmatpush1.msra.mxu0 0.0
  %5980 = vmatprep.subr.mxu0 0.0
  %5981 = vmatpush1.msra.mxu0 0.0
  %5982 = vmatprep.subr.mxu0 0.0
  %5983 = vmatpush1.msra.mxu0 0.0
  %5984 = vmatprep.subr.mxu0 0.0
  %5985 = vmatpush1.msra.mxu0 0.0
  %5986 = vmatprep.subr.mxu0 0.0
  %5987 = vmatpush1.msra.mxu0 0.0
  %5988 = vmatprep.subr.mxu0 0.0
  %5989 = vmatpush1.msra.mxu0 0.0
  %5990 = vmatprep.subr.mxu0 0.0
  %5991 = vmatpush1.msra.mxu0 0.0
  %5992 = vmatprep.subr.mxu0 %v5955
  %5993 = vmatpush1.msra.mxu0 %v5956
  %5994 = vmatprep.subr.mxu0 0.0
  %5995 = vmatpush2.msra.mxu0 0.0
  %5996 = vmatprep.subr.mxu0 0.0
  %5997 = vmatpush2.msra.mxu0 0.0
  %5998 = vmatprep.subr.mxu0 0.0
  %5999 = vmatpush2.msra.mxu0 0.0
  %6000 = vmatprep.subr.mxu0 0.0
  %6001 = vmatpush2.msra.mxu0 0.0
  %6002 = vmatprep.subr.mxu0 0.0
  %6003 = vmatpush2.msra.mxu0 0.0
  %6004 = vmatprep.subr.mxu0 0.0
  %6005 = vmatpush2.msra.mxu0 0.0
  %6006 = vmatprep.subr.mxu0 0.0
  %6007 = vmatpush2.msra.mxu0 0.0
  %6008 = vmatprep.subr.mxu0 0.0
  %6009 = vmatpush2.msra.mxu0 0.0
  %6010 = vmatprep.subr.mxu0 0.0
  %6011 = vmatpush2.msra.mxu0 0.0
  %6012 = vmatprep.subr.mxu0 0.0
  %6013 = vmatpush2.msra.mxu0 0.0
  %6014 = vmatprep.subr.mxu0 0.0
  %6015 = vmatpush2.msra.mxu0 0.0
  %6016 = vmatprep.subr.mxu0 0.0
  %6017 = vmatpush2.msra.mxu0 0.0
  %6018 = vmatprep.subr.mxu0 0.0
  %6019 = vmatpush2.msra.mxu0 0.0
  %6020 = vmatprep.subr.mxu0 0.0
  %6021 = vmatpush2.msra.mxu0 0.0
  %6022 = vmatprep.subr.mxu0 0.0
  %6023 = vmatpush2.msra.mxu0 0.0
  %6024 = vmatprep.subr.mxu0 0.0
  %6025 = vmatpush2.msra.mxu0 0.0
  %6026 = vmatprep.mubr.f32.mxu0 0.0
  %6027 = vmatmul.mubr.f32.gmra.mxu0 %v5960
  %v6028 = vpop.f32.mrf.mxu0
  %v6029 = vadd.f32 0.0, %v6028
  %v6030 = vpop.f32.mrf.mxu0
  %v6031 = vadd.f32 0.0, %v6030
  %6032 = vdwg.mxu0
  %v6033 = vadd.f32 %v5948, %v6029
  %v6034 = vadd.f32 %v5949, %v6031
  %v6035 = vld [vmem:[%s53] sm:$0xff]
  %6037 = vset.pattern.permute.xlu0 0
  %6038 = vperm.xlu0 %6037, %v6035
  %v6039 = vpop.permute.xlu0 %6038
  %v6041 = vadd.f32 %v6033, %v6039
  %vm6042 = vcmp.gt.f32.partialorder %v6041, 0.0
  %v6043 = vmul.f32 %v6041, 0.01
  %v6044 = vsel %vm6042, %v6041, %v6043
  %v6045 = vadd.f32 %v6034, %v6039
  %vm6046 = vcmp.gt.f32.partialorder %v6045, 0.0
  %v6047 = vmul.f32 %v6045, 0.01
  %v6048 = vsel %vm6046, %v6045, %v6047
  %v6049 = vld [vmem:[%s55] sm:$0xff]
  %v6050 = vld [vmem:[%s57] sm:$0xff]
  %v6051 = vsel %vm2328, %v6044, 0.0
  %6052 = vadd.xlane.f32.xlu0 %v6051
  %v6053 = vpop.xlane.xlu0 %6052
  %v6054 = vmul.f32 %v6044, %v6044
  %v6055 = vsel %vm2328, %v6054, 0.0
  %6056 = vadd.xlane.f32.xlu0 %v6055
  %v6057 = vpop.xlane.xlu0 %6056
  %v6058 = vsel %vm2328, %v6048, 0.0
  %6059 = vadd.xlane.f32.xlu0 %v6058
  %v6060 = vpop.xlane.xlu0 %6059
  %v6061 = vadd.f32 %v6053, %v6060
  %v6062 = vmul.f32 %v6048, %v6048
  %v6063 = vsel %vm2328, %v6062, 0.0
  %6064 = vadd.xlane.f32.xlu0 %v6063
  %v6065 = vpop.xlane.xlu0 %6064
  %v6066 = vadd.f32 %v6057, %v6065
  %v6067 = vmul.f32 %v6061, 0.0078125
  %v6068 = vmul.f32 %v6066, 0.0078125
  %v6069 = vmul.f32 %v6067, %v6067
  %v6070 = vsub.f32 %v6068, %v6069
  %v6071 = vmax.f32 %v6070, 0.0
  %v6072 = vadd.f32 %v6071, 1e-05
  %v6073 = vrsqrt.pop %v6072
  %v6074 = vmul.f32 %v6049, %v6073
  %v6075 = vmul.f32 %v6067, %v6074
  %v6076 = vsub.f32 %v6050, %v6075
  %6078 = vset.pattern.permute.xlu0 0
  %6079 = vperm.xlu0 %6078, %v6074
  %v6080 = vpop.permute.xlu0 %6079
  %v6082 = vmul.f32 %v6044, %v6080
  %6084 = vset.pattern.permute.xlu0 0
  %6085 = vperm.xlu0 %6084, %v6076
  %v6086 = vpop.permute.xlu0 %6085
  %v6088 = vadd.f32 %v6082, %v6086
  %v6089 = vmul.f32 %v6048, %v6080
  %v6090 = vadd.f32 %v6089, %v6086
  %v6091 = vld [vmem:[%s69] sm:$0xff]
  %v6092 = vld [vmem:[%s69 + $0x8] sm:$0xff]
  %v6093 = vld [vmem:[%s69 + $0x10] sm:$0xff]
  %v6094 = vld [vmem:[%s69 + $0x18] sm:$0xff]
  %v6095 = vld [vmem:[%s69 + $0x20] sm:$0xff]
  %v6096 = vld [vmem:[%s69 + $0x28] sm:$0xff]
  %v6097 = vld [vmem:[%s69 + $0x30] sm:$0xff]
  %v6098 = vld [vmem:[%s69 + $0x38] sm:$0xff]
  %v6099 = vld [vmem:[%s69 + $0x40] sm:$0xff]
  %v6100 = vld [vmem:[%s69 + $0x48] sm:$0xff]
  %v6101 = vld [vmem:[%s69 + $0x50] sm:$0xff]
  %v6102 = vld [vmem:[%s69 + $0x58] sm:$0xff]
  %v6103 = vld [vmem:[%s69 + $0x60] sm:$0xff]
  %v6104 = vld [vmem:[%s69 + $0x68] sm:$0xff]
  %v6105 = vld [vmem:[%s69 + $0x70] sm:$0xff]
  %v6106 = vld [vmem:[%s69 + $0x78] sm:$0xff]
  %v6108 = vsel %vm2328, %v6088, 0
  %6110 = vmatprep.subr.mxu0 0.0
  %6111 = vmatpush1.msra.mxu0 0.0
  %6112 = vmatprep.subr.mxu0 0.0
  %6113 = vmatpush1.msra.mxu0 0.0
  %6114 = vmatprep.subr.mxu0 0.0
  %6115 = vmatpush1.msra.mxu0 0.0
  %6116 = vmatprep.subr.mxu0 0.0
  %6117 = vmatpush1.msra.mxu0 0.0
  %6118 = vmatprep.subr.mxu0 0.0
  %6119 = vmatpush1.msra.mxu0 0.0
  %6120 = vmatprep.subr.mxu0 0.0
  %6121 = vmatpush1.msra.mxu0 0.0
  %6122 = vmatprep.subr.mxu0 0.0
  %6123 = vmatpush1.msra.mxu0 0.0
  %6124 = vmatprep.subr.mxu0 0.0
  %6125 = vmatpush1.msra.mxu0 0.0
  %6126 = vmatprep.subr.mxu0 %v6106
  %6127 = vmatpush1.msra.mxu0 %v6105
  %6128 = vmatprep.subr.mxu0 %v6104
  %6129 = vmatpush1.msra.mxu0 %v6103
  %6130 = vmatprep.subr.mxu0 %v6102
  %6131 = vmatpush1.msra.mxu0 %v6101
  %6132 = vmatprep.subr.mxu0 %v6100
  %6133 = vmatpush1.msra.mxu0 %v6099
  %6134 = vmatprep.subr.mxu0 %v6098
  %6135 = vmatpush1.msra.mxu0 %v6097
  %6136 = vmatprep.subr.mxu0 %v6096
  %6137 = vmatpush1.msra.mxu0 %v6095
  %6138 = vmatprep.subr.mxu0 %v6094
  %6139 = vmatpush1.msra.mxu0 %v6093
  %6140 = vmatprep.subr.mxu0 %v6092
  %6141 = vmatpush1.msra.mxu0 %v6091
  %6142 = vmatprep.subr.mxu0 0.0
  %6143 = vmatpush2.msra.mxu0 0.0
  %6144 = vmatprep.subr.mxu0 0.0
  %6145 = vmatpush2.msra.mxu0 0.0
  %6146 = vmatprep.subr.mxu0 0.0
  %6147 = vmatpush2.msra.mxu0 0.0
  %6148 = vmatprep.subr.mxu0 0.0
  %6149 = vmatpush2.msra.mxu0 0.0
  %6150 = vmatprep.subr.mxu0 0.0
  %6151 = vmatpush2.msra.mxu0 0.0
  %6152 = vmatprep.subr.mxu0 0.0
  %6153 = vmatpush2.msra.mxu0 0.0
  %6154 = vmatprep.subr.mxu0 0.0
  %6155 = vmatpush2.msra.mxu0 0.0
  %6156 = vmatprep.subr.mxu0 0.0
  %6157 = vmatpush2.msra.mxu0 0.0
  %6158 = vmatprep.subr.mxu0 0.0
  %6159 = vmatpush2.msra.mxu0 0.0
  %6160 = vmatprep.subr.mxu0 0.0
  %6161 = vmatpush2.msra.mxu0 0.0
  %6162 = vmatprep.subr.mxu0 0.0
  %6163 = vmatpush2.msra.mxu0 0.0
  %6164 = vmatprep.subr.mxu0 0.0
  %6165 = vmatpush2.msra.mxu0 0.0
  %6166 = vmatprep.subr.mxu0 0.0
  %6167 = vmatpush2.msra.mxu0 0.0
  %6168 = vmatprep.subr.mxu0 0.0
  %6169 = vmatpush2.msra.mxu0 0.0
  %6170 = vmatprep.subr.mxu0 0.0
  %6171 = vmatpush2.msra.mxu0 0.0
  %6172 = vmatprep.subr.mxu0 0.0
  %6173 = vmatpush2.msra.mxu0 0.0
  %6174 = vmatprep.mubr.f32.mxu0 0.0
  %6175 = vmatmul.mubr.f32.gmra.mxu0 %v6108
  %v6176 = vpop.f32.mrf.mxu0
  %v6177 = vadd.f32 0.0, %v6176
  %v6178 = vpop.f32.mrf.mxu0
  %v6179 = vadd.f32 0.0, %v6178
  %6180 = vdwg.mxu0
  %vm6181 = vcmask 39936
  %6182 = vst.msk [vmem:[#allocation2] sm:$0xff] %vm6181, 0.0
  %vm6183 = vcmask 56336
  %6184 = vst.msk [vmem:[#allocation2 + $0x10] sm:$0xff] %vm6183, 0.0
  %6187 = vrot.lane.b32.xlu0 %v6177, 5
  %v6188 = vpop.permute.xlu0 %6187
  %6189 = vrot.lane.b32.xlu0 %v6179, 5
  %v6190 = vpop.permute.xlu0 %6189
  %v6191 = vsel %vm6181, %v6188, %v6190
  %vm6195 = vcmask 1047592
  %6196 = vst.msk [vmem:[#allocation2] sm:$0xff] %vm6195, %v6188
  %6197 = vst [vmem:[#allocation2 + $0x8] sm:$0xff] %v6191
  %6198 = vst.msk [vmem:[#allocation2 + $0x10] sm:$0xff] %vm173, %v6190
  %v6199 = vld [vmem:[%s69] sm:$0xff]
  %v6200 = vld [vmem:[%s69 + $0x8] sm:$0xff]
  %v6201 = vld [vmem:[%s69 + $0x10] sm:$0xff]
  %v6202 = vld [vmem:[%s69 + $0x18] sm:$0xff]
  %v6203 = vld [vmem:[%s69 + $0x20] sm:$0xff]
  %v6204 = vld [vmem:[%s69 + $0x28] sm:$0xff]
  %v6205 = vld [vmem:[%s69 + $0x30] sm:$0xff]
  %v6206 = vld [vmem:[%s69 + $0x38] sm:$0xff]
  %v6207 = vld [vmem:[%s69 + $0x40] sm:$0xff]
  %v6208 = vld [vmem:[%s69 + $0x48] sm:$0xff]
  %v6209 = vld [vmem:[%s69 + $0x50] sm:$0xff]
  %v6210 = vld [vmem:[%s69 + $0x58] sm:$0xff]
  %v6211 = vld [vmem:[%s69 + $0x60] sm:$0xff]
  %v6212 = vld [vmem:[%s69 + $0x68] sm:$0xff]
  %v6213 = vld [vmem:[%s69 + $0x70] sm:$0xff]
  %v6214 = vld [vmem:[%s69 + $0x78] sm:$0xff]
  %v6216 = vsel %vm2328, %v6090, 0
  %6218 = vmatprep.subr.mxu0 0.0
  %6219 = vmatpush1.msra.mxu0 0.0
  %6220 = vmatprep.subr.mxu0 0.0
  %6221 = vmatpush1.msra.mxu0 0.0
  %6222 = vmatprep.subr.mxu0 0.0
  %6223 = vmatpush1.msra.mxu0 0.0
  %6224 = vmatprep.subr.mxu0 0.0
  %6225 = vmatpush1.msra.mxu0 0.0
  %6226 = vmatprep.subr.mxu0 0.0
  %6227 = vmatpush1.msra.mxu0 0.0
  %6228 = vmatprep.subr.mxu0 0.0
  %6229 = vmatpush1.msra.mxu0 0.0
  %6230 = vmatprep.subr.mxu0 0.0
  %6231 = vmatpush1.msra.mxu0 0.0
  %6232 = vmatprep.subr.mxu0 0.0
  %6233 = vmatpush1.msra.mxu0 0.0
  %6234 = vmatprep.subr.mxu0 %v6214
  %6235 = vmatpush1.msra.mxu0 %v6213
  %6236 = vmatprep.subr.mxu0 %v6212
  %6237 = vmatpush1.msra.mxu0 %v6211
  %6238 = vmatprep.subr.mxu0 %v6210
  %6239 = vmatpush1.msra.mxu0 %v6209
  %6240 = vmatprep.subr.mxu0 %v6208
  %6241 = vmatpush1.msra.mxu0 %v6207
  %6242 = vmatprep.subr.mxu0 %v6206
  %6243 = vmatpush1.msra.mxu0 %v6205
  %6244 = vmatprep.subr.mxu0 %v6204
  %6245 = vmatpush1.msra.mxu0 %v6203
  %6246 = vmatprep.subr.mxu0 %v6202
  %6247 = vmatpush1.msra.mxu0 %v6201
  %6248 = vmatprep.subr.mxu0 %v6200
  %6249 = vmatpush1.msra.mxu0 %v6199
  %6250 = vmatprep.subr.mxu0 0.0
  %6251 = vmatpush2.msra.mxu0 0.0
  %6252 = vmatprep.subr.mxu0 0.0
  %6253 = vmatpush2.msra.mxu0 0.0
  %6254 = vmatprep.subr.mxu0 0.0
  %6255 = vmatpush2.msra.mxu0 0.0
  %6256 = vmatprep.subr.mxu0 0.0
  %6257 = vmatpush2.msra.mxu0 0.0
  %6258 = vmatprep.subr.mxu0 0.0
  %6259 = vmatpush2.msra.mxu0 0.0
  %6260 = vmatprep.subr.mxu0 0.0
  %6261 = vmatpush2.msra.mxu0 0.0
  %6262 = vmatprep.subr.mxu0 0.0
  %6263 = vmatpush2.msra.mxu0 0.0
  %6264 = vmatprep.subr.mxu0 0.0
  %6265 = vmatpush2.msra.mxu0 0.0
  %6266 = vmatprep.subr.mxu0 0.0
  %6267 = vmatpush2.msra.mxu0 0.0
  %6268 = vmatprep.subr.mxu0 0.0
  %6269 = vmatpush2.msra.mxu0 0.0
  %6270 = vmatprep.subr.mxu0 0.0
  %6271 = vmatpush2.msra.mxu0 0.0
  %6272 = vmatprep.subr.mxu0 0.0
  %6273 = vmatpush2.msra.mxu0 0.0
  %6274 = vmatprep.subr.mxu0 0.0
  %6275 = vmatpush2.msra.mxu0 0.0
  %6276 = vmatprep.subr.mxu0 0.0
  %6277 = vmatpush2.msra.mxu0 0.0
  %6278 = vmatprep.subr.mxu0 0.0
  %6279 = vmatpush2.msra.mxu0 0.0
  %6280 = vmatprep.subr.mxu0 0.0
  %6281 = vmatpush2.msra.mxu0 0.0
  %6282 = vmatprep.mubr.f32.mxu0 0.0
  %6283 = vmatmul.mubr.f32.gmra.mxu0 %v6216
  %v6284 = vpop.f32.mrf.mxu0
  %v6285 = vadd.f32 0.0, %v6284
  %v6286 = vpop.f32.mrf.mxu0
  %v6287 = vadd.f32 0.0, %v6286
  %6288 = vdwg.mxu0
  %6289 = vst.msk [vmem:[#allocation2 + $0x18] sm:$0xff] %vm6181, 0.0
  %6290 = vst.msk [vmem:[#allocation2 + $0x28] sm:$0xff] %vm6183, 0.0
  %6293 = vrot.lane.b32.xlu0 %v6285, 5
  %v6294 = vpop.permute.xlu0 %6293
  %6295 = vrot.lane.b32.xlu0 %v6287, 5
  %v6296 = vpop.permute.xlu0 %6295
  %v6297 = vsel %vm6181, %v6294, %v6296
  %6301 = vst.msk [vmem:[#allocation2 + $0x18] sm:$0xff] %vm6195, %v6294
  %6302 = vst [vmem:[#allocation2 + $0x20] sm:$0xff] %v6297
  %6303 = vst.msk [vmem:[#allocation2 + $0x28] sm:$0xff] %vm173, %v6296
  %v6304 = vld [vmem:[%s61] sm:$0xff]
  %v6305 = vld [vmem:[#allocation2] sm:$0xff]
  %v6306 = vld [vmem:[#allocation2 + $0x8] sm:$0xff]
  %v6307 = vld [vmem:[#allocation2 + $0x10] sm:$0xff]
  %v6308 = vld [vmem:[#allocation2 + $0x18] sm:$0xff]
  %v6309 = vld [vmem:[#allocation2 + $0x20] sm:$0xff]
  %s6310 = scalar_lea.vmem %s61, 8
  %v6311 = vld [vmem:[%s6310] sm:$0xff]
  %v6312 = vld [vmem:[#allocation2] sm:$0xff]
  %v6313 = vld [vmem:[#allocation2 + $0x8] sm:$0xff]
  %v6314 = vld [vmem:[#allocation2 + $0x10] sm:$0xff]
  %v6315 = vld [vmem:[#allocation2 + $0x18] sm:$0xff]
  %v6316 = vld [vmem:[#allocation2 + $0x20] sm:$0xff]
  %v6317 = vld [vmem:[#allocation2 + $0x28] sm:$0xff]
  %6324 = vrot.lane.b32.xlu0 %v6312, 127
  %v6325 = vpop.permute.xlu0 %6324
  %6326 = vrot.lane.b32.xlu0 %v6313, 127
  %v6327 = vpop.permute.xlu0 %6326
  %6328 = vrot.lane.b32.xlu0 %v6314, 127
  %v6329 = vpop.permute.xlu0 %6328
  %6330 = vrot.lane.b32.xlu0 %v6315, 127
  %v6331 = vpop.permute.xlu0 %6330
  %6332 = vrot.lane.b32.xlu0 %v6316, 127
  %v6333 = vpop.permute.xlu0 %6332
  %6334 = vrot.lane.b32.xlu0 %v6317, 127
  %v6335 = vpop.permute.xlu0 %6334
  %v6336 = vsel %vm229, %v6325, %v6327
  %v6337 = vsel %vm229, %v6327, %v6329
  %v6338 = vsel %vm229, %v6329, %v6331
  %v6339 = vsel %vm229, %v6331, %v6333
  %v6340 = vsel %vm229, %v6333, %v6335
  %v6347 = vsel %vm239, %v6311, 0
  %6349 = vmatprep.subr.mxu0 0.0
  %6350 = vmatpush1.msra.mxu0 0.0
  %6351 = vmatprep.subr.mxu0 0.0
  %6352 = vmatpush1.msra.mxu0 0.0
  %6353 = vmatprep.subr.mxu0 0.0
  %6354 = vmatpush1.msra.mxu0 0.0
  %6355 = vmatprep.subr.mxu0 0.0
  %6356 = vmatpush1.msra.mxu0 0.0
  %6357 = vmatprep.subr.mxu0 0.0
  %6358 = vmatpush1.msra.mxu0 0.0
  %6359 = vmatprep.subr.mxu0 0.0
  %6360 = vmatpush1.msra.mxu0 0.0
  %6361 = vmatprep.subr.mxu0 0.0
  %6362 = vmatpush1.msra.mxu0 0.0
  %6363 = vmatprep.subr.mxu0 0.0
  %6364 = vmatpush1.msra.mxu0 0.0
  %6365 = vmatprep.subr.mxu0 0.0
  %6366 = vmatpush1.msra.mxu0 0.0
  %6367 = vmatprep.subr.mxu0 0.0
  %6368 = vmatpush1.msra.mxu0 0.0
  %6369 = vmatprep.subr.mxu0 0.0
  %6370 = vmatpush1.msra.mxu0 0.0
  %6371 = vmatprep.subr.mxu0 0.0
  %6372 = vmatpush1.msra.mxu0 0.0
  %6373 = vmatprep.subr.mxu0 0.0
  %6374 = vmatpush1.msra.mxu0 0.0
  %6375 = vmatprep.subr.mxu0 0.0
  %6376 = vmatpush1.msra.mxu0 0.0
  %6377 = vmatprep.subr.mxu0 0.0
  %6378 = vmatpush1.msra.mxu0 0.0
  %6379 = vmatprep.subr.mxu0 %v6337
  %6380 = vmatpush1.msra.mxu0 %v6336
  %6381 = vmatprep.subr.mxu0 0.0
  %6382 = vmatpush2.msra.mxu0 0.0
  %6383 = vmatprep.subr.mxu0 0.0
  %6384 = vmatpush2.msra.mxu0 0.0
  %6385 = vmatprep.subr.mxu0 0.0
  %6386 = vmatpush2.msra.mxu0 0.0
  %6387 = vmatprep.subr.mxu0 0.0
  %6388 = vmatpush2.msra.mxu0 0.0
  %6389 = vmatprep.subr.mxu0 0.0
  %6390 = vmatpush2.msra.mxu0 0.0
  %6391 = vmatprep.subr.mxu0 0.0
  %6392 = vmatpush2.msra.mxu0 0.0
  %6393 = vmatprep.subr.mxu0 0.0
  %6394 = vmatpush2.msra.mxu0 0.0
  %6395 = vmatprep.subr.mxu0 0.0
  %6396 = vmatpush2.msra.mxu0 0.0
  %6397 = vmatprep.subr.mxu0 0.0
  %6398 = vmatpush2.msra.mxu0 0.0
  %6399 = vmatprep.subr.mxu0 0.0
  %6400 = vmatpush2.msra.mxu0 0.0
  %6401 = vmatprep.subr.mxu0 0.0
  %6402 = vmatpush2.msra.mxu0 0.0
  %6403 = vmatprep.subr.mxu0 0.0
  %6404 = vmatpush2.msra.mxu0 0.0
  %6405 = vmatprep.subr.mxu0 0.0
  %6406 = vmatpush2.msra.mxu0 0.0
  %6407 = vmatprep.subr.mxu0 0.0
  %6408 = vmatpush2.msra.mxu0 0.0
  %6409 = vmatprep.subr.mxu0 0.0
  %6410 = vmatpush2.msra.mxu0 0.0
  %6411 = vmatprep.subr.mxu0 0.0
  %6412 = vmatpush2.msra.mxu0 0.0
  %6413 = vmatprep.mubr.f32.mxu0 0.0
  %6414 = vmatmul.mubr.f32.gmra.mxu0 %v6347
  %v6415 = vpop.f32.mrf.mxu0
  %v6416 = vadd.f32 0.0, %v6415
  %v6417 = vpop.f32.mrf.mxu0
  %v6418 = vadd.f32 0.0, %v6417
  %6419 = vdwg.mxu0
  %6420 = vmatprep.subr.mxu0 0.0
  %6421 = vmatpush1.msra.mxu0 0.0
  %6422 = vmatprep.subr.mxu0 0.0
  %6423 = vmatpush1.msra.mxu0 0.0
  %6424 = vmatprep.subr.mxu0 0.0
  %6425 = vmatpush1.msra.mxu0 0.0
  %6426 = vmatprep.subr.mxu0 0.0
  %6427 = vmatpush1.msra.mxu0 0.0
  %6428 = vmatprep.subr.mxu0 0.0
  %6429 = vmatpush1.msra.mxu0 0.0
  %6430 = vmatprep.subr.mxu0 0.0
  %6431 = vmatpush1.msra.mxu0 0.0
  %6432 = vmatprep.subr.mxu0 0.0
  %6433 = vmatpush1.msra.mxu0 0.0
  %6434 = vmatprep.subr.mxu0 0.0
  %6435 = vmatpush1.msra.mxu0 0.0
  %6436 = vmatprep.subr.mxu0 0.0
  %6437 = vmatpush1.msra.mxu0 0.0
  %6438 = vmatprep.subr.mxu0 0.0
  %6439 = vmatpush1.msra.mxu0 0.0
  %6440 = vmatprep.subr.mxu0 0.0
  %6441 = vmatpush1.msra.mxu0 0.0
  %6442 = vmatprep.subr.mxu0 0.0
  %6443 = vmatpush1.msra.mxu0 0.0
  %6444 = vmatprep.subr.mxu0 0.0
  %6445 = vmatpush1.msra.mxu0 0.0
  %6446 = vmatprep.subr.mxu0 0.0
  %6447 = vmatpush1.msra.mxu0 0.0
  %6448 = vmatprep.subr.mxu0 0.0
  %6449 = vmatpush1.msra.mxu0 0.0
  %6450 = vmatprep.subr.mxu0 %v6339
  %6451 = vmatpush1.msra.mxu0 %v6338
  %6452 = vmatprep.subr.mxu0 0.0
  %6453 = vmatpush2.msra.mxu0 0.0
  %6454 = vmatprep.subr.mxu0 0.0
  %6455 = vmatpush2.msra.mxu0 0.0
  %6456 = vmatprep.subr.mxu0 0.0
  %6457 = vmatpush2.msra.mxu0 0.0
  %6458 = vmatprep.subr.mxu0 0.0
  %6459 = vmatpush2.msra.mxu0 0.0
  %6460 = vmatprep.subr.mxu0 0.0
  %6461 = vmatpush2.msra.mxu0 0.0
  %6462 = vmatprep.subr.mxu0 0.0
  %6463 = vmatpush2.msra.mxu0 0.0
  %6464 = vmatprep.subr.mxu0 0.0
  %6465 = vmatpush2.msra.mxu0 0.0
  %6466 = vmatprep.subr.mxu0 0.0
  %6467 = vmatpush2.msra.mxu0 0.0
  %6468 = vmatprep.subr.mxu0 0.0
  %6469 = vmatpush2.msra.mxu0 0.0
  %6470 = vmatprep.subr.mxu0 0.0
  %6471 = vmatpush2.msra.mxu0 0.0
  %6472 = vmatprep.subr.mxu0 0.0
  %6473 = vmatpush2.msra.mxu0 0.0
  %6474 = vmatprep.subr.mxu0 0.0
  %6475 = vmatpush2.msra.mxu0 0.0
  %6476 = vmatprep.subr.mxu0 0.0
  %6477 = vmatpush2.msra.mxu0 0.0
  %6478 = vmatprep.subr.mxu0 0.0
  %6479 = vmatpush2.msra.mxu0 0.0
  %6480 = vmatprep.subr.mxu0 0.0
  %6481 = vmatpush2.msra.mxu0 0.0
  %6482 = vmatprep.subr.mxu0 0.0
  %6483 = vmatpush2.msra.mxu0 0.0
  %6484 = vmatprep.mubr.f32.mxu0 0.0
  %6485 = vmatmul.mubr.f32.gmra.mxu0 %v6347
  %v6486 = vpop.f32.mrf.mxu0
  %v6487 = vpop.f32.mrf.mxu0
  %v6488 = vadd.f32 0.0, %v6487
  %6489 = vdwg.mxu0
  %6490 = vmatprep.subr.mxu0 0.0
  %6491 = vmatpush1.msra.mxu0 0.0
  %6492 = vmatprep.subr.mxu0 0.0
  %6493 = vmatpush1.msra.mxu0 0.0
  %6494 = vmatprep.subr.mxu0 0.0
  %6495 = vmatpush1.msra.mxu0 0.0
  %6496 = vmatprep.subr.mxu0 0.0
  %6497 = vmatpush1.msra.mxu0 0.0
  %6498 = vmatprep.subr.mxu0 0.0
  %6499 = vmatpush1.msra.mxu0 0.0
  %6500 = vmatprep.subr.mxu0 0.0
  %6501 = vmatpush1.msra.mxu0 0.0
  %6502 = vmatprep.subr.mxu0 0.0
  %6503 = vmatpush1.msra.mxu0 0.0
  %6504 = vmatprep.subr.mxu0 0.0
  %6505 = vmatpush1.msra.mxu0 0.0
  %6506 = vmatprep.subr.mxu0 0.0
  %6507 = vmatpush1.msra.mxu0 0.0
  %6508 = vmatprep.subr.mxu0 0.0
  %6509 = vmatpush1.msra.mxu0 0.0
  %6510 = vmatprep.subr.mxu0 0.0
  %6511 = vmatpush1.msra.mxu0 0.0
  %6512 = vmatprep.subr.mxu0 0.0
  %6513 = vmatpush1.msra.mxu0 0.0
  %6514 = vmatprep.subr.mxu0 0.0
  %6515 = vmatpush1.msra.mxu0 0.0
  %6516 = vmatprep.subr.mxu0 0.0
  %6517 = vmatpush1.msra.mxu0 0.0
  %6518 = vmatprep.subr.mxu0 0.0
  %6519 = vmatpush1.msra.mxu0 0.0
  %6520 = vmatprep.subr.mxu0 0.0
  %6521 = vmatpush1.msra.mxu0 %v6340
  %6522 = vmatprep.subr.mxu0 0.0
  %6523 = vmatpush2.msra.mxu0 0.0
  %6524 = vmatprep.subr.mxu0 0.0
  %6525 = vmatpush2.msra.mxu0 0.0
  %6526 = vmatprep.subr.mxu0 0.0
  %6527 = vmatpush2.msra.mxu0 0.0
  %6528 = vmatprep.subr.mxu0 0.0
  %6529 = vmatpush2.msra.mxu0 0.0
  %6530 = vmatprep.subr.mxu0 0.0
  %6531 = vmatpush2.msra.mxu0 0.0
  %6532 = vmatprep.subr.mxu0 0.0
  %6533 = vmatpush2.msra.mxu0 0.0
  %6534 = vmatprep.subr.mxu0 0.0
  %6535 = vmatpush2.msra.mxu0 0.0
  %6536 = vmatprep.subr.mxu0 0.0
  %6537 = vmatpush2.msra.mxu0 0.0
  %6538 = vmatprep.subr.mxu0 0.0
  %6539 = vmatpush2.msra.mxu0 0.0
  %6540 = vmatprep.subr.mxu0 0.0
  %6541 = vmatpush2.msra.mxu0 0.0
  %6542 = vmatprep.subr.mxu0 0.0
  %6543 = vmatpush2.msra.mxu0 0.0
  %6544 = vmatprep.subr.mxu0 0.0
  %6545 = vmatpush2.msra.mxu0 0.0
  %6546 = vmatprep.subr.mxu0 0.0
  %6547 = vmatpush2.msra.mxu0 0.0
  %6548 = vmatprep.subr.mxu0 0.0
  %6549 = vmatpush2.msra.mxu0 0.0
  %6550 = vmatprep.subr.mxu0 0.0
  %6551 = vmatpush2.msra.mxu0 0.0
  %6552 = vmatprep.subr.mxu0 0.0
  %6553 = vmatpush2.msra.mxu0 0.0
  %6554 = vmatprep.mubr.f32.mxu0 0.0
  %6555 = vmatmul.mubr.f32.gmra.mxu0 %v6347
  %v6556 = vpop.f32.mrf.mxu0
  %v6557 = vadd.f32 0.0, %v6556
  %v6558 = vpop.f32.mrf.mxu0
  %6559 = vdwg.mxu0
  %v6561 = vsel %vm239, %v6304, 0
  %6563 = vmatprep.subr.mxu0 0.0
  %6564 = vmatpush1.msra.mxu0 0.0
  %6565 = vmatprep.subr.mxu0 0.0
  %6566 = vmatpush1.msra.mxu0 0.0
  %6567 = vmatprep.subr.mxu0 0.0
  %6568 = vmatpush1.msra.mxu0 0.0
  %6569 = vmatprep.subr.mxu0 0.0
  %6570 = vmatpush1.msra.mxu0 0.0
  %6571 = vmatprep.subr.mxu0 0.0
  %6572 = vmatpush1.msra.mxu0 0.0
  %6573 = vmatprep.subr.mxu0 0.0
  %6574 = vmatpush1.msra.mxu0 0.0
  %6575 = vmatprep.subr.mxu0 0.0
  %6576 = vmatpush1.msra.mxu0 0.0
  %6577 = vmatprep.subr.mxu0 0.0
  %6578 = vmatpush1.msra.mxu0 0.0
  %6579 = vmatprep.subr.mxu0 0.0
  %6580 = vmatpush1.msra.mxu0 0.0
  %6581 = vmatprep.subr.mxu0 0.0
  %6582 = vmatpush1.msra.mxu0 0.0
  %6583 = vmatprep.subr.mxu0 0.0
  %6584 = vmatpush1.msra.mxu0 0.0
  %6585 = vmatprep.subr.mxu0 0.0
  %6586 = vmatpush1.msra.mxu0 0.0
  %6587 = vmatprep.subr.mxu0 0.0
  %6588 = vmatpush1.msra.mxu0 0.0
  %6589 = vmatprep.subr.mxu0 0.0
  %6590 = vmatpush1.msra.mxu0 0.0
  %6591 = vmatprep.subr.mxu0 0.0
  %6592 = vmatpush1.msra.mxu0 0.0
  %6593 = vmatprep.subr.mxu0 %v6306
  %6594 = vmatpush1.msra.mxu0 %v6305
  %6595 = vmatprep.subr.mxu0 0.0
  %6596 = vmatpush2.msra.mxu0 0.0
  %6597 = vmatprep.subr.mxu0 0.0
  %6598 = vmatpush2.msra.mxu0 0.0
  %6599 = vmatprep.subr.mxu0 0.0
  %6600 = vmatpush2.msra.mxu0 0.0
  %6601 = vmatprep.subr.mxu0 0.0
  %6602 = vmatpush2.msra.mxu0 0.0
  %6603 = vmatprep.subr.mxu0 0.0
  %6604 = vmatpush2.msra.mxu0 0.0
  %6605 = vmatprep.subr.mxu0 0.0
  %6606 = vmatpush2.msra.mxu0 0.0
  %6607 = vmatprep.subr.mxu0 0.0
  %6608 = vmatpush2.msra.mxu0 0.0
  %6609 = vmatprep.subr.mxu0 0.0
  %6610 = vmatpush2.msra.mxu0 0.0
  %6611 = vmatprep.subr.mxu0 0.0
  %6612 = vmatpush2.msra.mxu0 0.0
  %6613 = vmatprep.subr.mxu0 0.0
  %6614 = vmatpush2.msra.mxu0 0.0
  %6615 = vmatprep.subr.mxu0 0.0
  %6616 = vmatpush2.msra.mxu0 0.0
  %6617 = vmatprep.subr.mxu0 0.0
  %6618 = vmatpush2.msra.mxu0 0.0
  %6619 = vmatprep.subr.mxu0 0.0
  %6620 = vmatpush2.msra.mxu0 0.0
  %6621 = vmatprep.subr.mxu0 0.0
  %6622 = vmatpush2.msra.mxu0 0.0
  %6623 = vmatprep.subr.mxu0 0.0
  %6624 = vmatpush2.msra.mxu0 0.0
  %6625 = vmatprep.subr.mxu0 0.0
  %6626 = vmatpush2.msra.mxu0 0.0
  %6627 = vmatprep.mubr.f32.mxu0 0.0
  %6628 = vmatmul.mubr.f32.gmra.mxu0 %v6561
  %v6629 = vpop.f32.mrf.mxu0
  %v6630 = vadd.f32 %v6416, %v6629
  %v6631 = vpop.f32.mrf.mxu0
  %v6632 = vadd.f32 %v6418, %v6631
  %6633 = vdwg.mxu0
  %6634 = vmatprep.subr.mxu0 0.0
  %6635 = vmatpush1.msra.mxu0 0.0
  %6636 = vmatprep.subr.mxu0 0.0
  %6637 = vmatpush1.msra.mxu0 0.0
  %6638 = vmatprep.subr.mxu0 0.0
  %6639 = vmatpush1.msra.mxu0 0.0
  %6640 = vmatprep.subr.mxu0 0.0
  %6641 = vmatpush1.msra.mxu0 0.0
  %6642 = vmatprep.subr.mxu0 0.0
  %6643 = vmatpush1.msra.mxu0 0.0
  %6644 = vmatprep.subr.mxu0 0.0
  %6645 = vmatpush1.msra.mxu0 0.0
  %6646 = vmatprep.subr.mxu0 0.0
  %6647 = vmatpush1.msra.mxu0 0.0
  %6648 = vmatprep.subr.mxu0 0.0
  %6649 = vmatpush1.msra.mxu0 0.0
  %6650 = vmatprep.subr.mxu0 0.0
  %6651 = vmatpush1.msra.mxu0 0.0
  %6652 = vmatprep.subr.mxu0 0.0
  %6653 = vmatpush1.msra.mxu0 0.0
  %6654 = vmatprep.subr.mxu0 0.0
  %6655 = vmatpush1.msra.mxu0 0.0
  %6656 = vmatprep.subr.mxu0 0.0
  %6657 = vmatpush1.msra.mxu0 0.0
  %6658 = vmatprep.subr.mxu0 0.0
  %6659 = vmatpush1.msra.mxu0 0.0
  %6660 = vmatprep.subr.mxu0 0.0
  %6661 = vmatpush1.msra.mxu0 0.0
  %6662 = vmatprep.subr.mxu0 0.0
  %6663 = vmatpush1.msra.mxu0 0.0
  %6664 = vmatprep.subr.mxu0 %v6308
  %6665 = vmatpush1.msra.mxu0 %v6307
  %6666 = vmatprep.subr.mxu0 0.0
  %6667 = vmatpush2.msra.mxu0 0.0
  %6668 = vmatprep.subr.mxu0 0.0
  %6669 = vmatpush2.msra.mxu0 0.0
  %6670 = vmatprep.subr.mxu0 0.0
  %6671 = vmatpush2.msra.mxu0 0.0
  %6672 = vmatprep.subr.mxu0 0.0
  %6673 = vmatpush2.msra.mxu0 0.0
  %6674 = vmatprep.subr.mxu0 0.0
  %6675 = vmatpush2.msra.mxu0 0.0
  %6676 = vmatprep.subr.mxu0 0.0
  %6677 = vmatpush2.msra.mxu0 0.0
  %6678 = vmatprep.subr.mxu0 0.0
  %6679 = vmatpush2.msra.mxu0 0.0
  %6680 = vmatprep.subr.mxu0 0.0
  %6681 = vmatpush2.msra.mxu0 0.0
  %6682 = vmatprep.subr.mxu0 0.0
  %6683 = vmatpush2.msra.mxu0 0.0
  %6684 = vmatprep.subr.mxu0 0.0
  %6685 = vmatpush2.msra.mxu0 0.0
  %6686 = vmatprep.subr.mxu0 0.0
  %6687 = vmatpush2.msra.mxu0 0.0
  %6688 = vmatprep.subr.mxu0 0.0
  %6689 = vmatpush2.msra.mxu0 0.0
  %6690 = vmatprep.subr.mxu0 0.0
  %6691 = vmatpush2.msra.mxu0 0.0
  %6692 = vmatprep.subr.mxu0 0.0
  %6693 = vmatpush2.msra.mxu0 0.0
  %6694 = vmatprep.subr.mxu0 0.0
  %6695 = vmatpush2.msra.mxu0 0.0
  %6696 = vmatprep.subr.mxu0 0.0
  %6697 = vmatpush2.msra.mxu0 0.0
  %6698 = vmatprep.mubr.f32.mxu0 0.0
  %6699 = vmatmul.mubr.f32.gmra.mxu0 %v6561
  %v6700 = vpop.f32.mrf.mxu0
  %v6701 = vpop.f32.mrf.mxu0
  %v6702 = vadd.f32 %v6488, %v6701
  %6703 = vdwg.mxu0
  %6704 = vmatprep.subr.mxu0 0.0
  %6705 = vmatpush1.msra.mxu0 0.0
  %6706 = vmatprep.subr.mxu0 0.0
  %6707 = vmatpush1.msra.mxu0 0.0
  %6708 = vmatprep.subr.mxu0 0.0
  %6709 = vmatpush1.msra.mxu0 0.0
  %6710 = vmatprep.subr.mxu0 0.0
  %6711 = vmatpush1.msra.mxu0 0.0
  %6712 = vmatprep.subr.mxu0 0.0
  %6713 = vmatpush1.msra.mxu0 0.0
  %6714 = vmatprep.subr.mxu0 0.0
  %6715 = vmatpush1.msra.mxu0 0.0
  %6716 = vmatprep.subr.mxu0 0.0
  %6717 = vmatpush1.msra.mxu0 0.0
  %6718 = vmatprep.subr.mxu0 0.0
  %6719 = vmatpush1.msra.mxu0 0.0
  %6720 = vmatprep.subr.mxu0 0.0
  %6721 = vmatpush1.msra.mxu0 0.0
  %6722 = vmatprep.subr.mxu0 0.0
  %6723 = vmatpush1.msra.mxu0 0.0
  %6724 = vmatprep.subr.mxu0 0.0
  %6725 = vmatpush1.msra.mxu0 0.0
  %6726 = vmatprep.subr.mxu0 0.0
  %6727 = vmatpush1.msra.mxu0 0.0
  %6728 = vmatprep.subr.mxu0 0.0
  %6729 = vmatpush1.msra.mxu0 0.0
  %6730 = vmatprep.subr.mxu0 0.0
  %6731 = vmatpush1.msra.mxu0 0.0
  %6732 = vmatprep.subr.mxu0 0.0
  %6733 = vmatpush1.msra.mxu0 0.0
  %6734 = vmatprep.subr.mxu0 0.0
  %6735 = vmatpush1.msra.mxu0 %v6309
  %6736 = vmatprep.subr.mxu0 0.0
  %6737 = vmatpush2.msra.mxu0 0.0
  %6738 = vmatprep.subr.mxu0 0.0
  %6739 = vmatpush2.msra.mxu0 0.0
  %6740 = vmatprep.subr.mxu0 0.0
  %6741 = vmatpush2.msra.mxu0 0.0
  %6742 = vmatprep.subr.mxu0 0.0
  %6743 = vmatpush2.msra.mxu0 0.0
  %6744 = vmatprep.subr.mxu0 0.0
  %6745 = vmatpush2.msra.mxu0 0.0
  %6746 = vmatprep.subr.mxu0 0.0
  %6747 = vmatpush2.msra.mxu0 0.0
  %6748 = vmatprep.subr.mxu0 0.0
  %6749 = vmatpush2.msra.mxu0 0.0
  %6750 = vmatprep.subr.mxu0 0.0
  %6751 = vmatpush2.msra.mxu0 0.0
  %6752 = vmatprep.subr.mxu0 0.0
  %6753 = vmatpush2.msra.mxu0 0.0
  %6754 = vmatprep.subr.mxu0 0.0
  %6755 = vmatpush2.msra.mxu0 0.0
  %6756 = vmatprep.subr.mxu0 0.0
  %6757 = vmatpush2.msra.mxu0 0.0
  %6758 = vmatprep.subr.mxu0 0.0
  %6759 = vmatpush2.msra.mxu0 0.0
  %6760 = vmatprep.subr.mxu0 0.0
  %6761 = vmatpush2.msra.mxu0 0.0
  %6762 = vmatprep.subr.mxu0 0.0
  %6763 = vmatpush2.msra.mxu0 0.0
  %6764 = vmatprep.subr.mxu0 0.0
  %6765 = vmatpush2.msra.mxu0 0.0
  %6766 = vmatprep.subr.mxu0 0.0
  %6767 = vmatpush2.msra.mxu0 0.0
  %6768 = vmatprep.mubr.f32.mxu0 0.0
  %6769 = vmatmul.mubr.f32.gmra.mxu0 %v6561
  %v6770 = vpop.f32.mrf.mxu0
  %v6771 = vadd.f32 %v6557, %v6770
  %v6772 = vpop.f32.mrf.mxu0
  %6773 = vdwg.mxu0
  %s6774 = scalar_lea.vmem %s61, 16
  %v6775 = vld [vmem:[%s6774] sm:$0xff]
  %6776 = vrot.lane.b32.xlu0 %v6312, 126
  %v6777 = vpop.permute.xlu0 %6776
  %6778 = vrot.lane.b32.xlu0 %v6313, 126
  %v6779 = vpop.permute.xlu0 %6778
  %6780 = vrot.lane.b32.xlu0 %v6314, 126
  %v6781 = vpop.permute.xlu0 %6780
  %6782 = vrot.lane.b32.xlu0 %v6315, 126
  %v6783 = vpop.permute.xlu0 %6782
  %6784 = vrot.lane.b32.xlu0 %v6316, 126
  %v6785 = vpop.permute.xlu0 %6784
  %6786 = vrot.lane.b32.xlu0 %v6317, 126
  %v6787 = vpop.permute.xlu0 %6786
  %v6788 = vsel %vm680, %v6777, %v6779
  %v6789 = vsel %vm680, %v6779, %v6781
  %v6790 = vsel %vm680, %v6781, %v6783
  %v6791 = vsel %vm680, %v6783, %v6785
  %v6792 = vsel %vm680, %v6785, %v6787
  %v6799 = vsel %vm239, %v6775, 0
  %6801 = vmatprep.subr.mxu0 0.0
  %6802 = vmatpush1.msra.mxu0 0.0
  %6803 = vmatprep.subr.mxu0 0.0
  %6804 = vmatpush1.msra.mxu0 0.0
  %6805 = vmatprep.subr.mxu0 0.0
  %6806 = vmatpush1.msra.mxu0 0.0
  %6807 = vmatprep.subr.mxu0 0.0
  %6808 = vmatpush1.msra.mxu0 0.0
  %6809 = vmatprep.subr.mxu0 0.0
  %6810 = vmatpush1.msra.mxu0 0.0
  %6811 = vmatprep.subr.mxu0 0.0
  %6812 = vmatpush1.msra.mxu0 0.0
  %6813 = vmatprep.subr.mxu0 0.0
  %6814 = vmatpush1.msra.mxu0 0.0
  %6815 = vmatprep.subr.mxu0 0.0
  %6816 = vmatpush1.msra.mxu0 0.0
  %6817 = vmatprep.subr.mxu0 0.0
  %6818 = vmatpush1.msra.mxu0 0.0
  %6819 = vmatprep.subr.mxu0 0.0
  %6820 = vmatpush1.msra.mxu0 0.0
  %6821 = vmatprep.subr.mxu0 0.0
  %6822 = vmatpush1.msra.mxu0 0.0
  %6823 = vmatprep.subr.mxu0 0.0
  %6824 = vmatpush1.msra.mxu0 0.0
  %6825 = vmatprep.subr.mxu0 0.0
  %6826 = vmatpush1.msra.mxu0 0.0
  %6827 = vmatprep.subr.mxu0 0.0
  %6828 = vmatpush1.msra.mxu0 0.0
  %6829 = vmatprep.subr.mxu0 0.0
  %6830 = vmatpush1.msra.mxu0 0.0
  %6831 = vmatprep.subr.mxu0 %v6789
  %6832 = vmatpush1.msra.mxu0 %v6788
  %6833 = vmatprep.subr.mxu0 0.0
  %6834 = vmatpush2.msra.mxu0 0.0
  %6835 = vmatprep.subr.mxu0 0.0
  %6836 = vmatpush2.msra.mxu0 0.0
  %6837 = vmatprep.subr.mxu0 0.0
  %6838 = vmatpush2.msra.mxu0 0.0
  %6839 = vmatprep.subr.mxu0 0.0
  %6840 = vmatpush2.msra.mxu0 0.0
  %6841 = vmatprep.subr.mxu0 0.0
  %6842 = vmatpush2.msra.mxu0 0.0
  %6843 = vmatprep.subr.mxu0 0.0
  %6844 = vmatpush2.msra.mxu0 0.0
  %6845 = vmatprep.subr.mxu0 0.0
  %6846 = vmatpush2.msra.mxu0 0.0
  %6847 = vmatprep.subr.mxu0 0.0
  %6848 = vmatpush2.msra.mxu0 0.0
  %6849 = vmatprep.subr.mxu0 0.0
  %6850 = vmatpush2.msra.mxu0 0.0
  %6851 = vmatprep.subr.mxu0 0.0
  %6852 = vmatpush2.msra.mxu0 0.0
  %6853 = vmatprep.subr.mxu0 0.0
  %6854 = vmatpush2.msra.mxu0 0.0
  %6855 = vmatprep.subr.mxu0 0.0
  %6856 = vmatpush2.msra.mxu0 0.0
  %6857 = vmatprep.subr.mxu0 0.0
  %6858 = vmatpush2.msra.mxu0 0.0
  %6859 = vmatprep.subr.mxu0 0.0
  %6860 = vmatpush2.msra.mxu0 0.0
  %6861 = vmatprep.subr.mxu0 0.0
  %6862 = vmatpush2.msra.mxu0 0.0
  %6863 = vmatprep.subr.mxu0 0.0
  %6864 = vmatpush2.msra.mxu0 0.0
  %6865 = vmatprep.mubr.f32.mxu0 0.0
  %6866 = vmatmul.mubr.f32.gmra.mxu0 %v6799
  %v6867 = vpop.f32.mrf.mxu0
  %v6868 = vadd.f32 0.0, %v6867
  %v6869 = vpop.f32.mrf.mxu0
  %v6870 = vadd.f32 0.0, %v6869
  %6871 = vdwg.mxu0
  %6872 = vmatprep.subr.mxu0 0.0
  %6873 = vmatpush1.msra.mxu0 0.0
  %6874 = vmatprep.subr.mxu0 0.0
  %6875 = vmatpush1.msra.mxu0 0.0
  %6876 = vmatprep.subr.mxu0 0.0
  %6877 = vmatpush1.msra.mxu0 0.0
  %6878 = vmatprep.subr.mxu0 0.0
  %6879 = vmatpush1.msra.mxu0 0.0
  %6880 = vmatprep.subr.mxu0 0.0
  %6881 = vmatpush1.msra.mxu0 0.0
  %6882 = vmatprep.subr.mxu0 0.0
  %6883 = vmatpush1.msra.mxu0 0.0
  %6884 = vmatprep.subr.mxu0 0.0
  %6885 = vmatpush1.msra.mxu0 0.0
  %6886 = vmatprep.subr.mxu0 0.0
  %6887 = vmatpush1.msra.mxu0 0.0
  %6888 = vmatprep.subr.mxu0 0.0
  %6889 = vmatpush1.msra.mxu0 0.0
  %6890 = vmatprep.subr.mxu0 0.0
  %6891 = vmatpush1.msra.mxu0 0.0
  %6892 = vmatprep.subr.mxu0 0.0
  %6893 = vmatpush1.msra.mxu0 0.0
  %6894 = vmatprep.subr.mxu0 0.0
  %6895 = vmatpush1.msra.mxu0 0.0
  %6896 = vmatprep.subr.mxu0 0.0
  %6897 = vmatpush1.msra.mxu0 0.0
  %6898 = vmatprep.subr.mxu0 0.0
  %6899 = vmatpush1.msra.mxu0 0.0
  %6900 = vmatprep.subr.mxu0 0.0
  %6901 = vmatpush1.msra.mxu0 0.0
  %6902 = vmatprep.subr.mxu0 %v6791
  %6903 = vmatpush1.msra.mxu0 %v6790
  %6904 = vmatprep.subr.mxu0 0.0
  %6905 = vmatpush2.msra.mxu0 0.0
  %6906 = vmatprep.subr.mxu0 0.0
  %6907 = vmatpush2.msra.mxu0 0.0
  %6908 = vmatprep.subr.mxu0 0.0
  %6909 = vmatpush2.msra.mxu0 0.0
  %6910 = vmatprep.subr.mxu0 0.0
  %6911 = vmatpush2.msra.mxu0 0.0
  %6912 = vmatprep.subr.mxu0 0.0
  %6913 = vmatpush2.msra.mxu0 0.0
  %6914 = vmatprep.subr.mxu0 0.0
  %6915 = vmatpush2.msra.mxu0 0.0
  %6916 = vmatprep.subr.mxu0 0.0
  %6917 = vmatpush2.msra.mxu0 0.0
  %6918 = vmatprep.subr.mxu0 0.0
  %6919 = vmatpush2.msra.mxu0 0.0
  %6920 = vmatprep.subr.mxu0 0.0
  %6921 = vmatpush2.msra.mxu0 0.0
  %6922 = vmatprep.subr.mxu0 0.0
  %6923 = vmatpush2.msra.mxu0 0.0
  %6924 = vmatprep.subr.mxu0 0.0
  %6925 = vmatpush2.msra.mxu0 0.0
  %6926 = vmatprep.subr.mxu0 0.0
  %6927 = vmatpush2.msra.mxu0 0.0
  %6928 = vmatprep.subr.mxu0 0.0
  %6929 = vmatpush2.msra.mxu0 0.0
  %6930 = vmatprep.subr.mxu0 0.0
  %6931 = vmatpush2.msra.mxu0 0.0
  %6932 = vmatprep.subr.mxu0 0.0
  %6933 = vmatpush2.msra.mxu0 0.0
  %6934 = vmatprep.subr.mxu0 0.0
  %6935 = vmatpush2.msra.mxu0 0.0
  %6936 = vmatprep.mubr.f32.mxu0 0.0
  %6937 = vmatmul.mubr.f32.gmra.mxu0 %v6799
  %v6938 = vpop.f32.mrf.mxu0
  %v6939 = vpop.f32.mrf.mxu0
  %v6940 = vadd.f32 0.0, %v6939
  %6941 = vdwg.mxu0
  %6942 = vmatprep.subr.mxu0 0.0
  %6943 = vmatpush1.msra.mxu0 0.0
  %6944 = vmatprep.subr.mxu0 0.0
  %6945 = vmatpush1.msra.mxu0 0.0
  %6946 = vmatprep.subr.mxu0 0.0
  %6947 = vmatpush1.msra.mxu0 0.0
  %6948 = vmatprep.subr.mxu0 0.0
  %6949 = vmatpush1.msra.mxu0 0.0
  %6950 = vmatprep.subr.mxu0 0.0
  %6951 = vmatpush1.msra.mxu0 0.0
  %6952 = vmatprep.subr.mxu0 0.0
  %6953 = vmatpush1.msra.mxu0 0.0
  %6954 = vmatprep.subr.mxu0 0.0
  %6955 = vmatpush1.msra.mxu0 0.0
  %6956 = vmatprep.subr.mxu0 0.0
  %6957 = vmatpush1.msra.mxu0 0.0
  %6958 = vmatprep.subr.mxu0 0.0
  %6959 = vmatpush1.msra.mxu0 0.0
  %6960 = vmatprep.subr.mxu0 0.0
  %6961 = vmatpush1.msra.mxu0 0.0
  %6962 = vmatprep.subr.mxu0 0.0
  %6963 = vmatpush1.msra.mxu0 0.0
  %6964 = vmatprep.subr.mxu0 0.0
  %6965 = vmatpush1.msra.mxu0 0.0
  %6966 = vmatprep.subr.mxu0 0.0
  %6967 = vmatpush1.msra.mxu0 0.0
  %6968 = vmatprep.subr.mxu0 0.0
  %6969 = vmatpush1.msra.mxu0 0.0
  %6970 = vmatprep.subr.mxu0 0.0
  %6971 = vmatpush1.msra.mxu0 0.0
  %6972 = vmatprep.subr.mxu0 0.0
  %6973 = vmatpush1.msra.mxu0 %v6792
  %6974 = vmatprep.subr.mxu0 0.0
  %6975 = vmatpush2.msra.mxu0 0.0
  %6976 = vmatprep.subr.mxu0 0.0
  %6977 = vmatpush2.msra.mxu0 0.0
  %6978 = vmatprep.subr.mxu0 0.0
  %6979 = vmatpush2.msra.mxu0 0.0
  %6980 = vmatprep.subr.mxu0 0.0
  %6981 = vmatpush2.msra.mxu0 0.0
  %6982 = vmatprep.subr.mxu0 0.0
  %6983 = vmatpush2.msra.mxu0 0.0
  %6984 = vmatprep.subr.mxu0 0.0
  %6985 = vmatpush2.msra.mxu0 0.0
  %6986 = vmatprep.subr.mxu0 0.0
  %6987 = vmatpush2.msra.mxu0 0.0
  %6988 = vmatprep.subr.mxu0 0.0
  %6989 = vmatpush2.msra.mxu0 0.0
  %6990 = vmatprep.subr.mxu0 0.0
  %6991 = vmatpush2.msra.mxu0 0.0
  %6992 = vmatprep.subr.mxu0 0.0
  %6993 = vmatpush2.msra.mxu0 0.0
  %6994 = vmatprep.subr.mxu0 0.0
  %6995 = vmatpush2.msra.mxu0 0.0
  %6996 = vmatprep.subr.mxu0 0.0
  %6997 = vmatpush2.msra.mxu0 0.0
  %6998 = vmatprep.subr.mxu0 0.0
  %6999 = vmatpush2.msra.mxu0 0.0
  %7000 = vmatprep.subr.mxu0 0.0
  %7001 = vmatpush2.msra.mxu0 0.0
  %7002 = vmatprep.subr.mxu0 0.0
  %7003 = vmatpush2.msra.mxu0 0.0
  %7004 = vmatprep.subr.mxu0 0.0
  %7005 = vmatpush2.msra.mxu0 0.0
  %7006 = vmatprep.mubr.f32.mxu0 0.0
  %7007 = vmatmul.mubr.f32.gmra.mxu0 %v6799
  %v7008 = vpop.f32.mrf.mxu0
  %v7009 = vadd.f32 0.0, %v7008
  %v7010 = vpop.f32.mrf.mxu0
  %7011 = vdwg.mxu0
  %v7012 = vadd.f32 %v6630, %v6868
  %v7013 = vadd.f32 %v6632, %v6870
  %v7014 = vadd.f32 %v6702, %v6940
  %v7015 = vadd.f32 %v6771, %v7009
  %s7016 = scalar_lea.vmem %s61, 24
  %v7017 = vld [vmem:[%s7016] sm:$0xff]
  %7018 = vrot.lane.b32.xlu0 %v6312, 125
  %v7019 = vpop.permute.xlu0 %7018
  %7020 = vrot.lane.b32.xlu0 %v6313, 125
  %v7021 = vpop.permute.xlu0 %7020
  %7022 = vrot.lane.b32.xlu0 %v6314, 125
  %v7023 = vpop.permute.xlu0 %7022
  %7024 = vrot.lane.b32.xlu0 %v6315, 125
  %v7025 = vpop.permute.xlu0 %7024
  %7026 = vrot.lane.b32.xlu0 %v6316, 125
  %v7027 = vpop.permute.xlu0 %7026
  %7028 = vrot.lane.b32.xlu0 %v6317, 125
  %v7029 = vpop.permute.xlu0 %7028
  %v7030 = vsel %vm920, %v7019, %v7021
  %v7031 = vsel %vm920, %v7021, %v7023
  %v7032 = vsel %vm920, %v7023, %v7025
  %v7033 = vsel %vm920, %v7025, %v7027
  %v7034 = vsel %vm920, %v7027, %v7029
  %v7041 = vsel %vm239, %v7017, 0
  %7043 = vmatprep.subr.mxu0 0.0
  %7044 = vmatpush1.msra.mxu0 0.0
  %7045 = vmatprep.subr.mxu0 0.0
  %7046 = vmatpush1.msra.mxu0 0.0
  %7047 = vmatprep.subr.mxu0 0.0
  %7048 = vmatpush1.msra.mxu0 0.0
  %7049 = vmatprep.subr.mxu0 0.0
  %7050 = vmatpush1.msra.mxu0 0.0
  %7051 = vmatprep.subr.mxu0 0.0
  %7052 = vmatpush1.msra.mxu0 0.0
  %7053 = vmatprep.subr.mxu0 0.0
  %7054 = vmatpush1.msra.mxu0 0.0
  %7055 = vmatprep.subr.mxu0 0.0
  %7056 = vmatpush1.msra.mxu0 0.0
  %7057 = vmatprep.subr.mxu0 0.0
  %7058 = vmatpush1.msra.mxu0 0.0
  %7059 = vmatprep.subr.mxu0 0.0
  %7060 = vmatpush1.msra.mxu0 0.0
  %7061 = vmatprep.subr.mxu0 0.0
  %7062 = vmatpush1.msra.mxu0 0.0
  %7063 = vmatprep.subr.mxu0 0.0
  %7064 = vmatpush1.msra.mxu0 0.0
  %7065 = vmatprep.subr.mxu0 0.0
  %7066 = vmatpush1.msra.mxu0 0.0
  %7067 = vmatprep.subr.mxu0 0.0
  %7068 = vmatpush1.msra.mxu0 0.0
  %7069 = vmatprep.subr.mxu0 0.0
  %7070 = vmatpush1.msra.mxu0 0.0
  %7071 = vmatprep.subr.mxu0 0.0
  %7072 = vmatpush1.msra.mxu0 0.0
  %7073 = vmatprep.subr.mxu0 %v7031
  %7074 = vmatpush1.msra.mxu0 %v7030
  %7075 = vmatprep.subr.mxu0 0.0
  %7076 = vmatpush2.msra.mxu0 0.0
  %7077 = vmatprep.subr.mxu0 0.0
  %7078 = vmatpush2.msra.mxu0 0.0
  %7079 = vmatprep.subr.mxu0 0.0
  %7080 = vmatpush2.msra.mxu0 0.0
  %7081 = vmatprep.subr.mxu0 0.0
  %7082 = vmatpush2.msra.mxu0 0.0
  %7083 = vmatprep.subr.mxu0 0.0
  %7084 = vmatpush2.msra.mxu0 0.0
  %7085 = vmatprep.subr.mxu0 0.0
  %7086 = vmatpush2.msra.mxu0 0.0
  %7087 = vmatprep.subr.mxu0 0.0
  %7088 = vmatpush2.msra.mxu0 0.0
  %7089 = vmatprep.subr.mxu0 0.0
  %7090 = vmatpush2.msra.mxu0 0.0
  %7091 = vmatprep.subr.mxu0 0.0
  %7092 = vmatpush2.msra.mxu0 0.0
  %7093 = vmatprep.subr.mxu0 0.0
  %7094 = vmatpush2.msra.mxu0 0.0
  %7095 = vmatprep.subr.mxu0 0.0
  %7096 = vmatpush2.msra.mxu0 0.0
  %7097 = vmatprep.subr.mxu0 0.0
  %7098 = vmatpush2.msra.mxu0 0.0
  %7099 = vmatprep.subr.mxu0 0.0
  %7100 = vmatpush2.msra.mxu0 0.0
  %7101 = vmatprep.subr.mxu0 0.0
  %7102 = vmatpush2.msra.mxu0 0.0
  %7103 = vmatprep.subr.mxu0 0.0
  %7104 = vmatpush2.msra.mxu0 0.0
  %7105 = vmatprep.subr.mxu0 0.0
  %7106 = vmatpush2.msra.mxu0 0.0
  %7107 = vmatprep.mubr.f32.mxu0 0.0
  %7108 = vmatmul.mubr.f32.gmra.mxu0 %v7041
  %v7109 = vpop.f32.mrf.mxu0
  %v7110 = vadd.f32 0.0, %v7109
  %v7111 = vpop.f32.mrf.mxu0
  %v7112 = vadd.f32 0.0, %v7111
  %7113 = vdwg.mxu0
  %7114 = vmatprep.subr.mxu0 0.0
  %7115 = vmatpush1.msra.mxu0 0.0
  %7116 = vmatprep.subr.mxu0 0.0
  %7117 = vmatpush1.msra.mxu0 0.0
  %7118 = vmatprep.subr.mxu0 0.0
  %7119 = vmatpush1.msra.mxu0 0.0
  %7120 = vmatprep.subr.mxu0 0.0
  %7121 = vmatpush1.msra.mxu0 0.0
  %7122 = vmatprep.subr.mxu0 0.0
  %7123 = vmatpush1.msra.mxu0 0.0
  %7124 = vmatprep.subr.mxu0 0.0
  %7125 = vmatpush1.msra.mxu0 0.0
  %7126 = vmatprep.subr.mxu0 0.0
  %7127 = vmatpush1.msra.mxu0 0.0
  %7128 = vmatprep.subr.mxu0 0.0
  %7129 = vmatpush1.msra.mxu0 0.0
  %7130 = vmatprep.subr.mxu0 0.0
  %7131 = vmatpush1.msra.mxu0 0.0
  %7132 = vmatprep.subr.mxu0 0.0
  %7133 = vmatpush1.msra.mxu0 0.0
  %7134 = vmatprep.subr.mxu0 0.0
  %7135 = vmatpush1.msra.mxu0 0.0
  %7136 = vmatprep.subr.mxu0 0.0
  %7137 = vmatpush1.msra.mxu0 0.0
  %7138 = vmatprep.subr.mxu0 0.0
  %7139 = vmatpush1.msra.mxu0 0.0
  %7140 = vmatprep.subr.mxu0 0.0
  %7141 = vmatpush1.msra.mxu0 0.0
  %7142 = vmatprep.subr.mxu0 0.0
  %7143 = vmatpush1.msra.mxu0 0.0
  %7144 = vmatprep.subr.mxu0 %v7033
  %7145 = vmatpush1.msra.mxu0 %v7032
  %7146 = vmatprep.subr.mxu0 0.0
  %7147 = vmatpush2.msra.mxu0 0.0
  %7148 = vmatprep.subr.mxu0 0.0
  %7149 = vmatpush2.msra.mxu0 0.0
  %7150 = vmatprep.subr.mxu0 0.0
  %7151 = vmatpush2.msra.mxu0 0.0
  %7152 = vmatprep.subr.mxu0 0.0
  %7153 = vmatpush2.msra.mxu0 0.0
  %7154 = vmatprep.subr.mxu0 0.0
  %7155 = vmatpush2.msra.mxu0 0.0
  %7156 = vmatprep.subr.mxu0 0.0
  %7157 = vmatpush2.msra.mxu0 0.0
  %7158 = vmatprep.subr.mxu0 0.0
  %7159 = vmatpush2.msra.mxu0 0.0
  %7160 = vmatprep.subr.mxu0 0.0
  %7161 = vmatpush2.msra.mxu0 0.0
  %7162 = vmatprep.subr.mxu0 0.0
  %7163 = vmatpush2.msra.mxu0 0.0
  %7164 = vmatprep.subr.mxu0 0.0
  %7165 = vmatpush2.msra.mxu0 0.0
  %7166 = vmatprep.subr.mxu0 0.0
  %7167 = vmatpush2.msra.mxu0 0.0
  %7168 = vmatprep.subr.mxu0 0.0
  %7169 = vmatpush2.msra.mxu0 0.0
  %7170 = vmatprep.subr.mxu0 0.0
  %7171 = vmatpush2.msra.mxu0 0.0
  %7172 = vmatprep.subr.mxu0 0.0
  %7173 = vmatpush2.msra.mxu0 0.0
  %7174 = vmatprep.subr.mxu0 0.0
  %7175 = vmatpush2.msra.mxu0 0.0
  %7176 = vmatprep.subr.mxu0 0.0
  %7177 = vmatpush2.msra.mxu0 0.0
  %7178 = vmatprep.mubr.f32.mxu0 0.0
  %7179 = vmatmul.mubr.f32.gmra.mxu0 %v7041
  %v7180 = vpop.f32.mrf.mxu0
  %v7181 = vpop.f32.mrf.mxu0
  %v7182 = vadd.f32 0.0, %v7181
  %7183 = vdwg.mxu0
  %7184 = vmatprep.subr.mxu0 0.0
  %7185 = vmatpush1.msra.mxu0 0.0
  %7186 = vmatprep.subr.mxu0 0.0
  %7187 = vmatpush1.msra.mxu0 0.0
  %7188 = vmatprep.subr.mxu0 0.0
  %7189 = vmatpush1.msra.mxu0 0.0
  %7190 = vmatprep.subr.mxu0 0.0
  %7191 = vmatpush1.msra.mxu0 0.0
  %7192 = vmatprep.subr.mxu0 0.0
  %7193 = vmatpush1.msra.mxu0 0.0
  %7194 = vmatprep.subr.mxu0 0.0
  %7195 = vmatpush1.msra.mxu0 0.0
  %7196 = vmatprep.subr.mxu0 0.0
  %7197 = vmatpush1.msra.mxu0 0.0
  %7198 = vmatprep.subr.mxu0 0.0
  %7199 = vmatpush1.msra.mxu0 0.0
  %7200 = vmatprep.subr.mxu0 0.0
  %7201 = vmatpush1.msra.mxu0 0.0
  %7202 = vmatprep.subr.mxu0 0.0
  %7203 = vmatpush1.msra.mxu0 0.0
  %7204 = vmatprep.subr.mxu0 0.0
  %7205 = vmatpush1.msra.mxu0 0.0
  %7206 = vmatprep.subr.mxu0 0.0
  %7207 = vmatpush1.msra.mxu0 0.0
  %7208 = vmatprep.subr.mxu0 0.0
  %7209 = vmatpush1.msra.mxu0 0.0
  %7210 = vmatprep.subr.mxu0 0.0
  %7211 = vmatpush1.msra.mxu0 0.0
  %7212 = vmatprep.subr.mxu0 0.0
  %7213 = vmatpush1.msra.mxu0 0.0
  %7214 = vmatprep.subr.mxu0 0.0
  %7215 = vmatpush1.msra.mxu0 %v7034
  %7216 = vmatprep.subr.mxu0 0.0
  %7217 = vmatpush2.msra.mxu0 0.0
  %7218 = vmatprep.subr.mxu0 0.0
  %7219 = vmatpush2.msra.mxu0 0.0
  %7220 = vmatprep.subr.mxu0 0.0
  %7221 = vmatpush2.msra.mxu0 0.0
  %7222 = vmatprep.subr.mxu0 0.0
  %7223 = vmatpush2.msra.mxu0 0.0
  %7224 = vmatprep.subr.mxu0 0.0
  %7225 = vmatpush2.msra.mxu0 0.0
  %7226 = vmatprep.subr.mxu0 0.0
  %7227 = vmatpush2.msra.mxu0 0.0
  %7228 = vmatprep.subr.mxu0 0.0
  %7229 = vmatpush2.msra.mxu0 0.0
  %7230 = vmatprep.subr.mxu0 0.0
  %7231 = vmatpush2.msra.mxu0 0.0
  %7232 = vmatprep.subr.mxu0 0.0
  %7233 = vmatpush2.msra.mxu0 0.0
  %7234 = vmatprep.subr.mxu0 0.0
  %7235 = vmatpush2.msra.mxu0 0.0
  %7236 = vmatprep.subr.mxu0 0.0
  %7237 = vmatpush2.msra.mxu0 0.0
  %7238 = vmatprep.subr.mxu0 0.0
  %7239 = vmatpush2.msra.mxu0 0.0
  %7240 = vmatprep.subr.mxu0 0.0
  %7241 = vmatpush2.msra.mxu0 0.0
  %7242 = vmatprep.subr.mxu0 0.0
  %7243 = vmatpush2.msra.mxu0 0.0
  %7244 = vmatprep.subr.mxu0 0.0
  %7245 = vmatpush2.msra.mxu0 0.0
  %7246 = vmatprep.subr.mxu0 0.0
  %7247 = vmatpush2.msra.mxu0 0.0
  %7248 = vmatprep.mubr.f32.mxu0 0.0
  %7249 = vmatmul.mubr.f32.gmra.mxu0 %v7041
  %v7250 = vpop.f32.mrf.mxu0
  %v7251 = vadd.f32 0.0, %v7250
  %v7252 = vpop.f32.mrf.mxu0
  %7253 = vdwg.mxu0
  %v7254 = vadd.f32 %v7012, %v7110
  %v7255 = vadd.f32 %v7013, %v7112
  %v7256 = vadd.f32 %v7014, %v7182
  %v7257 = vadd.f32 %v7015, %v7251
  %s7258 = scalar_lea.vmem %s61, 32
  %v7259 = vld [vmem:[%s7258] sm:$0xff]
  %7260 = vrot.lane.b32.xlu0 %v6312, 124
  %v7261 = vpop.permute.xlu0 %7260
  %7262 = vrot.lane.b32.xlu0 %v6313, 124
  %v7263 = vpop.permute.xlu0 %7262
  %7264 = vrot.lane.b32.xlu0 %v6314, 124
  %v7265 = vpop.permute.xlu0 %7264
  %7266 = vrot.lane.b32.xlu0 %v6315, 124
  %v7267 = vpop.permute.xlu0 %7266
  %7268 = vrot.lane.b32.xlu0 %v6316, 124
  %v7269 = vpop.permute.xlu0 %7268
  %7270 = vrot.lane.b32.xlu0 %v6317, 124
  %v7271 = vpop.permute.xlu0 %7270
  %v7272 = vsel %vm1174, %v7261, %v7263
  %v7273 = vsel %vm1174, %v7263, %v7265
  %v7274 = vsel %vm1174, %v7265, %v7267
  %v7275 = vsel %vm1174, %v7267, %v7269
  %v7276 = vsel %vm1174, %v7269, %v7271
  %v7283 = vsel %vm239, %v7259, 0
  %7285 = vmatprep.subr.mxu0 0.0
  %7286 = vmatpush1.msra.mxu0 0.0
  %7287 = vmatprep.subr.mxu0 0.0
  %7288 = vmatpush1.msra.mxu0 0.0
  %7289 = vmatprep.subr.mxu0 0.0
  %7290 = vmatpush1.msra.mxu0 0.0
  %7291 = vmatprep.subr.mxu0 0.0
  %7292 = vmatpush1.msra.mxu0 0.0
  %7293 = vmatprep.subr.mxu0 0.0
  %7294 = vmatpush1.msra.mxu0 0.0
  %7295 = vmatprep.subr.mxu0 0.0
  %7296 = vmatpush1.msra.mxu0 0.0
  %7297 = vmatprep.subr.mxu0 0.0
  %7298 = vmatpush1.msra.mxu0 0.0
  %7299 = vmatprep.subr.mxu0 0.0
  %7300 = vmatpush1.msra.mxu0 0.0
  %7301 = vmatprep.subr.mxu0 0.0
  %7302 = vmatpush1.msra.mxu0 0.0
  %7303 = vmatprep.subr.mxu0 0.0
  %7304 = vmatpush1.msra.mxu0 0.0
  %7305 = vmatprep.subr.mxu0 0.0
  %7306 = vmatpush1.msra.mxu0 0.0
  %7307 = vmatprep.subr.mxu0 0.0
  %7308 = vmatpush1.msra.mxu0 0.0
  %7309 = vmatprep.subr.mxu0 0.0
  %7310 = vmatpush1.msra.mxu0 0.0
  %7311 = vmatprep.subr.mxu0 0.0
  %7312 = vmatpush1.msra.mxu0 0.0
  %7313 = vmatprep.subr.mxu0 0.0
  %7314 = vmatpush1.msra.mxu0 0.0
  %7315 = vmatprep.subr.mxu0 %v7273
  %7316 = vmatpush1.msra.mxu0 %v7272
  %7317 = vmatprep.subr.mxu0 0.0
  %7318 = vmatpush2.msra.mxu0 0.0
  %7319 = vmatprep.subr.mxu0 0.0
  %7320 = vmatpush2.msra.mxu0 0.0
  %7321 = vmatprep.subr.mxu0 0.0
  %7322 = vmatpush2.msra.mxu0 0.0
  %7323 = vmatprep.subr.mxu0 0.0
  %7324 = vmatpush2.msra.mxu0 0.0
  %7325 = vmatprep.subr.mxu0 0.0
  %7326 = vmatpush2.msra.mxu0 0.0
  %7327 = vmatprep.subr.mxu0 0.0
  %7328 = vmatpush2.msra.mxu0 0.0
  %7329 = vmatprep.subr.mxu0 0.0
  %7330 = vmatpush2.msra.mxu0 0.0
  %7331 = vmatprep.subr.mxu0 0.0
  %7332 = vmatpush2.msra.mxu0 0.0
  %7333 = vmatprep.subr.mxu0 0.0
  %7334 = vmatpush2.msra.mxu0 0.0
  %7335 = vmatprep.subr.mxu0 0.0
  %7336 = vmatpush2.msra.mxu0 0.0
  %7337 = vmatprep.subr.mxu0 0.0
  %7338 = vmatpush2.msra.mxu0 0.0
  %7339 = vmatprep.subr.mxu0 0.0
  %7340 = vmatpush2.msra.mxu0 0.0
  %7341 = vmatprep.subr.mxu0 0.0
  %7342 = vmatpush2.msra.mxu0 0.0
  %7343 = vmatprep.subr.mxu0 0.0
  %7344 = vmatpush2.msra.mxu0 0.0
  %7345 = vmatprep.subr.mxu0 0.0
  %7346 = vmatpush2.msra.mxu0 0.0
  %7347 = vmatprep.subr.mxu0 0.0
  %7348 = vmatpush2.msra.mxu0 0.0
  %7349 = vmatprep.mubr.f32.mxu0 0.0
  %7350 = vmatmul.mubr.f32.gmra.mxu0 %v7283
  %v7351 = vpop.f32.mrf.mxu0
  %v7352 = vadd.f32 0.0, %v7351
  %v7353 = vpop.f32.mrf.mxu0
  %v7354 = vadd.f32 0.0, %v7353
  %7355 = vdwg.mxu0
  %7356 = vmatprep.subr.mxu0 0.0
  %7357 = vmatpush1.msra.mxu0 0.0
  %7358 = vmatprep.subr.mxu0 0.0
  %7359 = vmatpush1.msra.mxu0 0.0
  %7360 = vmatprep.subr.mxu0 0.0
  %7361 = vmatpush1.msra.mxu0 0.0
  %7362 = vmatprep.subr.mxu0 0.0
  %7363 = vmatpush1.msra.mxu0 0.0
  %7364 = vmatprep.subr.mxu0 0.0
  %7365 = vmatpush1.msra.mxu0 0.0
  %7366 = vmatprep.subr.mxu0 0.0
  %7367 = vmatpush1.msra.mxu0 0.0
  %7368 = vmatprep.subr.mxu0 0.0
  %7369 = vmatpush1.msra.mxu0 0.0
  %7370 = vmatprep.subr.mxu0 0.0
  %7371 = vmatpush1.msra.mxu0 0.0
  %7372 = vmatprep.subr.mxu0 0.0
  %7373 = vmatpush1.msra.mxu0 0.0
  %7374 = vmatprep.subr.mxu0 0.0
  %7375 = vmatpush1.msra.mxu0 0.0
  %7376 = vmatprep.subr.mxu0 0.0
  %7377 = vmatpush1.msra.mxu0 0.0
  %7378 = vmatprep.subr.mxu0 0.0
  %7379 = vmatpush1.msra.mxu0 0.0
  %7380 = vmatprep.subr.mxu0 0.0
  %7381 = vmatpush1.msra.mxu0 0.0
  %7382 = vmatprep.subr.mxu0 0.0
  %7383 = vmatpush1.msra.mxu0 0.0
  %7384 = vmatprep.subr.mxu0 0.0
  %7385 = vmatpush1.msra.mxu0 0.0
  %7386 = vmatprep.subr.mxu0 %v7275
  %7387 = vmatpush1.msra.mxu0 %v7274
  %7388 = vmatprep.subr.mxu0 0.0
  %7389 = vmatpush2.msra.mxu0 0.0
  %7390 = vmatprep.subr.mxu0 0.0
  %7391 = vmatpush2.msra.mxu0 0.0
  %7392 = vmatprep.subr.mxu0 0.0
  %7393 = vmatpush2.msra.mxu0 0.0
  %7394 = vmatprep.subr.mxu0 0.0
  %7395 = vmatpush2.msra.mxu0 0.0
  %7396 = vmatprep.subr.mxu0 0.0
  %7397 = vmatpush2.msra.mxu0 0.0
  %7398 = vmatprep.subr.mxu0 0.0
  %7399 = vmatpush2.msra.mxu0 0.0
  %7400 = vmatprep.subr.mxu0 0.0
  %7401 = vmatpush2.msra.mxu0 0.0
  %7402 = vmatprep.subr.mxu0 0.0
  %7403 = vmatpush2.msra.mxu0 0.0
  %7404 = vmatprep.subr.mxu0 0.0
  %7405 = vmatpush2.msra.mxu0 0.0
  %7406 = vmatprep.subr.mxu0 0.0
  %7407 = vmatpush2.msra.mxu0 0.0
  %7408 = vmatprep.subr.mxu0 0.0
  %7409 = vmatpush2.msra.mxu0 0.0
  %7410 = vmatprep.subr.mxu0 0.0
  %7411 = vmatpush2.msra.mxu0 0.0
  %7412 = vmatprep.subr.mxu0 0.0
  %7413 = vmatpush2.msra.mxu0 0.0
  %7414 = vmatprep.subr.mxu0 0.0
  %7415 = vmatpush2.msra.mxu0 0.0
  %7416 = vmatprep.subr.mxu0 0.0
  %7417 = vmatpush2.msra.mxu0 0.0
  %7418 = vmatprep.subr.mxu0 0.0
  %7419 = vmatpush2.msra.mxu0 0.0
  %7420 = vmatprep.mubr.f32.mxu0 0.0
  %7421 = vmatmul.mubr.f32.gmra.mxu0 %v7283
  %v7422 = vpop.f32.mrf.mxu0
  %v7423 = vpop.f32.mrf.mxu0
  %v7424 = vadd.f32 0.0, %v7423
  %7425 = vdwg.mxu0
  %7426 = vmatprep.subr.mxu0 0.0
  %7427 = vmatpush1.msra.mxu0 0.0
  %7428 = vmatprep.subr.mxu0 0.0
  %7429 = vmatpush1.msra.mxu0 0.0
  %7430 = vmatprep.subr.mxu0 0.0
  %7431 = vmatpush1.msra.mxu0 0.0
  %7432 = vmatprep.subr.mxu0 0.0
  %7433 = vmatpush1.msra.mxu0 0.0
  %7434 = vmatprep.subr.mxu0 0.0
  %7435 = vmatpush1.msra.mxu0 0.0
  %7436 = vmatprep.subr.mxu0 0.0
  %7437 = vmatpush1.msra.mxu0 0.0
  %7438 = vmatprep.subr.mxu0 0.0
  %7439 = vmatpush1.msra.mxu0 0.0
  %7440 = vmatprep.subr.mxu0 0.0
  %7441 = vmatpush1.msra.mxu0 0.0
  %7442 = vmatprep.subr.mxu0 0.0
  %7443 = vmatpush1.msra.mxu0 0.0
  %7444 = vmatprep.subr.mxu0 0.0
  %7445 = vmatpush1.msra.mxu0 0.0
  %7446 = vmatprep.subr.mxu0 0.0
  %7447 = vmatpush1.msra.mxu0 0.0
  %7448 = vmatprep.subr.mxu0 0.0
  %7449 = vmatpush1.msra.mxu0 0.0
  %7450 = vmatprep.subr.mxu0 0.0
  %7451 = vmatpush1.msra.mxu0 0.0
  %7452 = vmatprep.subr.mxu0 0.0
  %7453 = vmatpush1.msra.mxu0 0.0
  %7454 = vmatprep.subr.mxu0 0.0
  %7455 = vmatpush1.msra.mxu0 0.0
  %7456 = vmatprep.subr.mxu0 0.0
  %7457 = vmatpush1.msra.mxu0 %v7276
  %7458 = vmatprep.subr.mxu0 0.0
  %7459 = vmatpush2.msra.mxu0 0.0
  %7460 = vmatprep.subr.mxu0 0.0
  %7461 = vmatpush2.msra.mxu0 0.0
  %7462 = vmatprep.subr.mxu0 0.0
  %7463 = vmatpush2.msra.mxu0 0.0
  %7464 = vmatprep.subr.mxu0 0.0
  %7465 = vmatpush2.msra.mxu0 0.0
  %7466 = vmatprep.subr.mxu0 0.0
  %7467 = vmatpush2.msra.mxu0 0.0
  %7468 = vmatprep.subr.mxu0 0.0
  %7469 = vmatpush2.msra.mxu0 0.0
  %7470 = vmatprep.subr.mxu0 0.0
  %7471 = vmatpush2.msra.mxu0 0.0
  %7472 = vmatprep.subr.mxu0 0.0
  %7473 = vmatpush2.msra.mxu0 0.0
  %7474 = vmatprep.subr.mxu0 0.0
  %7475 = vmatpush2.msra.mxu0 0.0
  %7476 = vmatprep.subr.mxu0 0.0
  %7477 = vmatpush2.msra.mxu0 0.0
  %7478 = vmatprep.subr.mxu0 0.0
  %7479 = vmatpush2.msra.mxu0 0.0
  %7480 = vmatprep.subr.mxu0 0.0
  %7481 = vmatpush2.msra.mxu0 0.0
  %7482 = vmatprep.subr.mxu0 0.0
  %7483 = vmatpush2.msra.mxu0 0.0
  %7484 = vmatprep.subr.mxu0 0.0
  %7485 = vmatpush2.msra.mxu0 0.0
  %7486 = vmatprep.subr.mxu0 0.0
  %7487 = vmatpush2.msra.mxu0 0.0
  %7488 = vmatprep.subr.mxu0 0.0
  %7489 = vmatpush2.msra.mxu0 0.0
  %7490 = vmatprep.mubr.f32.mxu0 0.0
  %7491 = vmatmul.mubr.f32.gmra.mxu0 %v7283
  %v7492 = vpop.f32.mrf.mxu0
  %v7493 = vadd.f32 0.0, %v7492
  %v7494 = vpop.f32.mrf.mxu0
  %7495 = vdwg.mxu0
  %v7496 = vadd.f32 %v7254, %v7352
  %v7497 = vadd.f32 %v7255, %v7354
  %v7498 = vadd.f32 %v7256, %v7424
  %v7499 = vadd.f32 %v7257, %v7493
  %s7500 = scalar_lea.vmem %s61, 40
  %v7501 = vld [vmem:[%s7500] sm:$0xff]
  %7502 = vrot.lane.b32.xlu0 %v6312, 123
  %v7503 = vpop.permute.xlu0 %7502
  %7504 = vrot.lane.b32.xlu0 %v6313, 123
  %v7505 = vpop.permute.xlu0 %7504
  %7506 = vrot.lane.b32.xlu0 %v6314, 123
  %v7507 = vpop.permute.xlu0 %7506
  %7508 = vrot.lane.b32.xlu0 %v6315, 123
  %v7509 = vpop.permute.xlu0 %7508
  %7510 = vrot.lane.b32.xlu0 %v6316, 123
  %v7511 = vpop.permute.xlu0 %7510
  %7512 = vrot.lane.b32.xlu0 %v6317, 123
  %v7513 = vpop.permute.xlu0 %7512
  %v7514 = vsel %vm1417, %v7503, %v7505
  %v7515 = vsel %vm1417, %v7505, %v7507
  %v7516 = vsel %vm1417, %v7507, %v7509
  %v7517 = vsel %vm1417, %v7509, %v7511
  %v7518 = vsel %vm1417, %v7511, %v7513
  %v7525 = vsel %vm239, %v7501, 0
  %7527 = vmatprep.subr.mxu0 0.0
  %7528 = vmatpush1.msra.mxu0 0.0
  %7529 = vmatprep.subr.mxu0 0.0
  %7530 = vmatpush1.msra.mxu0 0.0
  %7531 = vmatprep.subr.mxu0 0.0
  %7532 = vmatpush1.msra.mxu0 0.0
  %7533 = vmatprep.subr.mxu0 0.0
  %7534 = vmatpush1.msra.mxu0 0.0
  %7535 = vmatprep.subr.mxu0 0.0
  %7536 = vmatpush1.msra.mxu0 0.0
  %7537 = vmatprep.subr.mxu0 0.0
  %7538 = vmatpush1.msra.mxu0 0.0
  %7539 = vmatprep.subr.mxu0 0.0
  %7540 = vmatpush1.msra.mxu0 0.0
  %7541 = vmatprep.subr.mxu0 0.0
  %7542 = vmatpush1.msra.mxu0 0.0
  %7543 = vmatprep.subr.mxu0 0.0
  %7544 = vmatpush1.msra.mxu0 0.0
  %7545 = vmatprep.subr.mxu0 0.0
  %7546 = vmatpush1.msra.mxu0 0.0
  %7547 = vmatprep.subr.mxu0 0.0
  %7548 = vmatpush1.msra.mxu0 0.0
  %7549 = vmatprep.subr.mxu0 0.0
  %7550 = vmatpush1.msra.mxu0 0.0
  %7551 = vmatprep.subr.mxu0 0.0
  %7552 = vmatpush1.msra.mxu0 0.0
  %7553 = vmatprep.subr.mxu0 0.0
  %7554 = vmatpush1.msra.mxu0 0.0
  %7555 = vmatprep.subr.mxu0 0.0
  %7556 = vmatpush1.msra.mxu0 0.0
  %7557 = vmatprep.subr.mxu0 %v7515
  %7558 = vmatpush1.msra.mxu0 %v7514
  %7559 = vmatprep.subr.mxu0 0.0
  %7560 = vmatpush2.msra.mxu0 0.0
  %7561 = vmatprep.subr.mxu0 0.0
  %7562 = vmatpush2.msra.mxu0 0.0
  %7563 = vmatprep.subr.mxu0 0.0
  %7564 = vmatpush2.msra.mxu0 0.0
  %7565 = vmatprep.subr.mxu0 0.0
  %7566 = vmatpush2.msra.mxu0 0.0
  %7567 = vmatprep.subr.mxu0 0.0
  %7568 = vmatpush2.msra.mxu0 0.0
  %7569 = vmatprep.subr.mxu0 0.0
  %7570 = vmatpush2.msra.mxu0 0.0
  %7571 = vmatprep.subr.mxu0 0.0
  %7572 = vmatpush2.msra.mxu0 0.0
  %7573 = vmatprep.subr.mxu0 0.0
  %7574 = vmatpush2.msra.mxu0 0.0
  %7575 = vmatprep.subr.mxu0 0.0
  %7576 = vmatpush2.msra.mxu0 0.0
  %7577 = vmatprep.subr.mxu0 0.0
  %7578 = vmatpush2.msra.mxu0 0.0
  %7579 = vmatprep.subr.mxu0 0.0
  %7580 = vmatpush2.msra.mxu0 0.0
  %7581 = vmatprep.subr.mxu0 0.0
  %7582 = vmatpush2.msra.mxu0 0.0
  %7583 = vmatprep.subr.mxu0 0.0
  %7584 = vmatpush2.msra.mxu0 0.0
  %7585 = vmatprep.subr.mxu0 0.0
  %7586 = vmatpush2.msra.mxu0 0.0
  %7587 = vmatprep.subr.mxu0 0.0
  %7588 = vmatpush2.msra.mxu0 0.0
  %7589 = vmatprep.subr.mxu0 0.0
  %7590 = vmatpush2.msra.mxu0 0.0
  %7591 = vmatprep.mubr.f32.mxu0 0.0
  %7592 = vmatmul.mubr.f32.gmra.mxu0 %v7525
  %v7593 = vpop.f32.mrf.mxu0
  %v7594 = vadd.f32 0.0, %v7593
  %v7595 = vpop.f32.mrf.mxu0
  %v7596 = vadd.f32 0.0, %v7595
  %7597 = vdwg.mxu0
  %7598 = vmatprep.subr.mxu0 0.0
  %7599 = vmatpush1.msra.mxu0 0.0
  %7600 = vmatprep.subr.mxu0 0.0
  %7601 = vmatpush1.msra.mxu0 0.0
  %7602 = vmatprep.subr.mxu0 0.0
  %7603 = vmatpush1.msra.mxu0 0.0
  %7604 = vmatprep.subr.mxu0 0.0
  %7605 = vmatpush1.msra.mxu0 0.0
  %7606 = vmatprep.subr.mxu0 0.0
  %7607 = vmatpush1.msra.mxu0 0.0
  %7608 = vmatprep.subr.mxu0 0.0
  %7609 = vmatpush1.msra.mxu0 0.0
  %7610 = vmatprep.subr.mxu0 0.0
  %7611 = vmatpush1.msra.mxu0 0.0
  %7612 = vmatprep.subr.mxu0 0.0
  %7613 = vmatpush1.msra.mxu0 0.0
  %7614 = vmatprep.subr.mxu0 0.0
  %7615 = vmatpush1.msra.mxu0 0.0
  %7616 = vmatprep.subr.mxu0 0.0
  %7617 = vmatpush1.msra.mxu0 0.0
  %7618 = vmatprep.subr.mxu0 0.0
  %7619 = vmatpush1.msra.mxu0 0.0
  %7620 = vmatprep.subr.mxu0 0.0
  %7621 = vmatpush1.msra.mxu0 0.0
  %7622 = vmatprep.subr.mxu0 0.0
  %7623 = vmatpush1.msra.mxu0 0.0
  %7624 = vmatprep.subr.mxu0 0.0
  %7625 = vmatpush1.msra.mxu0 0.0
  %7626 = vmatprep.subr.mxu0 0.0
  %7627 = vmatpush1.msra.mxu0 0.0
  %7628 = vmatprep.subr.mxu0 %v7517
  %7629 = vmatpush1.msra.mxu0 %v7516
  %7630 = vmatprep.subr.mxu0 0.0
  %7631 = vmatpush2.msra.mxu0 0.0
  %7632 = vmatprep.subr.mxu0 0.0
  %7633 = vmatpush2.msra.mxu0 0.0
  %7634 = vmatprep.subr.mxu0 0.0
  %7635 = vmatpush2.msra.mxu0 0.0
  %7636 = vmatprep.subr.mxu0 0.0
  %7637 = vmatpush2.msra.mxu0 0.0
  %7638 = vmatprep.subr.mxu0 0.0
  %7639 = vmatpush2.msra.mxu0 0.0
  %7640 = vmatprep.subr.mxu0 0.0
  %7641 = vmatpush2.msra.mxu0 0.0
  %7642 = vmatprep.subr.mxu0 0.0
  %7643 = vmatpush2.msra.mxu0 0.0
  %7644 = vmatprep.subr.mxu0 0.0
  %7645 = vmatpush2.msra.mxu0 0.0
  %7646 = vmatprep.subr.mxu0 0.0
  %7647 = vmatpush2.msra.mxu0 0.0
  %7648 = vmatprep.subr.mxu0 0.0
  %7649 = vmatpush2.msra.mxu0 0.0
  %7650 = vmatprep.subr.mxu0 0.0
  %7651 = vmatpush2.msra.mxu0 0.0
  %7652 = vmatprep.subr.mxu0 0.0
  %7653 = vmatpush2.msra.mxu0 0.0
  %7654 = vmatprep.subr.mxu0 0.0
  %7655 = vmatpush2.msra.mxu0 0.0
  %7656 = vmatprep.subr.mxu0 0.0
  %7657 = vmatpush2.msra.mxu0 0.0
  %7658 = vmatprep.subr.mxu0 0.0
  %7659 = vmatpush2.msra.mxu0 0.0
  %7660 = vmatprep.subr.mxu0 0.0
  %7661 = vmatpush2.msra.mxu0 0.0
  %7662 = vmatprep.mubr.f32.mxu0 0.0
  %7663 = vmatmul.mubr.f32.gmra.mxu0 %v7525
  %v7664 = vpop.f32.mrf.mxu0
  %v7665 = vpop.f32.mrf.mxu0
  %v7666 = vadd.f32 0.0, %v7665
  %7667 = vdwg.mxu0
  %7668 = vmatprep.subr.mxu0 0.0
  %7669 = vmatpush1.msra.mxu0 0.0
  %7670 = vmatprep.subr.mxu0 0.0
  %7671 = vmatpush1.msra.mxu0 0.0
  %7672 = vmatprep.subr.mxu0 0.0
  %7673 = vmatpush1.msra.mxu0 0.0
  %7674 = vmatprep.subr.mxu0 0.0
  %7675 = vmatpush1.msra.mxu0 0.0
  %7676 = vmatprep.subr.mxu0 0.0
  %7677 = vmatpush1.msra.mxu0 0.0
  %7678 = vmatprep.subr.mxu0 0.0
  %7679 = vmatpush1.msra.mxu0 0.0
  %7680 = vmatprep.subr.mxu0 0.0
  %7681 = vmatpush1.msra.mxu0 0.0
  %7682 = vmatprep.subr.mxu0 0.0
  %7683 = vmatpush1.msra.mxu0 0.0
  %7684 = vmatprep.subr.mxu0 0.0
  %7685 = vmatpush1.msra.mxu0 0.0
  %7686 = vmatprep.subr.mxu0 0.0
  %7687 = vmatpush1.msra.mxu0 0.0
  %7688 = vmatprep.subr.mxu0 0.0
  %7689 = vmatpush1.msra.mxu0 0.0
  %7690 = vmatprep.subr.mxu0 0.0
  %7691 = vmatpush1.msra.mxu0 0.0
  %7692 = vmatprep.subr.mxu0 0.0
  %7693 = vmatpush1.msra.mxu0 0.0
  %7694 = vmatprep.subr.mxu0 0.0
  %7695 = vmatpush1.msra.mxu0 0.0
  %7696 = vmatprep.subr.mxu0 0.0
  %7697 = vmatpush1.msra.mxu0 0.0
  %7698 = vmatprep.subr.mxu0 0.0
  %7699 = vmatpush1.msra.mxu0 %v7518
  %7700 = vmatprep.subr.mxu0 0.0
  %7701 = vmatpush2.msra.mxu0 0.0
  %7702 = vmatprep.subr.mxu0 0.0
  %7703 = vmatpush2.msra.mxu0 0.0
  %7704 = vmatprep.subr.mxu0 0.0
  %7705 = vmatpush2.msra.mxu0 0.0
  %7706 = vmatprep.subr.mxu0 0.0
  %7707 = vmatpush2.msra.mxu0 0.0
  %7708 = vmatprep.subr.mxu0 0.0
  %7709 = vmatpush2.msra.mxu0 0.0
  %7710 = vmatprep.subr.mxu0 0.0
  %7711 = vmatpush2.msra.mxu0 0.0
  %7712 = vmatprep.subr.mxu0 0.0
  %7713 = vmatpush2.msra.mxu0 0.0
  %7714 = vmatprep.subr.mxu0 0.0
  %7715 = vmatpush2.msra.mxu0 0.0
  %7716 = vmatprep.subr.mxu0 0.0
  %7717 = vmatpush2.msra.mxu0 0.0
  %7718 = vmatprep.subr.mxu0 0.0
  %7719 = vmatpush2.msra.mxu0 0.0
  %7720 = vmatprep.subr.mxu0 0.0
  %7721 = vmatpush2.msra.mxu0 0.0
  %7722 = vmatprep.subr.mxu0 0.0
  %7723 = vmatpush2.msra.mxu0 0.0
  %7724 = vmatprep.subr.mxu0 0.0
  %7725 = vmatpush2.msra.mxu0 0.0
  %7726 = vmatprep.subr.mxu0 0.0
  %7727 = vmatpush2.msra.mxu0 0.0
  %7728 = vmatprep.subr.mxu0 0.0
  %7729 = vmatpush2.msra.mxu0 0.0
  %7730 = vmatprep.subr.mxu0 0.0
  %7731 = vmatpush2.msra.mxu0 0.0
  %7732 = vmatprep.mubr.f32.mxu0 0.0
  %7733 = vmatmul.mubr.f32.gmra.mxu0 %v7525
  %v7734 = vpop.f32.mrf.mxu0
  %v7735 = vadd.f32 0.0, %v7734
  %v7736 = vpop.f32.mrf.mxu0
  %7737 = vdwg.mxu0
  %v7738 = vadd.f32 %v7496, %v7594
  %v7739 = vadd.f32 %v7497, %v7596
  %v7740 = vadd.f32 %v7498, %v7666
  %v7741 = vadd.f32 %v7499, %v7735
  %s7742 = scalar_lea.vmem %s61, 48
  %v7743 = vld [vmem:[%s7742] sm:$0xff]
  %7744 = vrot.lane.b32.xlu0 %v6312, 122
  %v7745 = vpop.permute.xlu0 %7744
  %7746 = vrot.lane.b32.xlu0 %v6313, 122
  %v7747 = vpop.permute.xlu0 %7746
  %7748 = vrot.lane.b32.xlu0 %v6314, 122
  %v7749 = vpop.permute.xlu0 %7748
  %7750 = vrot.lane.b32.xlu0 %v6315, 122
  %v7751 = vpop.permute.xlu0 %7750
  %7752 = vrot.lane.b32.xlu0 %v6316, 122
  %v7753 = vpop.permute.xlu0 %7752
  %7754 = vrot.lane.b32.xlu0 %v6317, 122
  %v7755 = vpop.permute.xlu0 %7754
  %v7756 = vsel %vm1660, %v7745, %v7747
  %v7757 = vsel %vm1660, %v7747, %v7749
  %v7758 = vsel %vm1660, %v7749, %v7751
  %v7759 = vsel %vm1660, %v7751, %v7753
  %v7760 = vsel %vm1660, %v7753, %v7755
  %v7767 = vsel %vm239, %v7743, 0
  %7769 = vmatprep.subr.mxu0 0.0
  %7770 = vmatpush1.msra.mxu0 0.0
  %7771 = vmatprep.subr.mxu0 0.0
  %7772 = vmatpush1.msra.mxu0 0.0
  %7773 = vmatprep.subr.mxu0 0.0
  %7774 = vmatpush1.msra.mxu0 0.0
  %7775 = vmatprep.subr.mxu0 0.0
  %7776 = vmatpush1.msra.mxu0 0.0
  %7777 = vmatprep.subr.mxu0 0.0
  %7778 = vmatpush1.msra.mxu0 0.0
  %7779 = vmatprep.subr.mxu0 0.0
  %7780 = vmatpush1.msra.mxu0 0.0
  %7781 = vmatprep.subr.mxu0 0.0
  %7782 = vmatpush1.msra.mxu0 0.0
  %7783 = vmatprep.subr.mxu0 0.0
  %7784 = vmatpush1.msra.mxu0 0.0
  %7785 = vmatprep.subr.mxu0 0.0
  %7786 = vmatpush1.msra.mxu0 0.0
  %7787 = vmatprep.subr.mxu0 0.0
  %7788 = vmatpush1.msra.mxu0 0.0
  %7789 = vmatprep.subr.mxu0 0.0
  %7790 = vmatpush1.msra.mxu0 0.0
  %7791 = vmatprep.subr.mxu0 0.0
  %7792 = vmatpush1.msra.mxu0 0.0
  %7793 = vmatprep.subr.mxu0 0.0
  %7794 = vmatpush1.msra.mxu0 0.0
  %7795 = vmatprep.subr.mxu0 0.0
  %7796 = vmatpush1.msra.mxu0 0.0
  %7797 = vmatprep.subr.mxu0 0.0
  %7798 = vmatpush1.msra.mxu0 0.0
  %7799 = vmatprep.subr.mxu0 %v7757
  %7800 = vmatpush1.msra.mxu0 %v7756
  %7801 = vmatprep.subr.mxu0 0.0
  %7802 = vmatpush2.msra.mxu0 0.0
  %7803 = vmatprep.subr.mxu0 0.0
  %7804 = vmatpush2.msra.mxu0 0.0
  %7805 = vmatprep.subr.mxu0 0.0
  %7806 = vmatpush2.msra.mxu0 0.0
  %7807 = vmatprep.subr.mxu0 0.0
  %7808 = vmatpush2.msra.mxu0 0.0
  %7809 = vmatprep.subr.mxu0 0.0
  %7810 = vmatpush2.msra.mxu0 0.0
  %7811 = vmatprep.subr.mxu0 0.0
  %7812 = vmatpush2.msra.mxu0 0.0
  %7813 = vmatprep.subr.mxu0 0.0
  %7814 = vmatpush2.msra.mxu0 0.0
  %7815 = vmatprep.subr.mxu0 0.0
  %7816 = vmatpush2.msra.mxu0 0.0
  %7817 = vmatprep.subr.mxu0 0.0
  %7818 = vmatpush2.msra.mxu0 0.0
  %7819 = vmatprep.subr.mxu0 0.0
  %7820 = vmatpush2.msra.mxu0 0.0
  %7821 = vmatprep.subr.mxu0 0.0
  %7822 = vmatpush2.msra.mxu0 0.0
  %7823 = vmatprep.subr.mxu0 0.0
  %7824 = vmatpush2.msra.mxu0 0.0
  %7825 = vmatprep.subr.mxu0 0.0
  %7826 = vmatpush2.msra.mxu0 0.0
  %7827 = vmatprep.subr.mxu0 0.0
  %7828 = vmatpush2.msra.mxu0 0.0
  %7829 = vmatprep.subr.mxu0 0.0
  %7830 = vmatpush2.msra.mxu0 0.0
  %7831 = vmatprep.subr.mxu0 0.0
  %7832 = vmatpush2.msra.mxu0 0.0
  %7833 = vmatprep.mubr.f32.mxu0 0.0
  %7834 = vmatmul.mubr.f32.gmra.mxu0 %v7767
  %v7835 = vpop.f32.mrf.mxu0
  %v7836 = vadd.f32 0.0, %v7835
  %v7837 = vpop.f32.mrf.mxu0
  %v7838 = vadd.f32 0.0, %v7837
  %7839 = vdwg.mxu0
  %7840 = vmatprep.subr.mxu0 0.0
  %7841 = vmatpush1.msra.mxu0 0.0
  %7842 = vmatprep.subr.mxu0 0.0
  %7843 = vmatpush1.msra.mxu0 0.0
  %7844 = vmatprep.subr.mxu0 0.0
  %7845 = vmatpush1.msra.mxu0 0.0
  %7846 = vmatprep.subr.mxu0 0.0
  %7847 = vmatpush1.msra.mxu0 0.0
  %7848 = vmatprep.subr.mxu0 0.0
  %7849 = vmatpush1.msra.mxu0 0.0
  %7850 = vmatprep.subr.mxu0 0.0
  %7851 = vmatpush1.msra.mxu0 0.0
  %7852 = vmatprep.subr.mxu0 0.0
  %7853 = vmatpush1.msra.mxu0 0.0
  %7854 = vmatprep.subr.mxu0 0.0
  %7855 = vmatpush1.msra.mxu0 0.0
  %7856 = vmatprep.subr.mxu0 0.0
  %7857 = vmatpush1.msra.mxu0 0.0
  %7858 = vmatprep.subr.mxu0 0.0
  %7859 = vmatpush1.msra.mxu0 0.0
  %7860 = vmatprep.subr.mxu0 0.0
  %7861 = vmatpush1.msra.mxu0 0.0
  %7862 = vmatprep.subr.mxu0 0.0
  %7863 = vmatpush1.msra.mxu0 0.0
  %7864 = vmatprep.subr.mxu0 0.0
  %7865 = vmatpush1.msra.mxu0 0.0
  %7866 = vmatprep.subr.mxu0 0.0
  %7867 = vmatpush1.msra.mxu0 0.0
  %7868 = vmatprep.subr.mxu0 0.0
  %7869 = vmatpush1.msra.mxu0 0.0
  %7870 = vmatprep.subr.mxu0 %v7759
  %7871 = vmatpush1.msra.mxu0 %v7758
  %7872 = vmatprep.subr.mxu0 0.0
  %7873 = vmatpush2.msra.mxu0 0.0
  %7874 = vmatprep.subr.mxu0 0.0
  %7875 = vmatpush2.msra.mxu0 0.0
  %7876 = vmatprep.subr.mxu0 0.0
  %7877 = vmatpush2.msra.mxu0 0.0
  %7878 = vmatprep.subr.mxu0 0.0
  %7879 = vmatpush2.msra.mxu0 0.0
  %7880 = vmatprep.subr.mxu0 0.0
  %7881 = vmatpush2.msra.mxu0 0.0
  %7882 = vmatprep.subr.mxu0 0.0
  %7883 = vmatpush2.msra.mxu0 0.0
  %7884 = vmatprep.subr.mxu0 0.0
  %7885 = vmatpush2.msra.mxu0 0.0
  %7886 = vmatprep.subr.mxu0 0.0
  %7887 = vmatpush2.msra.mxu0 0.0
  %7888 = vmatprep.subr.mxu0 0.0
  %7889 = vmatpush2.msra.mxu0 0.0
  %7890 = vmatprep.subr.mxu0 0.0
  %7891 = vmatpush2.msra.mxu0 0.0
  %7892 = vmatprep.subr.mxu0 0.0
  %7893 = vmatpush2.msra.mxu0 0.0
  %7894 = vmatprep.subr.mxu0 0.0
  %7895 = vmatpush2.msra.mxu0 0.0
  %7896 = vmatprep.subr.mxu0 0.0
  %7897 = vmatpush2.msra.mxu0 0.0
  %7898 = vmatprep.subr.mxu0 0.0
  %7899 = vmatpush2.msra.mxu0 0.0
  %7900 = vmatprep.subr.mxu0 0.0
  %7901 = vmatpush2.msra.mxu0 0.0
  %7902 = vmatprep.subr.mxu0 0.0
  %7903 = vmatpush2.msra.mxu0 0.0
  %7904 = vmatprep.mubr.f32.mxu0 0.0
  %7905 = vmatmul.mubr.f32.gmra.mxu0 %v7767
  %v7906 = vpop.f32.mrf.mxu0
  %v7907 = vpop.f32.mrf.mxu0
  %v7908 = vadd.f32 0.0, %v7907
  %7909 = vdwg.mxu0
  %7910 = vmatprep.subr.mxu0 0.0
  %7911 = vmatpush1.msra.mxu0 0.0
  %7912 = vmatprep.subr.mxu0 0.0
  %7913 = vmatpush1.msra.mxu0 0.0
  %7914 = vmatprep.subr.mxu0 0.0
  %7915 = vmatpush1.msra.mxu0 0.0
  %7916 = vmatprep.subr.mxu0 0.0
  %7917 = vmatpush1.msra.mxu0 0.0
  %7918 = vmatprep.subr.mxu0 0.0
  %7919 = vmatpush1.msra.mxu0 0.0
  %7920 = vmatprep.subr.mxu0 0.0
  %7921 = vmatpush1.msra.mxu0 0.0
  %7922 = vmatprep.subr.mxu0 0.0
  %7923 = vmatpush1.msra.mxu0 0.0
  %7924 = vmatprep.subr.mxu0 0.0
  %7925 = vmatpush1.msra.mxu0 0.0
  %7926 = vmatprep.subr.mxu0 0.0
  %7927 = vmatpush1.msra.mxu0 0.0
  %7928 = vmatprep.subr.mxu0 0.0
  %7929 = vmatpush1.msra.mxu0 0.0
  %7930 = vmatprep.subr.mxu0 0.0
  %7931 = vmatpush1.msra.mxu0 0.0
  %7932 = vmatprep.subr.mxu0 0.0
  %7933 = vmatpush1.msra.mxu0 0.0
  %7934 = vmatprep.subr.mxu0 0.0
  %7935 = vmatpush1.msra.mxu0 0.0
  %7936 = vmatprep.subr.mxu0 0.0
  %7937 = vmatpush1.msra.mxu0 0.0
  %7938 = vmatprep.subr.mxu0 0.0
  %7939 = vmatpush1.msra.mxu0 0.0
  %7940 = vmatprep.subr.mxu0 0.0
  %7941 = vmatpush1.msra.mxu0 %v7760
  %7942 = vmatprep.subr.mxu0 0.0
  %7943 = vmatpush2.msra.mxu0 0.0
  %7944 = vmatprep.subr.mxu0 0.0
  %7945 = vmatpush2.msra.mxu0 0.0
  %7946 = vmatprep.subr.mxu0 0.0
  %7947 = vmatpush2.msra.mxu0 0.0
  %7948 = vmatprep.subr.mxu0 0.0
  %7949 = vmatpush2.msra.mxu0 0.0
  %7950 = vmatprep.subr.mxu0 0.0
  %7951 = vmatpush2.msra.mxu0 0.0
  %7952 = vmatprep.subr.mxu0 0.0
  %7953 = vmatpush2.msra.mxu0 0.0
  %7954 = vmatprep.subr.mxu0 0.0
  %7955 = vmatpush2.msra.mxu0 0.0
  %7956 = vmatprep.subr.mxu0 0.0
  %7957 = vmatpush2.msra.mxu0 0.0
  %7958 = vmatprep.subr.mxu0 0.0
  %7959 = vmatpush2.msra.mxu0 0.0
  %7960 = vmatprep.subr.mxu0 0.0
  %7961 = vmatpush2.msra.mxu0 0.0
  %7962 = vmatprep.subr.mxu0 0.0
  %7963 = vmatpush2.msra.mxu0 0.0
  %7964 = vmatprep.subr.mxu0 0.0
  %7965 = vmatpush2.msra.mxu0 0.0
  %7966 = vmatprep.subr.mxu0 0.0
  %7967 = vmatpush2.msra.mxu0 0.0
  %7968 = vmatprep.subr.mxu0 0.0
  %7969 = vmatpush2.msra.mxu0 0.0
  %7970 = vmatprep.subr.mxu0 0.0
  %7971 = vmatpush2.msra.mxu0 0.0
  %7972 = vmatprep.subr.mxu0 0.0
  %7973 = vmatpush2.msra.mxu0 0.0
  %7974 = vmatprep.mubr.f32.mxu0 0.0
  %7975 = vmatmul.mubr.f32.gmra.mxu0 %v7767
  %v7976 = vpop.f32.mrf.mxu0
  %v7977 = vadd.f32 0.0, %v7976
  %v7978 = vpop.f32.mrf.mxu0
  %7979 = vdwg.mxu0
  %v7980 = vadd.f32 %v7738, %v7836
  %v7981 = vadd.f32 %v7739, %v7838
  %v7982 = vadd.f32 %v7740, %v7908
  %v7983 = vadd.f32 %v7741, %v7977
  %s7984 = scalar_lea.vmem %s61, 56
  %v7985 = vld [vmem:[%s7984] sm:$0xff]
  %7986 = vrot.lane.b32.xlu0 %v6312, 121
  %v7987 = vpop.permute.xlu0 %7986
  %7988 = vrot.lane.b32.xlu0 %v6313, 121
  %v7989 = vpop.permute.xlu0 %7988
  %7990 = vrot.lane.b32.xlu0 %v6314, 121
  %v7991 = vpop.permute.xlu0 %7990
  %7992 = vrot.lane.b32.xlu0 %v6315, 121
  %v7993 = vpop.permute.xlu0 %7992
  %7994 = vrot.lane.b32.xlu0 %v6316, 121
  %v7995 = vpop.permute.xlu0 %7994
  %7996 = vrot.lane.b32.xlu0 %v6317, 121
  %v7997 = vpop.permute.xlu0 %7996
  %v7998 = vsel %vm1903, %v7987, %v7989
  %v7999 = vsel %vm1903, %v7989, %v7991
  %v8000 = vsel %vm1903, %v7991, %v7993
  %v8001 = vsel %vm1903, %v7993, %v7995
  %v8002 = vsel %vm1903, %v7995, %v7997
  %v8009 = vsel %vm239, %v7985, 0
  %8011 = vmatprep.subr.mxu0 0.0
  %8012 = vmatpush1.msra.mxu0 0.0
  %8013 = vmatprep.subr.mxu0 0.0
  %8014 = vmatpush1.msra.mxu0 0.0
  %8015 = vmatprep.subr.mxu0 0.0
  %8016 = vmatpush1.msra.mxu0 0.0
  %8017 = vmatprep.subr.mxu0 0.0
  %8018 = vmatpush1.msra.mxu0 0.0
  %8019 = vmatprep.subr.mxu0 0.0
  %8020 = vmatpush1.msra.mxu0 0.0
  %8021 = vmatprep.subr.mxu0 0.0
  %8022 = vmatpush1.msra.mxu0 0.0
  %8023 = vmatprep.subr.mxu0 0.0
  %8024 = vmatpush1.msra.mxu0 0.0
  %8025 = vmatprep.subr.mxu0 0.0
  %8026 = vmatpush1.msra.mxu0 0.0
  %8027 = vmatprep.subr.mxu0 0.0
  %8028 = vmatpush1.msra.mxu0 0.0
  %8029 = vmatprep.subr.mxu0 0.0
  %8030 = vmatpush1.msra.mxu0 0.0
  %8031 = vmatprep.subr.mxu0 0.0
  %8032 = vmatpush1.msra.mxu0 0.0
  %8033 = vmatprep.subr.mxu0 0.0
  %8034 = vmatpush1.msra.mxu0 0.0
  %8035 = vmatprep.subr.mxu0 0.0
  %8036 = vmatpush1.msra.mxu0 0.0
  %8037 = vmatprep.subr.mxu0 0.0
  %8038 = vmatpush1.msra.mxu0 0.0
  %8039 = vmatprep.subr.mxu0 0.0
  %8040 = vmatpush1.msra.mxu0 0.0
  %8041 = vmatprep.subr.mxu0 %v7999
  %8042 = vmatpush1.msra.mxu0 %v7998
  %8043 = vmatprep.subr.mxu0 0.0
  %8044 = vmatpush2.msra.mxu0 0.0
  %8045 = vmatprep.subr.mxu0 0.0
  %8046 = vmatpush2.msra.mxu0 0.0
  %8047 = vmatprep.subr.mxu0 0.0
  %8048 = vmatpush2.msra.mxu0 0.0
  %8049 = vmatprep.subr.mxu0 0.0
  %8050 = vmatpush2.msra.mxu0 0.0
  %8051 = vmatprep.subr.mxu0 0.0
  %8052 = vmatpush2.msra.mxu0 0.0
  %8053 = vmatprep.subr.mxu0 0.0
  %8054 = vmatpush2.msra.mxu0 0.0
  %8055 = vmatprep.subr.mxu0 0.0
  %8056 = vmatpush2.msra.mxu0 0.0
  %8057 = vmatprep.subr.mxu0 0.0
  %8058 = vmatpush2.msra.mxu0 0.0
  %8059 = vmatprep.subr.mxu0 0.0
  %8060 = vmatpush2.msra.mxu0 0.0
  %8061 = vmatprep.subr.mxu0 0.0
  %8062 = vmatpush2.msra.mxu0 0.0
  %8063 = vmatprep.subr.mxu0 0.0
  %8064 = vmatpush2.msra.mxu0 0.0
  %8065 = vmatprep.subr.mxu0 0.0
  %8066 = vmatpush2.msra.mxu0 0.0
  %8067 = vmatprep.subr.mxu0 0.0
  %8068 = vmatpush2.msra.mxu0 0.0
  %8069 = vmatprep.subr.mxu0 0.0
  %8070 = vmatpush2.msra.mxu0 0.0
  %8071 = vmatprep.subr.mxu0 0.0
  %8072 = vmatpush2.msra.mxu0 0.0
  %8073 = vmatprep.subr.mxu0 0.0
  %8074 = vmatpush2.msra.mxu0 0.0
  %8075 = vmatprep.mubr.f32.mxu0 0.0
  %8076 = vmatmul.mubr.f32.gmra.mxu0 %v8009
  %v8077 = vpop.f32.mrf.mxu0
  %v8078 = vadd.f32 0.0, %v8077
  %v8079 = vpop.f32.mrf.mxu0
  %v8080 = vadd.f32 0.0, %v8079
  %8081 = vdwg.mxu0
  %8082 = vmatprep.subr.mxu0 0.0
  %8083 = vmatpush1.msra.mxu0 0.0
  %8084 = vmatprep.subr.mxu0 0.0
  %8085 = vmatpush1.msra.mxu0 0.0
  %8086 = vmatprep.subr.mxu0 0.0
  %8087 = vmatpush1.msra.mxu0 0.0
  %8088 = vmatprep.subr.mxu0 0.0
  %8089 = vmatpush1.msra.mxu0 0.0
  %8090 = vmatprep.subr.mxu0 0.0
  %8091 = vmatpush1.msra.mxu0 0.0
  %8092 = vmatprep.subr.mxu0 0.0
  %8093 = vmatpush1.msra.mxu0 0.0
  %8094 = vmatprep.subr.mxu0 0.0
  %8095 = vmatpush1.msra.mxu0 0.0
  %8096 = vmatprep.subr.mxu0 0.0
  %8097 = vmatpush1.msra.mxu0 0.0
  %8098 = vmatprep.subr.mxu0 0.0
  %8099 = vmatpush1.msra.mxu0 0.0
  %8100 = vmatprep.subr.mxu0 0.0
  %8101 = vmatpush1.msra.mxu0 0.0
  %8102 = vmatprep.subr.mxu0 0.0
  %8103 = vmatpush1.msra.mxu0 0.0
  %8104 = vmatprep.subr.mxu0 0.0
  %8105 = vmatpush1.msra.mxu0 0.0
  %8106 = vmatprep.subr.mxu0 0.0
  %8107 = vmatpush1.msra.mxu0 0.0
  %8108 = vmatprep.subr.mxu0 0.0
  %8109 = vmatpush1.msra.mxu0 0.0
  %8110 = vmatprep.subr.mxu0 0.0
  %8111 = vmatpush1.msra.mxu0 0.0
  %8112 = vmatprep.subr.mxu0 %v8001
  %8113 = vmatpush1.msra.mxu0 %v8000
  %8114 = vmatprep.subr.mxu0 0.0
  %8115 = vmatpush2.msra.mxu0 0.0
  %8116 = vmatprep.subr.mxu0 0.0
  %8117 = vmatpush2.msra.mxu0 0.0
  %8118 = vmatprep.subr.mxu0 0.0
  %8119 = vmatpush2.msra.mxu0 0.0
  %8120 = vmatprep.subr.mxu0 0.0
  %8121 = vmatpush2.msra.mxu0 0.0
  %8122 = vmatprep.subr.mxu0 0.0
  %8123 = vmatpush2.msra.mxu0 0.0
  %8124 = vmatprep.subr.mxu0 0.0
  %8125 = vmatpush2.msra.mxu0 0.0
  %8126 = vmatprep.subr.mxu0 0.0
  %8127 = vmatpush2.msra.mxu0 0.0
  %8128 = vmatprep.subr.mxu0 0.0
  %8129 = vmatpush2.msra.mxu0 0.0
  %8130 = vmatprep.subr.mxu0 0.0
  %8131 = vmatpush2.msra.mxu0 0.0
  %8132 = vmatprep.subr.mxu0 0.0
  %8133 = vmatpush2.msra.mxu0 0.0
  %8134 = vmatprep.subr.mxu0 0.0
  %8135 = vmatpush2.msra.mxu0 0.0
  %8136 = vmatprep.subr.mxu0 0.0
  %8137 = vmatpush2.msra.mxu0 0.0
  %8138 = vmatprep.subr.mxu0 0.0
  %8139 = vmatpush2.msra.mxu0 0.0
  %8140 = vmatprep.subr.mxu0 0.0
  %8141 = vmatpush2.msra.mxu0 0.0
  %8142 = vmatprep.subr.mxu0 0.0
  %8143 = vmatpush2.msra.mxu0 0.0
  %8144 = vmatprep.subr.mxu0 0.0
  %8145 = vmatpush2.msra.mxu0 0.0
  %8146 = vmatprep.mubr.f32.mxu0 0.0
  %8147 = vmatmul.mubr.f32.gmra.mxu0 %v8009
  %v8148 = vpop.f32.mrf.mxu0
  %v8149 = vpop.f32.mrf.mxu0
  %v8150 = vadd.f32 0.0, %v8149
  %8151 = vdwg.mxu0
  %8152 = vmatprep.subr.mxu0 0.0
  %8153 = vmatpush1.msra.mxu0 0.0
  %8154 = vmatprep.subr.mxu0 0.0
  %8155 = vmatpush1.msra.mxu0 0.0
  %8156 = vmatprep.subr.mxu0 0.0
  %8157 = vmatpush1.msra.mxu0 0.0
  %8158 = vmatprep.subr.mxu0 0.0
  %8159 = vmatpush1.msra.mxu0 0.0
  %8160 = vmatprep.subr.mxu0 0.0
  %8161 = vmatpush1.msra.mxu0 0.0
  %8162 = vmatprep.subr.mxu0 0.0
  %8163 = vmatpush1.msra.mxu0 0.0
  %8164 = vmatprep.subr.mxu0 0.0
  %8165 = vmatpush1.msra.mxu0 0.0
  %8166 = vmatprep.subr.mxu0 0.0
  %8167 = vmatpush1.msra.mxu0 0.0
  %8168 = vmatprep.subr.mxu0 0.0
  %8169 = vmatpush1.msra.mxu0 0.0
  %8170 = vmatprep.subr.mxu0 0.0
  %8171 = vmatpush1.msra.mxu0 0.0
  %8172 = vmatprep.subr.mxu0 0.0
  %8173 = vmatpush1.msra.mxu0 0.0
  %8174 = vmatprep.subr.mxu0 0.0
  %8175 = vmatpush1.msra.mxu0 0.0
  %8176 = vmatprep.subr.mxu0 0.0
  %8177 = vmatpush1.msra.mxu0 0.0
  %8178 = vmatprep.subr.mxu0 0.0
  %8179 = vmatpush1.msra.mxu0 0.0
  %8180 = vmatprep.subr.mxu0 0.0
  %8181 = vmatpush1.msra.mxu0 0.0
  %8182 = vmatprep.subr.mxu0 0.0
  %8183 = vmatpush1.msra.mxu0 %v8002
  %8184 = vmatprep.subr.mxu0 0.0
  %8185 = vmatpush2.msra.mxu0 0.0
  %8186 = vmatprep.subr.mxu0 0.0
  %8187 = vmatpush2.msra.mxu0 0.0
  %8188 = vmatprep.subr.mxu0 0.0
  %8189 = vmatpush2.msra.mxu0 0.0
  %8190 = vmatprep.subr.mxu0 0.0
  %8191 = vmatpush2.msra.mxu0 0.0
  %8192 = vmatprep.subr.mxu0 0.0
  %8193 = vmatpush2.msra.mxu0 0.0
  %8194 = vmatprep.subr.mxu0 0.0
  %8195 = vmatpush2.msra.mxu0 0.0
  %8196 = vmatprep.subr.mxu0 0.0
  %8197 = vmatpush2.msra.mxu0 0.0
  %8198 = vmatprep.subr.mxu0 0.0
  %8199 = vmatpush2.msra.mxu0 0.0
  %8200 = vmatprep.subr.mxu0 0.0
  %8201 = vmatpush2.msra.mxu0 0.0
  %8202 = vmatprep.subr.mxu0 0.0
  %8203 = vmatpush2.msra.mxu0 0.0
  %8204 = vmatprep.subr.mxu0 0.0
  %8205 = vmatpush2.msra.mxu0 0.0
  %8206 = vmatprep.subr.mxu0 0.0
  %8207 = vmatpush2.msra.mxu0 0.0
  %8208 = vmatprep.subr.mxu0 0.0
  %8209 = vmatpush2.msra.mxu0 0.0
  %8210 = vmatprep.subr.mxu0 0.0
  %8211 = vmatpush2.msra.mxu0 0.0
  %8212 = vmatprep.subr.mxu0 0.0
  %8213 = vmatpush2.msra.mxu0 0.0
  %8214 = vmatprep.subr.mxu0 0.0
  %8215 = vmatpush2.msra.mxu0 0.0
  %8216 = vmatprep.mubr.f32.mxu0 0.0
  %8217 = vmatmul.mubr.f32.gmra.mxu0 %v8009
  %v8218 = vpop.f32.mrf.mxu0
  %v8219 = vadd.f32 0.0, %v8218
  %v8220 = vpop.f32.mrf.mxu0
  %8221 = vdwg.mxu0
  %v8222 = vadd.f32 %v7980, %v8078
  %v8223 = vadd.f32 %v7981, %v8080
  %v8224 = vadd.f32 %v7982, %v8150
  %v8225 = vadd.f32 %v7983, %v8219
  %v8226 = vld [vmem:[%s63] sm:$0xff]
  %8228 = vset.pattern.permute.xlu0 0
  %8229 = vperm.xlu0 %8228, %v8226
  %v8230 = vpop.permute.xlu0 %8229
  %v8232 = vadd.f32 %v8222, %v8230
  %v8233 = vadd.f32 %v8223, %v8230
  %vm8234 = vcmp.gt.f32.partialorder %v8232, 0.0
  %vm8235 = vcmp.gt.f32.partialorder %v8233, 0.0
  %v8236 = vmul.f32 %v8232, 0.01
  %v8237 = vmul.f32 %v8233, 0.01
  %v8238 = vsel %vm8234, %v8232, %v8236
  %v8239 = vsel %vm8235, %v8233, %v8237
  %v8240 = vadd.f32 %v8224, %v8230
  %v8241 = vadd.f32 %v8225, %v8230
  %vm8242 = vcmp.gt.f32.partialorder %v8240, 0.0
  %vm8243 = vcmp.gt.f32.partialorder %v8241, 0.0
  %v8244 = vmul.f32 %v8240, 0.01
  %v8245 = vmul.f32 %v8241, 0.01
  %v8246 = vsel %vm8242, %v8240, %v8244
  %v8247 = vsel %vm8243, %v8241, %v8245
  %v8248 = vld [vmem:[%s65] sm:$0xff]
  %v8249 = vld [vmem:[%s67] sm:$0xff]
  %v8250 = vadd.f32 %v8238, %v8239
  %8251 = vadd.xlane.f32.xlu0 %v8250
  %v8252 = vpop.xlane.xlu0 %8251
  %v8253 = vmul.f32 %v8238, %v8238
  %v8254 = vmul.f32 %v8239, %v8239
  %v8255 = vadd.f32 %v8253, %v8254
  %8256 = vadd.xlane.f32.xlu0 %v8255
  %v8257 = vpop.xlane.xlu0 %8256
  %v8258 = vadd.f32 %v8246, %v8247
  %8259 = vadd.xlane.f32.xlu0 %v8258
  %v8260 = vpop.xlane.xlu0 %8259
  %v8261 = vadd.f32 %v8252, %v8260
  %v8262 = vmul.f32 %v8246, %v8246
  %v8263 = vmul.f32 %v8247, %v8247
  %v8264 = vadd.f32 %v8262, %v8263
  %8265 = vadd.xlane.f32.xlu0 %v8264
  %v8266 = vpop.xlane.xlu0 %8265
  %v8267 = vadd.f32 %v8257, %v8266
  %v8268 = vmul.f32 %v8261, 0.001953125
  %v8269 = vmul.f32 %v8267, 0.001953125
  %v8270 = vmul.f32 %v8268, %v8268
  %v8271 = vsub.f32 %v8269, %v8270
  %v8272 = vmax.f32 %v8271, 0.0
  %v8273 = vadd.f32 %v8272, 1e-05
  %v8274 = vrsqrt.pop %v8273
  %v8275 = vmul.f32 %v8248, %v8274
  %v8276 = vmul.f32 %v8268, %v8275
  %v8277 = vsub.f32 %v8249, %v8276
  %8279 = vset.pattern.permute.xlu0 0
  %8280 = vperm.xlu0 %8279, %v8275
  %v8281 = vpop.permute.xlu0 %8280
  %v8283 = vmul.f32 %v8238, %v8281
  %v8284 = vmul.f32 %v8239, %v8281
  %8286 = vset.pattern.permute.xlu0 0
  %8287 = vperm.xlu0 %8286, %v8277
  %v8288 = vpop.permute.xlu0 %8287
  %v8290 = vadd.f32 %v8283, %v8288
  %v8291 = vadd.f32 %v8284, %v8288
  %v8292 = vmul.f32 %v8246, %v8281
  %v8293 = vmul.f32 %v8247, %v8281
  %v8294 = vadd.f32 %v8292, %v8288
  %v8295 = vadd.f32 %v8293, %v8288
  %8296 = vst.msk [vmem:[#allocation2] sm:$0xff] %vm4373, 0.0
  %vm8297 = vcmask 64544
  %8298 = vst.msk [vmem:[#allocation2 + $0x10] sm:$0xff] %vm8297, 0.0
  %8301 = vrot.lane.b32.xlu0 %v8290, 4
  %v8302 = vpop.permute.xlu0 %8301
  %8303 = vrot.lane.b32.xlu0 %v8291, 4
  %v8304 = vpop.permute.xlu0 %8303
  %v8305 = vsel %vm4373, %v8302, %v8304
  %vm8309 = vcmask 1047584
  %8310 = vst.msk [vmem:[#allocation2] sm:$0xff] %vm8309, %v8302
  %8311 = vst [vmem:[#allocation2 + $0x8] sm:$0xff] %v8305
  %8312 = vst.msk [vmem:[#allocation2 + $0x10] sm:$0xff] %vm4373, %v8304
  %8313 = vst.msk [vmem:[#allocation2 + $0x18] sm:$0xff] %vm4373, 0.0
  %8314 = vst.msk [vmem:[#allocation2 + $0x28] sm:$0xff] %vm8297, 0.0
  %8317 = vrot.lane.b32.xlu0 %v8294, 4
  %v8318 = vpop.permute.xlu0 %8317
  %8319 = vrot.lane.b32.xlu0 %v8295, 4
  %v8320 = vpop.permute.xlu0 %8319
  %v8321 = vsel %vm4373, %v8318, %v8320
  %8325 = vst.msk [vmem:[#allocation2 + $0x18] sm:$0xff] %vm8309, %v8318
  %8326 = vst [vmem:[#allocation2 + $0x20] sm:$0xff] %v8321
  %8327 = vst.msk [vmem:[#allocation2 + $0x28] sm:$0xff] %vm4373, %v8320
  %v8328 = vld [vmem:[%s71] sm:$0xff]
  %v8329 = vld [vmem:[#allocation2] sm:$0xff]
  %v8330 = vld [vmem:[#allocation2 + $0x8] sm:$0xff]
  %v8331 = vld [vmem:[#allocation2 + $0x10] sm:$0xff]
  %v8332 = vld [vmem:[#allocation2 + $0x18] sm:$0xff]
  %v8333 = vld [vmem:[#allocation2 + $0x20] sm:$0xff]
  %s8334 = scalar_lea.vmem %s71, 8
  %v8335 = vld [vmem:[%s8334] sm:$0xff]
  %v8336 = vld [vmem:[#allocation2] sm:$0xff]
  %v8337 = vld [vmem:[#allocation2 + $0x8] sm:$0xff]
  %v8338 = vld [vmem:[#allocation2 + $0x10] sm:$0xff]
  %v8339 = vld [vmem:[#allocation2 + $0x18] sm:$0xff]
  %v8340 = vld [vmem:[#allocation2 + $0x20] sm:$0xff]
  %v8341 = vld [vmem:[#allocation2 + $0x28] sm:$0xff]
  %8348 = vrot.lane.b32.xlu0 %v8336, 127
  %v8349 = vpop.permute.xlu0 %8348
  %8350 = vrot.lane.b32.xlu0 %v8337, 127
  %v8351 = vpop.permute.xlu0 %8350
  %8352 = vrot.lane.b32.xlu0 %v8338, 127
  %v8353 = vpop.permute.xlu0 %8352
  %8354 = vrot.lane.b32.xlu0 %v8339, 127
  %v8355 = vpop.permute.xlu0 %8354
  %8356 = vrot.lane.b32.xlu0 %v8340, 127
  %v8357 = vpop.permute.xlu0 %8356
  %8358 = vrot.lane.b32.xlu0 %v8341, 127
  %v8359 = vpop.permute.xlu0 %8358
  %v8360 = vsel %vm229, %v8349, %v8351
  %v8361 = vsel %vm229, %v8351, %v8353
  %v8362 = vsel %vm229, %v8353, %v8355
  %v8363 = vsel %vm229, %v8355, %v8357
  %v8364 = vsel %vm229, %v8357, %v8359
  %v8371 = vsel %vm239, %v8335, 0
  %8373 = vmatprep.subr.mxu0 0.0
  %8374 = vmatpush1.msra.mxu0 0.0
  %8375 = vmatprep.subr.mxu0 0.0
  %8376 = vmatpush1.msra.mxu0 0.0
  %8377 = vmatprep.subr.mxu0 0.0
  %8378 = vmatpush1.msra.mxu0 0.0
  %8379 = vmatprep.subr.mxu0 0.0
  %8380 = vmatpush1.msra.mxu0 0.0
  %8381 = vmatprep.subr.mxu0 0.0
  %8382 = vmatpush1.msra.mxu0 0.0
  %8383 = vmatprep.subr.mxu0 0.0
  %8384 = vmatpush1.msra.mxu0 0.0
  %8385 = vmatprep.subr.mxu0 0.0
  %8386 = vmatpush1.msra.mxu0 0.0
  %8387 = vmatprep.subr.mxu0 0.0
  %8388 = vmatpush1.msra.mxu0 0.0
  %8389 = vmatprep.subr.mxu0 0.0
  %8390 = vmatpush1.msra.mxu0 0.0
  %8391 = vmatprep.subr.mxu0 0.0
  %8392 = vmatpush1.msra.mxu0 0.0
  %8393 = vmatprep.subr.mxu0 0.0
  %8394 = vmatpush1.msra.mxu0 0.0
  %8395 = vmatprep.subr.mxu0 0.0
  %8396 = vmatpush1.msra.mxu0 0.0
  %8397 = vmatprep.subr.mxu0 0.0
  %8398 = vmatpush1.msra.mxu0 0.0
  %8399 = vmatprep.subr.mxu0 0.0
  %8400 = vmatpush1.msra.mxu0 0.0
  %8401 = vmatprep.subr.mxu0 0.0
  %8402 = vmatpush1.msra.mxu0 0.0
  %8403 = vmatprep.subr.mxu0 %v8361
  %8404 = vmatpush1.msra.mxu0 %v8360
  %8405 = vmatprep.subr.mxu0 0.0
  %8406 = vmatpush2.msra.mxu0 0.0
  %8407 = vmatprep.subr.mxu0 0.0
  %8408 = vmatpush2.msra.mxu0 0.0
  %8409 = vmatprep.subr.mxu0 0.0
  %8410 = vmatpush2.msra.mxu0 0.0
  %8411 = vmatprep.subr.mxu0 0.0
  %8412 = vmatpush2.msra.mxu0 0.0
  %8413 = vmatprep.subr.mxu0 0.0
  %8414 = vmatpush2.msra.mxu0 0.0
  %8415 = vmatprep.subr.mxu0 0.0
  %8416 = vmatpush2.msra.mxu0 0.0
  %8417 = vmatprep.subr.mxu0 0.0
  %8418 = vmatpush2.msra.mxu0 0.0
  %8419 = vmatprep.subr.mxu0 0.0
  %8420 = vmatpush2.msra.mxu0 0.0
  %8421 = vmatprep.subr.mxu0 0.0
  %8422 = vmatpush2.msra.mxu0 0.0
  %8423 = vmatprep.subr.mxu0 0.0
  %8424 = vmatpush2.msra.mxu0 0.0
  %8425 = vmatprep.subr.mxu0 0.0
  %8426 = vmatpush2.msra.mxu0 0.0
  %8427 = vmatprep.subr.mxu0 0.0
  %8428 = vmatpush2.msra.mxu0 0.0
  %8429 = vmatprep.subr.mxu0 0.0
  %8430 = vmatpush2.msra.mxu0 0.0
  %8431 = vmatprep.subr.mxu0 0.0
  %8432 = vmatpush2.msra.mxu0 0.0
  %8433 = vmatprep.subr.mxu0 0.0
  %8434 = vmatpush2.msra.mxu0 0.0
  %8435 = vmatprep.subr.mxu0 0.0
  %8436 = vmatpush2.msra.mxu0 0.0
  %8437 = vmatprep.mubr.f32.mxu0 0.0
  %8438 = vmatmul.mubr.f32.gmra.mxu0 %v8371
  %v8439 = vpop.f32.mrf.mxu0
  %v8440 = vadd.f32 0.0, %v8439
  %v8441 = vpop.f32.mrf.mxu0
  %v8442 = vadd.f32 0.0, %v8441
  %8443 = vdwg.mxu0
  %8444 = vmatprep.subr.mxu0 0.0
  %8445 = vmatpush1.msra.mxu0 0.0
  %8446 = vmatprep.subr.mxu0 0.0
  %8447 = vmatpush1.msra.mxu0 0.0
  %8448 = vmatprep.subr.mxu0 0.0
  %8449 = vmatpush1.msra.mxu0 0.0
  %8450 = vmatprep.subr.mxu0 0.0
  %8451 = vmatpush1.msra.mxu0 0.0
  %8452 = vmatprep.subr.mxu0 0.0
  %8453 = vmatpush1.msra.mxu0 0.0
  %8454 = vmatprep.subr.mxu0 0.0
  %8455 = vmatpush1.msra.mxu0 0.0
  %8456 = vmatprep.subr.mxu0 0.0
  %8457 = vmatpush1.msra.mxu0 0.0
  %8458 = vmatprep.subr.mxu0 0.0
  %8459 = vmatpush1.msra.mxu0 0.0
  %8460 = vmatprep.subr.mxu0 0.0
  %8461 = vmatpush1.msra.mxu0 0.0
  %8462 = vmatprep.subr.mxu0 0.0
  %8463 = vmatpush1.msra.mxu0 0.0
  %8464 = vmatprep.subr.mxu0 0.0
  %8465 = vmatpush1.msra.mxu0 0.0
  %8466 = vmatprep.subr.mxu0 0.0
  %8467 = vmatpush1.msra.mxu0 0.0
  %8468 = vmatprep.subr.mxu0 0.0
  %8469 = vmatpush1.msra.mxu0 0.0
  %8470 = vmatprep.subr.mxu0 0.0
  %8471 = vmatpush1.msra.mxu0 0.0
  %8472 = vmatprep.subr.mxu0 0.0
  %8473 = vmatpush1.msra.mxu0 0.0
  %8474 = vmatprep.subr.mxu0 %v8363
  %8475 = vmatpush1.msra.mxu0 %v8362
  %8476 = vmatprep.subr.mxu0 0.0
  %8477 = vmatpush2.msra.mxu0 0.0
  %8478 = vmatprep.subr.mxu0 0.0
  %8479 = vmatpush2.msra.mxu0 0.0
  %8480 = vmatprep.subr.mxu0 0.0
  %8481 = vmatpush2.msra.mxu0 0.0
  %8482 = vmatprep.subr.mxu0 0.0
  %8483 = vmatpush2.msra.mxu0 0.0
  %8484 = vmatprep.subr.mxu0 0.0
  %8485 = vmatpush2.msra.mxu0 0.0
  %8486 = vmatprep.subr.mxu0 0.0
  %8487 = vmatpush2.msra.mxu0 0.0
  %8488 = vmatprep.subr.mxu0 0.0
  %8489 = vmatpush2.msra.mxu0 0.0
  %8490 = vmatprep.subr.mxu0 0.0
  %8491 = vmatpush2.msra.mxu0 0.0
  %8492 = vmatprep.subr.mxu0 0.0
  %8493 = vmatpush2.msra.mxu0 0.0
  %8494 = vmatprep.subr.mxu0 0.0
  %8495 = vmatpush2.msra.mxu0 0.0
  %8496 = vmatprep.subr.mxu0 0.0
  %8497 = vmatpush2.msra.mxu0 0.0
  %8498 = vmatprep.subr.mxu0 0.0
  %8499 = vmatpush2.msra.mxu0 0.0
  %8500 = vmatprep.subr.mxu0 0.0
  %8501 = vmatpush2.msra.mxu0 0.0
  %8502 = vmatprep.subr.mxu0 0.0
  %8503 = vmatpush2.msra.mxu0 0.0
  %8504 = vmatprep.subr.mxu0 0.0
  %8505 = vmatpush2.msra.mxu0 0.0
  %8506 = vmatprep.subr.mxu0 0.0
  %8507 = vmatpush2.msra.mxu0 0.0
  %8508 = vmatprep.mubr.f32.mxu0 0.0
  %8509 = vmatmul.mubr.f32.gmra.mxu0 %v8371
  %v8510 = vpop.f32.mrf.mxu0
  %v8511 = vpop.f32.mrf.mxu0
  %v8512 = vadd.f32 0.0, %v8511
  %8513 = vdwg.mxu0
  %8514 = vmatprep.subr.mxu0 0.0
  %8515 = vmatpush1.msra.mxu0 0.0
  %8516 = vmatprep.subr.mxu0 0.0
  %8517 = vmatpush1.msra.mxu0 0.0
  %8518 = vmatprep.subr.mxu0 0.0
  %8519 = vmatpush1.msra.mxu0 0.0
  %8520 = vmatprep.subr.mxu0 0.0
  %8521 = vmatpush1.msra.mxu0 0.0
  %8522 = vmatprep.subr.mxu0 0.0
  %8523 = vmatpush1.msra.mxu0 0.0
  %8524 = vmatprep.subr.mxu0 0.0
  %8525 = vmatpush1.msra.mxu0 0.0
  %8526 = vmatprep.subr.mxu0 0.0
  %8527 = vmatpush1.msra.mxu0 0.0
  %8528 = vmatprep.subr.mxu0 0.0
  %8529 = vmatpush1.msra.mxu0 0.0
  %8530 = vmatprep.subr.mxu0 0.0
  %8531 = vmatpush1.msra.mxu0 0.0
  %8532 = vmatprep.subr.mxu0 0.0
  %8533 = vmatpush1.msra.mxu0 0.0
  %8534 = vmatprep.subr.mxu0 0.0
  %8535 = vmatpush1.msra.mxu0 0.0
  %8536 = vmatprep.subr.mxu0 0.0
  %8537 = vmatpush1.msra.mxu0 0.0
  %8538 = vmatprep.subr.mxu0 0.0
  %8539 = vmatpush1.msra.mxu0 0.0
  %8540 = vmatprep.subr.mxu0 0.0
  %8541 = vmatpush1.msra.mxu0 0.0
  %8542 = vmatprep.subr.mxu0 0.0
  %8543 = vmatpush1.msra.mxu0 0.0
  %8544 = vmatprep.subr.mxu0 0.0
  %8545 = vmatpush1.msra.mxu0 %v8364
  %8546 = vmatprep.subr.mxu0 0.0
  %8547 = vmatpush2.msra.mxu0 0.0
  %8548 = vmatprep.subr.mxu0 0.0
  %8549 = vmatpush2.msra.mxu0 0.0
  %8550 = vmatprep.subr.mxu0 0.0
  %8551 = vmatpush2.msra.mxu0 0.0
  %8552 = vmatprep.subr.mxu0 0.0
  %8553 = vmatpush2.msra.mxu0 0.0
  %8554 = vmatprep.subr.mxu0 0.0
  %8555 = vmatpush2.msra.mxu0 0.0
  %8556 = vmatprep.subr.mxu0 0.0
  %8557 = vmatpush2.msra.mxu0 0.0
  %8558 = vmatprep.subr.mxu0 0.0
  %8559 = vmatpush2.msra.mxu0 0.0
  %8560 = vmatprep.subr.mxu0 0.0
  %8561 = vmatpush2.msra.mxu0 0.0
  %8562 = vmatprep.subr.mxu0 0.0
  %8563 = vmatpush2.msra.mxu0 0.0
  %8564 = vmatprep.subr.mxu0 0.0
  %8565 = vmatpush2.msra.mxu0 0.0
  %8566 = vmatprep.subr.mxu0 0.0
  %8567 = vmatpush2.msra.mxu0 0.0
  %8568 = vmatprep.subr.mxu0 0.0
  %8569 = vmatpush2.msra.mxu0 0.0
  %8570 = vmatprep.subr.mxu0 0.0
  %8571 = vmatpush2.msra.mxu0 0.0
  %8572 = vmatprep.subr.mxu0 0.0
  %8573 = vmatpush2.msra.mxu0 0.0
  %8574 = vmatprep.subr.mxu0 0.0
  %8575 = vmatpush2.msra.mxu0 0.0
  %8576 = vmatprep.subr.mxu0 0.0
  %8577 = vmatpush2.msra.mxu0 0.0
  %8578 = vmatprep.mubr.f32.mxu0 0.0
  %8579 = vmatmul.mubr.f32.gmra.mxu0 %v8371
  %v8580 = vpop.f32.mrf.mxu0
  %v8581 = vadd.f32 0.0, %v8580
  %v8582 = vpop.f32.mrf.mxu0
  %8583 = vdwg.mxu0
  %v8585 = vsel %vm239, %v8328, 0
  %8587 = vmatprep.subr.mxu0 0.0
  %8588 = vmatpush1.msra.mxu0 0.0
  %8589 = vmatprep.subr.mxu0 0.0
  %8590 = vmatpush1.msra.mxu0 0.0
  %8591 = vmatprep.subr.mxu0 0.0
  %8592 = vmatpush1.msra.mxu0 0.0
  %8593 = vmatprep.subr.mxu0 0.0
  %8594 = vmatpush1.msra.mxu0 0.0
  %8595 = vmatprep.subr.mxu0 0.0
  %8596 = vmatpush1.msra.mxu0 0.0
  %8597 = vmatprep.subr.mxu0 0.0
  %8598 = vmatpush1.msra.mxu0 0.0
  %8599 = vmatprep.subr.mxu0 0.0
  %8600 = vmatpush1.msra.mxu0 0.0
  %8601 = vmatprep.subr.mxu0 0.0
  %8602 = vmatpush1.msra.mxu0 0.0
  %8603 = vmatprep.subr.mxu0 0.0
  %8604 = vmatpush1.msra.mxu0 0.0
  %8605 = vmatprep.subr.mxu0 0.0
  %8606 = vmatpush1.msra.mxu0 0.0
  %8607 = vmatprep.subr.mxu0 0.0
  %8608 = vmatpush1.msra.mxu0 0.0
  %8609 = vmatprep.subr.mxu0 0.0
  %8610 = vmatpush1.msra.mxu0 0.0
  %8611 = vmatprep.subr.mxu0 0.0
  %8612 = vmatpush1.msra.mxu0 0.0
  %8613 = vmatprep.subr.mxu0 0.0
  %8614 = vmatpush1.msra.mxu0 0.0
  %8615 = vmatprep.subr.mxu0 0.0
  %8616 = vmatpush1.msra.mxu0 0.0
  %8617 = vmatprep.subr.mxu0 %v8330
  %8618 = vmatpush1.msra.mxu0 %v8329
  %8619 = vmatprep.subr.mxu0 0.0
  %8620 = vmatpush2.msra.mxu0 0.0
  %8621 = vmatprep.subr.mxu0 0.0
  %8622 = vmatpush2.msra.mxu0 0.0
  %8623 = vmatprep.subr.mxu0 0.0
  %8624 = vmatpush2.msra.mxu0 0.0
  %8625 = vmatprep.subr.mxu0 0.0
  %8626 = vmatpush2.msra.mxu0 0.0
  %8627 = vmatprep.subr.mxu0 0.0
  %8628 = vmatpush2.msra.mxu0 0.0
  %8629 = vmatprep.subr.mxu0 0.0
  %8630 = vmatpush2.msra.mxu0 0.0
  %8631 = vmatprep.subr.mxu0 0.0
  %8632 = vmatpush2.msra.mxu0 0.0
  %8633 = vmatprep.subr.mxu0 0.0
  %8634 = vmatpush2.msra.mxu0 0.0
  %8635 = vmatprep.subr.mxu0 0.0
  %8636 = vmatpush2.msra.mxu0 0.0
  %8637 = vmatprep.subr.mxu0 0.0
  %8638 = vmatpush2.msra.mxu0 0.0
  %8639 = vmatprep.subr.mxu0 0.0
  %8640 = vmatpush2.msra.mxu0 0.0
  %8641 = vmatprep.subr.mxu0 0.0
  %8642 = vmatpush2.msra.mxu0 0.0
  %8643 = vmatprep.subr.mxu0 0.0
  %8644 = vmatpush2.msra.mxu0 0.0
  %8645 = vmatprep.subr.mxu0 0.0
  %8646 = vmatpush2.msra.mxu0 0.0
  %8647 = vmatprep.subr.mxu0 0.0
  %8648 = vmatpush2.msra.mxu0 0.0
  %8649 = vmatprep.subr.mxu0 0.0
  %8650 = vmatpush2.msra.mxu0 0.0
  %8651 = vmatprep.mubr.f32.mxu0 0.0
  %8652 = vmatmul.mubr.f32.gmra.mxu0 %v8585
  %v8653 = vpop.f32.mrf.mxu0
  %v8654 = vadd.f32 %v8440, %v8653
  %v8655 = vpop.f32.mrf.mxu0
  %v8656 = vadd.f32 %v8442, %v8655
  %8657 = vdwg.mxu0
  %8658 = vmatprep.subr.mxu0 0.0
  %8659 = vmatpush1.msra.mxu0 0.0
  %8660 = vmatprep.subr.mxu0 0.0
  %8661 = vmatpush1.msra.mxu0 0.0
  %8662 = vmatprep.subr.mxu0 0.0
  %8663 = vmatpush1.msra.mxu0 0.0
  %8664 = vmatprep.subr.mxu0 0.0
  %8665 = vmatpush1.msra.mxu0 0.0
  %8666 = vmatprep.subr.mxu0 0.0
  %8667 = vmatpush1.msra.mxu0 0.0
  %8668 = vmatprep.subr.mxu0 0.0
  %8669 = vmatpush1.msra.mxu0 0.0
  %8670 = vmatprep.subr.mxu0 0.0
  %8671 = vmatpush1.msra.mxu0 0.0
  %8672 = vmatprep.subr.mxu0 0.0
  %8673 = vmatpush1.msra.mxu0 0.0
  %8674 = vmatprep.subr.mxu0 0.0
  %8675 = vmatpush1.msra.mxu0 0.0
  %8676 = vmatprep.subr.mxu0 0.0
  %8677 = vmatpush1.msra.mxu0 0.0
  %8678 = vmatprep.subr.mxu0 0.0
  %8679 = vmatpush1.msra.mxu0 0.0
  %8680 = vmatprep.subr.mxu0 0.0
  %8681 = vmatpush1.msra.mxu0 0.0
  %8682 = vmatprep.subr.mxu0 0.0
  %8683 = vmatpush1.msra.mxu0 0.0
  %8684 = vmatprep.subr.mxu0 0.0
  %8685 = vmatpush1.msra.mxu0 0.0
  %8686 = vmatprep.subr.mxu0 0.0
  %8687 = vmatpush1.msra.mxu0 0.0
  %8688 = vmatprep.subr.mxu0 %v8332
  %8689 = vmatpush1.msra.mxu0 %v8331
  %8690 = vmatprep.subr.mxu0 0.0
  %8691 = vmatpush2.msra.mxu0 0.0
  %8692 = vmatprep.subr.mxu0 0.0
  %8693 = vmatpush2.msra.mxu0 0.0
  %8694 = vmatprep.subr.mxu0 0.0
  %8695 = vmatpush2.msra.mxu0 0.0
  %8696 = vmatprep.subr.mxu0 0.0
  %8697 = vmatpush2.msra.mxu0 0.0
  %8698 = vmatprep.subr.mxu0 0.0
  %8699 = vmatpush2.msra.mxu0 0.0
  %8700 = vmatprep.subr.mxu0 0.0
  %8701 = vmatpush2.msra.mxu0 0.0
  %8702 = vmatprep.subr.mxu0 0.0
  %8703 = vmatpush2.msra.mxu0 0.0
  %8704 = vmatprep.subr.mxu0 0.0
  %8705 = vmatpush2.msra.mxu0 0.0
  %8706 = vmatprep.subr.mxu0 0.0
  %8707 = vmatpush2.msra.mxu0 0.0
  %8708 = vmatprep.subr.mxu0 0.0
  %8709 = vmatpush2.msra.mxu0 0.0
  %8710 = vmatprep.subr.mxu0 0.0
  %8711 = vmatpush2.msra.mxu0 0.0
  %8712 = vmatprep.subr.mxu0 0.0
  %8713 = vmatpush2.msra.mxu0 0.0
  %8714 = vmatprep.subr.mxu0 0.0
  %8715 = vmatpush2.msra.mxu0 0.0
  %8716 = vmatprep.subr.mxu0 0.0
  %8717 = vmatpush2.msra.mxu0 0.0
  %8718 = vmatprep.subr.mxu0 0.0
  %8719 = vmatpush2.msra.mxu0 0.0
  %8720 = vmatprep.subr.mxu0 0.0
  %8721 = vmatpush2.msra.mxu0 0.0
  %8722 = vmatprep.mubr.f32.mxu0 0.0
  %8723 = vmatmul.mubr.f32.gmra.mxu0 %v8585
  %v8724 = vpop.f32.mrf.mxu0
  %v8725 = vpop.f32.mrf.mxu0
  %v8726 = vadd.f32 %v8512, %v8725
  %8727 = vdwg.mxu0
  %8728 = vmatprep.subr.mxu0 0.0
  %8729 = vmatpush1.msra.mxu0 0.0
  %8730 = vmatprep.subr.mxu0 0.0
  %8731 = vmatpush1.msra.mxu0 0.0
  %8732 = vmatprep.subr.mxu0 0.0
  %8733 = vmatpush1.msra.mxu0 0.0
  %8734 = vmatprep.subr.mxu0 0.0
  %8735 = vmatpush1.msra.mxu0 0.0
  %8736 = vmatprep.subr.mxu0 0.0
  %8737 = vmatpush1.msra.mxu0 0.0
  %8738 = vmatprep.subr.mxu0 0.0
  %8739 = vmatpush1.msra.mxu0 0.0
  %8740 = vmatprep.subr.mxu0 0.0
  %8741 = vmatpush1.msra.mxu0 0.0
  %8742 = vmatprep.subr.mxu0 0.0
  %8743 = vmatpush1.msra.mxu0 0.0
  %8744 = vmatprep.subr.mxu0 0.0
  %8745 = vmatpush1.msra.mxu0 0.0
  %8746 = vmatprep.subr.mxu0 0.0
  %8747 = vmatpush1.msra.mxu0 0.0
  %8748 = vmatprep.subr.mxu0 0.0
  %8749 = vmatpush1.msra.mxu0 0.0
  %8750 = vmatprep.subr.mxu0 0.0
  %8751 = vmatpush1.msra.mxu0 0.0
  %8752 = vmatprep.subr.mxu0 0.0
  %8753 = vmatpush1.msra.mxu0 0.0
  %8754 = vmatprep.subr.mxu0 0.0
  %8755 = vmatpush1.msra.mxu0 0.0
  %8756 = vmatprep.subr.mxu0 0.0
  %8757 = vmatpush1.msra.mxu0 0.0
  %8758 = vmatprep.subr.mxu0 0.0
  %8759 = vmatpush1.msra.mxu0 %v8333
  %8760 = vmatprep.subr.mxu0 0.0
  %8761 = vmatpush2.msra.mxu0 0.0
  %8762 = vmatprep.subr.mxu0 0.0
  %8763 = vmatpush2.msra.mxu0 0.0
  %8764 = vmatprep.subr.mxu0 0.0
  %8765 = vmatpush2.msra.mxu0 0.0
  %8766 = vmatprep.subr.mxu0 0.0
  %8767 = vmatpush2.msra.mxu0 0.0
  %8768 = vmatprep.subr.mxu0 0.0
  %8769 = vmatpush2.msra.mxu0 0.0
  %8770 = vmatprep.subr.mxu0 0.0
  %8771 = vmatpush2.msra.mxu0 0.0
  %8772 = vmatprep.subr.mxu0 0.0
  %8773 = vmatpush2.msra.mxu0 0.0
  %8774 = vmatprep.subr.mxu0 0.0
  %8775 = vmatpush2.msra.mxu0 0.0
  %8776 = vmatprep.subr.mxu0 0.0
  %8777 = vmatpush2.msra.mxu0 0.0
  %8778 = vmatprep.subr.mxu0 0.0
  %8779 = vmatpush2.msra.mxu0 0.0
  %8780 = vmatprep.subr.mxu0 0.0
  %8781 = vmatpush2.msra.mxu0 0.0
  %8782 = vmatprep.subr.mxu0 0.0
  %8783 = vmatpush2.msra.mxu0 0.0
  %8784 = vmatprep.subr.mxu0 0.0
  %8785 = vmatpush2.msra.mxu0 0.0
  %8786 = vmatprep.subr.mxu0 0.0
  %8787 = vmatpush2.msra.mxu0 0.0
  %8788 = vmatprep.subr.mxu0 0.0
  %8789 = vmatpush2.msra.mxu0 0.0
  %8790 = vmatprep.subr.mxu0 0.0
  %8791 = vmatpush2.msra.mxu0 0.0
  %8792 = vmatprep.mubr.f32.mxu0 0.0
  %8793 = vmatmul.mubr.f32.gmra.mxu0 %v8585
  %v8794 = vpop.f32.mrf.mxu0
  %v8795 = vadd.f32 %v8581, %v8794
  %v8796 = vpop.f32.mrf.mxu0
  %8797 = vdwg.mxu0
  %s8798 = scalar_lea.vmem %s71, 16
  %v8799 = vld [vmem:[%s8798] sm:$0xff]
  %8800 = vrot.lane.b32.xlu0 %v8336, 126
  %v8801 = vpop.permute.xlu0 %8800
  %8802 = vrot.lane.b32.xlu0 %v8337, 126
  %v8803 = vpop.permute.xlu0 %8802
  %8804 = vrot.lane.b32.xlu0 %v8338, 126
  %v8805 = vpop.permute.xlu0 %8804
  %8806 = vrot.lane.b32.xlu0 %v8339, 126
  %v8807 = vpop.permute.xlu0 %8806
  %8808 = vrot.lane.b32.xlu0 %v8340, 126
  %v8809 = vpop.permute.xlu0 %8808
  %8810 = vrot.lane.b32.xlu0 %v8341, 126
  %v8811 = vpop.permute.xlu0 %8810
  %v8812 = vsel %vm680, %v8801, %v8803
  %v8813 = vsel %vm680, %v8803, %v8805
  %v8814 = vsel %vm680, %v8805, %v8807
  %v8815 = vsel %vm680, %v8807, %v8809
  %v8816 = vsel %vm680, %v8809, %v8811
  %v8823 = vsel %vm239, %v8799, 0
  %8825 = vmatprep.subr.mxu0 0.0
  %8826 = vmatpush1.msra.mxu0 0.0
  %8827 = vmatprep.subr.mxu0 0.0
  %8828 = vmatpush1.msra.mxu0 0.0
  %8829 = vmatprep.subr.mxu0 0.0
  %8830 = vmatpush1.msra.mxu0 0.0
  %8831 = vmatprep.subr.mxu0 0.0
  %8832 = vmatpush1.msra.mxu0 0.0
  %8833 = vmatprep.subr.mxu0 0.0
  %8834 = vmatpush1.msra.mxu0 0.0
  %8835 = vmatprep.subr.mxu0 0.0
  %8836 = vmatpush1.msra.mxu0 0.0
  %8837 = vmatprep.subr.mxu0 0.0
  %8838 = vmatpush1.msra.mxu0 0.0
  %8839 = vmatprep.subr.mxu0 0.0
  %8840 = vmatpush1.msra.mxu0 0.0
  %8841 = vmatprep.subr.mxu0 0.0
  %8842 = vmatpush1.msra.mxu0 0.0
  %8843 = vmatprep.subr.mxu0 0.0
  %8844 = vmatpush1.msra.mxu0 0.0
  %8845 = vmatprep.subr.mxu0 0.0
  %8846 = vmatpush1.msra.mxu0 0.0
  %8847 = vmatprep.subr.mxu0 0.0
  %8848 = vmatpush1.msra.mxu0 0.0
  %8849 = vmatprep.subr.mxu0 0.0
  %8850 = vmatpush1.msra.mxu0 0.0
  %8851 = vmatprep.subr.mxu0 0.0
  %8852 = vmatpush1.msra.mxu0 0.0
  %8853 = vmatprep.subr.mxu0 0.0
  %8854 = vmatpush1.msra.mxu0 0.0
  %8855 = vmatprep.subr.mxu0 %v8813
  %8856 = vmatpush1.msra.mxu0 %v8812
  %8857 = vmatprep.subr.mxu0 0.0
  %8858 = vmatpush2.msra.mxu0 0.0
  %8859 = vmatprep.subr.mxu0 0.0
  %8860 = vmatpush2.msra.mxu0 0.0
  %8861 = vmatprep.subr.mxu0 0.0
  %8862 = vmatpush2.msra.mxu0 0.0
  %8863 = vmatprep.subr.mxu0 0.0
  %8864 = vmatpush2.msra.mxu0 0.0
  %8865 = vmatprep.subr.mxu0 0.0
  %8866 = vmatpush2.msra.mxu0 0.0
  %8867 = vmatprep.subr.mxu0 0.0
  %8868 = vmatpush2.msra.mxu0 0.0
  %8869 = vmatprep.subr.mxu0 0.0
  %8870 = vmatpush2.msra.mxu0 0.0
  %8871 = vmatprep.subr.mxu0 0.0
  %8872 = vmatpush2.msra.mxu0 0.0
  %8873 = vmatprep.subr.mxu0 0.0
  %8874 = vmatpush2.msra.mxu0 0.0
  %8875 = vmatprep.subr.mxu0 0.0
  %8876 = vmatpush2.msra.mxu0 0.0
  %8877 = vmatprep.subr.mxu0 0.0
  %8878 = vmatpush2.msra.mxu0 0.0
  %8879 = vmatprep.subr.mxu0 0.0
  %8880 = vmatpush2.msra.mxu0 0.0
  %8881 = vmatprep.subr.mxu0 0.0
  %8882 = vmatpush2.msra.mxu0 0.0
  %8883 = vmatprep.subr.mxu0 0.0
  %8884 = vmatpush2.msra.mxu0 0.0
  %8885 = vmatprep.subr.mxu0 0.0
  %8886 = vmatpush2.msra.mxu0 0.0
  %8887 = vmatprep.subr.mxu0 0.0
  %8888 = vmatpush2.msra.mxu0 0.0
  %8889 = vmatprep.mubr.f32.mxu0 0.0
  %8890 = vmatmul.mubr.f32.gmra.mxu0 %v8823
  %v8891 = vpop.f32.mrf.mxu0
  %v8892 = vadd.f32 0.0, %v8891
  %v8893 = vpop.f32.mrf.mxu0
  %v8894 = vadd.f32 0.0, %v8893
  %8895 = vdwg.mxu0
  %8896 = vmatprep.subr.mxu0 0.0
  %8897 = vmatpush1.msra.mxu0 0.0
  %8898 = vmatprep.subr.mxu0 0.0
  %8899 = vmatpush1.msra.mxu0 0.0
  %8900 = vmatprep.subr.mxu0 0.0
  %8901 = vmatpush1.msra.mxu0 0.0
  %8902 = vmatprep.subr.mxu0 0.0
  %8903 = vmatpush1.msra.mxu0 0.0
  %8904 = vmatprep.subr.mxu0 0.0
  %8905 = vmatpush1.msra.mxu0 0.0
  %8906 = vmatprep.subr.mxu0 0.0
  %8907 = vmatpush1.msra.mxu0 0.0
  %8908 = vmatprep.subr.mxu0 0.0
  %8909 = vmatpush1.msra.mxu0 0.0
  %8910 = vmatprep.subr.mxu0 0.0
  %8911 = vmatpush1.msra.mxu0 0.0
  %8912 = vmatprep.subr.mxu0 0.0
  %8913 = vmatpush1.msra.mxu0 0.0
  %8914 = vmatprep.subr.mxu0 0.0
  %8915 = vmatpush1.msra.mxu0 0.0
  %8916 = vmatprep.subr.mxu0 0.0
  %8917 = vmatpush1.msra.mxu0 0.0
  %8918 = vmatprep.subr.mxu0 0.0
  %8919 = vmatpush1.msra.mxu0 0.0
  %8920 = vmatprep.subr.mxu0 0.0
  %8921 = vmatpush1.msra.mxu0 0.0
  %8922 = vmatprep.subr.mxu0 0.0
  %8923 = vmatpush1.msra.mxu0 0.0
  %8924 = vmatprep.subr.mxu0 0.0
  %8925 = vmatpush1.msra.mxu0 0.0
  %8926 = vmatprep.subr.mxu0 %v8815
  %8927 = vmatpush1.msra.mxu0 %v8814
  %8928 = vmatprep.subr.mxu0 0.0
  %8929 = vmatpush2.msra.mxu0 0.0
  %8930 = vmatprep.subr.mxu0 0.0
  %8931 = vmatpush2.msra.mxu0 0.0
  %8932 = vmatprep.subr.mxu0 0.0
  %8933 = vmatpush2.msra.mxu0 0.0
  %8934 = vmatprep.subr.mxu0 0.0
  %8935 = vmatpush2.msra.mxu0 0.0
  %8936 = vmatprep.subr.mxu0 0.0
  %8937 = vmatpush2.msra.mxu0 0.0
  %8938 = vmatprep.subr.mxu0 0.0
  %8939 = vmatpush2.msra.mxu0 0.0
  %8940 = vmatprep.subr.mxu0 0.0
  %8941 = vmatpush2.msra.mxu0 0.0
  %8942 = vmatprep.subr.mxu0 0.0
  %8943 = vmatpush2.msra.mxu0 0.0
  %8944 = vmatprep.subr.mxu0 0.0
  %8945 = vmatpush2.msra.mxu0 0.0
  %8946 = vmatprep.subr.mxu0 0.0
  %8947 = vmatpush2.msra.mxu0 0.0
  %8948 = vmatprep.subr.mxu0 0.0
  %8949 = vmatpush2.msra.mxu0 0.0
  %8950 = vmatprep.subr.mxu0 0.0
  %8951 = vmatpush2.msra.mxu0 0.0
  %8952 = vmatprep.subr.mxu0 0.0
  %8953 = vmatpush2.msra.mxu0 0.0
  %8954 = vmatprep.subr.mxu0 0.0
  %8955 = vmatpush2.msra.mxu0 0.0
  %8956 = vmatprep.subr.mxu0 0.0
  %8957 = vmatpush2.msra.mxu0 0.0
  %8958 = vmatprep.subr.mxu0 0.0
  %8959 = vmatpush2.msra.mxu0 0.0
  %8960 = vmatprep.mubr.f32.mxu0 0.0
  %8961 = vmatmul.mubr.f32.gmra.mxu0 %v8823
  %v8962 = vpop.f32.mrf.mxu0
  %v8963 = vpop.f32.mrf.mxu0
  %v8964 = vadd.f32 0.0, %v8963
  %8965 = vdwg.mxu0
  %8966 = vmatprep.subr.mxu0 0.0
  %8967 = vmatpush1.msra.mxu0 0.0
  %8968 = vmatprep.subr.mxu0 0.0
  %8969 = vmatpush1.msra.mxu0 0.0
  %8970 = vmatprep.subr.mxu0 0.0
  %8971 = vmatpush1.msra.mxu0 0.0
  %8972 = vmatprep.subr.mxu0 0.0
  %8973 = vmatpush1.msra.mxu0 0.0
  %8974 = vmatprep.subr.mxu0 0.0
  %8975 = vmatpush1.msra.mxu0 0.0
  %8976 = vmatprep.subr.mxu0 0.0
  %8977 = vmatpush1.msra.mxu0 0.0
  %8978 = vmatprep.subr.mxu0 0.0
  %8979 = vmatpush1.msra.mxu0 0.0
  %8980 = vmatprep.subr.mxu0 0.0
  %8981 = vmatpush1.msra.mxu0 0.0
  %8982 = vmatprep.subr.mxu0 0.0
  %8983 = vmatpush1.msra.mxu0 0.0
  %8984 = vmatprep.subr.mxu0 0.0
  %8985 = vmatpush1.msra.mxu0 0.0
  %8986 = vmatprep.subr.mxu0 0.0
  %8987 = vmatpush1.msra.mxu0 0.0
  %8988 = vmatprep.subr.mxu0 0.0
  %8989 = vmatpush1.msra.mxu0 0.0
  %8990 = vmatprep.subr.mxu0 0.0
  %8991 = vmatpush1.msra.mxu0 0.0
  %8992 = vmatprep.subr.mxu0 0.0
  %8993 = vmatpush1.msra.mxu0 0.0
  %8994 = vmatprep.subr.mxu0 0.0
  %8995 = vmatpush1.msra.mxu0 0.0
  %8996 = vmatprep.subr.mxu0 0.0
  %8997 = vmatpush1.msra.mxu0 %v8816
  %8998 = vmatprep.subr.mxu0 0.0
  %8999 = vmatpush2.msra.mxu0 0.0
  %9000 = vmatprep.subr.mxu0 0.0
  %9001 = vmatpush2.msra.mxu0 0.0
  %9002 = vmatprep.subr.mxu0 0.0
  %9003 = vmatpush2.msra.mxu0 0.0
  %9004 = vmatprep.subr.mxu0 0.0
  %9005 = vmatpush2.msra.mxu0 0.0
  %9006 = vmatprep.subr.mxu0 0.0
  %9007 = vmatpush2.msra.mxu0 0.0
  %9008 = vmatprep.subr.mxu0 0.0
  %9009 = vmatpush2.msra.mxu0 0.0
  %9010 = vmatprep.subr.mxu0 0.0
  %9011 = vmatpush2.msra.mxu0 0.0
  %9012 = vmatprep.subr.mxu0 0.0
  %9013 = vmatpush2.msra.mxu0 0.0
  %9014 = vmatprep.subr.mxu0 0.0
  %9015 = vmatpush2.msra.mxu0 0.0
  %9016 = vmatprep.subr.mxu0 0.0
  %9017 = vmatpush2.msra.mxu0 0.0
  %9018 = vmatprep.subr.mxu0 0.0
  %9019 = vmatpush2.msra.mxu0 0.0
  %9020 = vmatprep.subr.mxu0 0.0
  %9021 = vmatpush2.msra.mxu0 0.0
  %9022 = vmatprep.subr.mxu0 0.0
  %9023 = vmatpush2.msra.mxu0 0.0
  %9024 = vmatprep.subr.mxu0 0.0
  %9025 = vmatpush2.msra.mxu0 0.0
  %9026 = vmatprep.subr.mxu0 0.0
  %9027 = vmatpush2.msra.mxu0 0.0
  %9028 = vmatprep.subr.mxu0 0.0
  %9029 = vmatpush2.msra.mxu0 0.0
  %9030 = vmatprep.mubr.f32.mxu0 0.0
  %9031 = vmatmul.mubr.f32.gmra.mxu0 %v8823
  %v9032 = vpop.f32.mrf.mxu0
  %v9033 = vadd.f32 0.0, %v9032
  %v9034 = vpop.f32.mrf.mxu0
  %9035 = vdwg.mxu0
  %v9036 = vadd.f32 %v8654, %v8892
  %v9037 = vadd.f32 %v8656, %v8894
  %v9038 = vadd.f32 %v8726, %v8964
  %v9039 = vadd.f32 %v8795, %v9033
  %s9040 = scalar_lea.vmem %s71, 24
  %v9041 = vld [vmem:[%s9040] sm:$0xff]
  %9042 = vrot.lane.b32.xlu0 %v8336, 125
  %v9043 = vpop.permute.xlu0 %9042
  %9044 = vrot.lane.b32.xlu0 %v8337, 125
  %v9045 = vpop.permute.xlu0 %9044
  %9046 = vrot.lane.b32.xlu0 %v8338, 125
  %v9047 = vpop.permute.xlu0 %9046
  %9048 = vrot.lane.b32.xlu0 %v8339, 125
  %v9049 = vpop.permute.xlu0 %9048
  %9050 = vrot.lane.b32.xlu0 %v8340, 125
  %v9051 = vpop.permute.xlu0 %9050
  %9052 = vrot.lane.b32.xlu0 %v8341, 125
  %v9053 = vpop.permute.xlu0 %9052
  %v9054 = vsel %vm920, %v9043, %v9045
  %v9055 = vsel %vm920, %v9045, %v9047
  %v9056 = vsel %vm920, %v9047, %v9049
  %v9057 = vsel %vm920, %v9049, %v9051
  %v9058 = vsel %vm920, %v9051, %v9053
  %v9065 = vsel %vm239, %v9041, 0
  %9067 = vmatprep.subr.mxu0 0.0
  %9068 = vmatpush1.msra.mxu0 0.0
  %9069 = vmatprep.subr.mxu0 0.0
  %9070 = vmatpush1.msra.mxu0 0.0
  %9071 = vmatprep.subr.mxu0 0.0
  %9072 = vmatpush1.msra.mxu0 0.0
  %9073 = vmatprep.subr.mxu0 0.0
  %9074 = vmatpush1.msra.mxu0 0.0
  %9075 = vmatprep.subr.mxu0 0.0
  %9076 = vmatpush1.msra.mxu0 0.0
  %9077 = vmatprep.subr.mxu0 0.0
  %9078 = vmatpush1.msra.mxu0 0.0
  %9079 = vmatprep.subr.mxu0 0.0
  %9080 = vmatpush1.msra.mxu0 0.0
  %9081 = vmatprep.subr.mxu0 0.0
  %9082 = vmatpush1.msra.mxu0 0.0
  %9083 = vmatprep.subr.mxu0 0.0
  %9084 = vmatpush1.msra.mxu0 0.0
  %9085 = vmatprep.subr.mxu0 0.0
  %9086 = vmatpush1.msra.mxu0 0.0
  %9087 = vmatprep.subr.mxu0 0.0
  %9088 = vmatpush1.msra.mxu0 0.0
  %9089 = vmatprep.subr.mxu0 0.0
  %9090 = vmatpush1.msra.mxu0 0.0
  %9091 = vmatprep.subr.mxu0 0.0
  %9092 = vmatpush1.msra.mxu0 0.0
  %9093 = vmatprep.subr.mxu0 0.0
  %9094 = vmatpush1.msra.mxu0 0.0
  %9095 = vmatprep.subr.mxu0 0.0
  %9096 = vmatpush1.msra.mxu0 0.0
  %9097 = vmatprep.subr.mxu0 %v9055
  %9098 = vmatpush1.msra.mxu0 %v9054
  %9099 = vmatprep.subr.mxu0 0.0
  %9100 = vmatpush2.msra.mxu0 0.0
  %9101 = vmatprep.subr.mxu0 0.0
  %9102 = vmatpush2.msra.mxu0 0.0
  %9103 = vmatprep.subr.mxu0 0.0
  %9104 = vmatpush2.msra.mxu0 0.0
  %9105 = vmatprep.subr.mxu0 0.0
  %9106 = vmatpush2.msra.mxu0 0.0
  %9107 = vmatprep.subr.mxu0 0.0
  %9108 = vmatpush2.msra.mxu0 0.0
  %9109 = vmatprep.subr.mxu0 0.0
  %9110 = vmatpush2.msra.mxu0 0.0
  %9111 = vmatprep.subr.mxu0 0.0
  %9112 = vmatpush2.msra.mxu0 0.0
  %9113 = vmatprep.subr.mxu0 0.0
  %9114 = vmatpush2.msra.mxu0 0.0
  %9115 = vmatprep.subr.mxu0 0.0
  %9116 = vmatpush2.msra.mxu0 0.0
  %9117 = vmatprep.subr.mxu0 0.0
  %9118 = vmatpush2.msra.mxu0 0.0
  %9119 = vmatprep.subr.mxu0 0.0
  %9120 = vmatpush2.msra.mxu0 0.0
  %9121 = vmatprep.subr.mxu0 0.0
  %9122 = vmatpush2.msra.mxu0 0.0
  %9123 = vmatprep.subr.mxu0 0.0
  %9124 = vmatpush2.msra.mxu0 0.0
  %9125 = vmatprep.subr.mxu0 0.0
  %9126 = vmatpush2.msra.mxu0 0.0
  %9127 = vmatprep.subr.mxu0 0.0
  %9128 = vmatpush2.msra.mxu0 0.0
  %9129 = vmatprep.subr.mxu0 0.0
  %9130 = vmatpush2.msra.mxu0 0.0
  %9131 = vmatprep.mubr.f32.mxu0 0.0
  %9132 = vmatmul.mubr.f32.gmra.mxu0 %v9065
  %v9133 = vpop.f32.mrf.mxu0
  %v9134 = vadd.f32 0.0, %v9133
  %v9135 = vpop.f32.mrf.mxu0
  %v9136 = vadd.f32 0.0, %v9135
  %9137 = vdwg.mxu0
  %9138 = vmatprep.subr.mxu0 0.0
  %9139 = vmatpush1.msra.mxu0 0.0
  %9140 = vmatprep.subr.mxu0 0.0
  %9141 = vmatpush1.msra.mxu0 0.0
  %9142 = vmatprep.subr.mxu0 0.0
  %9143 = vmatpush1.msra.mxu0 0.0
  %9144 = vmatprep.subr.mxu0 0.0
  %9145 = vmatpush1.msra.mxu0 0.0
  %9146 = vmatprep.subr.mxu0 0.0
  %9147 = vmatpush1.msra.mxu0 0.0
  %9148 = vmatprep.subr.mxu0 0.0
  %9149 = vmatpush1.msra.mxu0 0.0
  %9150 = vmatprep.subr.mxu0 0.0
  %9151 = vmatpush1.msra.mxu0 0.0
  %9152 = vmatprep.subr.mxu0 0.0
  %9153 = vmatpush1.msra.mxu0 0.0
  %9154 = vmatprep.subr.mxu0 0.0
  %9155 = vmatpush1.msra.mxu0 0.0
  %9156 = vmatprep.subr.mxu0 0.0
  %9157 = vmatpush1.msra.mxu0 0.0
  %9158 = vmatprep.subr.mxu0 0.0
  %9159 = vmatpush1.msra.mxu0 0.0
  %9160 = vmatprep.subr.mxu0 0.0
  %9161 = vmatpush1.msra.mxu0 0.0
  %9162 = vmatprep.subr.mxu0 0.0
  %9163 = vmatpush1.msra.mxu0 0.0
  %9164 = vmatprep.subr.mxu0 0.0
  %9165 = vmatpush1.msra.mxu0 0.0
  %9166 = vmatprep.subr.mxu0 0.0
  %9167 = vmatpush1.msra.mxu0 0.0
  %9168 = vmatprep.subr.mxu0 %v9057
  %9169 = vmatpush1.msra.mxu0 %v9056
  %9170 = vmatprep.subr.mxu0 0.0
  %9171 = vmatpush2.msra.mxu0 0.0
  %9172 = vmatprep.subr.mxu0 0.0
  %9173 = vmatpush2.msra.mxu0 0.0
  %9174 = vmatprep.subr.mxu0 0.0
  %9175 = vmatpush2.msra.mxu0 0.0
  %9176 = vmatprep.subr.mxu0 0.0
  %9177 = vmatpush2.msra.mxu0 0.0
  %9178 = vmatprep.subr.mxu0 0.0
  %9179 = vmatpush2.msra.mxu0 0.0
  %9180 = vmatprep.subr.mxu0 0.0
  %9181 = vmatpush2.msra.mxu0 0.0
  %9182 = vmatprep.subr.mxu0 0.0
  %9183 = vmatpush2.msra.mxu0 0.0
  %9184 = vmatprep.subr.mxu0 0.0
  %9185 = vmatpush2.msra.mxu0 0.0
  %9186 = vmatprep.subr.mxu0 0.0
  %9187 = vmatpush2.msra.mxu0 0.0
  %9188 = vmatprep.subr.mxu0 0.0
  %9189 = vmatpush2.msra.mxu0 0.0
  %9190 = vmatprep.subr.mxu0 0.0
  %9191 = vmatpush2.msra.mxu0 0.0
  %9192 = vmatprep.subr.mxu0 0.0
  %9193 = vmatpush2.msra.mxu0 0.0
  %9194 = vmatprep.subr.mxu0 0.0
  %9195 = vmatpush2.msra.mxu0 0.0
  %9196 = vmatprep.subr.mxu0 0.0
  %9197 = vmatpush2.msra.mxu0 0.0
  %9198 = vmatprep.subr.mxu0 0.0
  %9199 = vmatpush2.msra.mxu0 0.0
  %9200 = vmatprep.subr.mxu0 0.0
  %9201 = vmatpush2.msra.mxu0 0.0
  %9202 = vmatprep.mubr.f32.mxu0 0.0
  %9203 = vmatmul.mubr.f32.gmra.mxu0 %v9065
  %v9204 = vpop.f32.mrf.mxu0
  %v9205 = vpop.f32.mrf.mxu0
  %v9206 = vadd.f32 0.0, %v9205
  %9207 = vdwg.mxu0
  %9208 = vmatprep.subr.mxu0 0.0
  %9209 = vmatpush1.msra.mxu0 0.0
  %9210 = vmatprep.subr.mxu0 0.0
  %9211 = vmatpush1.msra.mxu0 0.0
  %9212 = vmatprep.subr.mxu0 0.0
  %9213 = vmatpush1.msra.mxu0 0.0
  %9214 = vmatprep.subr.mxu0 0.0
  %9215 = vmatpush1.msra.mxu0 0.0
  %9216 = vmatprep.subr.mxu0 0.0
  %9217 = vmatpush1.msra.mxu0 0.0
  %9218 = vmatprep.subr.mxu0 0.0
  %9219 = vmatpush1.msra.mxu0 0.0
  %9220 = vmatprep.subr.mxu0 0.0
  %9221 = vmatpush1.msra.mxu0 0.0
  %9222 = vmatprep.subr.mxu0 0.0
  %9223 = vmatpush1.msra.mxu0 0.0
  %9224 = vmatprep.subr.mxu0 0.0
  %9225 = vmatpush1.msra.mxu0 0.0
  %9226 = vmatprep.subr.mxu0 0.0
  %9227 = vmatpush1.msra.mxu0 0.0
  %9228 = vmatprep.subr.mxu0 0.0
  %9229 = vmatpush1.msra.mxu0 0.0
  %9230 = vmatprep.subr.mxu0 0.0
  %9231 = vmatpush1.msra.mxu0 0.0
  %9232 = vmatprep.subr.mxu0 0.0
  %9233 = vmatpush1.msra.mxu0 0.0
  %9234 = vmatprep.subr.mxu0 0.0
  %9235 = vmatpush1.msra.mxu0 0.0
  %9236 = vmatprep.subr.mxu0 0.0
  %9237 = vmatpush1.msra.mxu0 0.0
  %9238 = vmatprep.subr.mxu0 0.0
  %9239 = vmatpush1.msra.mxu0 %v9058
  %9240 = vmatprep.subr.mxu0 0.0
  %9241 = vmatpush2.msra.mxu0 0.0
  %9242 = vmatprep.subr.mxu0 0.0
  %9243 = vmatpush2.msra.mxu0 0.0
  %9244 = vmatprep.subr.mxu0 0.0
  %9245 = vmatpush2.msra.mxu0 0.0
  %9246 = vmatprep.subr.mxu0 0.0
  %9247 = vmatpush2.msra.mxu0 0.0
  %9248 = vmatprep.subr.mxu0 0.0
  %9249 = vmatpush2.msra.mxu0 0.0
  %9250 = vmatprep.subr.mxu0 0.0
  %9251 = vmatpush2.msra.mxu0 0.0
  %9252 = vmatprep.subr.mxu0 0.0
  %9253 = vmatpush2.msra.mxu0 0.0
  %9254 = vmatprep.subr.mxu0 0.0
  %9255 = vmatpush2.msra.mxu0 0.0
  %9256 = vmatprep.subr.mxu0 0.0
  %9257 = vmatpush2.msra.mxu0 0.0
  %9258 = vmatprep.subr.mxu0 0.0
  %9259 = vmatpush2.msra.mxu0 0.0
  %9260 = vmatprep.subr.mxu0 0.0
  %9261 = vmatpush2.msra.mxu0 0.0
  %9262 = vmatprep.subr.mxu0 0.0
  %9263 = vmatpush2.msra.mxu0 0.0
  %9264 = vmatprep.subr.mxu0 0.0
  %9265 = vmatpush2.msra.mxu0 0.0
  %9266 = vmatprep.subr.mxu0 0.0
  %9267 = vmatpush2.msra.mxu0 0.0
  %9268 = vmatprep.subr.mxu0 0.0
  %9269 = vmatpush2.msra.mxu0 0.0
  %9270 = vmatprep.subr.mxu0 0.0
  %9271 = vmatpush2.msra.mxu0 0.0
  %9272 = vmatprep.mubr.f32.mxu0 0.0
  %9273 = vmatmul.mubr.f32.gmra.mxu0 %v9065
  %v9274 = vpop.f32.mrf.mxu0
  %v9275 = vadd.f32 0.0, %v9274
  %v9276 = vpop.f32.mrf.mxu0
  %9277 = vdwg.mxu0
  %v9278 = vadd.f32 %v9036, %v9134
  %v9279 = vadd.f32 %v9037, %v9136
  %v9280 = vadd.f32 %v9038, %v9206
  %v9281 = vadd.f32 %v9039, %v9275
  %s9282 = scalar_lea.vmem %s71, 32
  %v9283 = vld [vmem:[%s9282] sm:$0xff]
  %9284 = vrot.lane.b32.xlu0 %v8336, 124
  %v9285 = vpop.permute.xlu0 %9284
  %9286 = vrot.lane.b32.xlu0 %v8337, 124
  %v9287 = vpop.permute.xlu0 %9286
  %9288 = vrot.lane.b32.xlu0 %v8338, 124
  %v9289 = vpop.permute.xlu0 %9288
  %9290 = vrot.lane.b32.xlu0 %v8339, 124
  %v9291 = vpop.permute.xlu0 %9290
  %9292 = vrot.lane.b32.xlu0 %v8340, 124
  %v9293 = vpop.permute.xlu0 %9292
  %9294 = vrot.lane.b32.xlu0 %v8341, 124
  %v9295 = vpop.permute.xlu0 %9294
  %v9296 = vsel %vm1174, %v9285, %v9287
  %v9297 = vsel %vm1174, %v9287, %v9289
  %v9298 = vsel %vm1174, %v9289, %v9291
  %v9299 = vsel %vm1174, %v9291, %v9293
  %v9300 = vsel %vm1174, %v9293, %v9295
  %v9307 = vsel %vm239, %v9283, 0
  %9309 = vmatprep.subr.mxu0 0.0
  %9310 = vmatpush1.msra.mxu0 0.0
  %9311 = vmatprep.subr.mxu0 0.0
  %9312 = vmatpush1.msra.mxu0 0.0
  %9313 = vmatprep.subr.mxu0 0.0
  %9314 = vmatpush1.msra.mxu0 0.0
  %9315 = vmatprep.subr.mxu0 0.0
  %9316 = vmatpush1.msra.mxu0 0.0
  %9317 = vmatprep.subr.mxu0 0.0
  %9318 = vmatpush1.msra.mxu0 0.0
  %9319 = vmatprep.subr.mxu0 0.0
  %9320 = vmatpush1.msra.mxu0 0.0
  %9321 = vmatprep.subr.mxu0 0.0
  %9322 = vmatpush1.msra.mxu0 0.0
  %9323 = vmatprep.subr.mxu0 0.0
  %9324 = vmatpush1.msra.mxu0 0.0
  %9325 = vmatprep.subr.mxu0 0.0
  %9326 = vmatpush1.msra.mxu0 0.0
  %9327 = vmatprep.subr.mxu0 0.0
  %9328 = vmatpush1.msra.mxu0 0.0
  %9329 = vmatprep.subr.mxu0 0.0
  %9330 = vmatpush1.msra.mxu0 0.0
  %9331 = vmatprep.subr.mxu0 0.0
  %9332 = vmatpush1.msra.mxu0 0.0
  %9333 = vmatprep.subr.mxu0 0.0
  %9334 = vmatpush1.msra.mxu0 0.0
  %9335 = vmatprep.subr.mxu0 0.0
  %9336 = vmatpush1.msra.mxu0 0.0
  %9337 = vmatprep.subr.mxu0 0.0
  %9338 = vmatpush1.msra.mxu0 0.0
  %9339 = vmatprep.subr.mxu0 %v9297
  %9340 = vmatpush1.msra.mxu0 %v9296
  %9341 = vmatprep.subr.mxu0 0.0
  %9342 = vmatpush2.msra.mxu0 0.0
  %9343 = vmatprep.subr.mxu0 0.0
  %9344 = vmatpush2.msra.mxu0 0.0
  %9345 = vmatprep.subr.mxu0 0.0
  %9346 = vmatpush2.msra.mxu0 0.0
  %9347 = vmatprep.subr.mxu0 0.0
  %9348 = vmatpush2.msra.mxu0 0.0
  %9349 = vmatprep.subr.mxu0 0.0
  %9350 = vmatpush2.msra.mxu0 0.0
  %9351 = vmatprep.subr.mxu0 0.0
  %9352 = vmatpush2.msra.mxu0 0.0
  %9353 = vmatprep.subr.mxu0 0.0
  %9354 = vmatpush2.msra.mxu0 0.0
  %9355 = vmatprep.subr.mxu0 0.0
  %9356 = vmatpush2.msra.mxu0 0.0
  %9357 = vmatprep.subr.mxu0 0.0
  %9358 = vmatpush2.msra.mxu0 0.0
  %9359 = vmatprep.subr.mxu0 0.0
  %9360 = vmatpush2.msra.mxu0 0.0
  %9361 = vmatprep.subr.mxu0 0.0
  %9362 = vmatpush2.msra.mxu0 0.0
  %9363 = vmatprep.subr.mxu0 0.0
  %9364 = vmatpush2.msra.mxu0 0.0
  %9365 = vmatprep.subr.mxu0 0.0
  %9366 = vmatpush2.msra.mxu0 0.0
  %9367 = vmatprep.subr.mxu0 0.0
  %9368 = vmatpush2.msra.mxu0 0.0
  %9369 = vmatprep.subr.mxu0 0.0
  %9370 = vmatpush2.msra.mxu0 0.0
  %9371 = vmatprep.subr.mxu0 0.0
  %9372 = vmatpush2.msra.mxu0 0.0
  %9373 = vmatprep.mubr.f32.mxu0 0.0
  %9374 = vmatmul.mubr.f32.gmra.mxu0 %v9307
  %v9375 = vpop.f32.mrf.mxu0
  %v9376 = vadd.f32 0.0, %v9375
  %v9377 = vpop.f32.mrf.mxu0
  %v9378 = vadd.f32 0.0, %v9377
  %9379 = vdwg.mxu0
  %9380 = vmatprep.subr.mxu0 0.0
  %9381 = vmatpush1.msra.mxu0 0.0
  %9382 = vmatprep.subr.mxu0 0.0
  %9383 = vmatpush1.msra.mxu0 0.0
  %9384 = vmatprep.subr.mxu0 0.0
  %9385 = vmatpush1.msra.mxu0 0.0
  %9386 = vmatprep.subr.mxu0 0.0
  %9387 = vmatpush1.msra.mxu0 0.0
  %9388 = vmatprep.subr.mxu0 0.0
  %9389 = vmatpush1.msra.mxu0 0.0
  %9390 = vmatprep.subr.mxu0 0.0
  %9391 = vmatpush1.msra.mxu0 0.0
  %9392 = vmatprep.subr.mxu0 0.0
  %9393 = vmatpush1.msra.mxu0 0.0
  %9394 = vmatprep.subr.mxu0 0.0
  %9395 = vmatpush1.msra.mxu0 0.0
  %9396 = vmatprep.subr.mxu0 0.0
  %9397 = vmatpush1.msra.mxu0 0.0
  %9398 = vmatprep.subr.mxu0 0.0
  %9399 = vmatpush1.msra.mxu0 0.0
  %9400 = vmatprep.subr.mxu0 0.0
  %9401 = vmatpush1.msra.mxu0 0.0
  %9402 = vmatprep.subr.mxu0 0.0
  %9403 = vmatpush1.msra.mxu0 0.0
  %9404 = vmatprep.subr.mxu0 0.0
  %9405 = vmatpush1.msra.mxu0 0.0
  %9406 = vmatprep.subr.mxu0 0.0
  %9407 = vmatpush1.msra.mxu0 0.0
  %9408 = vmatprep.subr.mxu0 0.0
  %9409 = vmatpush1.msra.mxu0 0.0
  %9410 = vmatprep.subr.mxu0 %v9299
  %9411 = vmatpush1.msra.mxu0 %v9298
  %9412 = vmatprep.subr.mxu0 0.0
  %9413 = vmatpush2.msra.mxu0 0.0
  %9414 = vmatprep.subr.mxu0 0.0
  %9415 = vmatpush2.msra.mxu0 0.0
  %9416 = vmatprep.subr.mxu0 0.0
  %9417 = vmatpush2.msra.mxu0 0.0
  %9418 = vmatprep.subr.mxu0 0.0
  %9419 = vmatpush2.msra.mxu0 0.0
  %9420 = vmatprep.subr.mxu0 0.0
  %9421 = vmatpush2.msra.mxu0 0.0
  %9422 = vmatprep.subr.mxu0 0.0
  %9423 = vmatpush2.msra.mxu0 0.0
  %9424 = vmatprep.subr.mxu0 0.0
  %9425 = vmatpush2.msra.mxu0 0.0
  %9426 = vmatprep.subr.mxu0 0.0
  %9427 = vmatpush2.msra.mxu0 0.0
  %9428 = vmatprep.subr.mxu0 0.0
  %9429 = vmatpush2.msra.mxu0 0.0
  %9430 = vmatprep.subr.mxu0 0.0
  %9431 = vmatpush2.msra.mxu0 0.0
  %9432 = vmatprep.subr.mxu0 0.0
  %9433 = vmatpush2.msra.mxu0 0.0
  %9434 = vmatprep.subr.mxu0 0.0
  %9435 = vmatpush2.msra.mxu0 0.0
  %9436 = vmatprep.subr.mxu0 0.0
  %9437 = vmatpush2.msra.mxu0 0.0
  %9438 = vmatprep.subr.mxu0 0.0
  %9439 = vmatpush2.msra.mxu0 0.0
  %9440 = vmatprep.subr.mxu0 0.0
  %9441 = vmatpush2.msra.mxu0 0.0
  %9442 = vmatprep.subr.mxu0 0.0
  %9443 = vmatpush2.msra.mxu0 0.0
  %9444 = vmatprep.mubr.f32.mxu0 0.0
  %9445 = vmatmul.mubr.f32.gmra.mxu0 %v9307
  %v9446 = vpop.f32.mrf.mxu0
  %v9447 = vpop.f32.mrf.mxu0
  %v9448 = vadd.f32 0.0, %v9447
  %9449 = vdwg.mxu0
  %9450 = vmatprep.subr.mxu0 0.0
  %9451 = vmatpush1.msra.mxu0 0.0
  %9452 = vmatprep.subr.mxu0 0.0
  %9453 = vmatpush1.msra.mxu0 0.0
  %9454 = vmatprep.subr.mxu0 0.0
  %9455 = vmatpush1.msra.mxu0 0.0
  %9456 = vmatprep.subr.mxu0 0.0
  %9457 = vmatpush1.msra.mxu0 0.0
  %9458 = vmatprep.subr.mxu0 0.0
  %9459 = vmatpush1.msra.mxu0 0.0
  %9460 = vmatprep.subr.mxu0 0.0
  %9461 = vmatpush1.msra.mxu0 0.0
  %9462 = vmatprep.subr.mxu0 0.0
  %9463 = vmatpush1.msra.mxu0 0.0
  %9464 = vmatprep.subr.mxu0 0.0
  %9465 = vmatpush1.msra.mxu0 0.0
  %9466 = vmatprep.subr.mxu0 0.0
  %9467 = vmatpush1.msra.mxu0 0.0
  %9468 = vmatprep.subr.mxu0 0.0
  %9469 = vmatpush1.msra.mxu0 0.0
  %9470 = vmatprep.subr.mxu0 0.0
  %9471 = vmatpush1.msra.mxu0 0.0
  %9472 = vmatprep.subr.mxu0 0.0
  %9473 = vmatpush1.msra.mxu0 0.0
  %9474 = vmatprep.subr.mxu0 0.0
  %9475 = vmatpush1.msra.mxu0 0.0
  %9476 = vmatprep.subr.mxu0 0.0
  %9477 = vmatpush1.msra.mxu0 0.0
  %9478 = vmatprep.subr.mxu0 0.0
  %9479 = vmatpush1.msra.mxu0 0.0
  %9480 = vmatprep.subr.mxu0 0.0
  %9481 = vmatpush1.msra.mxu0 %v9300
  %9482 = vmatprep.subr.mxu0 0.0
  %9483 = vmatpush2.msra.mxu0 0.0
  %9484 = vmatprep.subr.mxu0 0.0
  %9485 = vmatpush2.msra.mxu0 0.0
  %9486 = vmatprep.subr.mxu0 0.0
  %9487 = vmatpush2.msra.mxu0 0.0
  %9488 = vmatprep.subr.mxu0 0.0
  %9489 = vmatpush2.msra.mxu0 0.0
  %9490 = vmatprep.subr.mxu0 0.0
  %9491 = vmatpush2.msra.mxu0 0.0
  %9492 = vmatprep.subr.mxu0 0.0
  %9493 = vmatpush2.msra.mxu0 0.0
  %9494 = vmatprep.subr.mxu0 0.0
  %9495 = vmatpush2.msra.mxu0 0.0
  %9496 = vmatprep.subr.mxu0 0.0
  %9497 = vmatpush2.msra.mxu0 0.0
  %9498 = vmatprep.subr.mxu0 0.0
  %9499 = vmatpush2.msra.mxu0 0.0
  %9500 = vmatprep.subr.mxu0 0.0
  %9501 = vmatpush2.msra.mxu0 0.0
  %9502 = vmatprep.subr.mxu0 0.0
  %9503 = vmatpush2.msra.mxu0 0.0
  %9504 = vmatprep.subr.mxu0 0.0
  %9505 = vmatpush2.msra.mxu0 0.0
  %9506 = vmatprep.subr.mxu0 0.0
  %9507 = vmatpush2.msra.mxu0 0.0
  %9508 = vmatprep.subr.mxu0 0.0
  %9509 = vmatpush2.msra.mxu0 0.0
  %9510 = vmatprep.subr.mxu0 0.0
  %9511 = vmatpush2.msra.mxu0 0.0
  %9512 = vmatprep.subr.mxu0 0.0
  %9513 = vmatpush2.msra.mxu0 0.0
  %9514 = vmatprep.mubr.f32.mxu0 0.0
  %9515 = vmatmul.mubr.f32.gmra.mxu0 %v9307
  %v9516 = vpop.f32.mrf.mxu0
  %v9517 = vadd.f32 0.0, %v9516
  %v9518 = vpop.f32.mrf.mxu0
  %9519 = vdwg.mxu0
  %v9520 = vadd.f32 %v9278, %v9376
  %v9521 = vadd.f32 %v9279, %v9378
  %v9522 = vadd.f32 %v9280, %v9448
  %v9523 = vadd.f32 %v9281, %v9517
  %s9524 = scalar_lea.vmem %s71, 40
  %v9525 = vld [vmem:[%s9524] sm:$0xff]
  %9526 = vrot.lane.b32.xlu0 %v8336, 123
  %v9527 = vpop.permute.xlu0 %9526
  %9528 = vrot.lane.b32.xlu0 %v8337, 123
  %v9529 = vpop.permute.xlu0 %9528
  %9530 = vrot.lane.b32.xlu0 %v8338, 123
  %v9531 = vpop.permute.xlu0 %9530
  %9532 = vrot.lane.b32.xlu0 %v8339, 123
  %v9533 = vpop.permute.xlu0 %9532
  %9534 = vrot.lane.b32.xlu0 %v8340, 123
  %v9535 = vpop.permute.xlu0 %9534
  %9536 = vrot.lane.b32.xlu0 %v8341, 123
  %v9537 = vpop.permute.xlu0 %9536
  %v9538 = vsel %vm1417, %v9527, %v9529
  %v9539 = vsel %vm1417, %v9529, %v9531
  %v9540 = vsel %vm1417, %v9531, %v9533
  %v9541 = vsel %vm1417, %v9533, %v9535
  %v9542 = vsel %vm1417, %v9535, %v9537
  %v9549 = vsel %vm239, %v9525, 0
  %9551 = vmatprep.subr.mxu0 0.0
  %9552 = vmatpush1.msra.mxu0 0.0
  %9553 = vmatprep.subr.mxu0 0.0
  %9554 = vmatpush1.msra.mxu0 0.0
  %9555 = vmatprep.subr.mxu0 0.0
  %9556 = vmatpush1.msra.mxu0 0.0
  %9557 = vmatprep.subr.mxu0 0.0
  %9558 = vmatpush1.msra.mxu0 0.0
  %9559 = vmatprep.subr.mxu0 0.0
  %9560 = vmatpush1.msra.mxu0 0.0
  %9561 = vmatprep.subr.mxu0 0.0
  %9562 = vmatpush1.msra.mxu0 0.0
  %9563 = vmatprep.subr.mxu0 0.0
  %9564 = vmatpush1.msra.mxu0 0.0
  %9565 = vmatprep.subr.mxu0 0.0
  %9566 = vmatpush1.msra.mxu0 0.0
  %9567 = vmatprep.subr.mxu0 0.0
  %9568 = vmatpush1.msra.mxu0 0.0
  %9569 = vmatprep.subr.mxu0 0.0
  %9570 = vmatpush1.msra.mxu0 0.0
  %9571 = vmatprep.subr.mxu0 0.0
  %9572 = vmatpush1.msra.mxu0 0.0
  %9573 = vmatprep.subr.mxu0 0.0
  %9574 = vmatpush1.msra.mxu0 0.0
  %9575 = vmatprep.subr.mxu0 0.0
  %9576 = vmatpush1.msra.mxu0 0.0
  %9577 = vmatprep.subr.mxu0 0.0
  %9578 = vmatpush1.msra.mxu0 0.0
  %9579 = vmatprep.subr.mxu0 0.0
  %9580 = vmatpush1.msra.mxu0 0.0
  %9581 = vmatprep.subr.mxu0 %v9539
  %9582 = vmatpush1.msra.mxu0 %v9538
  %9583 = vmatprep.subr.mxu0 0.0
  %9584 = vmatpush2.msra.mxu0 0.0
  %9585 = vmatprep.subr.mxu0 0.0
  %9586 = vmatpush2.msra.mxu0 0.0
  %9587 = vmatprep.subr.mxu0 0.0
  %9588 = vmatpush2.msra.mxu0 0.0
  %9589 = vmatprep.subr.mxu0 0.0
  %9590 = vmatpush2.msra.mxu0 0.0
  %9591 = vmatprep.subr.mxu0 0.0
  %9592 = vmatpush2.msra.mxu0 0.0
  %9593 = vmatprep.subr.mxu0 0.0
  %9594 = vmatpush2.msra.mxu0 0.0
  %9595 = vmatprep.subr.mxu0 0.0
  %9596 = vmatpush2.msra.mxu0 0.0
  %9597 = vmatprep.subr.mxu0 0.0
  %9598 = vmatpush2.msra.mxu0 0.0
  %9599 = vmatprep.subr.mxu0 0.0
  %9600 = vmatpush2.msra.mxu0 0.0
  %9601 = vmatprep.subr.mxu0 0.0
  %9602 = vmatpush2.msra.mxu0 0.0
  %9603 = vmatprep.subr.mxu0 0.0
  %9604 = vmatpush2.msra.mxu0 0.0
  %9605 = vmatprep.subr.mxu0 0.0
  %9606 = vmatpush2.msra.mxu0 0.0
  %9607 = vmatprep.subr.mxu0 0.0
  %9608 = vmatpush2.msra.mxu0 0.0
  %9609 = vmatprep.subr.mxu0 0.0
  %9610 = vmatpush2.msra.mxu0 0.0
  %9611 = vmatprep.subr.mxu0 0.0
  %9612 = vmatpush2.msra.mxu0 0.0
  %9613 = vmatprep.subr.mxu0 0.0
  %9614 = vmatpush2.msra.mxu0 0.0
  %9615 = vmatprep.mubr.f32.mxu0 0.0
  %9616 = vmatmul.mubr.f32.gmra.mxu0 %v9549
  %v9617 = vpop.f32.mrf.mxu0
  %v9618 = vadd.f32 0.0, %v9617
  %v9619 = vpop.f32.mrf.mxu0
  %v9620 = vadd.f32 0.0, %v9619
  %9621 = vdwg.mxu0
  %9622 = vmatprep.subr.mxu0 0.0
  %9623 = vmatpush1.msra.mxu0 0.0
  %9624 = vmatprep.subr.mxu0 0.0
  %9625 = vmatpush1.msra.mxu0 0.0
  %9626 = vmatprep.subr.mxu0 0.0
  %9627 = vmatpush1.msra.mxu0 0.0
  %9628 = vmatprep.subr.mxu0 0.0
  %9629 = vmatpush1.msra.mxu0 0.0
  %9630 = vmatprep.subr.mxu0 0.0
  %9631 = vmatpush1.msra.mxu0 0.0
  %9632 = vmatprep.subr.mxu0 0.0
  %9633 = vmatpush1.msra.mxu0 0.0
  %9634 = vmatprep.subr.mxu0 0.0
  %9635 = vmatpush1.msra.mxu0 0.0
  %9636 = vmatprep.subr.mxu0 0.0
  %9637 = vmatpush1.msra.mxu0 0.0
  %9638 = vmatprep.subr.mxu0 0.0
  %9639 = vmatpush1.msra.mxu0 0.0
  %9640 = vmatprep.subr.mxu0 0.0
  %9641 = vmatpush1.msra.mxu0 0.0
  %9642 = vmatprep.subr.mxu0 0.0
  %9643 = vmatpush1.msra.mxu0 0.0
  %9644 = vmatprep.subr.mxu0 0.0
  %9645 = vmatpush1.msra.mxu0 0.0
  %9646 = vmatprep.subr.mxu0 0.0
  %9647 = vmatpush1.msra.mxu0 0.0
  %9648 = vmatprep.subr.mxu0 0.0
  %9649 = vmatpush1.msra.mxu0 0.0
  %9650 = vmatprep.subr.mxu0 0.0
  %9651 = vmatpush1.msra.mxu0 0.0
  %9652 = vmatprep.subr.mxu0 %v9541
  %9653 = vmatpush1.msra.mxu0 %v9540
  %9654 = vmatprep.subr.mxu0 0.0
  %9655 = vmatpush2.msra.mxu0 0.0
  %9656 = vmatprep.subr.mxu0 0.0
  %9657 = vmatpush2.msra.mxu0 0.0
  %9658 = vmatprep.subr.mxu0 0.0
  %9659 = vmatpush2.msra.mxu0 0.0
  %9660 = vmatprep.subr.mxu0 0.0
  %9661 = vmatpush2.msra.mxu0 0.0
  %9662 = vmatprep.subr.mxu0 0.0
  %9663 = vmatpush2.msra.mxu0 0.0
  %9664 = vmatprep.subr.mxu0 0.0
  %9665 = vmatpush2.msra.mxu0 0.0
  %9666 = vmatprep.subr.mxu0 0.0
  %9667 = vmatpush2.msra.mxu0 0.0
  %9668 = vmatprep.subr.mxu0 0.0
  %9669 = vmatpush2.msra.mxu0 0.0
  %9670 = vmatprep.subr.mxu0 0.0
  %9671 = vmatpush2.msra.mxu0 0.0
  %9672 = vmatprep.subr.mxu0 0.0
  %9673 = vmatpush2.msra.mxu0 0.0
  %9674 = vmatprep.subr.mxu0 0.0
  %9675 = vmatpush2.msra.mxu0 0.0
  %9676 = vmatprep.subr.mxu0 0.0
  %9677 = vmatpush2.msra.mxu0 0.0
  %9678 = vmatprep.subr.mxu0 0.0
  %9679 = vmatpush2.msra.mxu0 0.0
  %9680 = vmatprep.subr.mxu0 0.0
  %9681 = vmatpush2.msra.mxu0 0.0
  %9682 = vmatprep.subr.mxu0 0.0
  %9683 = vmatpush2.msra.mxu0 0.0
  %9684 = vmatprep.subr.mxu0 0.0
  %9685 = vmatpush2.msra.mxu0 0.0
  %9686 = vmatprep.mubr.f32.mxu0 0.0
  %9687 = vmatmul.mubr.f32.gmra.mxu0 %v9549
  %v9688 = vpop.f32.mrf.mxu0
  %v9689 = vpop.f32.mrf.mxu0
  %v9690 = vadd.f32 0.0, %v9689
  %9691 = vdwg.mxu0
  %9692 = vmatprep.subr.mxu0 0.0
  %9693 = vmatpush1.msra.mxu0 0.0
  %9694 = vmatprep.subr.mxu0 0.0
  %9695 = vmatpush1.msra.mxu0 0.0
  %9696 = vmatprep.subr.mxu0 0.0
  %9697 = vmatpush1.msra.mxu0 0.0
  %9698 = vmatprep.subr.mxu0 0.0
  %9699 = vmatpush1.msra.mxu0 0.0
  %9700 = vmatprep.subr.mxu0 0.0
  %9701 = vmatpush1.msra.mxu0 0.0
  %9702 = vmatprep.subr.mxu0 0.0
  %9703 = vmatpush1.msra.mxu0 0.0
  %9704 = vmatprep.subr.mxu0 0.0
  %9705 = vmatpush1.msra.mxu0 0.0
  %9706 = vmatprep.subr.mxu0 0.0
  %9707 = vmatpush1.msra.mxu0 0.0
  %9708 = vmatprep.subr.mxu0 0.0
  %9709 = vmatpush1.msra.mxu0 0.0
  %9710 = vmatprep.subr.mxu0 0.0
  %9711 = vmatpush1.msra.mxu0 0.0
  %9712 = vmatprep.subr.mxu0 0.0
  %9713 = vmatpush1.msra.mxu0 0.0
  %9714 = vmatprep.subr.mxu0 0.0
  %9715 = vmatpush1.msra.mxu0 0.0
  %9716 = vmatprep.subr.mxu0 0.0
  %9717 = vmatpush1.msra.mxu0 0.0
  %9718 = vmatprep.subr.mxu0 0.0
  %9719 = vmatpush1.msra.mxu0 0.0
  %9720 = vmatprep.subr.mxu0 0.0
  %9721 = vmatpush1.msra.mxu0 0.0
  %9722 = vmatprep.subr.mxu0 0.0
  %9723 = vmatpush1.msra.mxu0 %v9542
  %9724 = vmatprep.subr.mxu0 0.0
  %9725 = vmatpush2.msra.mxu0 0.0
  %9726 = vmatprep.subr.mxu0 0.0
  %9727 = vmatpush2.msra.mxu0 0.0
  %9728 = vmatprep.subr.mxu0 0.0
  %9729 = vmatpush2.msra.mxu0 0.0
  %9730 = vmatprep.subr.mxu0 0.0
  %9731 = vmatpush2.msra.mxu0 0.0
  %9732 = vmatprep.subr.mxu0 0.0
  %9733 = vmatpush2.msra.mxu0 0.0
  %9734 = vmatprep.subr.mxu0 0.0
  %9735 = vmatpush2.msra.mxu0 0.0
  %9736 = vmatprep.subr.mxu0 0.0
  %9737 = vmatpush2.msra.mxu0 0.0
  %9738 = vmatprep.subr.mxu0 0.0
  %9739 = vmatpush2.msra.mxu0 0.0
  %9740 = vmatprep.subr.mxu0 0.0
  %9741 = vmatpush2.msra.mxu0 0.0
  %9742 = vmatprep.subr.mxu0 0.0
  %9743 = vmatpush2.msra.mxu0 0.0
  %9744 = vmatprep.subr.mxu0 0.0
  %9745 = vmatpush2.msra.mxu0 0.0
  %9746 = vmatprep.subr.mxu0 0.0
  %9747 = vmatpush2.msra.mxu0 0.0
  %9748 = vmatprep.subr.mxu0 0.0
  %9749 = vmatpush2.msra.mxu0 0.0
  %9750 = vmatprep.subr.mxu0 0.0
  %9751 = vmatpush2.msra.mxu0 0.0
  %9752 = vmatprep.subr.mxu0 0.0
  %9753 = vmatpush2.msra.mxu0 0.0
  %9754 = vmatprep.subr.mxu0 0.0
  %9755 = vmatpush2.msra.mxu0 0.0
  %9756 = vmatprep.mubr.f32.mxu0 0.0
  %9757 = vmatmul.mubr.f32.gmra.mxu0 %v9549
  %v9758 = vpop.f32.mrf.mxu0
  %v9759 = vadd.f32 0.0, %v9758
  %v9760 = vpop.f32.mrf.mxu0
  %9761 = vdwg.mxu0
  %v9762 = vadd.f32 %v9520, %v9618
  %v9763 = vadd.f32 %v9521, %v9620
  %v9764 = vadd.f32 %v9522, %v9690
  %v9765 = vadd.f32 %v9523, %v9759
  %s9766 = scalar_lea.vmem %s71, 48
  %v9767 = vld [vmem:[%s9766] sm:$0xff]
  %9768 = vrot.lane.b32.xlu0 %v8336, 122
  %v9769 = vpop.permute.xlu0 %9768
  %9770 = vrot.lane.b32.xlu0 %v8337, 122
  %v9771 = vpop.permute.xlu0 %9770
  %9772 = vrot.lane.b32.xlu0 %v8338, 122
  %v9773 = vpop.permute.xlu0 %9772
  %9774 = vrot.lane.b32.xlu0 %v8339, 122
  %v9775 = vpop.permute.xlu0 %9774
  %9776 = vrot.lane.b32.xlu0 %v8340, 122
  %v9777 = vpop.permute.xlu0 %9776
  %9778 = vrot.lane.b32.xlu0 %v8341, 122
  %v9779 = vpop.permute.xlu0 %9778
  %v9780 = vsel %vm1660, %v9769, %v9771
  %v9781 = vsel %vm1660, %v9771, %v9773
  %v9782 = vsel %vm1660, %v9773, %v9775
  %v9783 = vsel %vm1660, %v9775, %v9777
  %v9784 = vsel %vm1660, %v9777, %v9779
  %v9791 = vsel %vm239, %v9767, 0
  %9793 = vmatprep.subr.mxu0 0.0
  %9794 = vmatpush1.msra.mxu0 0.0
  %9795 = vmatprep.subr.mxu0 0.0
  %9796 = vmatpush1.msra.mxu0 0.0
  %9797 = vmatprep.subr.mxu0 0.0
  %9798 = vmatpush1.msra.mxu0 0.0
  %9799 = vmatprep.subr.mxu0 0.0
  %9800 = vmatpush1.msra.mxu0 0.0
  %9801 = vmatprep.subr.mxu0 0.0
  %9802 = vmatpush1.msra.mxu0 0.0
  %9803 = vmatprep.subr.mxu0 0.0
  %9804 = vmatpush1.msra.mxu0 0.0
  %9805 = vmatprep.subr.mxu0 0.0
  %9806 = vmatpush1.msra.mxu0 0.0
  %9807 = vmatprep.subr.mxu0 0.0
  %9808 = vmatpush1.msra.mxu0 0.0
  %9809 = vmatprep.subr.mxu0 0.0
  %9810 = vmatpush1.msra.mxu0 0.0
  %9811 = vmatprep.subr.mxu0 0.0
  %9812 = vmatpush1.msra.mxu0 0.0
  %9813 = vmatprep.subr.mxu0 0.0
  %9814 = vmatpush1.msra.mxu0 0.0
  %9815 = vmatprep.subr.mxu0 0.0
  %9816 = vmatpush1.msra.mxu0 0.0
  %9817 = vmatprep.subr.mxu0 0.0
  %9818 = vmatpush1.msra.mxu0 0.0
  %9819 = vmatprep.subr.mxu0 0.0
  %9820 = vmatpush1.msra.mxu0 0.0
  %9821 = vmatprep.subr.mxu0 0.0
  %9822 = vmatpush1.msra.mxu0 0.0
  %9823 = vmatprep.subr.mxu0 %v9781
  %9824 = vmatpush1.msra.mxu0 %v9780
  %9825 = vmatprep.subr.mxu0 0.0
  %9826 = vmatpush2.msra.mxu0 0.0
  %9827 = vmatprep.subr.mxu0 0.0
  %9828 = vmatpush2.msra.mxu0 0.0
  %9829 = vmatprep.subr.mxu0 0.0
  %9830 = vmatpush2.msra.mxu0 0.0
  %9831 = vmatprep.subr.mxu0 0.0
  %9832 = vmatpush2.msra.mxu0 0.0
  %9833 = vmatprep.subr.mxu0 0.0
  %9834 = vmatpush2.msra.mxu0 0.0
  %9835 = vmatprep.subr.mxu0 0.0
  %9836 = vmatpush2.msra.mxu0 0.0
  %9837 = vmatprep.subr.mxu0 0.0
  %9838 = vmatpush2.msra.mxu0 0.0
  %9839 = vmatprep.subr.mxu0 0.0
  %9840 = vmatpush2.msra.mxu0 0.0
  %9841 = vmatprep.subr.mxu0 0.0
  %9842 = vmatpush2.msra.mxu0 0.0
  %9843 = vmatprep.subr.mxu0 0.0
  %9844 = vmatpush2.msra.mxu0 0.0
  %9845 = vmatprep.subr.mxu0 0.0
  %9846 = vmatpush2.msra.mxu0 0.0
  %9847 = vmatprep.subr.mxu0 0.0
  %9848 = vmatpush2.msra.mxu0 0.0
  %9849 = vmatprep.subr.mxu0 0.0
  %9850 = vmatpush2.msra.mxu0 0.0
  %9851 = vmatprep.subr.mxu0 0.0
  %9852 = vmatpush2.msra.mxu0 0.0
  %9853 = vmatprep.subr.mxu0 0.0
  %9854 = vmatpush2.msra.mxu0 0.0
  %9855 = vmatprep.subr.mxu0 0.0
  %9856 = vmatpush2.msra.mxu0 0.0
  %9857 = vmatprep.mubr.f32.mxu0 0.0
  %9858 = vmatmul.mubr.f32.gmra.mxu0 %v9791
  %v9859 = vpop.f32.mrf.mxu0
  %v9860 = vadd.f32 0.0, %v9859
  %v9861 = vpop.f32.mrf.mxu0
  %v9862 = vadd.f32 0.0, %v9861
  %9863 = vdwg.mxu0
  %9864 = vmatprep.subr.mxu0 0.0
  %9865 = vmatpush1.msra.mxu0 0.0
  %9866 = vmatprep.subr.mxu0 0.0
  %9867 = vmatpush1.msra.mxu0 0.0
  %9868 = vmatprep.subr.mxu0 0.0
  %9869 = vmatpush1.msra.mxu0 0.0
  %9870 = vmatprep.subr.mxu0 0.0
  %9871 = vmatpush1.msra.mxu0 0.0
  %9872 = vmatprep.subr.mxu0 0.0
  %9873 = vmatpush1.msra.mxu0 0.0
  %9874 = vmatprep.subr.mxu0 0.0
  %9875 = vmatpush1.msra.mxu0 0.0
  %9876 = vmatprep.subr.mxu0 0.0
  %9877 = vmatpush1.msra.mxu0 0.0
  %9878 = vmatprep.subr.mxu0 0.0
  %9879 = vmatpush1.msra.mxu0 0.0
  %9880 = vmatprep.subr.mxu0 0.0
  %9881 = vmatpush1.msra.mxu0 0.0
  %9882 = vmatprep.subr.mxu0 0.0
  %9883 = vmatpush1.msra.mxu0 0.0
  %9884 = vmatprep.subr.mxu0 0.0
  %9885 = vmatpush1.msra.mxu0 0.0
  %9886 = vmatprep.subr.mxu0 0.0
  %9887 = vmatpush1.msra.mxu0 0.0
  %9888 = vmatprep.subr.mxu0 0.0
  %9889 = vmatpush1.msra.mxu0 0.0
  %9890 = vmatprep.subr.mxu0 0.0
  %9891 = vmatpush1.msra.mxu0 0.0
  %9892 = vmatprep.subr.mxu0 0.0
  %9893 = vmatpush1.msra.mxu0 0.0
  %9894 = vmatprep.subr.mxu0 %v9783
  %9895 = vmatpush1.msra.mxu0 %v9782
  %9896 = vmatprep.subr.mxu0 0.0
  %9897 = vmatpush2.msra.mxu0 0.0
  %9898 = vmatprep.subr.mxu0 0.0
  %9899 = vmatpush2.msra.mxu0 0.0
  %9900 = vmatprep.subr.mxu0 0.0
  %9901 = vmatpush2.msra.mxu0 0.0
  %9902 = vmatprep.subr.mxu0 0.0
  %9903 = vmatpush2.msra.mxu0 0.0
  %9904 = vmatprep.subr.mxu0 0.0
  %9905 = vmatpush2.msra.mxu0 0.0
  %9906 = vmatprep.subr.mxu0 0.0
  %9907 = vmatpush2.msra.mxu0 0.0
  %9908 = vmatprep.subr.mxu0 0.0
  %9909 = vmatpush2.msra.mxu0 0.0
  %9910 = vmatprep.subr.mxu0 0.0
  %9911 = vmatpush2.msra.mxu0 0.0
  %9912 = vmatprep.subr.mxu0 0.0
  %9913 = vmatpush2.msra.mxu0 0.0
  %9914 = vmatprep.subr.mxu0 0.0
  %9915 = vmatpush2.msra.mxu0 0.0
  %9916 = vmatprep.subr.mxu0 0.0
  %9917 = vmatpush2.msra.mxu0 0.0
  %9918 = vmatprep.subr.mxu0 0.0
  %9919 = vmatpush2.msra.mxu0 0.0
  %9920 = vmatprep.subr.mxu0 0.0
  %9921 = vmatpush2.msra.mxu0 0.0
  %9922 = vmatprep.subr.mxu0 0.0
  %9923 = vmatpush2.msra.mxu0 0.0
  %9924 = vmatprep.subr.mxu0 0.0
  %9925 = vmatpush2.msra.mxu0 0.0
  %9926 = vmatprep.subr.mxu0 0.0
  %9927 = vmatpush2.msra.mxu0 0.0
  %9928 = vmatprep.mubr.f32.mxu0 0.0
  %9929 = vmatmul.mubr.f32.gmra.mxu0 %v9791
  %v9930 = vpop.f32.mrf.mxu0
  %v9931 = vpop.f32.mrf.mxu0
  %v9932 = vadd.f32 0.0, %v9931
  %9933 = vdwg.mxu0
  %9934 = vmatprep.subr.mxu0 0.0
  %9935 = vmatpush1.msra.mxu0 0.0
  %9936 = vmatprep.subr.mxu0 0.0
  %9937 = vmatpush1.msra.mxu0 0.0
  %9938 = vmatprep.subr.mxu0 0.0
  %9939 = vmatpush1.msra.mxu0 0.0
  %9940 = vmatprep.subr.mxu0 0.0
  %9941 = vmatpush1.msra.mxu0 0.0
  %9942 = vmatprep.subr.mxu0 0.0
  %9943 = vmatpush1.msra.mxu0 0.0
  %9944 = vmatprep.subr.mxu0 0.0
  %9945 = vmatpush1.msra.mxu0 0.0
  %9946 = vmatprep.subr.mxu0 0.0
  %9947 = vmatpush1.msra.mxu0 0.0
  %9948 = vmatprep.subr.mxu0 0.0
  %9949 = vmatpush1.msra.mxu0 0.0
  %9950 = vmatprep.subr.mxu0 0.0
  %9951 = vmatpush1.msra.mxu0 0.0
  %9952 = vmatprep.subr.mxu0 0.0
  %9953 = vmatpush1.msra.mxu0 0.0
  %9954 = vmatprep.subr.mxu0 0.0
  %9955 = vmatpush1.msra.mxu0 0.0
  %9956 = vmatprep.subr.mxu0 0.0
  %9957 = vmatpush1.msra.mxu0 0.0
  %9958 = vmatprep.subr.mxu0 0.0
  %9959 = vmatpush1.msra.mxu0 0.0
  %9960 = vmatprep.subr.mxu0 0.0
  %9961 = vmatpush1.msra.mxu0 0.0
  %9962 = vmatprep.subr.mxu0 0.0
  %9963 = vmatpush1.msra.mxu0 0.0
  %9964 = vmatprep.subr.mxu0 0.0
  %9965 = vmatpush1.msra.mxu0 %v9784
  %9966 = vmatprep.subr.mxu0 0.0
  %9967 = vmatpush2.msra.mxu0 0.0
  %9968 = vmatprep.subr.mxu0 0.0
  %9969 = vmatpush2.msra.mxu0 0.0
  %9970 = vmatprep.subr.mxu0 0.0
  %9971 = vmatpush2.msra.mxu0 0.0
  %9972 = vmatprep.subr.mxu0 0.0
  %9973 = vmatpush2.msra.mxu0 0.0
  %9974 = vmatprep.subr.mxu0 0.0
  %9975 = vmatpush2.msra.mxu0 0.0
  %9976 = vmatprep.subr.mxu0 0.0
  %9977 = vmatpush2.msra.mxu0 0.0
  %9978 = vmatprep.subr.mxu0 0.0
  %9979 = vmatpush2.msra.mxu0 0.0
  %9980 = vmatprep.subr.mxu0 0.0
  %9981 = vmatpush2.msra.mxu0 0.0
  %9982 = vmatprep.subr.mxu0 0.0
  %9983 = vmatpush2.msra.mxu0 0.0
  %9984 = vmatprep.subr.mxu0 0.0
  %9985 = vmatpush2.msra.mxu0 0.0
  %9986 = vmatprep.subr.mxu0 0.0
  %9987 = vmatpush2.msra.mxu0 0.0
  %9988 = vmatprep.subr.mxu0 0.0
  %9989 = vmatpush2.msra.mxu0 0.0
  %9990 = vmatprep.subr.mxu0 0.0
  %9991 = vmatpush2.msra.mxu0 0.0
  %9992 = vmatprep.subr.mxu0 0.0
  %9993 = vmatpush2.msra.mxu0 0.0
  %9994 = vmatprep.subr.mxu0 0.0
  %9995 = vmatpush2.msra.mxu0 0.0
  %9996 = vmatprep.subr.mxu0 0.0
  %9997 = vmatpush2.msra.mxu0 0.0
  %9998 = vmatprep.mubr.f32.mxu0 0.0
  %9999 = vmatmul.mubr.f32.gmra.mxu0 %v9791
  %v10000 = vpop.f32.mrf.mxu0
  %v10001 = vadd.f32 0.0, %v10000
  %v10002 = vpop.f32.mrf.mxu0
  %10003 = vdwg.mxu0
  %v10004 = vadd.f32 %v9762, %v9860
  %v10005 = vadd.f32 %v9763, %v9862
  %v10006 = vadd.f32 %v9764, %v9932
  %v10007 = vadd.f32 %v9765, %v10001
  %s10008 = scalar_lea.vmem %s71, 56
  %v10009 = vld [vmem:[%s10008] sm:$0xff]
  %10010 = vrot.lane.b32.xlu0 %v8336, 121
  %v10011 = vpop.permute.xlu0 %10010
  %10012 = vrot.lane.b32.xlu0 %v8337, 121
  %v10013 = vpop.permute.xlu0 %10012
  %10014 = vrot.lane.b32.xlu0 %v8338, 121
  %v10015 = vpop.permute.xlu0 %10014
  %10016 = vrot.lane.b32.xlu0 %v8339, 121
  %v10017 = vpop.permute.xlu0 %10016
  %10018 = vrot.lane.b32.xlu0 %v8340, 121
  %v10019 = vpop.permute.xlu0 %10018
  %10020 = vrot.lane.b32.xlu0 %v8341, 121
  %v10021 = vpop.permute.xlu0 %10020
  %v10022 = vsel %vm1903, %v10011, %v10013
  %v10023 = vsel %vm1903, %v10013, %v10015
  %v10024 = vsel %vm1903, %v10015, %v10017
  %v10025 = vsel %vm1903, %v10017, %v10019
  %v10026 = vsel %vm1903, %v10019, %v10021
  %v10033 = vsel %vm239, %v10009, 0
  %10035 = vmatprep.subr.mxu0 0.0
  %10036 = vmatpush1.msra.mxu0 0.0
  %10037 = vmatprep.subr.mxu0 0.0
  %10038 = vmatpush1.msra.mxu0 0.0
  %10039 = vmatprep.subr.mxu0 0.0
  %10040 = vmatpush1.msra.mxu0 0.0
  %10041 = vmatprep.subr.mxu0 0.0
  %10042 = vmatpush1.msra.mxu0 0.0
  %10043 = vmatprep.subr.mxu0 0.0
  %10044 = vmatpush1.msra.mxu0 0.0
  %10045 = vmatprep.subr.mxu0 0.0
  %10046 = vmatpush1.msra.mxu0 0.0
  %10047 = vmatprep.subr.mxu0 0.0
  %10048 = vmatpush1.msra.mxu0 0.0
  %10049 = vmatprep.subr.mxu0 0.0
  %10050 = vmatpush1.msra.mxu0 0.0
  %10051 = vmatprep.subr.mxu0 0.0
  %10052 = vmatpush1.msra.mxu0 0.0
  %10053 = vmatprep.subr.mxu0 0.0
  %10054 = vmatpush1.msra.mxu0 0.0
  %10055 = vmatprep.subr.mxu0 0.0
  %10056 = vmatpush1.msra.mxu0 0.0
  %10057 = vmatprep.subr.mxu0 0.0
  %10058 = vmatpush1.msra.mxu0 0.0
  %10059 = vmatprep.subr.mxu0 0.0
  %10060 = vmatpush1.msra.mxu0 0.0
  %10061 = vmatprep.subr.mxu0 0.0
  %10062 = vmatpush1.msra.mxu0 0.0
  %10063 = vmatprep.subr.mxu0 0.0
  %10064 = vmatpush1.msra.mxu0 0.0
  %10065 = vmatprep.subr.mxu0 %v10023
  %10066 = vmatpush1.msra.mxu0 %v10022
  %10067 = vmatprep.subr.mxu0 0.0
  %10068 = vmatpush2.msra.mxu0 0.0
  %10069 = vmatprep.subr.mxu0 0.0
  %10070 = vmatpush2.msra.mxu0 0.0
  %10071 = vmatprep.subr.mxu0 0.0
  %10072 = vmatpush2.msra.mxu0 0.0
  %10073 = vmatprep.subr.mxu0 0.0
  %10074 = vmatpush2.msra.mxu0 0.0
  %10075 = vmatprep.subr.mxu0 0.0
  %10076 = vmatpush2.msra.mxu0 0.0
  %10077 = vmatprep.subr.mxu0 0.0
  %10078 = vmatpush2.msra.mxu0 0.0
  %10079 = vmatprep.subr.mxu0 0.0
  %10080 = vmatpush2.msra.mxu0 0.0
  %10081 = vmatprep.subr.mxu0 0.0
  %10082 = vmatpush2.msra.mxu0 0.0
  %10083 = vmatprep.subr.mxu0 0.0
  %10084 = vmatpush2.msra.mxu0 0.0
  %10085 = vmatprep.subr.mxu0 0.0
  %10086 = vmatpush2.msra.mxu0 0.0
  %10087 = vmatprep.subr.mxu0 0.0
  %10088 = vmatpush2.msra.mxu0 0.0
  %10089 = vmatprep.subr.mxu0 0.0
  %10090 = vmatpush2.msra.mxu0 0.0
  %10091 = vmatprep.subr.mxu0 0.0
  %10092 = vmatpush2.msra.mxu0 0.0
  %10093 = vmatprep.subr.mxu0 0.0
  %10094 = vmatpush2.msra.mxu0 0.0
  %10095 = vmatprep.subr.mxu0 0.0
  %10096 = vmatpush2.msra.mxu0 0.0
  %10097 = vmatprep.subr.mxu0 0.0
  %10098 = vmatpush2.msra.mxu0 0.0
  %10099 = vmatprep.mubr.f32.mxu0 0.0
  %10100 = vmatmul.mubr.f32.gmra.mxu0 %v10033
  %v10101 = vpop.f32.mrf.mxu0
  %v10102 = vadd.f32 0.0, %v10101
  %v10103 = vpop.f32.mrf.mxu0
  %v10104 = vadd.f32 0.0, %v10103
  %10105 = vdwg.mxu0
  %10106 = vmatprep.subr.mxu0 0.0
  %10107 = vmatpush1.msra.mxu0 0.0
  %10108 = vmatprep.subr.mxu0 0.0
  %10109 = vmatpush1.msra.mxu0 0.0
  %10110 = vmatprep.subr.mxu0 0.0
  %10111 = vmatpush1.msra.mxu0 0.0
  %10112 = vmatprep.subr.mxu0 0.0
  %10113 = vmatpush1.msra.mxu0 0.0
  %10114 = vmatprep.subr.mxu0 0.0
  %10115 = vmatpush1.msra.mxu0 0.0
  %10116 = vmatprep.subr.mxu0 0.0
  %10117 = vmatpush1.msra.mxu0 0.0
  %10118 = vmatprep.subr.mxu0 0.0
  %10119 = vmatpush1.msra.mxu0 0.0
  %10120 = vmatprep.subr.mxu0 0.0
  %10121 = vmatpush1.msra.mxu0 0.0
  %10122 = vmatprep.subr.mxu0 0.0
  %10123 = vmatpush1.msra.mxu0 0.0
  %10124 = vmatprep.subr.mxu0 0.0
  %10125 = vmatpush1.msra.mxu0 0.0
  %10126 = vmatprep.subr.mxu0 0.0
  %10127 = vmatpush1.msra.mxu0 0.0
  %10128 = vmatprep.subr.mxu0 0.0
  %10129 = vmatpush1.msra.mxu0 0.0
  %10130 = vmatprep.subr.mxu0 0.0
  %10131 = vmatpush1.msra.mxu0 0.0
  %10132 = vmatprep.subr.mxu0 0.0
  %10133 = vmatpush1.msra.mxu0 0.0
  %10134 = vmatprep.subr.mxu0 0.0
  %10135 = vmatpush1.msra.mxu0 0.0
  %10136 = vmatprep.subr.mxu0 %v10025
  %10137 = vmatpush1.msra.mxu0 %v10024
  %10138 = vmatprep.subr.mxu0 0.0
  %10139 = vmatpush2.msra.mxu0 0.0
  %10140 = vmatprep.subr.mxu0 0.0
  %10141 = vmatpush2.msra.mxu0 0.0
  %10142 = vmatprep.subr.mxu0 0.0
  %10143 = vmatpush2.msra.mxu0 0.0
  %10144 = vmatprep.subr.mxu0 0.0
  %10145 = vmatpush2.msra.mxu0 0.0
  %10146 = vmatprep.subr.mxu0 0.0
  %10147 = vmatpush2.msra.mxu0 0.0
  %10148 = vmatprep.subr.mxu0 0.0
  %10149 = vmatpush2.msra.mxu0 0.0
  %10150 = vmatprep.subr.mxu0 0.0
  %10151 = vmatpush2.msra.mxu0 0.0
  %10152 = vmatprep.subr.mxu0 0.0
  %10153 = vmatpush2.msra.mxu0 0.0
  %10154 = vmatprep.subr.mxu0 0.0
  %10155 = vmatpush2.msra.mxu0 0.0
  %10156 = vmatprep.subr.mxu0 0.0
  %10157 = vmatpush2.msra.mxu0 0.0
  %10158 = vmatprep.subr.mxu0 0.0
  %10159 = vmatpush2.msra.mxu0 0.0
  %10160 = vmatprep.subr.mxu0 0.0
  %10161 = vmatpush2.msra.mxu0 0.0
  %10162 = vmatprep.subr.mxu0 0.0
  %10163 = vmatpush2.msra.mxu0 0.0
  %10164 = vmatprep.subr.mxu0 0.0
  %10165 = vmatpush2.msra.mxu0 0.0
  %10166 = vmatprep.subr.mxu0 0.0
  %10167 = vmatpush2.msra.mxu0 0.0
  %10168 = vmatprep.subr.mxu0 0.0
  %10169 = vmatpush2.msra.mxu0 0.0
  %10170 = vmatprep.mubr.f32.mxu0 0.0
  %10171 = vmatmul.mubr.f32.gmra.mxu0 %v10033
  %v10172 = vpop.f32.mrf.mxu0
  %v10173 = vpop.f32.mrf.mxu0
  %v10174 = vadd.f32 0.0, %v10173
  %10175 = vdwg.mxu0
  %10176 = vmatprep.subr.mxu0 0.0
  %10177 = vmatpush1.msra.mxu0 0.0
  %10178 = vmatprep.subr.mxu0 0.0
  %10179 = vmatpush1.msra.mxu0 0.0
  %10180 = vmatprep.subr.mxu0 0.0
  %10181 = vmatpush1.msra.mxu0 0.0
  %10182 = vmatprep.subr.mxu0 0.0
  %10183 = vmatpush1.msra.mxu0 0.0
  %10184 = vmatprep.subr.mxu0 0.0
  %10185 = vmatpush1.msra.mxu0 0.0
  %10186 = vmatprep.subr.mxu0 0.0
  %10187 = vmatpush1.msra.mxu0 0.0
  %10188 = vmatprep.subr.mxu0 0.0
  %10189 = vmatpush1.msra.mxu0 0.0
  %10190 = vmatprep.subr.mxu0 0.0
  %10191 = vmatpush1.msra.mxu0 0.0
  %10192 = vmatprep.subr.mxu0 0.0
  %10193 = vmatpush1.msra.mxu0 0.0
  %10194 = vmatprep.subr.mxu0 0.0
  %10195 = vmatpush1.msra.mxu0 0.0
  %10196 = vmatprep.subr.mxu0 0.0
  %10197 = vmatpush1.msra.mxu0 0.0
  %10198 = vmatprep.subr.mxu0 0.0
  %10199 = vmatpush1.msra.mxu0 0.0
  %10200 = vmatprep.subr.mxu0 0.0
  %10201 = vmatpush1.msra.mxu0 0.0
  %10202 = vmatprep.subr.mxu0 0.0
  %10203 = vmatpush1.msra.mxu0 0.0
  %10204 = vmatprep.subr.mxu0 0.0
  %10205 = vmatpush1.msra.mxu0 0.0
  %10206 = vmatprep.subr.mxu0 0.0
  %10207 = vmatpush1.msra.mxu0 %v10026
  %10208 = vmatprep.subr.mxu0 0.0
  %10209 = vmatpush2.msra.mxu0 0.0
  %10210 = vmatprep.subr.mxu0 0.0
  %10211 = vmatpush2.msra.mxu0 0.0
  %10212 = vmatprep.subr.mxu0 0.0
  %10213 = vmatpush2.msra.mxu0 0.0
  %10214 = vmatprep.subr.mxu0 0.0
  %10215 = vmatpush2.msra.mxu0 0.0
  %10216 = vmatprep.subr.mxu0 0.0
  %10217 = vmatpush2.msra.mxu0 0.0
  %10218 = vmatprep.subr.mxu0 0.0
  %10219 = vmatpush2.msra.mxu0 0.0
  %10220 = vmatprep.subr.mxu0 0.0
  %10221 = vmatpush2.msra.mxu0 0.0
  %10222 = vmatprep.subr.mxu0 0.0
  %10223 = vmatpush2.msra.mxu0 0.0
  %10224 = vmatprep.subr.mxu0 0.0
  %10225 = vmatpush2.msra.mxu0 0.0
  %10226 = vmatprep.subr.mxu0 0.0
  %10227 = vmatpush2.msra.mxu0 0.0
  %10228 = vmatprep.subr.mxu0 0.0
  %10229 = vmatpush2.msra.mxu0 0.0
  %10230 = vmatprep.subr.mxu0 0.0
  %10231 = vmatpush2.msra.mxu0 0.0
  %10232 = vmatprep.subr.mxu0 0.0
  %10233 = vmatpush2.msra.mxu0 0.0
  %10234 = vmatprep.subr.mxu0 0.0
  %10235 = vmatpush2.msra.mxu0 0.0
  %10236 = vmatprep.subr.mxu0 0.0
  %10237 = vmatpush2.msra.mxu0 0.0
  %10238 = vmatprep.subr.mxu0 0.0
  %10239 = vmatpush2.msra.mxu0 0.0
  %10240 = vmatprep.mubr.f32.mxu0 0.0
  %10241 = vmatmul.mubr.f32.gmra.mxu0 %v10033
  %v10242 = vpop.f32.mrf.mxu0
  %v10243 = vadd.f32 0.0, %v10242
  %v10244 = vpop.f32.mrf.mxu0
  %10245 = vdwg.mxu0
  %v10246 = vadd.f32 %v10004, %v10102
  %v10247 = vadd.f32 %v10005, %v10104
  %v10248 = vadd.f32 %v10006, %v10174
  %v10249 = vadd.f32 %v10007, %v10243
  %s10250 = scalar_lea.vmem %s71, 64
  %v10251 = vld [vmem:[%s10250] sm:$0xff]
  %10252 = vrot.lane.b32.xlu0 %v8336, 120
  %v10253 = vpop.permute.xlu0 %10252
  %10254 = vrot.lane.b32.xlu0 %v8337, 120
  %v10255 = vpop.permute.xlu0 %10254
  %10256 = vrot.lane.b32.xlu0 %v8338, 120
  %v10257 = vpop.permute.xlu0 %10256
  %10258 = vrot.lane.b32.xlu0 %v8339, 120
  %v10259 = vpop.permute.xlu0 %10258
  %10260 = vrot.lane.b32.xlu0 %v8340, 120
  %v10261 = vpop.permute.xlu0 %10260
  %10262 = vrot.lane.b32.xlu0 %v8341, 120
  %v10263 = vpop.permute.xlu0 %10262
  %vm10264 = vcmask 982016
  %v10265 = vsel %vm10264, %v10253, %v10255
  %v10266 = vsel %vm10264, %v10255, %v10257
  %v10267 = vsel %vm10264, %v10257, %v10259
  %v10268 = vsel %vm10264, %v10259, %v10261
  %v10269 = vsel %vm10264, %v10261, %v10263
  %v10276 = vsel %vm239, %v10251, 0
  %10278 = vmatprep.subr.mxu0 0.0
  %10279 = vmatpush1.msra.mxu0 0.0
  %10280 = vmatprep.subr.mxu0 0.0
  %10281 = vmatpush1.msra.mxu0 0.0
  %10282 = vmatprep.subr.mxu0 0.0
  %10283 = vmatpush1.msra.mxu0 0.0
  %10284 = vmatprep.subr.mxu0 0.0
  %10285 = vmatpush1.msra.mxu0 0.0
  %10286 = vmatprep.subr.mxu0 0.0
  %10287 = vmatpush1.msra.mxu0 0.0
  %10288 = vmatprep.subr.mxu0 0.0
  %10289 = vmatpush1.msra.mxu0 0.0
  %10290 = vmatprep.subr.mxu0 0.0
  %10291 = vmatpush1.msra.mxu0 0.0
  %10292 = vmatprep.subr.mxu0 0.0
  %10293 = vmatpush1.msra.mxu0 0.0
  %10294 = vmatprep.subr.mxu0 0.0
  %10295 = vmatpush1.msra.mxu0 0.0
  %10296 = vmatprep.subr.mxu0 0.0
  %10297 = vmatpush1.msra.mxu0 0.0
  %10298 = vmatprep.subr.mxu0 0.0
  %10299 = vmatpush1.msra.mxu0 0.0
  %10300 = vmatprep.subr.mxu0 0.0
  %10301 = vmatpush1.msra.mxu0 0.0
  %10302 = vmatprep.subr.mxu0 0.0
  %10303 = vmatpush1.msra.mxu0 0.0
  %10304 = vmatprep.subr.mxu0 0.0
  %10305 = vmatpush1.msra.mxu0 0.0
  %10306 = vmatprep.subr.mxu0 0.0
  %10307 = vmatpush1.msra.mxu0 0.0
  %10308 = vmatprep.subr.mxu0 %v10266
  %10309 = vmatpush1.msra.mxu0 %v10265
  %10310 = vmatprep.subr.mxu0 0.0
  %10311 = vmatpush2.msra.mxu0 0.0
  %10312 = vmatprep.subr.mxu0 0.0
  %10313 = vmatpush2.msra.mxu0 0.0
  %10314 = vmatprep.subr.mxu0 0.0
  %10315 = vmatpush2.msra.mxu0 0.0
  %10316 = vmatprep.subr.mxu0 0.0
  %10317 = vmatpush2.msra.mxu0 0.0
  %10318 = vmatprep.subr.mxu0 0.0
  %10319 = vmatpush2.msra.mxu0 0.0
  %10320 = vmatprep.subr.mxu0 0.0
  %10321 = vmatpush2.msra.mxu0 0.0
  %10322 = vmatprep.subr.mxu0 0.0
  %10323 = vmatpush2.msra.mxu0 0.0
  %10324 = vmatprep.subr.mxu0 0.0
  %10325 = vmatpush2.msra.mxu0 0.0
  %10326 = vmatprep.subr.mxu0 0.0
  %10327 = vmatpush2.msra.mxu0 0.0
  %10328 = vmatprep.subr.mxu0 0.0
  %10329 = vmatpush2.msra.mxu0 0.0
  %10330 = vmatprep.subr.mxu0 0.0
  %10331 = vmatpush2.msra.mxu0 0.0
  %10332 = vmatprep.subr.mxu0 0.0
  %10333 = vmatpush2.msra.mxu0 0.0
  %10334 = vmatprep.subr.mxu0 0.0
  %10335 = vmatpush2.msra.mxu0 0.0
  %10336 = vmatprep.subr.mxu0 0.0
  %10337 = vmatpush2.msra.mxu0 0.0
  %10338 = vmatprep.subr.mxu0 0.0
  %10339 = vmatpush2.msra.mxu0 0.0
  %10340 = vmatprep.subr.mxu0 0.0
  %10341 = vmatpush2.msra.mxu0 0.0
  %10342 = vmatprep.mubr.f32.mxu0 0.0
  %10343 = vmatmul.mubr.f32.gmra.mxu0 %v10276
  %v10344 = vpop.f32.mrf.mxu0
  %v10345 = vadd.f32 0.0, %v10344
  %v10346 = vpop.f32.mrf.mxu0
  %v10347 = vadd.f32 0.0, %v10346
  %10348 = vdwg.mxu0
  %10349 = vmatprep.subr.mxu0 0.0
  %10350 = vmatpush1.msra.mxu0 0.0
  %10351 = vmatprep.subr.mxu0 0.0
  %10352 = vmatpush1.msra.mxu0 0.0
  %10353 = vmatprep.subr.mxu0 0.0
  %10354 = vmatpush1.msra.mxu0 0.0
  %10355 = vmatprep.subr.mxu0 0.0
  %10356 = vmatpush1.msra.mxu0 0.0
  %10357 = vmatprep.subr.mxu0 0.0
  %10358 = vmatpush1.msra.mxu0 0.0
  %10359 = vmatprep.subr.mxu0 0.0
  %10360 = vmatpush1.msra.mxu0 0.0
  %10361 = vmatprep.subr.mxu0 0.0
  %10362 = vmatpush1.msra.mxu0 0.0
  %10363 = vmatprep.subr.mxu0 0.0
  %10364 = vmatpush1.msra.mxu0 0.0
  %10365 = vmatprep.subr.mxu0 0.0
  %10366 = vmatpush1.msra.mxu0 0.0
  %10367 = vmatprep.subr.mxu0 0.0
  %10368 = vmatpush1.msra.mxu0 0.0
  %10369 = vmatprep.subr.mxu0 0.0
  %10370 = vmatpush1.msra.mxu0 0.0
  %10371 = vmatprep.subr.mxu0 0.0
  %10372 = vmatpush1.msra.mxu0 0.0
  %10373 = vmatprep.subr.mxu0 0.0
  %10374 = vmatpush1.msra.mxu0 0.0
  %10375 = vmatprep.subr.mxu0 0.0
  %10376 = vmatpush1.msra.mxu0 0.0
  %10377 = vmatprep.subr.mxu0 0.0
  %10378 = vmatpush1.msra.mxu0 0.0
  %10379 = vmatprep.subr.mxu0 %v10268
  %10380 = vmatpush1.msra.mxu0 %v10267
  %10381 = vmatprep.subr.mxu0 0.0
  %10382 = vmatpush2.msra.mxu0 0.0
  %10383 = vmatprep.subr.mxu0 0.0
  %10384 = vmatpush2.msra.mxu0 0.0
  %10385 = vmatprep.subr.mxu0 0.0
  %10386 = vmatpush2.msra.mxu0 0.0
  %10387 = vmatprep.subr.mxu0 0.0
  %10388 = vmatpush2.msra.mxu0 0.0
  %10389 = vmatprep.subr.mxu0 0.0
  %10390 = vmatpush2.msra.mxu0 0.0
  %10391 = vmatprep.subr.mxu0 0.0
  %10392 = vmatpush2.msra.mxu0 0.0
  %10393 = vmatprep.subr.mxu0 0.0
  %10394 = vmatpush2.msra.mxu0 0.0
  %10395 = vmatprep.subr.mxu0 0.0
  %10396 = vmatpush2.msra.mxu0 0.0
  %10397 = vmatprep.subr.mxu0 0.0
  %10398 = vmatpush2.msra.mxu0 0.0
  %10399 = vmatprep.subr.mxu0 0.0
  %10400 = vmatpush2.msra.mxu0 0.0
  %10401 = vmatprep.subr.mxu0 0.0
  %10402 = vmatpush2.msra.mxu0 0.0
  %10403 = vmatprep.subr.mxu0 0.0
  %10404 = vmatpush2.msra.mxu0 0.0
  %10405 = vmatprep.subr.mxu0 0.0
  %10406 = vmatpush2.msra.mxu0 0.0
  %10407 = vmatprep.subr.mxu0 0.0
  %10408 = vmatpush2.msra.mxu0 0.0
  %10409 = vmatprep.subr.mxu0 0.0
  %10410 = vmatpush2.msra.mxu0 0.0
  %10411 = vmatprep.subr.mxu0 0.0
  %10412 = vmatpush2.msra.mxu0 0.0
  %10413 = vmatprep.mubr.f32.mxu0 0.0
  %10414 = vmatmul.mubr.f32.gmra.mxu0 %v10276
  %v10415 = vpop.f32.mrf.mxu0
  %v10416 = vpop.f32.mrf.mxu0
  %v10417 = vadd.f32 0.0, %v10416
  %10418 = vdwg.mxu0
  %10419 = vmatprep.subr.mxu0 0.0
  %10420 = vmatpush1.msra.mxu0 0.0
  %10421 = vmatprep.subr.mxu0 0.0
  %10422 = vmatpush1.msra.mxu0 0.0
  %10423 = vmatprep.subr.mxu0 0.0
  %10424 = vmatpush1.msra.mxu0 0.0
  %10425 = vmatprep.subr.mxu0 0.0
  %10426 = vmatpush1.msra.mxu0 0.0
  %10427 = vmatprep.subr.mxu0 0.0
  %10428 = vmatpush1.msra.mxu0 0.0
  %10429 = vmatprep.subr.mxu0 0.0
  %10430 = vmatpush1.msra.mxu0 0.0
  %10431 = vmatprep.subr.mxu0 0.0
  %10432 = vmatpush1.msra.mxu0 0.0
  %10433 = vmatprep.subr.mxu0 0.0
  %10434 = vmatpush1.msra.mxu0 0.0
  %10435 = vmatprep.subr.mxu0 0.0
  %10436 = vmatpush1.msra.mxu0 0.0
  %10437 = vmatprep.subr.mxu0 0.0
  %10438 = vmatpush1.msra.mxu0 0.0
  %10439 = vmatprep.subr.mxu0 0.0
  %10440 = vmatpush1.msra.mxu0 0.0
  %10441 = vmatprep.subr.mxu0 0.0
  %10442 = vmatpush1.msra.mxu0 0.0
  %10443 = vmatprep.subr.mxu0 0.0
  %10444 = vmatpush1.msra.mxu0 0.0
  %10445 = vmatprep.subr.mxu0 0.0
  %10446 = vmatpush1.msra.mxu0 0.0
  %10447 = vmatprep.subr.mxu0 0.0
  %10448 = vmatpush1.msra.mxu0 0.0
  %10449 = vmatprep.subr.mxu0 0.0
  %10450 = vmatpush1.msra.mxu0 %v10269
  %10451 = vmatprep.subr.mxu0 0.0
  %10452 = vmatpush2.msra.mxu0 0.0
  %10453 = vmatprep.subr.mxu0 0.0
  %10454 = vmatpush2.msra.mxu0 0.0
  %10455 = vmatprep.subr.mxu0 0.0
  %10456 = vmatpush2.msra.mxu0 0.0
  %10457 = vmatprep.subr.mxu0 0.0
  %10458 = vmatpush2.msra.mxu0 0.0
  %10459 = vmatprep.subr.mxu0 0.0
  %10460 = vmatpush2.msra.mxu0 0.0
  %10461 = vmatprep.subr.mxu0 0.0
  %10462 = vmatpush2.msra.mxu0 0.0
  %10463 = vmatprep.subr.mxu0 0.0
  %10464 = vmatpush2.msra.mxu0 0.0
  %10465 = vmatprep.subr.mxu0 0.0
  %10466 = vmatpush2.msra.mxu0 0.0
  %10467 = vmatprep.subr.mxu0 0.0
  %10468 = vmatpush2.msra.mxu0 0.0
  %10469 = vmatprep.subr.mxu0 0.0
  %10470 = vmatpush2.msra.mxu0 0.0
  %10471 = vmatprep.subr.mxu0 0.0
  %10472 = vmatpush2.msra.mxu0 0.0
  %10473 = vmatprep.subr.mxu0 0.0
  %10474 = vmatpush2.msra.mxu0 0.0
  %10475 = vmatprep.subr.mxu0 0.0
  %10476 = vmatpush2.msra.mxu0 0.0
  %10477 = vmatprep.subr.mxu0 0.0
  %10478 = vmatpush2.msra.mxu0 0.0
  %10479 = vmatprep.subr.mxu0 0.0
  %10480 = vmatpush2.msra.mxu0 0.0
  %10481 = vmatprep.subr.mxu0 0.0
  %10482 = vmatpush2.msra.mxu0 0.0
  %10483 = vmatprep.mubr.f32.mxu0 0.0
  %10484 = vmatmul.mubr.f32.gmra.mxu0 %v10276
  %v10485 = vpop.f32.mrf.mxu0
  %v10486 = vadd.f32 0.0, %v10485
  %v10487 = vpop.f32.mrf.mxu0
  %10488 = vdwg.mxu0
  %v10489 = vadd.f32 %v10246, %v10345
  %v10490 = vadd.f32 %v10247, %v10347
  %v10491 = vadd.f32 %v10248, %v10417
  %v10492 = vadd.f32 %v10249, %v10486
  %v10493 = vld [vmem:[%s73] sm:$0xff]
  %10495 = vset.pattern.permute.xlu0 0
  %10496 = vperm.xlu0 %10495, %v10493
  %v10497 = vpop.permute.xlu0 %10496
  %v10499 = vadd.f32 %v10489, %v10497
  %v10500 = vadd.f32 %v10490, %v10497
  %v10501 = vadd.f32 %v10491, %v10497
  %v10502 = vadd.f32 %v10492, %v10497
  %v10503 = vmul.f32 %v10499, 0.5
  %v10504 = vmul.f32 %v10500, 0.5
  %v10505 = vtanh.pop %v10503
  %v10506 = vtanh.pop %v10504
  %v10507 = vadd.f32 %v10505, 1.0
  %v10508 = vadd.f32 %v10506, 1.0
  %v10509 = vmul.f32 %v10507, 0.5
  %v10510 = vmul.f32 %v10508, 0.5
  %v10511 = vmul.f32 %v10501, 0.5
  %v10512 = vmul.f32 %v10502, 0.5
  %v10513 = vtanh.pop %v10511
  %v10514 = vtanh.pop %v10512
  %v10515 = vadd.f32 %v10513, 1.0
  %v10516 = vadd.f32 %v10514, 1.0
  %v10517 = vmul.f32 %v10515, 0.5
  %v10518 = vmul.f32 %v10516, 0.5
  %10519 = vst [vmem:[%s79] sm:$0xff] %v10509
  %10520 = vst [vmem:[%s79 + $0x8] sm:$0xff] %v10510
  %s10521 = scalar_lea.vmem %s79, 16
  %10522 = vst [vmem:[%s10521] sm:$0xff] %v10517
  %10523 = vst [vmem:[%s10521 + $0x8] sm:$0xff] %v10518
  // Predicated region
  $region158: #{convae_forward.1} parent=0 // pred_check
    _
  $region159: #{convae_forward.1} parent=0 // pred_check_branch
    %10525 = sbr.rel (0) target = $region161
  $region160: #{convae_forward.1} parent=0 // pred_region
    _
  $region161: #{convae_forward.1} parent=0 // pred_fallthru
    _
  // Predicated region
  $region162: #{convae_forward.1} parent=0 // pred_check
    _
  $region163: #{convae_forward.1} parent=0 // pred_check_branch
    %10527 = sbr.rel (0) target = $region165
  $region164: #{convae_forward.1} parent=0 // pred_region
    _
  $region165: #{convae_forward.1} parent=0 // pred_fallthru
    _

</llo_original>
